<compile_context>
chip_gen: v5e
topology: v5e:2x2
jax: 0.10.0
libtpu: 0.0.40
codegen_flags: <defaults>
</compile_context>

<pallas_src>
import jax
import jax.numpy as jnp
from jax.experimental import pallas as pl
from jax.experimental.pallas import tpu as pltpu

# --- small config consistent with the module ---
IMAGE_SIZE = 16
PATCH = 4
CHANNELS = 3
DIM = 32
HEADS = 4
DIM_HEAD = 8
MLP_DIM = 64
BATCH = 2
DEPTH_LOOPS = 4                                    # forward applies the transformer 4x

NUM_PATCHES = (IMAGE_SIZE // PATCH) ** 2           # 16
SEQ = NUM_PATCHES + 1                              # 17 (cls token prepended)
TOT = BATCH * SEQ                                  # 34 rows (batch folded into sublanes)
PATCH_DIM = CHANNELS * PATCH * PATCH               # 48
INNER = HEADS * DIM_HEAD                           # 32
SCALE = DIM_HEAD ** -0.5
LN_EPS = 1e-5                                      # torch.nn.LayerNorm default
NEG_INF = -1e30                                    # additive mask for cross-batch attention


# ---------------- in-kernel helpers (pure element/lane ops) ----------------

def _erf_f32(x):
    # Eigen/XLA single-precision rational erf (same accuracy class as torch.erf in f32).
    x = jnp.clip(x, -4.0, 4.0)
    x2 = x * x
    a = jnp.float32(-2.72614225801306e-10)
    a = a * x2 + jnp.float32(2.77068142495902e-08)
    a = a * x2 + jnp.float32(-2.10102402082508e-06)
    a = a * x2 + jnp.float32(-5.69250639462346e-05)
    a = a * x2 + jnp.float32(-7.34990630326855e-04)
    a = a * x2 + jnp.float32(-2.95459980854025e-03)
    a = a * x2 + jnp.float32(-1.60960333262415e-02)
    a = a * x
    b = jnp.float32(-1.45660718464996e-05)
    b = b * x2 + jnp.float32(-2.13374055278905e-04)
    b = b * x2 + jnp.float32(-1.68282697438203e-03)
    b = b * x2 + jnp.float32(-7.37332916720468e-03)
    b = b * x2 + jnp.float32(-1.42647390514189e-02)
    return a / b


def _gelu_exact(x):
    # matches torch.nn.GELU() default (erf-based, NOT the tanh approximation)
    return 0.5 * x * (1.0 + _erf_f32(x * jnp.float32(0.7071067811865476)))


def _layernorm(x, g, b):
    # torch.nn.LayerNorm over last dim (biased variance, eps=1e-5)
    mu = jnp.mean(x, axis=-1, keepdims=True)
    var = jnp.mean(jnp.square(x - mu), axis=-1, keepdims=True)
    return (x - mu) * jax.lax.rsqrt(var + LN_EPS) * g + b


# ---------------- the fused encoder kernel (single invocation, no grid) ----------------

def _encoder_kernel(pp_ref, init_ref, mask_ref, pw_ref, vec_ref,
                    attn_ref, w1_ref, w2_ref, o_ref):
    tot = pp_ref.shape[0]        # B*SEQ
    dim = pw_ref.shape[1]        # DIM
    mlp = w1_ref.shape[1]        # MLP_DIM
    heads = attn_ref.shape[1] // dim   # HEADS

    # ---- load every parameter once; the same weights are reused by all 4 layers ----
    pw = pw_ref[...]                                   # (PATCH_DIM, DIM)
    w1 = w1_ref[...]                                   # (DIM, MLP_DIM)
    w2 = w2_ref[...]                                   # (MLP_DIM, DIM)
    attn_w = attn_ref[...]                             # (2*DIM, HEADS*DIM) lane-dense
    a_flat = attn_w[:dim, :]                           # (DIM, H*DIM): [:, hD:(h+1)D]=scale*Wq_h Wk_h^T
    m_flat = attn_w[dim:, :]                           # (DIM, H*DIM): [:, hD:(h+1)D]=Wv_h Wo_h
    neg_mask = mask_ref[...]                           # (TOT, TOT) block-diagonal 0 / -1e30

    vecs = vec_ref[...]                                # (8, 128) packed small vectors
    ln1_g = jnp.broadcast_to(vecs[0:1, :dim], (tot, dim))
    ln1_b = jnp.broadcast_to(vecs[1:2, :dim], (tot, dim))
    ln2_g = jnp.broadcast_to(vecs[2:3, :dim], (tot, dim))
    ln2_b = jnp.broadcast_to(vecs[3:4, :dim], (tot, dim))
    bo    = jnp.broadcast_to(vecs[4:5, :dim], (tot, dim))
    b2f   = jnp.broadcast_to(vecs[5:6, :dim], (tot, dim))
    b1f   = jnp.broadcast_to(vecs[6:7, :mlp], (tot, mlp))

    # ---- patch embedding + cls token + positional embedding ----
    # cls rows of pp are zeros; init_add already holds cls+pos[0] / pos[n]+patch_bias.
    x = jnp.dot(pp_ref[...], pw, preferred_element_type=jnp.float32) + init_ref[...]

    outs = []
    for _ in range(DEPTH_LOOPS):                       # same single-layer Transformer, 4x
        # --- PreNorm + multi-head self-attention (dropout p=0 -> identity) ---
        xn = _layernorm(x, ln1_g, ln1_b)
        # all-head projections as two full-lane-width (TOT,DIM)x(DIM,H*DIM) matmuls
        qa_all = jnp.dot(xn, a_flat, preferred_element_type=jnp.float32)   # (TOT, H*D)
        va_all = jnp.dot(xn, m_flat, preferred_element_type=jnp.float32)   # (TOT, H*D)
        acc = None
        for h in range(heads):                         # static unroll
            qa = qa_all[:, h * dim:(h + 1) * dim]                          # (TOT, D)
            # dots_h = scale * (xn Wq_h)(xn Wk_h)^T == qa_h @ xn^T
            dots = jax.lax.dot_general(qa, xn, (((1,), (1,)), ((), ())),
                                       preferred_element_type=jnp.float32)  # (TOT, TOT)
            dots = dots + neg_mask                     # queries only see their own batch
            dots = dots - jnp.max(dots, axis=-1, keepdims=True)   # stable softmax
            p = jnp.exp(dots)
            attn = p / jnp.sum(p, axis=-1, keepdims=True)
            # attn_h @ v_h @ Wo_h == attn_h @ (xn @ (Wv_h Wo_h))
            contrib = jnp.dot(attn, va_all[:, h * dim:(h + 1) * dim],
                              preferred_element_type=jnp.float32)
            acc = contrib if acc is None else acc + contrib
        x = x + acc + bo                               # residual (+ to_out bias once)

        # --- PreNorm + FeedForward ---
        xn2 = _layernorm(x, ln2_g, ln2_b)
        hid = _gelu_exact(jnp.dot(xn2, w1, preferred_element_type=jnp.float32) + b1f)
        x = x + jnp.dot(hid, w2, preferred_element_type=jnp.float32) + b2f   # residual
        outs.append(x)

    # lane-dense (TOT, 4*DIM) = (34, 128) slab, one unmasked full-width store
    o_ref[...] = jnp.concatenate(outs, axis=-1).astype(o_ref.dtype)


# ---------------- wrapper (layout plumbing + parameter preprocessing) ----------------

def encoder_forward(x, params):
    """x: (B, C, H, W) NCHW, like the PyTorch module. Returns list of 4 tensors."""
    B, C, H, W = x.shape
    hh, ww = H // PATCH, W // PATCH
    tot = B * SEQ

    # Rearrange 'b c (h p1) (w p2) -> b (h w) (p1 p2 c)'   (pure layout, no compute)
    patches = x.reshape(B, C, hh, PATCH, ww, PATCH)
    patches = patches.transpose(0, 2, 4, 3, 5, 1).reshape(B, hh * ww, PATCH * PATCH * C)
    # Prepend a zero row per batch at the cls position and flatten batch*seq.
    patches_padded = jnp.concatenate(
        [jnp.zeros((B, 1, PATCH_DIM), jnp.float32), patches.astype(jnp.float32)], axis=1
    ).reshape(tot, PATCH_DIM)

    # Row-wise additive term: cls+pos[0] for cls rows, pos[n]+patch_bias for patch rows.
    pos = params['pos'][0]                                   # (SEQ, DIM)
    row0 = params['cls'][0, 0] + pos[0]                      # (DIM,)
    rest = pos[1:] + params['patch_b'][0]                    # (SEQ-1, DIM)
    init_add = jnp.tile(jnp.concatenate([row0[None, :], rest], axis=0), (B, 1))  # (tot, DIM)

    # Block-diagonal additive attention mask (no cross-batch attention).
    ids = jnp.arange(tot, dtype=jnp.int32) // SEQ
    neg_mask = jnp.where(ids[:, None] == ids[None, :], 0.0, NEG_INF).astype(jnp.float32)

    # Per-head composed attention weights (mathematically identical recombination),
    # packed lane-dense: a_flat[:, hD:(h+1)D] = scale*Wq_h Wk_h^T, m_flat[...] = Wv_h Wo_h.
    wqkv, wo = params['wqkv'], params['wo']
    wq = wqkv[:, 0 * INNER:1 * INNER].reshape(DIM, HEADS, DIM_HEAD).transpose(1, 0, 2)
    wk = wqkv[:, 1 * INNER:2 * INNER].reshape(DIM, HEADS, DIM_HEAD).transpose(1, 0, 2)
    wv = wqkv[:, 2 * INNER:3 * INNER].reshape(DIM, HEADS, DIM_HEAD).transpose(1, 0, 2)
    wo_h = wo.reshape(HEADS, DIM_HEAD, DIM)                  # (H, dh, D)
    attn_a = SCALE * jnp.einsum('hde,hfe->hdf', wq, wk)      # (H, D, D) = scale*Wq_h Wk_h^T
    attn_m = jnp.einsum('hde,hef->hdf', wv, wo_h)            # (H, D, D) = Wv_h Wo_h
    a_flat = attn_a.transpose(1, 0, 2).reshape(DIM, HEADS * DIM)   # (32, 128)
    m_flat = attn_m.transpose(1, 0, 2).reshape(DIM, HEADS * DIM)   # (32, 128)
    attn_w = jnp.concatenate([a_flat, m_flat], axis=0)             # (64, 128) single DMA

    # Pack the seven small LN/bias vectors into one (8, 128) tile (single DMA).
    vecs = jnp.zeros((8, 128), jnp.float32)
    vecs = vecs.at[0, :DIM].set(params['ln1_g'][0])
    vecs = vecs.at[1, :DIM].set(params['ln1_b'][0])
    vecs = vecs.at[2, :DIM].set(params['ln2_g'][0])
    vecs = vecs.at[3, :DIM].set(params['ln2_b'][0])
    vecs = vecs.at[4, :DIM].set(params['bo'][0])
    vecs = vecs.at[5, :DIM].set(params['b2'][0])
    vecs = vecs.at[6, :MLP_DIM].set(params['b1'][0])

    vmem = pl.BlockSpec(memory_space=pltpu.MemorySpace.VMEM)
    slab = pl.pallas_call(
        _encoder_kernel,
        out_shape=jax.ShapeDtypeStruct((tot, DEPTH_LOOPS * DIM), jnp.float32),
        in_specs=[vmem] * 8,
        out_specs=vmem,
    )(patches_padded, init_add, neg_mask, params['patch_w'], vecs,
      attn_w, params['w1'], params['w2'])

    # Split the lane-dense slab back into the 4 per-layer outputs (layout plumbing).
    slab = slab.reshape(B, SEQ, DEPTH_LOOPS * DIM)
    return [slab[:, :, l * DIM:(l + 1) * DIM] for l in range(DEPTH_LOOPS)]


# ---------------- deterministic parameter init ----------------

def init_params(key):
    ks = jax.random.split(key, 11)
    s = 0.02
    return dict(
        patch_w=jax.random.normal(ks[0], (PATCH_DIM, DIM), jnp.float32) * s,   # Linear W^T
        patch_b=jax.random.normal(ks[1], (1, DIM), jnp.float32) * s,
        cls=jax.random.normal(ks[2], (1, 1, DIM), jnp.float32),
        pos=jax.random.normal(ks[3], (1, SEQ, DIM), jnp.float32),
        ln1_g=jnp.ones((1, DIM), jnp.float32),
        ln1_b=jnp.zeros((1, DIM), jnp.float32),
        wqkv=jax.random.normal(ks[4], (DIM, 3 * INNER), jnp.float32) * s,      # to_qkv W^T (no bias)
        wo=jax.random.normal(ks[5], (INNER, DIM), jnp.float32) * s,            # to_out W^T
        bo=jax.random.normal(ks[6], (1, DIM), jnp.float32) * s,
        ln2_g=jnp.ones((1, DIM), jnp.float32),
        ln2_b=jnp.zeros((1, DIM), jnp.float32),
        w1=jax.random.normal(ks[7], (DIM, MLP_DIM), jnp.float32) * s,
        b1=jax.random.normal(ks[8], (1, MLP_DIM), jnp.float32) * s,
        w2=jax.random.normal(ks[9], (MLP_DIM, DIM), jnp.float32) * s,
        b2=jax.random.normal(ks[10], (1, DIM), jnp.float32) * s,
    )


if __name__ == "__main__":
    key = jax.random.PRNGKey(0)
    pkey, xkey = jax.random.split(key)
    params = init_params(pkey)
    x = jax.random.normal(xkey, (BATCH, CHANNELS, IMAGE_SIZE, IMAGE_SIZE), jnp.float32)

    outs = jax.jit(lambda xx: encoder_forward(xx, params))(x)
    outs = jax.block_until_ready(outs)

    assert len(outs) == 4
    for o in outs:
        assert o.shape == (BATCH, SEQ, DIM) and o.dtype == jnp.float32
        assert bool(jnp.all(jnp.isfinite(o)))
    print("KERNEL_OK")
</pallas_src>

<mosaic_0001>
module attributes {stable_mosaic.version = 11 : i64} {
  func.func @_encoder_kernel(%arg0: memref<34x48xf32, #tpu.memory_space<vmem>>, %arg1: memref<34x32xf32, #tpu.memory_space<vmem>>, %arg2: memref<34x34xf32, #tpu.memory_space<vmem>>, %arg3: memref<48x32xf32, #tpu.memory_space<vmem>>, %arg4: memref<8x128xf32, #tpu.memory_space<vmem>>, %arg5: memref<64x128xf32, #tpu.memory_space<vmem>>, %arg6: memref<32x64xf32, #tpu.memory_space<vmem>>, %arg7: memref<64x32xf32, #tpu.memory_space<vmem>>, %arg8: memref<34x128xf32, #tpu.memory_space<vmem>>) attributes {dimension_semantics = [], scalar_prefetch = 0 : i64, scratch_operands = 0 : i64, tpu.core_type = #tpu.core_type<tc>} {
    %c0 = arith.constant 0 : index
    %c0_0 = arith.constant 0 : index
    %0 = vector.load %arg3[%c0, %c0_0] : memref<48x32xf32, #tpu.memory_space<vmem>>, vector<48x32xf32>
    %c0_1 = arith.constant 0 : index
    %c0_2 = arith.constant 0 : index
    %1 = vector.load %arg6[%c0_1, %c0_2] : memref<32x64xf32, #tpu.memory_space<vmem>>, vector<32x64xf32>
    %c0_3 = arith.constant 0 : index
    %c0_4 = arith.constant 0 : index
    %2 = vector.load %arg7[%c0_3, %c0_4] : memref<64x32xf32, #tpu.memory_space<vmem>>, vector<64x32xf32>
    %c0_5 = arith.constant 0 : index
    %c0_6 = arith.constant 0 : index
    %3 = vector.load %arg5[%c0_5, %c0_6] : memref<64x128xf32, #tpu.memory_space<vmem>>, vector<64x128xf32>
    %4 = vector.extract_strided_slice %3 {offsets = [0, 0], sizes = [32, 128], strides = [1, 1]} : vector<64x128xf32> to vector<32x128xf32>
    %5 = vector.extract_strided_slice %3 {offsets = [32, 0], sizes = [32, 128], strides = [1, 1]} : vector<64x128xf32> to vector<32x128xf32>
    %c0_7 = arith.constant 0 : index
    %c0_8 = arith.constant 0 : index
    %6 = vector.load %arg2[%c0_7, %c0_8] : memref<34x34xf32, #tpu.memory_space<vmem>>, vector<34x34xf32>
    %c0_9 = arith.constant 0 : index
    %c0_10 = arith.constant 0 : index
    %7 = vector.load %arg4[%c0_9, %c0_10] : memref<8x128xf32, #tpu.memory_space<vmem>>, vector<8x128xf32>
    %8 = vector.extract_strided_slice %7 {offsets = [0, 0], sizes = [1, 32], strides = [1, 1]} : vector<8x128xf32> to vector<1x32xf32>
    %9 = vector.shape_cast %8 : vector<1x32xf32> to vector<1x32xf32>
    %10 = vector.broadcast %9 : vector<1x32xf32> to vector<34x32xf32>
    %11 = vector.extract_strided_slice %7 {offsets = [1, 0], sizes = [1, 32], strides = [1, 1]} : vector<8x128xf32> to vector<1x32xf32>
    %12 = vector.shape_cast %11 : vector<1x32xf32> to vector<1x32xf32>
    %13 = vector.broadcast %12 : vector<1x32xf32> to vector<34x32xf32>
    %14 = vector.extract_strided_slice %7 {offsets = [2, 0], sizes = [1, 32], strides = [1, 1]} : vector<8x128xf32> to vector<1x32xf32>
    %15 = vector.shape_cast %14 : vector<1x32xf32> to vector<1x32xf32>
    %16 = vector.broadcast %15 : vector<1x32xf32> to vector<34x32xf32>
    %17 = vector.extract_strided_slice %7 {offsets = [3, 0], sizes = [1, 32], strides = [1, 1]} : vector<8x128xf32> to vector<1x32xf32>
    %18 = vector.shape_cast %17 : vector<1x32xf32> to vector<1x32xf32>
    %19 = vector.broadcast %18 : vector<1x32xf32> to vector<34x32xf32>
    %20 = vector.extract_strided_slice %7 {offsets = [4, 0], sizes = [1, 32], strides = [1, 1]} : vector<8x128xf32> to vector<1x32xf32>
    %21 = vector.shape_cast %20 : vector<1x32xf32> to vector<1x32xf32>
    %22 = vector.broadcast %21 : vector<1x32xf32> to vector<34x32xf32>
    %23 = vector.extract_strided_slice %7 {offsets = [5, 0], sizes = [1, 32], strides = [1, 1]} : vector<8x128xf32> to vector<1x32xf32>
    %24 = vector.shape_cast %23 : vector<1x32xf32> to vector<1x32xf32>
    %25 = vector.broadcast %24 : vector<1x32xf32> to vector<34x32xf32>
    %26 = vector.extract_strided_slice %7 {offsets = [6, 0], sizes = [1, 64], strides = [1, 1]} : vector<8x128xf32> to vector<1x64xf32>
    %27 = vector.shape_cast %26 : vector<1x64xf32> to vector<1x64xf32>
    %28 = vector.broadcast %27 : vector<1x64xf32> to vector<34x64xf32>
    %c0_11 = arith.constant 0 : index
    %c0_12 = arith.constant 0 : index
    %29 = vector.load %arg0[%c0_11, %c0_12] : memref<34x48xf32, #tpu.memory_space<vmem>>, vector<34x48xf32>
    %cst = arith.constant dense<0.000000e+00> : vector<34x32xf32>
    %30 = tpu.matmul %29, %0, %cst {dimension_numbers = #tpu.dot_dimension_numbers<[1], [0], [0], [1], [0, 0, 1, 1], [], []>} : vector<34x48xf32>, vector<48x32xf32>, vector<34x32xf32> -> vector<34x32xf32>
    %c0_13 = arith.constant 0 : index
    %c0_14 = arith.constant 0 : index
    %31 = vector.load %arg1[%c0_13, %c0_14] : memref<34x32xf32, #tpu.memory_space<vmem>>, vector<34x32xf32>
    %32 = arith.addf %30, %31 : vector<34x32xf32>
    %cst_15 = arith.constant dense<0.000000e+00> : vector<34xf32>
    %33 = vector.multi_reduction <add>, %32, %cst_15 [1] : vector<34x32xf32> to vector<34xf32>
    %34 = vector.shape_cast %33 : vector<34xf32> to vector<34x1xf32>
    %cst_16 = arith.constant 3.200000e+01 : f32
    %35 = vector.broadcast %cst_16 : f32 to vector<34x1xf32>
    %36 = arith.divf %34, %35 : vector<34x1xf32>
    %37 = vector.broadcast %36 : vector<34x1xf32> to vector<34x32xf32>
    %38 = arith.subf %32, %37 : vector<34x32xf32>
    %39 = arith.mulf %38, %38 : vector<34x32xf32>
    %cst_17 = arith.constant dense<0.000000e+00> : vector<34xf32>
    %40 = vector.multi_reduction <add>, %39, %cst_17 [1] : vector<34x32xf32> to vector<34xf32>
    %41 = vector.shape_cast %40 : vector<34xf32> to vector<34x1xf32>
    %cst_18 = arith.constant 3.200000e+01 : f32
    %42 = vector.broadcast %cst_18 : f32 to vector<34x1xf32>
    %43 = arith.divf %41, %42 : vector<34x1xf32>
    %44 = vector.broadcast %36 : vector<34x1xf32> to vector<34x32xf32>
    %45 = arith.subf %32, %44 : vector<34x32xf32>
    %cst_19 = arith.constant 9.99999974E-6 : f32
    %46 = vector.broadcast %cst_19 : f32 to vector<34x1xf32>
    %47 = arith.addf %43, %46 : vector<34x1xf32>
    %48 = math.rsqrt %47 : vector<34x1xf32>
    %49 = vector.broadcast %48 : vector<34x1xf32> to vector<34x32xf32>
    %50 = arith.mulf %45, %49 : vector<34x32xf32>
    %51 = arith.mulf %50, %10 : vector<34x32xf32>
    %52 = arith.addf %51, %13 : vector<34x32xf32>
    %cst_20 = arith.constant dense<0.000000e+00> : vector<34x128xf32>
    %53 = tpu.matmul %52, %4, %cst_20 {dimension_numbers = #tpu.dot_dimension_numbers<[1], [0], [0], [1], [0, 0, 1, 1], [], []>} : vector<34x32xf32>, vector<32x128xf32>, vector<34x128xf32> -> vector<34x128xf32>
    %cst_21 = arith.constant dense<0.000000e+00> : vector<34x128xf32>
    %54 = tpu.matmul %52, %5, %cst_21 {dimension_numbers = #tpu.dot_dimension_numbers<[1], [0], [0], [1], [0, 0, 1, 1], [], []>} : vector<34x32xf32>, vector<32x128xf32>, vector<34x128xf32> -> vector<34x128xf32>
    %55 = vector.extract_strided_slice %53 {offsets = [0, 0], sizes = [34, 32], strides = [1, 1]} : vector<34x128xf32> to vector<34x32xf32>
    %cst_22 = arith.constant dense<0.000000e+00> : vector<34x34xf32>
    %56 = tpu.matmul %55, %52, %cst_22 {dimension_numbers = #tpu.dot_dimension_numbers<[1], [1], [0], [0], [0, 0, 1, 0], [], []>} : vector<34x32xf32>, vector<34x32xf32>, vector<34x34xf32> -> vector<34x34xf32>
    %57 = arith.addf %56, %6 : vector<34x34xf32>
    %cst_23 = arith.constant dense<0xFF800000> : vector<34xf32>
    %58 = vector.multi_reduction <maximumf>, %57, %cst_23 [1] : vector<34x34xf32> to vector<34xf32>
    %59 = vector.shape_cast %58 : vector<34xf32> to vector<34x1xf32>
    %60 = vector.broadcast %59 : vector<34x1xf32> to vector<34x34xf32>
    %61 = arith.subf %57, %60 : vector<34x34xf32>
    %62 = math.exp %61 : vector<34x34xf32>
    %cst_24 = arith.constant dense<0.000000e+00> : vector<34xf32>
    %63 = vector.multi_reduction <add>, %62, %cst_24 [1] : vector<34x34xf32> to vector<34xf32>
    %64 = vector.shape_cast %63 : vector<34xf32> to vector<34x1xf32>
    %65 = vector.broadcast %64 : vector<34x1xf32> to vector<34x34xf32>
    %66 = arith.divf %62, %65 : vector<34x34xf32>
    %67 = vector.extract_strided_slice %54 {offsets = [0, 0], sizes = [34, 32], strides = [1, 1]} : vector<34x128xf32> to vector<34x32xf32>
    %cst_25 = arith.constant dense<0.000000e+00> : vector<34x32xf32>
    %68 = tpu.matmul %66, %67, %cst_25 {dimension_numbers = #tpu.dot_dimension_numbers<[1], [0], [0], [1], [0, 0, 1, 1], [], []>} : vector<34x34xf32>, vector<34x32xf32>, vector<34x32xf32> -> vector<34x32xf32>
    %69 = vector.extract_strided_slice %53 {offsets = [0, 32], sizes = [34, 32], strides = [1, 1]} : vector<34x128xf32> to vector<34x32xf32>
    %cst_26 = arith.constant dense<0.000000e+00> : vector<34x34xf32>
    %70 = tpu.matmul %69, %52, %cst_26 {dimension_numbers = #tpu.dot_dimension_numbers<[1], [1], [0], [0], [0, 0, 1, 0], [], []>} : vector<34x32xf32>, vector<34x32xf32>, vector<34x34xf32> -> vector<34x34xf32>
    %71 = arith.addf %70, %6 : vector<34x34xf32>
    %cst_27 = arith.constant dense<0xFF800000> : vector<34xf32>
    %72 = vector.multi_reduction <maximumf>, %71, %cst_27 [1] : vector<34x34xf32> to vector<34xf32>
    %73 = vector.shape_cast %72 : vector<34xf32> to vector<34x1xf32>
    %74 = vector.broadcast %73 : vector<34x1xf32> to vector<34x34xf32>
    %75 = arith.subf %71, %74 : vector<34x34xf32>
    %76 = math.exp %75 : vector<34x34xf32>
    %cst_28 = arith.constant dense<0.000000e+00> : vector<34xf32>
    %77 = vector.multi_reduction <add>, %76, %cst_28 [1] : vector<34x34xf32> to vector<34xf32>
    %78 = vector.shape_cast %77 : vector<34xf32> to vector<34x1xf32>
    %79 = vector.broadcast %78 : vector<34x1xf32> to vector<34x34xf32>
    %80 = arith.divf %76, %79 : vector<34x34xf32>
    %81 = vector.extract_strided_slice %54 {offsets = [0, 32], sizes = [34, 32], strides = [1, 1]} : vector<34x128xf32> to vector<34x32xf32>
    %cst_29 = arith.constant dense<0.000000e+00> : vector<34x32xf32>
    %82 = tpu.matmul %80, %81, %cst_29 {dimension_numbers = #tpu.dot_dimension_numbers<[1], [0], [0], [1], [0, 0, 1, 1], [], []>} : vector<34x34xf32>, vector<34x32xf32>, vector<34x32xf32> -> vector<34x32xf32>
    %83 = arith.addf %68, %82 : vector<34x32xf32>
    %84 = vector.extract_strided_slice %53 {offsets = [0, 64], sizes = [34, 32], strides = [1, 1]} : vector<34x128xf32> to vector<34x32xf32>
    %cst_30 = arith.constant dense<0.000000e+00> : vector<34x34xf32>
    %85 = tpu.matmul %84, %52, %cst_30 {dimension_numbers = #tpu.dot_dimension_numbers<[1], [1], [0], [0], [0, 0, 1, 0], [], []>} : vector<34x32xf32>, vector<34x32xf32>, vector<34x34xf32> -> vector<34x34xf32>
    %86 = arith.addf %85, %6 : vector<34x34xf32>
    %cst_31 = arith.constant dense<0xFF800000> : vector<34xf32>
    %87 = vector.multi_reduction <maximumf>, %86, %cst_31 [1] : vector<34x34xf32> to vector<34xf32>
    %88 = vector.shape_cast %87 : vector<34xf32> to vector<34x1xf32>
    %89 = vector.broadcast %88 : vector<34x1xf32> to vector<34x34xf32>
    %90 = arith.subf %86, %89 : vector<34x34xf32>
    %91 = math.exp %90 : vector<34x34xf32>
    %cst_32 = arith.constant dense<0.000000e+00> : vector<34xf32>
    %92 = vector.multi_reduction <add>, %91, %cst_32 [1] : vector<34x34xf32> to vector<34xf32>
    %93 = vector.shape_cast %92 : vector<34xf32> to vector<34x1xf32>
    %94 = vector.broadcast %93 : vector<34x1xf32> to vector<34x34xf32>
    %95 = arith.divf %91, %94 : vector<34x34xf32>
    %96 = vector.extract_strided_slice %54 {offsets = [0, 64], sizes = [34, 32], strides = [1, 1]} : vector<34x128xf32> to vector<34x32xf32>
    %cst_33 = arith.constant dense<0.000000e+00> : vector<34x32xf32>
    %97 = tpu.matmul %95, %96, %cst_33 {dimension_numbers = #tpu.dot_dimension_numbers<[1], [0], [0], [1], [0, 0, 1, 1], [], []>} : vector<34x34xf32>, vector<34x32xf32>, vector<34x32xf32> -> vector<34x32xf32>
    %98 = arith.addf %83, %97 : vector<34x32xf32>
    %99 = vector.extract_strided_slice %53 {offsets = [0, 96], sizes = [34, 32], strides = [1, 1]} : vector<34x128xf32> to vector<34x32xf32>
    %cst_34 = arith.constant dense<0.000000e+00> : vector<34x34xf32>
    %100 = tpu.matmul %99, %52, %cst_34 {dimension_numbers = #tpu.dot_dimension_numbers<[1], [1], [0], [0], [0, 0, 1, 0], [], []>} : vector<34x32xf32>, vector<34x32xf32>, vector<34x34xf32> -> vector<34x34xf32>
    %101 = arith.addf %100, %6 : vector<34x34xf32>
    %cst_35 = arith.constant dense<0xFF800000> : vector<34xf32>
    %102 = vector.multi_reduction <maximumf>, %101, %cst_35 [1] : vector<34x34xf32> to vector<34xf32>
    %103 = vector.shape_cast %102 : vector<34xf32> to vector<34x1xf32>
    %104 = vector.broadcast %103 : vector<34x1xf32> to vector<34x34xf32>
    %105 = arith.subf %101, %104 : vector<34x34xf32>
    %106 = math.exp %105 : vector<34x34xf32>
    %cst_36 = arith.constant dense<0.000000e+00> : vector<34xf32>
    %107 = vector.multi_reduction <add>, %106, %cst_36 [1] : vector<34x34xf32> to vector<34xf32>
    %108 = vector.shape_cast %107 : vector<34xf32> to vector<34x1xf32>
    %109 = vector.broadcast %108 : vector<34x1xf32> to vector<34x34xf32>
    %110 = arith.divf %106, %109 : vector<34x34xf32>
    %111 = vector.extract_strided_slice %54 {offsets = [0, 96], sizes = [34, 32], strides = [1, 1]} : vector<34x128xf32> to vector<34x32xf32>
    %cst_37 = arith.constant dense<0.000000e+00> : vector<34x32xf32>
    %112 = tpu.matmul %110, %111, %cst_37 {dimension_numbers = #tpu.dot_dimension_numbers<[1], [0], [0], [1], [0, 0, 1, 1], [], []>} : vector<34x34xf32>, vector<34x32xf32>, vector<34x32xf32> -> vector<34x32xf32>
    %113 = arith.addf %98, %112 : vector<34x32xf32>
    %114 = arith.addf %32, %113 : vector<34x32xf32>
    %115 = arith.addf %114, %22 : vector<34x32xf32>
    %cst_38 = arith.constant dense<0.000000e+00> : vector<34xf32>
    %116 = vector.multi_reduction <add>, %115, %cst_38 [1] : vector<34x32xf32> to vector<34xf32>
    %117 = vector.shape_cast %116 : vector<34xf32> to vector<34x1xf32>
    %cst_39 = arith.constant 3.200000e+01 : f32
    %118 = vector.broadcast %cst_39 : f32 to vector<34x1xf32>
    %119 = arith.divf %117, %118 : vector<34x1xf32>
    %120 = vector.broadcast %119 : vector<34x1xf32> to vector<34x32xf32>
    %121 = arith.subf %115, %120 : vector<34x32xf32>
    %122 = arith.mulf %121, %121 : vector<34x32xf32>
    %cst_40 = arith.constant dense<0.000000e+00> : vector<34xf32>
    %123 = vector.multi_reduction <add>, %122, %cst_40 [1] : vector<34x32xf32> to vector<34xf32>
    %124 = vector.shape_cast %123 : vector<34xf32> to vector<34x1xf32>
    %cst_41 = arith.constant 3.200000e+01 : f32
    %125 = vector.broadcast %cst_41 : f32 to vector<34x1xf32>
    %126 = arith.divf %124, %125 : vector<34x1xf32>
    %127 = vector.broadcast %119 : vector<34x1xf32> to vector<34x32xf32>
    %128 = arith.subf %115, %127 : vector<34x32xf32>
    %cst_42 = arith.constant 9.99999974E-6 : f32
    %129 = vector.broadcast %cst_42 : f32 to vector<34x1xf32>
    %130 = arith.addf %126, %129 : vector<34x1xf32>
    %131 = math.rsqrt %130 : vector<34x1xf32>
    %132 = vector.broadcast %131 : vector<34x1xf32> to vector<34x32xf32>
    %133 = arith.mulf %128, %132 : vector<34x32xf32>
    %134 = arith.mulf %133, %16 : vector<34x32xf32>
    %135 = arith.addf %134, %19 : vector<34x32xf32>
    %cst_43 = arith.constant dense<0.000000e+00> : vector<34x64xf32>
    %136 = tpu.matmul %135, %1, %cst_43 {dimension_numbers = #tpu.dot_dimension_numbers<[1], [0], [0], [1], [0, 0, 1, 1], [], []>} : vector<34x32xf32>, vector<32x64xf32>, vector<34x64xf32> -> vector<34x64xf32>
    %137 = arith.addf %136, %28 : vector<34x64xf32>
    %cst_44 = arith.constant 5.000000e-01 : f32
    %138 = vector.broadcast %cst_44 : f32 to vector<34x64xf32>
    %139 = arith.mulf %138, %137 : vector<34x64xf32>
    %cst_45 = arith.constant 0.707106769 : f32
    %140 = vector.broadcast %cst_45 : f32 to vector<34x64xf32>
    %141 = arith.mulf %137, %140 : vector<34x64xf32>
    %cst_46 = arith.constant -4.000000e+00 : f32
    %cst_47 = arith.constant 4.000000e+00 : f32
    %142 = vector.broadcast %cst_46 : f32 to vector<34x64xf32>
    %143 = arith.maximumf %142, %141 : vector<34x64xf32>
    %144 = vector.broadcast %cst_47 : f32 to vector<34x64xf32>
    %145 = arith.minimumf %144, %143 : vector<34x64xf32>
    %146 = arith.mulf %145, %145 : vector<34x64xf32>
    %cst_48 = arith.constant -2.72614237E-10 : f32
    %147 = vector.broadcast %cst_48 : f32 to vector<34x64xf32>
    %148 = arith.mulf %147, %146 : vector<34x64xf32>
    %cst_49 = arith.constant 2.77068146E-8 : f32
    %149 = vector.broadcast %cst_49 : f32 to vector<34x64xf32>
    %150 = arith.addf %148, %149 : vector<34x64xf32>
    %151 = arith.mulf %150, %146 : vector<34x64xf32>
    %cst_50 = arith.constant -2.10102394E-6 : f32
    %152 = vector.broadcast %cst_50 : f32 to vector<34x64xf32>
    %153 = arith.addf %151, %152 : vector<34x64xf32>
    %154 = arith.mulf %153, %146 : vector<34x64xf32>
    %cst_51 = arith.constant -5.69250624E-5 : f32
    %155 = vector.broadcast %cst_51 : f32 to vector<34x64xf32>
    %156 = arith.addf %154, %155 : vector<34x64xf32>
    %157 = arith.mulf %156, %146 : vector<34x64xf32>
    %cst_52 = arith.constant -7.34990637E-4 : f32
    %158 = vector.broadcast %cst_52 : f32 to vector<34x64xf32>
    %159 = arith.addf %157, %158 : vector<34x64xf32>
    %160 = arith.mulf %159, %146 : vector<34x64xf32>
    %cst_53 = arith.constant -2.954600e-03 : f32
    %161 = vector.broadcast %cst_53 : f32 to vector<34x64xf32>
    %162 = arith.addf %160, %161 : vector<34x64xf32>
    %163 = arith.mulf %162, %146 : vector<34x64xf32>
    %cst_54 = arith.constant -0.0160960332 : f32
    %164 = vector.broadcast %cst_54 : f32 to vector<34x64xf32>
    %165 = arith.addf %163, %164 : vector<34x64xf32>
    %166 = arith.mulf %165, %145 : vector<34x64xf32>
    %cst_55 = arith.constant -1.45660715E-5 : f32
    %167 = vector.broadcast %cst_55 : f32 to vector<34x64xf32>
    %168 = arith.mulf %167, %146 : vector<34x64xf32>
    %cst_56 = arith.constant -2.13374049E-4 : f32
    %169 = vector.broadcast %cst_56 : f32 to vector<34x64xf32>
    %170 = arith.addf %168, %169 : vector<34x64xf32>
    %171 = arith.mulf %170, %146 : vector<34x64xf32>
    %cst_57 = arith.constant -0.00168282702 : f32
    %172 = vector.broadcast %cst_57 : f32 to vector<34x64xf32>
    %173 = arith.addf %171, %172 : vector<34x64xf32>
    %174 = arith.mulf %173, %146 : vector<34x64xf32>
    %cst_58 = arith.constant -0.00737332925 : f32
    %175 = vector.broadcast %cst_58 : f32 to vector<34x64xf32>
    %176 = arith.addf %174, %175 : vector<34x64xf32>
    %177 = arith.mulf %176, %146 : vector<34x64xf32>
    %cst_59 = arith.constant -0.0142647391 : f32
    %178 = vector.broadcast %cst_59 : f32 to vector<34x64xf32>
    %179 = arith.addf %177, %178 : vector<34x64xf32>
    %180 = arith.divf %166, %179 : vector<34x64xf32>
    %cst_60 = arith.constant 1.000000e+00 : f32
    %181 = vector.broadcast %cst_60 : f32 to vector<34x64xf32>
    %182 = arith.addf %181, %180 : vector<34x64xf32>
    %183 = arith.mulf %139, %182 : vector<34x64xf32>
    %cst_61 = arith.constant dense<0.000000e+00> : vector<34x32xf32>
    %184 = tpu.matmul %183, %2, %cst_61 {dimension_numbers = #tpu.dot_dimension_numbers<[1], [0], [0], [1], [0, 0, 1, 1], [], []>} : vector<34x64xf32>, vector<64x32xf32>, vector<34x32xf32> -> vector<34x32xf32>
    %185 = arith.addf %115, %184 : vector<34x32xf32>
    %186 = arith.addf %185, %25 : vector<34x32xf32>
    %cst_62 = arith.constant dense<0.000000e+00> : vector<34xf32>
    %187 = vector.multi_reduction <add>, %186, %cst_62 [1] : vector<34x32xf32> to vector<34xf32>
    %188 = vector.shape_cast %187 : vector<34xf32> to vector<34x1xf32>
    %cst_63 = arith.constant 3.200000e+01 : f32
    %189 = vector.broadcast %cst_63 : f32 to vector<34x1xf32>
    %190 = arith.divf %188, %189 : vector<34x1xf32>
    %191 = vector.broadcast %190 : vector<34x1xf32> to vector<34x32xf32>
    %192 = arith.subf %186, %191 : vector<34x32xf32>
    %193 = arith.mulf %192, %192 : vector<34x32xf32>
    %cst_64 = arith.constant dense<0.000000e+00> : vector<34xf32>
    %194 = vector.multi_reduction <add>, %193, %cst_64 [1] : vector<34x32xf32> to vector<34xf32>
    %195 = vector.shape_cast %194 : vector<34xf32> to vector<34x1xf32>
    %cst_65 = arith.constant 3.200000e+01 : f32
    %196 = vector.broadcast %cst_65 : f32 to vector<34x1xf32>
    %197 = arith.divf %195, %196 : vector<34x1xf32>
    %198 = vector.broadcast %190 : vector<34x1xf32> to vector<34x32xf32>
    %199 = arith.subf %186, %198 : vector<34x32xf32>
    %cst_66 = arith.constant 9.99999974E-6 : f32
    %200 = vector.broadcast %cst_66 : f32 to vector<34x1xf32>
    %201 = arith.addf %197, %200 : vector<34x1xf32>
    %202 = math.rsqrt %201 : vector<34x1xf32>
    %203 = vector.broadcast %202 : vector<34x1xf32> to vector<34x32xf32>
    %204 = arith.mulf %199, %203 : vector<34x32xf32>
    %205 = arith.mulf %204, %10 : vector<34x32xf32>
    %206 = arith.addf %205, %13 : vector<34x32xf32>
    %cst_67 = arith.constant dense<0.000000e+00> : vector<34x128xf32>
    %207 = tpu.matmul %206, %4, %cst_67 {dimension_numbers = #tpu.dot_dimension_numbers<[1], [0], [0], [1], [0, 0, 1, 1], [], []>} : vector<34x32xf32>, vector<32x128xf32>, vector<34x128xf32> -> vector<34x128xf32>
    %cst_68 = arith.constant dense<0.000000e+00> : vector<34x128xf32>
    %208 = tpu.matmul %206, %5, %cst_68 {dimension_numbers = #tpu.dot_dimension_numbers<[1], [0], [0], [1], [0, 0, 1, 1], [], []>} : vector<34x32xf32>, vector<32x128xf32>, vector<34x128xf32> -> vector<34x128xf32>
    %209 = vector.extract_strided_slice %207 {offsets = [0, 0], sizes = [34, 32], strides = [1, 1]} : vector<34x128xf32> to vector<34x32xf32>
    %cst_69 = arith.constant dense<0.000000e+00> : vector<34x34xf32>
    %210 = tpu.matmul %209, %206, %cst_69 {dimension_numbers = #tpu.dot_dimension_numbers<[1], [1], [0], [0], [0, 0, 1, 0], [], []>} : vector<34x32xf32>, vector<34x32xf32>, vector<34x34xf32> -> vector<34x34xf32>
    %211 = arith.addf %210, %6 : vector<34x34xf32>
    %cst_70 = arith.constant dense<0xFF800000> : vector<34xf32>
    %212 = vector.multi_reduction <maximumf>, %211, %cst_70 [1] : vector<34x34xf32> to vector<34xf32>
    %213 = vector.shape_cast %212 : vector<34xf32> to vector<34x1xf32>
    %214 = vector.broadcast %213 : vector<34x1xf32> to vector<34x34xf32>
    %215 = arith.subf %211, %214 : vector<34x34xf32>
    %216 = math.exp %215 : vector<34x34xf32>
    %cst_71 = arith.constant dense<0.000000e+00> : vector<34xf32>
    %217 = vector.multi_reduction <add>, %216, %cst_71 [1] : vector<34x34xf32> to vector<34xf32>
    %218 = vector.shape_cast %217 : vector<34xf32> to vector<34x1xf32>
    %219 = vector.broadcast %218 : vector<34x1xf32> to vector<34x34xf32>
    %220 = arith.divf %216, %219 : vector<34x34xf32>
    %221 = vector.extract_strided_slice %208 {offsets = [0, 0], sizes = [34, 32], strides = [1, 1]} : vector<34x128xf32> to vector<34x32xf32>
    %cst_72 = arith.constant dense<0.000000e+00> : vector<34x32xf32>
    %222 = tpu.matmul %220, %221, %cst_72 {dimension_numbers = #tpu.dot_dimension_numbers<[1], [0], [0], [1], [0, 0, 1, 1], [], []>} : vector<34x34xf32>, vector<34x32xf32>, vector<34x32xf32> -> vector<34x32xf32>
    %223 = vector.extract_strided_slice %207 {offsets = [0, 32], sizes = [34, 32], strides = [1, 1]} : vector<34x128xf32> to vector<34x32xf32>
    %cst_73 = arith.constant dense<0.000000e+00> : vector<34x34xf32>
    %224 = tpu.matmul %223, %206, %cst_73 {dimension_numbers = #tpu.dot_dimension_numbers<[1], [1], [0], [0], [0, 0, 1, 0], [], []>} : vector<34x32xf32>, vector<34x32xf32>, vector<34x34xf32> -> vector<34x34xf32>
    %225 = arith.addf %224, %6 : vector<34x34xf32>
    %cst_74 = arith.constant dense<0xFF800000> : vector<34xf32>
    %226 = vector.multi_reduction <maximumf>, %225, %cst_74 [1] : vector<34x34xf32> to vector<34xf32>
    %227 = vector.shape_cast %226 : vector<34xf32> to vector<34x1xf32>
    %228 = vector.broadcast %227 : vector<34x1xf32> to vector<34x34xf32>
    %229 = arith.subf %225, %228 : vector<34x34xf32>
    %230 = math.exp %229 : vector<34x34xf32>
    %cst_75 = arith.constant dense<0.000000e+00> : vector<34xf32>
    %231 = vector.multi_reduction <add>, %230, %cst_75 [1] : vector<34x34xf32> to vector<34xf32>
    %232 = vector.shape_cast %231 : vector<34xf32> to vector<34x1xf32>
    %233 = vector.broadcast %232 : vector<34x1xf32> to vector<34x34xf32>
    %234 = arith.divf %230, %233 : vector<34x34xf32>
    %235 = vector.extract_strided_slice %208 {offsets = [0, 32], sizes = [34, 32], strides = [1, 1]} : vector<34x128xf32> to vector<34x32xf32>
    %cst_76 = arith.constant dense<0.000000e+00> : vector<34x32xf32>
    %236 = tpu.matmul %234, %235, %cst_76 {dimension_numbers = #tpu.dot_dimension_numbers<[1], [0], [0], [1], [0, 0, 1, 1], [], []>} : vector<34x34xf32>, vector<34x32xf32>, vector<34x32xf32> -> vector<34x32xf32>
    %237 = arith.addf %222, %236 : vector<34x32xf32>
    %238 = vector.extract_strided_slice %207 {offsets = [0, 64], sizes = [34, 32], strides = [1, 1]} : vector<34x128xf32> to vector<34x32xf32>
    %cst_77 = arith.constant dense<0.000000e+00> : vector<34x34xf32>
    %239 = tpu.matmul %238, %206, %cst_77 {dimension_numbers = #tpu.dot_dimension_numbers<[1], [1], [0], [0], [0, 0, 1, 0], [], []>} : vector<34x32xf32>, vector<34x32xf32>, vector<34x34xf32> -> vector<34x34xf32>
    %240 = arith.addf %239, %6 : vector<34x34xf32>
    %cst_78 = arith.constant dense<0xFF800000> : vector<34xf32>
    %241 = vector.multi_reduction <maximumf>, %240, %cst_78 [1] : vector<34x34xf32> to vector<34xf32>
    %242 = vector.shape_cast %241 : vector<34xf32> to vector<34x1xf32>
    %243 = vector.broadcast %242 : vector<34x1xf32> to vector<34x34xf32>
    %244 = arith.subf %240, %243 : vector<34x34xf32>
    %245 = math.exp %244 : vector<34x34xf32>
    %cst_79 = arith.constant dense<0.000000e+00> : vector<34xf32>
    %246 = vector.multi_reduction <add>, %245, %cst_79 [1] : vector<34x34xf32> to vector<34xf32>
    %247 = vector.shape_cast %246 : vector<34xf32> to vector<34x1xf32>
    %248 = vector.broadcast %247 : vector<34x1xf32> to vector<34x34xf32>
    %249 = arith.divf %245, %248 : vector<34x34xf32>
    %250 = vector.extract_strided_slice %208 {offsets = [0, 64], sizes = [34, 32], strides = [1, 1]} : vector<34x128xf32> to vector<34x32xf32>
    %cst_80 = arith.constant dense<0.000000e+00> : vector<34x32xf32>
    %251 = tpu.matmul %249, %250, %cst_80 {dimension_numbers = #tpu.dot_dimension_numbers<[1], [0], [0], [1], [0, 0, 1, 1], [], []>} : vector<34x34xf32>, vector<34x32xf32>, vector<34x32xf32> -> vector<34x32xf32>
    %252 = arith.addf %237, %251 : vector<34x32xf32>
    %253 = vector.extract_strided_slice %207 {offsets = [0, 96], sizes = [34, 32], strides = [1, 1]} : vector<34x128xf32> to vector<34x32xf32>
    %cst_81 = arith.constant dense<0.000000e+00> : vector<34x34xf32>
    %254 = tpu.matmul %253, %206, %cst_81 {dimension_numbers = #tpu.dot_dimension_numbers<[1], [1], [0], [0], [0, 0, 1, 0], [], []>} : vector<34x32xf32>, vector<34x32xf32>, vector<34x34xf32> -> vector<34x34xf32>
    %255 = arith.addf %254, %6 : vector<34x34xf32>
    %cst_82 = arith.constant dense<0xFF800000> : vector<34xf32>
    %256 = vector.multi_reduction <maximumf>, %255, %cst_82 [1] : vector<34x34xf32> to vector<34xf32>
    %257 = vector.shape_cast %256 : vector<34xf32> to vector<34x1xf32>
    %258 = vector.broadcast %257 : vector<34x1xf32> to vector<34x34xf32>
    %259 = arith.subf %255, %258 : vector<34x34xf32>
    %260 = math.exp %259 : vector<34x34xf32>
    %cst_83 = arith.constant dense<0.000000e+00> : vector<34xf32>
    %261 = vector.multi_reduction <add>, %260, %cst_83 [1] : vector<34x34xf32> to vector<34xf32>
    %262 = vector.shape_cast %261 : vector<34xf32> to vector<34x1xf32>
    %263 = vector.broadcast %262 : vector<34x1xf32> to vector<34x34xf32>
    %264 = arith.divf %260, %263 : vector<34x34xf32>
    %265 = vector.extract_strided_slice %208 {offsets = [0, 96], sizes = [34, 32], strides = [1, 1]} : vector<34x128xf32> to vector<34x32xf32>
    %cst_84 = arith.constant dense<0.000000e+00> : vector<34x32xf32>
    %266 = tpu.matmul %264, %265, %cst_84 {dimension_numbers = #tpu.dot_dimension_numbers<[1], [0], [0], [1], [0, 0, 1, 1], [], []>} : vector<34x34xf32>, vector<34x32xf32>, vector<34x32xf32> -> vector<34x32xf32>
    %267 = arith.addf %252, %266 : vector<34x32xf32>
    %268 = arith.addf %186, %267 : vector<34x32xf32>
    %269 = arith.addf %268, %22 : vector<34x32xf32>
    %cst_85 = arith.constant dense<0.000000e+00> : vector<34xf32>
    %270 = vector.multi_reduction <add>, %269, %cst_85 [1] : vector<34x32xf32> to vector<34xf32>
    %271 = vector.shape_cast %270 : vector<34xf32> to vector<34x1xf32>
    %cst_86 = arith.constant 3.200000e+01 : f32
    %272 = vector.broadcast %cst_86 : f32 to vector<34x1xf32>
    %273 = arith.divf %271, %272 : vector<34x1xf32>
    %274 = vector.broadcast %273 : vector<34x1xf32> to vector<34x32xf32>
    %275 = arith.subf %269, %274 : vector<34x32xf32>
    %276 = arith.mulf %275, %275 : vector<34x32xf32>
    %cst_87 = arith.constant dense<0.000000e+00> : vector<34xf32>
    %277 = vector.multi_reduction <add>, %276, %cst_87 [1] : vector<34x32xf32> to vector<34xf32>
    %278 = vector.shape_cast %277 : vector<34xf32> to vector<34x1xf32>
    %cst_88 = arith.constant 3.200000e+01 : f32
    %279 = vector.broadcast %cst_88 : f32 to vector<34x1xf32>
    %280 = arith.divf %278, %279 : vector<34x1xf32>
    %281 = vector.broadcast %273 : vector<34x1xf32> to vector<34x32xf32>
    %282 = arith.subf %269, %281 : vector<34x32xf32>
    %cst_89 = arith.constant 9.99999974E-6 : f32
    %283 = vector.broadcast %cst_89 : f32 to vector<34x1xf32>
    %284 = arith.addf %280, %283 : vector<34x1xf32>
    %285 = math.rsqrt %284 : vector<34x1xf32>
    %286 = vector.broadcast %285 : vector<34x1xf32> to vector<34x32xf32>
    %287 = arith.mulf %282, %286 : vector<34x32xf32>
    %288 = arith.mulf %287, %16 : vector<34x32xf32>
    %289 = arith.addf %288, %19 : vector<34x32xf32>
    %cst_90 = arith.constant dense<0.000000e+00> : vector<34x64xf32>
    %290 = tpu.matmul %289, %1, %cst_90 {dimension_numbers = #tpu.dot_dimension_numbers<[1], [0], [0], [1], [0, 0, 1, 1], [], []>} : vector<34x32xf32>, vector<32x64xf32>, vector<34x64xf32> -> vector<34x64xf32>
    %291 = arith.addf %290, %28 : vector<34x64xf32>
    %cst_91 = arith.constant 5.000000e-01 : f32
    %292 = vector.broadcast %cst_91 : f32 to vector<34x64xf32>
    %293 = arith.mulf %292, %291 : vector<34x64xf32>
    %cst_92 = arith.constant 0.707106769 : f32
    %294 = vector.broadcast %cst_92 : f32 to vector<34x64xf32>
    %295 = arith.mulf %291, %294 : vector<34x64xf32>
    %cst_93 = arith.constant -4.000000e+00 : f32
    %cst_94 = arith.constant 4.000000e+00 : f32
    %296 = vector.broadcast %cst_93 : f32 to vector<34x64xf32>
    %297 = arith.maximumf %296, %295 : vector<34x64xf32>
    %298 = vector.broadcast %cst_94 : f32 to vector<34x64xf32>
    %299 = arith.minimumf %298, %297 : vector<34x64xf32>
    %300 = arith.mulf %299, %299 : vector<34x64xf32>
    %cst_95 = arith.constant -2.72614237E-10 : f32
    %301 = vector.broadcast %cst_95 : f32 to vector<34x64xf32>
    %302 = arith.mulf %301, %300 : vector<34x64xf32>
    %cst_96 = arith.constant 2.77068146E-8 : f32
    %303 = vector.broadcast %cst_96 : f32 to vector<34x64xf32>
    %304 = arith.addf %302, %303 : vector<34x64xf32>
    %305 = arith.mulf %304, %300 : vector<34x64xf32>
    %cst_97 = arith.constant -2.10102394E-6 : f32
    %306 = vector.broadcast %cst_97 : f32 to vector<34x64xf32>
    %307 = arith.addf %305, %306 : vector<34x64xf32>
    %308 = arith.mulf %307, %300 : vector<34x64xf32>
    %cst_98 = arith.constant -5.69250624E-5 : f32
    %309 = vector.broadcast %cst_98 : f32 to vector<34x64xf32>
    %310 = arith.addf %308, %309 : vector<34x64xf32>
    %311 = arith.mulf %310, %300 : vector<34x64xf32>
    %cst_99 = arith.constant -7.34990637E-4 : f32
    %312 = vector.broadcast %cst_99 : f32 to vector<34x64xf32>
    %313 = arith.addf %311, %312 : vector<34x64xf32>
    %314 = arith.mulf %313, %300 : vector<34x64xf32>
    %cst_100 = arith.constant -2.954600e-03 : f32
    %315 = vector.broadcast %cst_100 : f32 to vector<34x64xf32>
    %316 = arith.addf %314, %315 : vector<34x64xf32>
    %317 = arith.mulf %316, %300 : vector<34x64xf32>
    %cst_101 = arith.constant -0.0160960332 : f32
    %318 = vector.broadcast %cst_101 : f32 to vector<34x64xf32>
    %319 = arith.addf %317, %318 : vector<34x64xf32>
    %320 = arith.mulf %319, %299 : vector<34x64xf32>
    %cst_102 = arith.constant -1.45660715E-5 : f32
    %321 = vector.broadcast %cst_102 : f32 to vector<34x64xf32>
    %322 = arith.mulf %321, %300 : vector<34x64xf32>
    %cst_103 = arith.constant -2.13374049E-4 : f32
    %323 = vector.broadcast %cst_103 : f32 to vector<34x64xf32>
    %324 = arith.addf %322, %323 : vector<34x64xf32>
    %325 = arith.mulf %324, %300 : vector<34x64xf32>
    %cst_104 = arith.constant -0.00168282702 : f32
    %326 = vector.broadcast %cst_104 : f32 to vector<34x64xf32>
    %327 = arith.addf %325, %326 : vector<34x64xf32>
    %328 = arith.mulf %327, %300 : vector<34x64xf32>
    %cst_105 = arith.constant -0.00737332925 : f32
    %329 = vector.broadcast %cst_105 : f32 to vector<34x64xf32>
    %330 = arith.addf %328, %329 : vector<34x64xf32>
    %331 = arith.mulf %330, %300 : vector<34x64xf32>
    %cst_106 = arith.constant -0.0142647391 : f32
    %332 = vector.broadcast %cst_106 : f32 to vector<34x64xf32>
    %333 = arith.addf %331, %332 : vector<34x64xf32>
    %334 = arith.divf %320, %333 : vector<34x64xf32>
    %cst_107 = arith.constant 1.000000e+00 : f32
    %335 = vector.broadcast %cst_107 : f32 to vector<34x64xf32>
    %336 = arith.addf %335, %334 : vector<34x64xf32>
    %337 = arith.mulf %293, %336 : vector<34x64xf32>
    %cst_108 = arith.constant dense<0.000000e+00> : vector<34x32xf32>
    %338 = tpu.matmul %337, %2, %cst_108 {dimension_numbers = #tpu.dot_dimension_numbers<[1], [0], [0], [1], [0, 0, 1, 1], [], []>} : vector<34x64xf32>, vector<64x32xf32>, vector<34x32xf32> -> vector<34x32xf32>
    %339 = arith.addf %269, %338 : vector<34x32xf32>
    %340 = arith.addf %339, %25 : vector<34x32xf32>
    %cst_109 = arith.constant dense<0.000000e+00> : vector<34xf32>
    %341 = vector.multi_reduction <add>, %340, %cst_109 [1] : vector<34x32xf32> to vector<34xf32>
    %342 = vector.shape_cast %341 : vector<34xf32> to vector<34x1xf32>
    %cst_110 = arith.constant 3.200000e+01 : f32
    %343 = vector.broadcast %cst_110 : f32 to vector<34x1xf32>
    %344 = arith.divf %342, %343 : vector<34x1xf32>
    %345 = vector.broadcast %344 : vector<34x1xf32> to vector<34x32xf32>
    %346 = arith.subf %340, %345 : vector<34x32xf32>
    %347 = arith.mulf %346, %346 : vector<34x32xf32>
    %cst_111 = arith.constant dense<0.000000e+00> : vector<34xf32>
    %348 = vector.multi_reduction <add>, %347, %cst_111 [1] : vector<34x32xf32> to vector<34xf32>
    %349 = vector.shape_cast %348 : vector<34xf32> to vector<34x1xf32>
    %cst_112 = arith.constant 3.200000e+01 : f32
    %350 = vector.broadcast %cst_112 : f32 to vector<34x1xf32>
    %351 = arith.divf %349, %350 : vector<34x1xf32>
    %352 = vector.broadcast %344 : vector<34x1xf32> to vector<34x32xf32>
    %353 = arith.subf %340, %352 : vector<34x32xf32>
    %cst_113 = arith.constant 9.99999974E-6 : f32
    %354 = vector.broadcast %cst_113 : f32 to vector<34x1xf32>
    %355 = arith.addf %351, %354 : vector<34x1xf32>
    %356 = math.rsqrt %355 : vector<34x1xf32>
    %357 = vector.broadcast %356 : vector<34x1xf32> to vector<34x32xf32>
    %358 = arith.mulf %353, %357 : vector<34x32xf32>
    %359 = arith.mulf %358, %10 : vector<34x32xf32>
    %360 = arith.addf %359, %13 : vector<34x32xf32>
    %cst_114 = arith.constant dense<0.000000e+00> : vector<34x128xf32>
    %361 = tpu.matmul %360, %4, %cst_114 {dimension_numbers = #tpu.dot_dimension_numbers<[1], [0], [0], [1], [0, 0, 1, 1], [], []>} : vector<34x32xf32>, vector<32x128xf32>, vector<34x128xf32> -> vector<34x128xf32>
    %cst_115 = arith.constant dense<0.000000e+00> : vector<34x128xf32>
    %362 = tpu.matmul %360, %5, %cst_115 {dimension_numbers = #tpu.dot_dimension_numbers<[1], [0], [0], [1], [0, 0, 1, 1], [], []>} : vector<34x32xf32>, vector<32x128xf32>, vector<34x128xf32> -> vector<34x128xf32>
    %363 = vector.extract_strided_slice %361 {offsets = [0, 0], sizes = [34, 32], strides = [1, 1]} : vector<34x128xf32> to vector<34x32xf32>
    %cst_116 = arith.constant dense<0.000000e+00> : vector<34x34xf32>
    %364 = tpu.matmul %363, %360, %cst_116 {dimension_numbers = #tpu.dot_dimension_numbers<[1], [1], [0], [0], [0, 0, 1, 0], [], []>} : vector<34x32xf32>, vector<34x32xf32>, vector<34x34xf32> -> vector<34x34xf32>
    %365 = arith.addf %364, %6 : vector<34x34xf32>
    %cst_117 = arith.constant dense<0xFF800000> : vector<34xf32>
    %366 = vector.multi_reduction <maximumf>, %365, %cst_117 [1] : vector<34x34xf32> to vector<34xf32>
    %367 = vector.shape_cast %366 : vector<34xf32> to vector<34x1xf32>
    %368 = vector.broadcast %367 : vector<34x1xf32> to vector<34x34xf32>
    %369 = arith.subf %365, %368 : vector<34x34xf32>
    %370 = math.exp %369 : vector<34x34xf32>
    %cst_118 = arith.constant dense<0.000000e+00> : vector<34xf32>
    %371 = vector.multi_reduction <add>, %370, %cst_118 [1] : vector<34x34xf32> to vector<34xf32>
    %372 = vector.shape_cast %371 : vector<34xf32> to vector<34x1xf32>
    %373 = vector.broadcast %372 : vector<34x1xf32> to vector<34x34xf32>
    %374 = arith.divf %370, %373 : vector<34x34xf32>
    %375 = vector.extract_strided_slice %362 {offsets = [0, 0], sizes = [34, 32], strides = [1, 1]} : vector<34x128xf32> to vector<34x32xf32>
    %cst_119 = arith.constant dense<0.000000e+00> : vector<34x32xf32>
    %376 = tpu.matmul %374, %375, %cst_119 {dimension_numbers = #tpu.dot_dimension_numbers<[1], [0], [0], [1], [0, 0, 1, 1], [], []>} : vector<34x34xf32>, vector<34x32xf32>, vector<34x32xf32> -> vector<34x32xf32>
    %377 = vector.extract_strided_slice %361 {offsets = [0, 32], sizes = [34, 32], strides = [1, 1]} : vector<34x128xf32> to vector<34x32xf32>
    %cst_120 = arith.constant dense<0.000000e+00> : vector<34x34xf32>
    %378 = tpu.matmul %377, %360, %cst_120 {dimension_numbers = #tpu.dot_dimension_numbers<[1], [1], [0], [0], [0, 0, 1, 0], [], []>} : vector<34x32xf32>, vector<34x32xf32>, vector<34x34xf32> -> vector<34x34xf32>
    %379 = arith.addf %378, %6 : vector<34x34xf32>
    %cst_121 = arith.constant dense<0xFF800000> : vector<34xf32>
    %380 = vector.multi_reduction <maximumf>, %379, %cst_121 [1] : vector<34x34xf32> to vector<34xf32>
    %381 = vector.shape_cast %380 : vector<34xf32> to vector<34x1xf32>
    %382 = vector.broadcast %381 : vector<34x1xf32> to vector<34x34xf32>
    %383 = arith.subf %379, %382 : vector<34x34xf32>
    %384 = math.exp %383 : vector<34x34xf32>
    %cst_122 = arith.constant dense<0.000000e+00> : vector<34xf32>
    %385 = vector.multi_reduction <add>, %384, %cst_122 [1] : vector<34x34xf32> to vector<34xf32>
    %386 = vector.shape_cast %385 : vector<34xf32> to vector<34x1xf32>
    %387 = vector.broadcast %386 : vector<34x1xf32> to vector<34x34xf32>
    %388 = arith.divf %384, %387 : vector<34x34xf32>
    %389 = vector.extract_strided_slice %362 {offsets = [0, 32], sizes = [34, 32], strides = [1, 1]} : vector<34x128xf32> to vector<34x32xf32>
    %cst_123 = arith.constant dense<0.000000e+00> : vector<34x32xf32>
    %390 = tpu.matmul %388, %389, %cst_123 {dimension_numbers = #tpu.dot_dimension_numbers<[1], [0], [0], [1], [0, 0, 1, 1], [], []>} : vector<34x34xf32>, vector<34x32xf32>, vector<34x32xf32> -> vector<34x32xf32>
    %391 = arith.addf %376, %390 : vector<34x32xf32>
    %392 = vector.extract_strided_slice %361 {offsets = [0, 64], sizes = [34, 32], strides = [1, 1]} : vector<34x128xf32> to vector<34x32xf32>
    %cst_124 = arith.constant dense<0.000000e+00> : vector<34x34xf32>
    %393 = tpu.matmul %392, %360, %cst_124 {dimension_numbers = #tpu.dot_dimension_numbers<[1], [1], [0], [0], [0, 0, 1, 0], [], []>} : vector<34x32xf32>, vector<34x32xf32>, vector<34x34xf32> -> vector<34x34xf32>
    %394 = arith.addf %393, %6 : vector<34x34xf32>
    %cst_125 = arith.constant dense<0xFF800000> : vector<34xf32>
    %395 = vector.multi_reduction <maximumf>, %394, %cst_125 [1] : vector<34x34xf32> to vector<34xf32>
    %396 = vector.shape_cast %395 : vector<34xf32> to vector<34x1xf32>
    %397 = vector.broadcast %396 : vector<34x1xf32> to vector<34x34xf32>
    %398 = arith.subf %394, %397 : vector<34x34xf32>
    %399 = math.exp %398 : vector<34x34xf32>
    %cst_126 = arith.constant dense<0.000000e+00> : vector<34xf32>
    %400 = vector.multi_reduction <add>, %399, %cst_126 [1] : vector<34x34xf32> to vector<34xf32>
    %401 = vector.shape_cast %400 : vector<34xf32> to vector<34x1xf32>
    %402 = vector.broadcast %401 : vector<34x1xf32> to vector<34x34xf32>
    %403 = arith.divf %399, %402 : vector<34x34xf32>
    %404 = vector.extract_strided_slice %362 {offsets = [0, 64], sizes = [34, 32], strides = [1, 1]} : vector<34x128xf32> to vector<34x32xf32>
    %cst_127 = arith.constant dense<0.000000e+00> : vector<34x32xf32>
    %405 = tpu.matmul %403, %404, %cst_127 {dimension_numbers = #tpu.dot_dimension_numbers<[1], [0], [0], [1], [0, 0, 1, 1], [], []>} : vector<34x34xf32>, vector<34x32xf32>, vector<34x32xf32> -> vector<34x32xf32>
    %406 = arith.addf %391, %405 : vector<34x32xf32>
    %407 = vector.extract_strided_slice %361 {offsets = [0, 96], sizes = [34, 32], strides = [1, 1]} : vector<34x128xf32> to vector<34x32xf32>
    %cst_128 = arith.constant dense<0.000000e+00> : vector<34x34xf32>
    %408 = tpu.matmul %407, %360, %cst_128 {dimension_numbers = #tpu.dot_dimension_numbers<[1], [1], [0], [0], [0, 0, 1, 0], [], []>} : vector<34x32xf32>, vector<34x32xf32>, vector<34x34xf32> -> vector<34x34xf32>
    %409 = arith.addf %408, %6 : vector<34x34xf32>
    %cst_129 = arith.constant dense<0xFF800000> : vector<34xf32>
    %410 = vector.multi_reduction <maximumf>, %409, %cst_129 [1] : vector<34x34xf32> to vector<34xf32>
    %411 = vector.shape_cast %410 : vector<34xf32> to vector<34x1xf32>
    %412 = vector.broadcast %411 : vector<34x1xf32> to vector<34x34xf32>
    %413 = arith.subf %409, %412 : vector<34x34xf32>
    %414 = math.exp %413 : vector<34x34xf32>
    %cst_130 = arith.constant dense<0.000000e+00> : vector<34xf32>
    %415 = vector.multi_reduction <add>, %414, %cst_130 [1] : vector<34x34xf32> to vector<34xf32>
    %416 = vector.shape_cast %415 : vector<34xf32> to vector<34x1xf32>
    %417 = vector.broadcast %416 : vector<34x1xf32> to vector<34x34xf32>
    %418 = arith.divf %414, %417 : vector<34x34xf32>
    %419 = vector.extract_strided_slice %362 {offsets = [0, 96], sizes = [34, 32], strides = [1, 1]} : vector<34x128xf32> to vector<34x32xf32>
    %cst_131 = arith.constant dense<0.000000e+00> : vector<34x32xf32>
    %420 = tpu.matmul %418, %419, %cst_131 {dimension_numbers = #tpu.dot_dimension_numbers<[1], [0], [0], [1], [0, 0, 1, 1], [], []>} : vector<34x34xf32>, vector<34x32xf32>, vector<34x32xf32> -> vector<34x32xf32>
    %421 = arith.addf %406, %420 : vector<34x32xf32>
    %422 = arith.addf %340, %421 : vector<34x32xf32>
    %423 = arith.addf %422, %22 : vector<34x32xf32>
    %cst_132 = arith.constant dense<0.000000e+00> : vector<34xf32>
    %424 = vector.multi_reduction <add>, %423, %cst_132 [1] : vector<34x32xf32> to vector<34xf32>
    %425 = vector.shape_cast %424 : vector<34xf32> to vector<34x1xf32>
    %cst_133 = arith.constant 3.200000e+01 : f32
    %426 = vector.broadcast %cst_133 : f32 to vector<34x1xf32>
    %427 = arith.divf %425, %426 : vector<34x1xf32>
    %428 = vector.broadcast %427 : vector<34x1xf32> to vector<34x32xf32>
    %429 = arith.subf %423, %428 : vector<34x32xf32>
    %430 = arith.mulf %429, %429 : vector<34x32xf32>
    %cst_134 = arith.constant dense<0.000000e+00> : vector<34xf32>
    %431 = vector.multi_reduction <add>, %430, %cst_134 [1] : vector<34x32xf32> to vector<34xf32>
    %432 = vector.shape_cast %431 : vector<34xf32> to vector<34x1xf32>
    %cst_135 = arith.constant 3.200000e+01 : f32
    %433 = vector.broadcast %cst_135 : f32 to vector<34x1xf32>
    %434 = arith.divf %432, %433 : vector<34x1xf32>
    %435 = vector.broadcast %427 : vector<34x1xf32> to vector<34x32xf32>
    %436 = arith.subf %423, %435 : vector<34x32xf32>
    %cst_136 = arith.constant 9.99999974E-6 : f32
    %437 = vector.broadcast %cst_136 : f32 to vector<34x1xf32>
    %438 = arith.addf %434, %437 : vector<34x1xf32>
    %439 = math.rsqrt %438 : vector<34x1xf32>
    %440 = vector.broadcast %439 : vector<34x1xf32> to vector<34x32xf32>
    %441 = arith.mulf %436, %440 : vector<34x32xf32>
    %442 = arith.mulf %441, %16 : vector<34x32xf32>
    %443 = arith.addf %442, %19 : vector<34x32xf32>
    %cst_137 = arith.constant dense<0.000000e+00> : vector<34x64xf32>
    %444 = tpu.matmul %443, %1, %cst_137 {dimension_numbers = #tpu.dot_dimension_numbers<[1], [0], [0], [1], [0, 0, 1, 1], [], []>} : vector<34x32xf32>, vector<32x64xf32>, vector<34x64xf32> -> vector<34x64xf32>
    %445 = arith.addf %444, %28 : vector<34x64xf32>
    %cst_138 = arith.constant 5.000000e-01 : f32
    %446 = vector.broadcast %cst_138 : f32 to vector<34x64xf32>
    %447 = arith.mulf %446, %445 : vector<34x64xf32>
    %cst_139 = arith.constant 0.707106769 : f32
    %448 = vector.broadcast %cst_139 : f32 to vector<34x64xf32>
    %449 = arith.mulf %445, %448 : vector<34x64xf32>
    %cst_140 = arith.constant -4.000000e+00 : f32
    %cst_141 = arith.constant 4.000000e+00 : f32
    %450 = vector.broadcast %cst_140 : f32 to vector<34x64xf32>
    %451 = arith.maximumf %450, %449 : vector<34x64xf32>
    %452 = vector.broadcast %cst_141 : f32 to vector<34x64xf32>
    %453 = arith.minimumf %452, %451 : vector<34x64xf32>
    %454 = arith.mulf %453, %453 : vector<34x64xf32>
    %cst_142 = arith.constant -2.72614237E-10 : f32
    %455 = vector.broadcast %cst_142 : f32 to vector<34x64xf32>
    %456 = arith.mulf %455, %454 : vector<34x64xf32>
    %cst_143 = arith.constant 2.77068146E-8 : f32
    %457 = vector.broadcast %cst_143 : f32 to vector<34x64xf32>
    %458 = arith.addf %456, %457 : vector<34x64xf32>
    %459 = arith.mulf %458, %454 : vector<34x64xf32>
    %cst_144 = arith.constant -2.10102394E-6 : f32
    %460 = vector.broadcast %cst_144 : f32 to vector<34x64xf32>
    %461 = arith.addf %459, %460 : vector<34x64xf32>
    %462 = arith.mulf %461, %454 : vector<34x64xf32>
    %cst_145 = arith.constant -5.69250624E-5 : f32
    %463 = vector.broadcast %cst_145 : f32 to vector<34x64xf32>
    %464 = arith.addf %462, %463 : vector<34x64xf32>
    %465 = arith.mulf %464, %454 : vector<34x64xf32>
    %cst_146 = arith.constant -7.34990637E-4 : f32
    %466 = vector.broadcast %cst_146 : f32 to vector<34x64xf32>
    %467 = arith.addf %465, %466 : vector<34x64xf32>
    %468 = arith.mulf %467, %454 : vector<34x64xf32>
    %cst_147 = arith.constant -2.954600e-03 : f32
    %469 = vector.broadcast %cst_147 : f32 to vector<34x64xf32>
    %470 = arith.addf %468, %469 : vector<34x64xf32>
    %471 = arith.mulf %470, %454 : vector<34x64xf32>
    %cst_148 = arith.constant -0.0160960332 : f32
    %472 = vector.broadcast %cst_148 : f32 to vector<34x64xf32>
    %473 = arith.addf %471, %472 : vector<34x64xf32>
    %474 = arith.mulf %473, %453 : vector<34x64xf32>
    %cst_149 = arith.constant -1.45660715E-5 : f32
    %475 = vector.broadcast %cst_149 : f32 to vector<34x64xf32>
    %476 = arith.mulf %475, %454 : vector<34x64xf32>
    %cst_150 = arith.constant -2.13374049E-4 : f32
    %477 = vector.broadcast %cst_150 : f32 to vector<34x64xf32>
    %478 = arith.addf %476, %477 : vector<34x64xf32>
    %479 = arith.mulf %478, %454 : vector<34x64xf32>
    %cst_151 = arith.constant -0.00168282702 : f32
    %480 = vector.broadcast %cst_151 : f32 to vector<34x64xf32>
    %481 = arith.addf %479, %480 : vector<34x64xf32>
    %482 = arith.mulf %481, %454 : vector<34x64xf32>
    %cst_152 = arith.constant -0.00737332925 : f32
    %483 = vector.broadcast %cst_152 : f32 to vector<34x64xf32>
    %484 = arith.addf %482, %483 : vector<34x64xf32>
    %485 = arith.mulf %484, %454 : vector<34x64xf32>
    %cst_153 = arith.constant -0.0142647391 : f32
    %486 = vector.broadcast %cst_153 : f32 to vector<34x64xf32>
    %487 = arith.addf %485, %486 : vector<34x64xf32>
    %488 = arith.divf %474, %487 : vector<34x64xf32>
    %cst_154 = arith.constant 1.000000e+00 : f32
    %489 = vector.broadcast %cst_154 : f32 to vector<34x64xf32>
    %490 = arith.addf %489, %488 : vector<34x64xf32>
    %491 = arith.mulf %447, %490 : vector<34x64xf32>
    %cst_155 = arith.constant dense<0.000000e+00> : vector<34x32xf32>
    %492 = tpu.matmul %491, %2, %cst_155 {dimension_numbers = #tpu.dot_dimension_numbers<[1], [0], [0], [1], [0, 0, 1, 1], [], []>} : vector<34x64xf32>, vector<64x32xf32>, vector<34x32xf32> -> vector<34x32xf32>
    %493 = arith.addf %423, %492 : vector<34x32xf32>
    %494 = arith.addf %493, %25 : vector<34x32xf32>
    %cst_156 = arith.constant dense<0.000000e+00> : vector<34xf32>
    %495 = vector.multi_reduction <add>, %494, %cst_156 [1] : vector<34x32xf32> to vector<34xf32>
    %496 = vector.shape_cast %495 : vector<34xf32> to vector<34x1xf32>
    %cst_157 = arith.constant 3.200000e+01 : f32
    %497 = vector.broadcast %cst_157 : f32 to vector<34x1xf32>
    %498 = arith.divf %496, %497 : vector<34x1xf32>
    %499 = vector.broadcast %498 : vector<34x1xf32> to vector<34x32xf32>
    %500 = arith.subf %494, %499 : vector<34x32xf32>
    %501 = arith.mulf %500, %500 : vector<34x32xf32>
    %cst_158 = arith.constant dense<0.000000e+00> : vector<34xf32>
    %502 = vector.multi_reduction <add>, %501, %cst_158 [1] : vector<34x32xf32> to vector<34xf32>
    %503 = vector.shape_cast %502 : vector<34xf32> to vector<34x1xf32>
    %cst_159 = arith.constant 3.200000e+01 : f32
    %504 = vector.broadcast %cst_159 : f32 to vector<34x1xf32>
    %505 = arith.divf %503, %504 : vector<34x1xf32>
    %506 = vector.broadcast %498 : vector<34x1xf32> to vector<34x32xf32>
    %507 = arith.subf %494, %506 : vector<34x32xf32>
    %cst_160 = arith.constant 9.99999974E-6 : f32
    %508 = vector.broadcast %cst_160 : f32 to vector<34x1xf32>
    %509 = arith.addf %505, %508 : vector<34x1xf32>
    %510 = math.rsqrt %509 : vector<34x1xf32>
    %511 = vector.broadcast %510 : vector<34x1xf32> to vector<34x32xf32>
    %512 = arith.mulf %507, %511 : vector<34x32xf32>
    %513 = arith.mulf %512, %10 : vector<34x32xf32>
    %514 = arith.addf %513, %13 : vector<34x32xf32>
    %cst_161 = arith.constant dense<0.000000e+00> : vector<34x128xf32>
    %515 = tpu.matmul %514, %4, %cst_161 {dimension_numbers = #tpu.dot_dimension_numbers<[1], [0], [0], [1], [0, 0, 1, 1], [], []>} : vector<34x32xf32>, vector<32x128xf32>, vector<34x128xf32> -> vector<34x128xf32>
    %cst_162 = arith.constant dense<0.000000e+00> : vector<34x128xf32>
    %516 = tpu.matmul %514, %5, %cst_162 {dimension_numbers = #tpu.dot_dimension_numbers<[1], [0], [0], [1], [0, 0, 1, 1], [], []>} : vector<34x32xf32>, vector<32x128xf32>, vector<34x128xf32> -> vector<34x128xf32>
    %517 = vector.extract_strided_slice %515 {offsets = [0, 0], sizes = [34, 32], strides = [1, 1]} : vector<34x128xf32> to vector<34x32xf32>
    %cst_163 = arith.constant dense<0.000000e+00> : vector<34x34xf32>
    %518 = tpu.matmul %517, %514, %cst_163 {dimension_numbers = #tpu.dot_dimension_numbers<[1], [1], [0], [0], [0, 0, 1, 0], [], []>} : vector<34x32xf32>, vector<34x32xf32>, vector<34x34xf32> -> vector<34x34xf32>
    %519 = arith.addf %518, %6 : vector<34x34xf32>
    %cst_164 = arith.constant dense<0xFF800000> : vector<34xf32>
    %520 = vector.multi_reduction <maximumf>, %519, %cst_164 [1] : vector<34x34xf32> to vector<34xf32>
    %521 = vector.shape_cast %520 : vector<34xf32> to vector<34x1xf32>
    %522 = vector.broadcast %521 : vector<34x1xf32> to vector<34x34xf32>
    %523 = arith.subf %519, %522 : vector<34x34xf32>
    %524 = math.exp %523 : vector<34x34xf32>
    %cst_165 = arith.constant dense<0.000000e+00> : vector<34xf32>
    %525 = vector.multi_reduction <add>, %524, %cst_165 [1] : vector<34x34xf32> to vector<34xf32>
    %526 = vector.shape_cast %525 : vector<34xf32> to vector<34x1xf32>
    %527 = vector.broadcast %526 : vector<34x1xf32> to vector<34x34xf32>
    %528 = arith.divf %524, %527 : vector<34x34xf32>
    %529 = vector.extract_strided_slice %516 {offsets = [0, 0], sizes = [34, 32], strides = [1, 1]} : vector<34x128xf32> to vector<34x32xf32>
    %cst_166 = arith.constant dense<0.000000e+00> : vector<34x32xf32>
    %530 = tpu.matmul %528, %529, %cst_166 {dimension_numbers = #tpu.dot_dimension_numbers<[1], [0], [0], [1], [0, 0, 1, 1], [], []>} : vector<34x34xf32>, vector<34x32xf32>, vector<34x32xf32> -> vector<34x32xf32>
    %531 = vector.extract_strided_slice %515 {offsets = [0, 32], sizes = [34, 32], strides = [1, 1]} : vector<34x128xf32> to vector<34x32xf32>
    %cst_167 = arith.constant dense<0.000000e+00> : vector<34x34xf32>
    %532 = tpu.matmul %531, %514, %cst_167 {dimension_numbers = #tpu.dot_dimension_numbers<[1], [1], [0], [0], [0, 0, 1, 0], [], []>} : vector<34x32xf32>, vector<34x32xf32>, vector<34x34xf32> -> vector<34x34xf32>
    %533 = arith.addf %532, %6 : vector<34x34xf32>
    %cst_168 = arith.constant dense<0xFF800000> : vector<34xf32>
    %534 = vector.multi_reduction <maximumf>, %533, %cst_168 [1] : vector<34x34xf32> to vector<34xf32>
    %535 = vector.shape_cast %534 : vector<34xf32> to vector<34x1xf32>
    %536 = vector.broadcast %535 : vector<34x1xf32> to vector<34x34xf32>
    %537 = arith.subf %533, %536 : vector<34x34xf32>
    %538 = math.exp %537 : vector<34x34xf32>
    %cst_169 = arith.constant dense<0.000000e+00> : vector<34xf32>
    %539 = vector.multi_reduction <add>, %538, %cst_169 [1] : vector<34x34xf32> to vector<34xf32>
    %540 = vector.shape_cast %539 : vector<34xf32> to vector<34x1xf32>
    %541 = vector.broadcast %540 : vector<34x1xf32> to vector<34x34xf32>
    %542 = arith.divf %538, %541 : vector<34x34xf32>
    %543 = vector.extract_strided_slice %516 {offsets = [0, 32], sizes = [34, 32], strides = [1, 1]} : vector<34x128xf32> to vector<34x32xf32>
    %cst_170 = arith.constant dense<0.000000e+00> : vector<34x32xf32>
    %544 = tpu.matmul %542, %543, %cst_170 {dimension_numbers = #tpu.dot_dimension_numbers<[1], [0], [0], [1], [0, 0, 1, 1], [], []>} : vector<34x34xf32>, vector<34x32xf32>, vector<34x32xf32> -> vector<34x32xf32>
    %545 = arith.addf %530, %544 : vector<34x32xf32>
    %546 = vector.extract_strided_slice %515 {offsets = [0, 64], sizes = [34, 32], strides = [1, 1]} : vector<34x128xf32> to vector<34x32xf32>
    %cst_171 = arith.constant dense<0.000000e+00> : vector<34x34xf32>
    %547 = tpu.matmul %546, %514, %cst_171 {dimension_numbers = #tpu.dot_dimension_numbers<[1], [1], [0], [0], [0, 0, 1, 0], [], []>} : vector<34x32xf32>, vector<34x32xf32>, vector<34x34xf32> -> vector<34x34xf32>
    %548 = arith.addf %547, %6 : vector<34x34xf32>
    %cst_172 = arith.constant dense<0xFF800000> : vector<34xf32>
    %549 = vector.multi_reduction <maximumf>, %548, %cst_172 [1] : vector<34x34xf32> to vector<34xf32>
    %550 = vector.shape_cast %549 : vector<34xf32> to vector<34x1xf32>
    %551 = vector.broadcast %550 : vector<34x1xf32> to vector<34x34xf32>
    %552 = arith.subf %548, %551 : vector<34x34xf32>
    %553 = math.exp %552 : vector<34x34xf32>
    %cst_173 = arith.constant dense<0.000000e+00> : vector<34xf32>
    %554 = vector.multi_reduction <add>, %553, %cst_173 [1] : vector<34x34xf32> to vector<34xf32>
    %555 = vector.shape_cast %554 : vector<34xf32> to vector<34x1xf32>
    %556 = vector.broadcast %555 : vector<34x1xf32> to vector<34x34xf32>
    %557 = arith.divf %553, %556 : vector<34x34xf32>
    %558 = vector.extract_strided_slice %516 {offsets = [0, 64], sizes = [34, 32], strides = [1, 1]} : vector<34x128xf32> to vector<34x32xf32>
    %cst_174 = arith.constant dense<0.000000e+00> : vector<34x32xf32>
    %559 = tpu.matmul %557, %558, %cst_174 {dimension_numbers = #tpu.dot_dimension_numbers<[1], [0], [0], [1], [0, 0, 1, 1], [], []>} : vector<34x34xf32>, vector<34x32xf32>, vector<34x32xf32> -> vector<34x32xf32>
    %560 = arith.addf %545, %559 : vector<34x32xf32>
    %561 = vector.extract_strided_slice %515 {offsets = [0, 96], sizes = [34, 32], strides = [1, 1]} : vector<34x128xf32> to vector<34x32xf32>
    %cst_175 = arith.constant dense<0.000000e+00> : vector<34x34xf32>
    %562 = tpu.matmul %561, %514, %cst_175 {dimension_numbers = #tpu.dot_dimension_numbers<[1], [1], [0], [0], [0, 0, 1, 0], [], []>} : vector<34x32xf32>, vector<34x32xf32>, vector<34x34xf32> -> vector<34x34xf32>
    %563 = arith.addf %562, %6 : vector<34x34xf32>
    %cst_176 = arith.constant dense<0xFF800000> : vector<34xf32>
    %564 = vector.multi_reduction <maximumf>, %563, %cst_176 [1] : vector<34x34xf32> to vector<34xf32>
    %565 = vector.shape_cast %564 : vector<34xf32> to vector<34x1xf32>
    %566 = vector.broadcast %565 : vector<34x1xf32> to vector<34x34xf32>
    %567 = arith.subf %563, %566 : vector<34x34xf32>
    %568 = math.exp %567 : vector<34x34xf32>
    %cst_177 = arith.constant dense<0.000000e+00> : vector<34xf32>
    %569 = vector.multi_reduction <add>, %568, %cst_177 [1] : vector<34x34xf32> to vector<34xf32>
    %570 = vector.shape_cast %569 : vector<34xf32> to vector<34x1xf32>
    %571 = vector.broadcast %570 : vector<34x1xf32> to vector<34x34xf32>
    %572 = arith.divf %568, %571 : vector<34x34xf32>
    %573 = vector.extract_strided_slice %516 {offsets = [0, 96], sizes = [34, 32], strides = [1, 1]} : vector<34x128xf32> to vector<34x32xf32>
    %cst_178 = arith.constant dense<0.000000e+00> : vector<34x32xf32>
    %574 = tpu.matmul %572, %573, %cst_178 {dimension_numbers = #tpu.dot_dimension_numbers<[1], [0], [0], [1], [0, 0, 1, 1], [], []>} : vector<34x34xf32>, vector<34x32xf32>, vector<34x32xf32> -> vector<34x32xf32>
    %575 = arith.addf %560, %574 : vector<34x32xf32>
    %576 = arith.addf %494, %575 : vector<34x32xf32>
    %577 = arith.addf %576, %22 : vector<34x32xf32>
    %cst_179 = arith.constant dense<0.000000e+00> : vector<34xf32>
    %578 = vector.multi_reduction <add>, %577, %cst_179 [1] : vector<34x32xf32> to vector<34xf32>
    %579 = vector.shape_cast %578 : vector<34xf32> to vector<34x1xf32>
    %cst_180 = arith.constant 3.200000e+01 : f32
    %580 = vector.broadcast %cst_180 : f32 to vector<34x1xf32>
    %581 = arith.divf %579, %580 : vector<34x1xf32>
    %582 = vector.broadcast %581 : vector<34x1xf32> to vector<34x32xf32>
    %583 = arith.subf %577, %582 : vector<34x32xf32>
    %584 = arith.mulf %583, %583 : vector<34x32xf32>
    %cst_181 = arith.constant dense<0.000000e+00> : vector<34xf32>
    %585 = vector.multi_reduction <add>, %584, %cst_181 [1] : vector<34x32xf32> to vector<34xf32>
    %586 = vector.shape_cast %585 : vector<34xf32> to vector<34x1xf32>
    %cst_182 = arith.constant 3.200000e+01 : f32
    %587 = vector.broadcast %cst_182 : f32 to vector<34x1xf32>
    %588 = arith.divf %586, %587 : vector<34x1xf32>
    %589 = vector.broadcast %581 : vector<34x1xf32> to vector<34x32xf32>
    %590 = arith.subf %577, %589 : vector<34x32xf32>
    %cst_183 = arith.constant 9.99999974E-6 : f32
    %591 = vector.broadcast %cst_183 : f32 to vector<34x1xf32>
    %592 = arith.addf %588, %591 : vector<34x1xf32>
    %593 = math.rsqrt %592 : vector<34x1xf32>
    %594 = vector.broadcast %593 : vector<34x1xf32> to vector<34x32xf32>
    %595 = arith.mulf %590, %594 : vector<34x32xf32>
    %596 = arith.mulf %595, %16 : vector<34x32xf32>
    %597 = arith.addf %596, %19 : vector<34x32xf32>
    %cst_184 = arith.constant dense<0.000000e+00> : vector<34x64xf32>
    %598 = tpu.matmul %597, %1, %cst_184 {dimension_numbers = #tpu.dot_dimension_numbers<[1], [0], [0], [1], [0, 0, 1, 1], [], []>} : vector<34x32xf32>, vector<32x64xf32>, vector<34x64xf32> -> vector<34x64xf32>
    %599 = arith.addf %598, %28 : vector<34x64xf32>
    %cst_185 = arith.constant 5.000000e-01 : f32
    %600 = vector.broadcast %cst_185 : f32 to vector<34x64xf32>
    %601 = arith.mulf %600, %599 : vector<34x64xf32>
    %cst_186 = arith.constant 0.707106769 : f32
    %602 = vector.broadcast %cst_186 : f32 to vector<34x64xf32>
    %603 = arith.mulf %599, %602 : vector<34x64xf32>
    %cst_187 = arith.constant -4.000000e+00 : f32
    %cst_188 = arith.constant 4.000000e+00 : f32
    %604 = vector.broadcast %cst_187 : f32 to vector<34x64xf32>
    %605 = arith.maximumf %604, %603 : vector<34x64xf32>
    %606 = vector.broadcast %cst_188 : f32 to vector<34x64xf32>
    %607 = arith.minimumf %606, %605 : vector<34x64xf32>
    %608 = arith.mulf %607, %607 : vector<34x64xf32>
    %cst_189 = arith.constant -2.72614237E-10 : f32
    %609 = vector.broadcast %cst_189 : f32 to vector<34x64xf32>
    %610 = arith.mulf %609, %608 : vector<34x64xf32>
    %cst_190 = arith.constant 2.77068146E-8 : f32
    %611 = vector.broadcast %cst_190 : f32 to vector<34x64xf32>
    %612 = arith.addf %610, %611 : vector<34x64xf32>
    %613 = arith.mulf %612, %608 : vector<34x64xf32>
    %cst_191 = arith.constant -2.10102394E-6 : f32
    %614 = vector.broadcast %cst_191 : f32 to vector<34x64xf32>
    %615 = arith.addf %613, %614 : vector<34x64xf32>
    %616 = arith.mulf %615, %608 : vector<34x64xf32>
    %cst_192 = arith.constant -5.69250624E-5 : f32
    %617 = vector.broadcast %cst_192 : f32 to vector<34x64xf32>
    %618 = arith.addf %616, %617 : vector<34x64xf32>
    %619 = arith.mulf %618, %608 : vector<34x64xf32>
    %cst_193 = arith.constant -7.34990637E-4 : f32
    %620 = vector.broadcast %cst_193 : f32 to vector<34x64xf32>
    %621 = arith.addf %619, %620 : vector<34x64xf32>
    %622 = arith.mulf %621, %608 : vector<34x64xf32>
    %cst_194 = arith.constant -2.954600e-03 : f32
    %623 = vector.broadcast %cst_194 : f32 to vector<34x64xf32>
    %624 = arith.addf %622, %623 : vector<34x64xf32>
    %625 = arith.mulf %624, %608 : vector<34x64xf32>
    %cst_195 = arith.constant -0.0160960332 : f32
    %626 = vector.broadcast %cst_195 : f32 to vector<34x64xf32>
    %627 = arith.addf %625, %626 : vector<34x64xf32>
    %628 = arith.mulf %627, %607 : vector<34x64xf32>
    %cst_196 = arith.constant -1.45660715E-5 : f32
    %629 = vector.broadcast %cst_196 : f32 to vector<34x64xf32>
    %630 = arith.mulf %629, %608 : vector<34x64xf32>
    %cst_197 = arith.constant -2.13374049E-4 : f32
    %631 = vector.broadcast %cst_197 : f32 to vector<34x64xf32>
    %632 = arith.addf %630, %631 : vector<34x64xf32>
    %633 = arith.mulf %632, %608 : vector<34x64xf32>
    %cst_198 = arith.constant -0.00168282702 : f32
    %634 = vector.broadcast %cst_198 : f32 to vector<34x64xf32>
    %635 = arith.addf %633, %634 : vector<34x64xf32>
    %636 = arith.mulf %635, %608 : vector<34x64xf32>
    %cst_199 = arith.constant -0.00737332925 : f32
    %637 = vector.broadcast %cst_199 : f32 to vector<34x64xf32>
    %638 = arith.addf %636, %637 : vector<34x64xf32>
    %639 = arith.mulf %638, %608 : vector<34x64xf32>
    %cst_200 = arith.constant -0.0142647391 : f32
    %640 = vector.broadcast %cst_200 : f32 to vector<34x64xf32>
    %641 = arith.addf %639, %640 : vector<34x64xf32>
    %642 = arith.divf %628, %641 : vector<34x64xf32>
    %cst_201 = arith.constant 1.000000e+00 : f32
    %643 = vector.broadcast %cst_201 : f32 to vector<34x64xf32>
    %644 = arith.addf %643, %642 : vector<34x64xf32>
    %645 = arith.mulf %601, %644 : vector<34x64xf32>
    %cst_202 = arith.constant dense<0.000000e+00> : vector<34x32xf32>
    %646 = tpu.matmul %645, %2, %cst_202 {dimension_numbers = #tpu.dot_dimension_numbers<[1], [0], [0], [1], [0, 0, 1, 1], [], []>} : vector<34x64xf32>, vector<64x32xf32>, vector<34x32xf32> -> vector<34x32xf32>
    %647 = arith.addf %577, %646 : vector<34x32xf32>
    %648 = arith.addf %647, %25 : vector<34x32xf32>
    %649 = tpu.concatenate %186, %340, %494, %648 in 1 : vector<34x32xf32>, vector<34x32xf32>, vector<34x32xf32>, vector<34x32xf32> -> vector<34x128xf32>
    %c0_203 = arith.constant 0 : index
    %c0_204 = arith.constant 0 : index
    %650 = vector.load %arg8[%c0_203, %c0_204] : memref<34x128xf32, #tpu.memory_space<vmem>>, vector<34x128xf32>
    tpu.vector_store %arg8[%c0_203, %c0_204], %649 {strides = array<i32>} : memref<34x128xf32, #tpu.memory_space<vmem>>, vector<34x128xf32>,
    return
  }
}

</mosaic_0001>

<llo_original>
// kernel: tile.9
$region0: #{tile.9}
  %s0 = inlined_call_operand.vmem [shape: f32[2,17,32], index: 0, kind: input, shape index: {}]
  %s1 = inlined_call_operand.vmem [shape: f32[34,32], index: 1, kind: output, shape index: {}]
  %v2 = vld [vmem:[%s0] sm:$0xff]
  %vm3 = vcmask 261120
  %4 = vst.msk [vmem:[%s1] sm:$0xff] %vm3, %v2
  %s5 = scalar_lea.vmem %s0, 8
  %v6 = vld [vmem:[%s5] sm:$0xff]
  %vm7 = vcmask 261120
  %s8 = scalar_lea.vmem %s1, 8
  %9 = vst.msk [vmem:[%s8] sm:$0xff] %vm7, %v6
  %s10 = scalar_lea.vmem %s0, 16
  %s11 = smov 3
  %v12 = vld [vmem:[%s10] ss:$8 sm:%s11]
  %vm13 = vcmask 261120
  %s14 = scalar_lea.vmem %s1, 16
  %15 = vst.msk [vmem:[%s14] sm:$0x3] %vm13, %v12
  %s16 = scalar_lea.vmem %s0, 25
  %v17 = vld [vmem:[%s16] sm:$0xff]
  %vm18 = vcmask 261120
  %s19 = scalar_lea.vmem %s1, 18
  %20 = vst.msk [vmem:[%s19] sm:$0xff] %vm18, %v17
  %s21 = scalar_lea.vmem %s0, 33
  %v22 = vld [vmem:[%s21] sm:$0xff]
  %vm23 = vcmask 261120
  %s24 = scalar_lea.vmem %s1, 26
  %25 = vst.msk [vmem:[%s24] sm:$0xff] %vm23, %v22

// kernel: _lambda_.1
$region0: #{_lambda_.1}
  #allocation0 [shape = 'u32[]', space=smem, size = 0x4, offset = 0x4, fixed_abs, tag = 'smem constant byte address 0x4 - core index']
  #allocation1 [shape = 'u32[72,128]{1,0:T(1,128)}', space=vmem, size = 0x9000, scoped, tag = 'internal scratch']
  %s0 = inlined_call_operand.vmem [shape: f32[34,48], index: 0, kind: input, shape index: {}]
  %s1 = inlined_call_operand.vmem [shape: f32[34,32], index: 1, kind: input, shape index: {}]
  %s2 = inlined_call_operand.vmem [shape: f32[34,34], index: 2, kind: input, shape index: {}]
  %s3 = inlined_call_operand.vmem [shape: f32[48,32], index: 3, kind: input, shape index: {}]
  %s4 = inlined_call_operand.vmem [shape: f32[8,128], index: 4, kind: input, shape index: {}]
  %s5 = inlined_call_operand.vmem [shape: f32[64,128], index: 5, kind: input, shape index: {}]
  %s6 = inlined_call_operand.vmem [shape: f32[32,64], index: 6, kind: input, shape index: {}]
  %s7 = inlined_call_operand.vmem [shape: f32[64,32], index: 7, kind: input, shape index: {}]
  %s8 = inlined_call_operand.vmem [shape: f32[34,128], index: 8, kind: output, shape index: {}]
  %s9 = sld [smem:[#allocation0]]
  $region42: #{_lambda_.1} parent=0
    _
  %s11 = ssub.s32 1, %s9
  %s12 = scalar_select 0, %s11, %s9
  // Predicated region
  $region2: #{_lambda_.1} parent=0 // pred_check
    _
  $region3: #{_lambda_.1} parent=0 // pred_check_branch
    %14 = sbr.rel (0) target = $region5
  $region4: #{_lambda_.1} parent=0 // pred_region
    _
  $region5: #{_lambda_.1} parent=0 // pred_fallthru
    _
  // Predicated region
  $region6: #{_lambda_.1} parent=0 // pred_check
    _
  $region7: #{_lambda_.1} parent=0 // pred_check_branch
    %16 = sbr.rel (0) target = $region9
  $region8: #{_lambda_.1} parent=0 // pred_region
    _
  $region9: #{_lambda_.1} parent=0 // pred_fallthru
    _
  // Predicated region
  $region10: #{_lambda_.1} parent=0 // pred_check
    _
  $region11: #{_lambda_.1} parent=0 // pred_check_branch
    %18 = sbr.rel (0) target = $region13
  $region12: #{_lambda_.1} parent=0 // pred_region
    _
  $region13: #{_lambda_.1} parent=0 // pred_fallthru
    _
  // Predicated region
  $region14: #{_lambda_.1} parent=0 // pred_check
    _
  $region15: #{_lambda_.1} parent=0 // pred_check_branch
    %20 = sbr.rel (0) target = $region17
  $region16: #{_lambda_.1} parent=0 // pred_region
    _
  $region17: #{_lambda_.1} parent=0 // pred_fallthru
    _
  // Predicated region
  $region18: #{_lambda_.1} parent=0 // pred_check
    _
  $region19: #{_lambda_.1} parent=0 // pred_check_branch
    %22 = sbr.rel (0) target = $region21
  $region20: #{_lambda_.1} parent=0 // pred_region
    _
  $region21: #{_lambda_.1} parent=0 // pred_fallthru
    _
  // Predicated region
  $region22: #{_lambda_.1} parent=0 // pred_check
    _
  $region23: #{_lambda_.1} parent=0 // pred_check_branch
    %24 = sbr.rel (0) target = $region25
  $region24: #{_lambda_.1} parent=0 // pred_region
    _
  $region25: #{_lambda_.1} parent=0 // pred_fallthru
    _
  // Predicated region
  $region26: #{_lambda_.1} parent=0 // pred_check
    _
  $region27: #{_lambda_.1} parent=0 // pred_check_branch
    %26 = sbr.rel (0) target = $region29
  $region28: #{_lambda_.1} parent=0 // pred_region
    _
  $region29: #{_lambda_.1} parent=0 // pred_fallthru
    _
  // Predicated region
  $region30: #{_lambda_.1} parent=0 // pred_check
    _
  $region31: #{_lambda_.1} parent=0 // pred_check_branch
    %28 = sbr.rel (0) target = $region33
  $region32: #{_lambda_.1} parent=0 // pred_region
    _
  $region33: #{_lambda_.1} parent=0 // pred_fallthru
    _
  %v29 = vld [vmem:[%s3] sm:$0xff]
  %v30 = vld [vmem:[%s3 + $0x8] sm:$0xff]
  %v31 = vld [vmem:[%s3 + $0x10] sm:$0xff]
  %v32 = vld [vmem:[%s3 + $0x18] sm:$0xff]
  %v33 = vld [vmem:[%s3 + $0x20] sm:$0xff]
  %v34 = vld [vmem:[%s3 + $0x28] sm:$0xff]
  %v35 = vld [vmem:[%s6] sm:$0xff]
  %v36 = vld [vmem:[%s6 + $0x8] sm:$0xff]
  %v37 = vld [vmem:[%s6 + $0x10] sm:$0xff]
  %v38 = vld [vmem:[%s6 + $0x18] sm:$0xff]
  %v39 = vld [vmem:[%s7] sm:$0xff]
  %v40 = vld [vmem:[%s7 + $0x8] sm:$0xff]
  %v41 = vld [vmem:[%s7 + $0x10] sm:$0xff]
  %v42 = vld [vmem:[%s7 + $0x18] sm:$0xff]
  %v43 = vld [vmem:[%s7 + $0x20] sm:$0xff]
  %v44 = vld [vmem:[%s7 + $0x28] sm:$0xff]
  %v45 = vld [vmem:[%s7 + $0x30] sm:$0xff]
  %v46 = vld [vmem:[%s7 + $0x38] sm:$0xff]
  %v47 = vld [vmem:[%s5] sm:$0xff]
  %v48 = vld [vmem:[%s5 + $0x8] sm:$0xff]
  %v49 = vld [vmem:[%s5 + $0x10] sm:$0xff]
  %v50 = vld [vmem:[%s5 + $0x18] sm:$0xff]
  %v51 = vld [vmem:[%s5 + $0x20] sm:$0xff]
  %v52 = vld [vmem:[%s5 + $0x28] sm:$0xff]
  %v53 = vld [vmem:[%s5 + $0x30] sm:$0xff]
  %v54 = vld [vmem:[%s5 + $0x38] sm:$0xff]
  %v55 = vld [vmem:[%s2] sm:$0xff]
  %v56 = vld [vmem:[%s2 + $0x8] sm:$0xff]
  %v57 = vld [vmem:[%s2 + $0x10] sm:$0xff]
  %v58 = vld [vmem:[%s2 + $0x18] sm:$0xff]
  %v59 = vld [vmem:[%s2 + $0x20] sm:$0x3]
  %v60 = vld [vmem:[%s4] sm:$0xff]
  %v61 = vperm.slane %v60, 0
  %v62 = vperm.slane %v60, 1
  %v63 = vperm.slane %v60, 2
  %v64 = vperm.slane %v60, 3
  %v65 = vperm.slane %v60, 4
  %v66 = vperm.slane %v60, 5
  %v67 = vperm.slane %v60, 6
  %v68 = vld [vmem:[%s0] sm:$0xff]
  %v69 = vld [vmem:[%s0 + $0x8] sm:$0xff]
  %v70 = vld [vmem:[%s0 + $0x10] sm:$0xff]
  %v71 = vld [vmem:[%s0 + $0x18] sm:$0xff]
  %v72 = vld [vmem:[%s0 + $0x20] sm:$0x3]
  %v73 = vld [vmem:[%s1] sm:$0xff]
  %v74 = vld [vmem:[%s1 + $0x8] sm:$0xff]
  %v75 = vld [vmem:[%s1 + $0x10] sm:$0xff]
  %v76 = vld [vmem:[%s1 + $0x18] sm:$0xff]
  %v77 = vld [vmem:[%s1 + $0x20] sm:$0x3]
  %vm78 = vcmask 392192
  %v80 = vsel %vm78, %v68, 0
  %v83 = vsel %vm78, %v69, 0
  %v86 = vsel %vm78, %v70, 0
  %v89 = vsel %vm78, %v71, 0
  %v92 = vsel %vm78, %v72, 0
  %94 = vmatpush.msra.mxu0 0.0
  %95 = vmatpush.msra.mxu0 0.0
  %96 = vmatpush.msra.mxu0 0.0
  %97 = vmatpush.msra.mxu0 0.0
  %98 = vmatpush.msra.mxu0 0.0
  %99 = vmatpush.msra.mxu0 0.0
  %100 = vmatpush.msra.mxu0 0.0
  %101 = vmatpush.msra.mxu0 0.0
  %102 = vmatpush.msra.mxu0 0.0
  %103 = vmatpush.msra.mxu0 0.0
  %104 = vmatpush.msra.mxu0 %v34
  %105 = vmatpush.msra.mxu0 %v33
  %106 = vmatpush.msra.mxu0 %v32
  %107 = vmatpush.msra.mxu0 %v31
  %108 = vmatpush.msra.mxu0 %v30
  %109 = vmatpush.msra.mxu0 %v29
  %110 = vmatmul.f32.gmra.mxu0 %v80
  %v111 = vpop.f32.mrf.mxu0
  %v112 = vadd.f32 %v73, %v111
  %113 = vmatmul.f32.gmra.mxu0 %v83
  %v114 = vpop.f32.mrf.mxu0
  %v115 = vadd.f32 %v74, %v114
  %116 = vmatmul.f32.gmra.mxu0 %v86
  %v117 = vpop.f32.mrf.mxu0
  %v118 = vadd.f32 %v75, %v117
  %119 = vmatmul.f32.gmra.mxu0 %v89
  %v120 = vpop.f32.mrf.mxu0
  %v121 = vadd.f32 %v76, %v120
  %122 = vmatmul.f32.gmra.mxu0 %v92
  %v123 = vpop.f32.mrf.mxu0
  %v124 = vadd.f32 %v77, %v123
  %125 = vdwg.mxu0
  %vm126 = vcmask 261120
  %v127 = vsel %vm126, %v112, 0.0
  %128 = vadd.xlane.f32.xlu0 %v127
  %v129 = vpop.xlane.xlu0 %128
  %v130 = vsel %vm126, %v115, 0.0
  %131 = vadd.xlane.f32.xlu0 %v130
  %v132 = vpop.xlane.xlu0 %131
  %v133 = vsel %vm126, %v118, 0.0
  %134 = vadd.xlane.f32.xlu0 %v133
  %v135 = vpop.xlane.xlu0 %134
  %v136 = vsel %vm126, %v121, 0.0
  %137 = vadd.xlane.f32.xlu0 %v136
  %v138 = vpop.xlane.xlu0 %137
  %vm139 = vcmask 254976
  %v140 = vsel %vm139, %v124, 0.0
  %141 = vadd.xlane.f32.xlu0 %v140
  %v142 = vpop.xlane.xlu0 %141
  %v143 = vrcp.pop 32.0
  %v144 = vmul.f32 32.0, %v143
  %v145 = vsub.f32 1.0, %v144
  %v146 = vmul.f32 %v143, %v145
  %v147 = vadd.f32 %v143, %v146
  %vm148 = vweird.f32 %v143
  %v149 = vsel %vm148, %v143, %v147
  %v150 = vmul.f32 %v129, %v149
  %v151 = vmul.f32 %v132, %v149
  %v152 = vmul.f32 %v135, %v149
  %v153 = vmul.f32 %v138, %v149
  %v154 = vmul.f32 %v142, %v149
  %v155 = vsub.f32 %v112, %v150
  %v156 = vsub.f32 %v115, %v151
  %v157 = vsub.f32 %v118, %v152
  %v158 = vsub.f32 %v121, %v153
  %v159 = vsub.f32 %v124, %v154
  %v160 = vmul.f32 %v155, %v155
  %v161 = vmul.f32 %v156, %v156
  %v162 = vmul.f32 %v157, %v157
  %v163 = vmul.f32 %v158, %v158
  %v164 = vmul.f32 %v159, %v159
  %v165 = vsel %vm126, %v160, 0.0
  %166 = vadd.xlane.f32.xlu0 %v165
  %v167 = vpop.xlane.xlu0 %166
  %v168 = vsel %vm126, %v161, 0.0
  %169 = vadd.xlane.f32.xlu0 %v168
  %v170 = vpop.xlane.xlu0 %169
  %v171 = vsel %vm126, %v162, 0.0
  %172 = vadd.xlane.f32.xlu0 %v171
  %v173 = vpop.xlane.xlu0 %172
  %v174 = vsel %vm126, %v163, 0.0
  %175 = vadd.xlane.f32.xlu0 %v174
  %v176 = vpop.xlane.xlu0 %175
  %v177 = vsel %vm139, %v164, 0.0
  %178 = vadd.xlane.f32.xlu0 %v177
  %v179 = vpop.xlane.xlu0 %178
  %v180 = vmul.f32 %v167, %v149
  %v181 = vmul.f32 %v170, %v149
  %v182 = vmul.f32 %v173, %v149
  %v183 = vmul.f32 %v176, %v149
  %v184 = vmul.f32 %v179, %v149
  %v185 = vadd.f32 %v180, 1e-05
  %v186 = vadd.f32 %v181, 1e-05
  %v187 = vadd.f32 %v182, 1e-05
  %v188 = vadd.f32 %v183, 1e-05
  %v189 = vadd.f32 %v184, 1e-05
  %v190 = vrsqrt.pop %v185
  %v191 = vmul.f32 %v190, %v185
  %v192 = vmul.f32 %v191, %v190
  %v193 = vmul.f32 0.5, %v192
  %v194 = vsub.f32 1.5, %v193
  %v195 = vmul.f32 %v190, %v194
  %vm196 = vweird.f32 %v185
  %vm197 = vweird.f32 %v190
  %vm198 = vmor %vm196, %vm197
  %v199 = vsel %vm198, %v190, %v195
  %v200 = vrsqrt.pop %v186
  %v201 = vmul.f32 %v200, %v186
  %v202 = vmul.f32 %v201, %v200
  %v203 = vmul.f32 0.5, %v202
  %v204 = vsub.f32 1.5, %v203
  %v205 = vmul.f32 %v200, %v204
  %vm206 = vweird.f32 %v186
  %vm207 = vweird.f32 %v200
  %vm208 = vmor %vm206, %vm207
  %v209 = vsel %vm208, %v200, %v205
  %v210 = vrsqrt.pop %v187
  %v211 = vmul.f32 %v210, %v187
  %v212 = vmul.f32 %v211, %v210
  %v213 = vmul.f32 0.5, %v212
  %v214 = vsub.f32 1.5, %v213
  %v215 = vmul.f32 %v210, %v214
  %vm216 = vweird.f32 %v187
  %vm217 = vweird.f32 %v210
  %vm218 = vmor %vm216, %vm217
  %v219 = vsel %vm218, %v210, %v215
  %v220 = vrsqrt.pop %v188
  %v221 = vmul.f32 %v220, %v188
  %v222 = vmul.f32 %v221, %v220
  %v223 = vmul.f32 0.5, %v222
  %v224 = vsub.f32 1.5, %v223
  %v225 = vmul.f32 %v220, %v224
  %vm226 = vweird.f32 %v188
  %vm227 = vweird.f32 %v220
  %vm228 = vmor %vm226, %vm227
  %v229 = vsel %vm228, %v220, %v225
  %v230 = vrsqrt.pop %v189
  %v231 = vmul.f32 %v230, %v189
  %v232 = vmul.f32 %v231, %v230
  %v233 = vmul.f32 0.5, %v232
  %v234 = vsub.f32 1.5, %v233
  %v235 = vmul.f32 %v230, %v234
  %vm236 = vweird.f32 %v189
  %vm237 = vweird.f32 %v230
  %vm238 = vmor %vm236, %vm237
  %v239 = vsel %vm238, %v230, %v235
  %v240 = vmul.f32 %v155, %v199
  %v241 = vmul.f32 %v156, %v209
  %v242 = vmul.f32 %v157, %v219
  %v243 = vmul.f32 %v158, %v229
  %v244 = vmul.f32 %v159, %v239
  %v245 = vmul.f32 %v240, %v61
  %v246 = vmul.f32 %v241, %v61
  %v247 = vmul.f32 %v242, %v61
  %v248 = vmul.f32 %v243, %v61
  %v249 = vmul.f32 %v244, %v61
  %v250 = vadd.f32 %v245, %v62
  %v251 = vadd.f32 %v246, %v62
  %v252 = vadd.f32 %v247, %v62
  %v253 = vadd.f32 %v248, %v62
  %v254 = vadd.f32 %v249, %v62
  %v256 = vsel %vm126, %v250, 0
  %v259 = vsel %vm126, %v251, 0
  %v262 = vsel %vm126, %v252, 0
  %v265 = vsel %vm126, %v253, 0
  %v268 = vsel %vm126, %v254, 0
  %270 = vmatpush.msra.mxu0 0.0
  %271 = vmatpush.msra.mxu0 0.0
  %272 = vmatpush.msra.mxu0 0.0
  %273 = vmatpush.msra.mxu0 0.0
  %274 = vmatpush.msra.mxu0 0.0
  %275 = vmatpush.msra.mxu0 0.0
  %276 = vmatpush.msra.mxu0 0.0
  %277 = vmatpush.msra.mxu0 0.0
  %278 = vmatpush.msra.mxu0 0.0
  %279 = vmatpush.msra.mxu0 0.0
  %280 = vmatpush.msra.mxu0 0.0
  %281 = vmatpush.msra.mxu0 0.0
  %282 = vmatpush.msra.mxu0 %v50
  %283 = vmatpush.msra.mxu0 %v49
  %284 = vmatpush.msra.mxu0 %v48
  %285 = vmatpush.msra.mxu0 %v47
  %286 = vmatmul.f32.gmra.mxu0 %v256
  %v287 = vpop.f32.mrf.mxu0
  %v288 = vadd.f32 0.0, %v287
  %289 = vmatmul.f32.gmra.mxu0 %v259
  %v290 = vpop.f32.mrf.mxu0
  %v291 = vadd.f32 0.0, %v290
  %292 = vmatmul.f32.gmra.mxu0 %v262
  %v293 = vpop.f32.mrf.mxu0
  %v294 = vadd.f32 0.0, %v293
  %295 = vmatmul.f32.gmra.mxu0 %v265
  %v296 = vpop.f32.mrf.mxu0
  %v297 = vadd.f32 0.0, %v296
  %298 = vmatmul.f32.gmra.mxu0 %v268
  %v299 = vpop.f32.mrf.mxu0
  %v300 = vadd.f32 0.0, %v299
  %301 = vdwg.mxu0
  %302 = vmatpush.msra.mxu0 0.0
  %303 = vmatpush.msra.mxu0 0.0
  %304 = vmatpush.msra.mxu0 0.0
  %305 = vmatpush.msra.mxu0 0.0
  %306 = vmatpush.msra.mxu0 0.0
  %307 = vmatpush.msra.mxu0 0.0
  %308 = vmatpush.msra.mxu0 0.0
  %309 = vmatpush.msra.mxu0 0.0
  %310 = vmatpush.msra.mxu0 0.0
  %311 = vmatpush.msra.mxu0 0.0
  %312 = vmatpush.msra.mxu0 0.0
  %313 = vmatpush.msra.mxu0 0.0
  %314 = vmatpush.msra.mxu0 %v54
  %315 = vmatpush.msra.mxu0 %v53
  %316 = vmatpush.msra.mxu0 %v52
  %317 = vmatpush.msra.mxu0 %v51
  %318 = vmatmul.f32.gmra.mxu0 %v256
  %v319 = vpop.f32.mrf.mxu0
  %v320 = vadd.f32 0.0, %v319
  %321 = vmatmul.f32.gmra.mxu0 %v259
  %v322 = vpop.f32.mrf.mxu0
  %v323 = vadd.f32 0.0, %v322
  %324 = vmatmul.f32.gmra.mxu0 %v262
  %v325 = vpop.f32.mrf.mxu0
  %v326 = vadd.f32 0.0, %v325
  %327 = vmatmul.f32.gmra.mxu0 %v265
  %v328 = vpop.f32.mrf.mxu0
  %v329 = vadd.f32 0.0, %v328
  %330 = vmatmul.f32.gmra.mxu0 %v268
  %v331 = vpop.f32.mrf.mxu0
  %v332 = vadd.f32 0.0, %v331
  %333 = vdwg.mxu0
  %v335 = vsel %vm126, %v288, 0
  %v338 = vsel %vm126, %v291, 0
  %v341 = vsel %vm126, %v294, 0
  %v344 = vsel %vm126, %v297, 0
  %v347 = vsel %vm126, %v300, 0
  %349 = vmatpush.xpose.msra.mxu0 0.0
  %350 = vmatpush.xpose.msra.mxu0 0.0
  %351 = vmatpush.xpose.msra.mxu0 0.0
  %352 = vmatpush.xpose.msra.mxu0 0.0
  %353 = vmatpush.xpose.msra.mxu0 0.0
  %354 = vmatpush.xpose.msra.mxu0 0.0
  %355 = vmatpush.xpose.msra.mxu0 0.0
  %356 = vmatpush.xpose.msra.mxu0 0.0
  %357 = vmatpush.xpose.msra.mxu0 0.0
  %358 = vmatpush.xpose.msra.mxu0 0.0
  %359 = vmatpush.xpose.msra.mxu0 0.0
  %360 = vmatpush.xpose.msra.mxu0 %v268
  %361 = vmatpush.xpose.msra.mxu0 %v265
  %362 = vmatpush.xpose.msra.mxu0 %v262
  %363 = vmatpush.xpose.msra.mxu0 %v259
  %364 = vmatpush.xpose.msra.mxu0 %v256
  %365 = vmatmul.f32.gmra.mxu0 %v335
  %v366 = vpop.f32.mrf.mxu0
  %v367 = vadd.f32 %v55, %v366
  %368 = vmatmul.f32.gmra.mxu0 %v338
  %v369 = vpop.f32.mrf.mxu0
  %v370 = vadd.f32 %v56, %v369
  %371 = vmatmul.f32.gmra.mxu0 %v341
  %v372 = vpop.f32.mrf.mxu0
  %v373 = vadd.f32 %v57, %v372
  %374 = vmatmul.f32.gmra.mxu0 %v344
  %v375 = vpop.f32.mrf.mxu0
  %v376 = vadd.f32 %v58, %v375
  %377 = vmatmul.f32.gmra.mxu0 %v347
  %v378 = vpop.f32.mrf.mxu0
  %v379 = vadd.f32 %v59, %v378
  %380 = vdwg.mxu0
  %vm381 = vcmask 277504
  %v382 = vsel %vm381, %v367, -inf
  %383 = vmax.xlane.f32.xlu0 %v382
  %v384 = vpop.xlane.xlu0 %383
  %v385 = vsel %vm381, %v370, -inf
  %386 = vmax.xlane.f32.xlu0 %v385
  %v387 = vpop.xlane.xlu0 %386
  %v388 = vsel %vm381, %v373, -inf
  %389 = vmax.xlane.f32.xlu0 %v388
  %v390 = vpop.xlane.xlu0 %389
  %v391 = vsel %vm381, %v376, -inf
  %392 = vmax.xlane.f32.xlu0 %v391
  %v393 = vpop.xlane.xlu0 %392
  %vm394 = vcmask 271360
  %v395 = vsel %vm394, %v379, -inf
  %396 = vmax.xlane.f32.xlu0 %v395
  %v397 = vpop.xlane.xlu0 %396
  %v398 = vsub.f32 %v367, %v384
  %v399 = vsub.f32 %v370, %v387
  %v400 = vsub.f32 %v373, %v390
  %v401 = vsub.f32 %v376, %v393
  %v402 = vsub.f32 %v379, %v397
  %v403 = vmul.f32 %v398, 1.442695
  %v404 = vpow.pop %v403
  %v405 = vmul.f32 %v399, 1.442695
  %v406 = vpow.pop %v405
  %v407 = vmul.f32 %v400, 1.442695
  %v408 = vpow.pop %v407
  %v409 = vmul.f32 %v401, 1.442695
  %v410 = vpow.pop %v409
  %v411 = vmul.f32 %v402, 1.442695
  %v412 = vpow.pop %v411
  %v413 = vsel %vm381, %v404, 0.0
  %414 = vadd.xlane.f32.xlu0 %v413
  %v415 = vpop.xlane.xlu0 %414
  %v416 = vsel %vm381, %v406, 0.0
  %417 = vadd.xlane.f32.xlu0 %v416
  %v418 = vpop.xlane.xlu0 %417
  %v419 = vsel %vm381, %v408, 0.0
  %420 = vadd.xlane.f32.xlu0 %v419
  %v421 = vpop.xlane.xlu0 %420
  %v422 = vsel %vm381, %v410, 0.0
  %423 = vadd.xlane.f32.xlu0 %v422
  %v424 = vpop.xlane.xlu0 %423
  %v425 = vsel %vm394, %v412, 0.0
  %426 = vadd.xlane.f32.xlu0 %v425
  %v427 = vpop.xlane.xlu0 %426
  %v428 = vrcp.pop %v415
  %v429 = vmul.f32 %v415, %v428
  %v430 = vsub.f32 1.0, %v429
  %v431 = vmul.f32 %v428, %v430
  %v432 = vadd.f32 %v428, %v431
  %vm433 = vweird.f32 %v415
  %vm434 = vweird.f32 %v428
  %vm435 = vmor %vm433, %vm434
  %v436 = vsel %vm435, %v428, %v432
  %v437 = vand.u32 2147483647, %v415
  %vm438 = vcmp.eq.f32.partialorder %v437, 8.507059e+37
  %v439 = vand.u32 %v415, 2147483648
  %v440 = vor.u32 1.1754944e-38, %v439
  %v441 = vsel %vm438, %v440, %v436
  %v442 = vmul.f32 %v404, %v441
  %v443 = vrcp.pop %v418
  %v444 = vmul.f32 %v418, %v443
  %v445 = vsub.f32 1.0, %v444
  %v446 = vmul.f32 %v443, %v445
  %v447 = vadd.f32 %v443, %v446
  %vm448 = vweird.f32 %v418
  %vm449 = vweird.f32 %v443
  %vm450 = vmor %vm448, %vm449
  %v451 = vsel %vm450, %v443, %v447
  %v452 = vand.u32 2147483647, %v418
  %vm453 = vcmp.eq.f32.partialorder %v452, 8.507059e+37
  %v454 = vand.u32 %v418, 2147483648
  %v455 = vor.u32 1.1754944e-38, %v454
  %v456 = vsel %vm453, %v455, %v451
  %v457 = vmul.f32 %v406, %v456
  %v458 = vrcp.pop %v421
  %v459 = vmul.f32 %v421, %v458
  %v460 = vsub.f32 1.0, %v459
  %v461 = vmul.f32 %v458, %v460
  %v462 = vadd.f32 %v458, %v461
  %vm463 = vweird.f32 %v421
  %vm464 = vweird.f32 %v458
  %vm465 = vmor %vm463, %vm464
  %v466 = vsel %vm465, %v458, %v462
  %v467 = vand.u32 2147483647, %v421
  %vm468 = vcmp.eq.f32.partialorder %v467, 8.507059e+37
  %v469 = vand.u32 %v421, 2147483648
  %v470 = vor.u32 1.1754944e-38, %v469
  %v471 = vsel %vm468, %v470, %v466
  %v472 = vmul.f32 %v408, %v471
  %v473 = vrcp.pop %v424
  %v474 = vmul.f32 %v424, %v473
  %v475 = vsub.f32 1.0, %v474
  %v476 = vmul.f32 %v473, %v475
  %v477 = vadd.f32 %v473, %v476
  %vm478 = vweird.f32 %v424
  %vm479 = vweird.f32 %v473
  %vm480 = vmor %vm478, %vm479
  %v481 = vsel %vm480, %v473, %v477
  %v482 = vand.u32 2147483647, %v424
  %vm483 = vcmp.eq.f32.partialorder %v482, 8.507059e+37
  %v484 = vand.u32 %v424, 2147483648
  %v485 = vor.u32 1.1754944e-38, %v484
  %v486 = vsel %vm483, %v485, %v481
  %v487 = vmul.f32 %v410, %v486
  %v488 = vrcp.pop %v427
  %v489 = vmul.f32 %v427, %v488
  %v490 = vsub.f32 1.0, %v489
  %v491 = vmul.f32 %v488, %v490
  %v492 = vadd.f32 %v488, %v491
  %vm493 = vweird.f32 %v427
  %vm494 = vweird.f32 %v488
  %vm495 = vmor %vm493, %vm494
  %v496 = vsel %vm495, %v488, %v492
  %v497 = vand.u32 2147483647, %v427
  %vm498 = vcmp.eq.f32.partialorder %v497, 8.507059e+37
  %v499 = vand.u32 %v427, 2147483648
  %v500 = vor.u32 1.1754944e-38, %v499
  %v501 = vsel %vm498, %v500, %v496
  %v502 = vmul.f32 %v412, %v501
  %503 = vrot.lane.b32.xlu0 %v288, 96
  %v504 = vpop.permute.xlu0 %503
  %505 = vrot.lane.b32.xlu0 %v291, 96
  %v506 = vpop.permute.xlu0 %505
  %507 = vrot.lane.b32.xlu0 %v294, 96
  %v508 = vpop.permute.xlu0 %507
  %509 = vrot.lane.b32.xlu0 %v297, 96
  %v510 = vpop.permute.xlu0 %509
  %511 = vrot.lane.b32.xlu0 %v300, 96
  %v512 = vpop.permute.xlu0 %511
  %v513 = vsel %vm126, %v504, 0
  %v515 = vsel %vm126, %v506, 0
  %v517 = vsel %vm126, %v508, 0
  %v519 = vsel %vm126, %v510, 0
  %v521 = vsel %vm126, %v512, 0
  %523 = vmatpush.xpose.msra.mxu0 0.0
  %524 = vmatpush.xpose.msra.mxu0 0.0
  %525 = vmatpush.xpose.msra.mxu0 0.0
  %526 = vmatpush.xpose.msra.mxu0 0.0
  %527 = vmatpush.xpose.msra.mxu0 0.0
  %528 = vmatpush.xpose.msra.mxu0 0.0
  %529 = vmatpush.xpose.msra.mxu0 0.0
  %530 = vmatpush.xpose.msra.mxu0 0.0
  %531 = vmatpush.xpose.msra.mxu0 0.0
  %532 = vmatpush.xpose.msra.mxu0 0.0
  %533 = vmatpush.xpose.msra.mxu0 0.0
  %534 = vmatpush.xpose.msra.mxu0 %v268
  %535 = vmatpush.xpose.msra.mxu0 %v265
  %536 = vmatpush.xpose.msra.mxu0 %v262
  %537 = vmatpush.xpose.msra.mxu0 %v259
  %538 = vmatpush.xpose.msra.mxu0 %v256
  %539 = vmatmul.f32.gmra.mxu0 %v513
  %v540 = vpop.f32.mrf.mxu0
  %v541 = vadd.f32 %v55, %v540
  %542 = vmatmul.f32.gmra.mxu0 %v515
  %v543 = vpop.f32.mrf.mxu0
  %v544 = vadd.f32 %v56, %v543
  %545 = vmatmul.f32.gmra.mxu0 %v517
  %v546 = vpop.f32.mrf.mxu0
  %v547 = vadd.f32 %v57, %v546
  %548 = vmatmul.f32.gmra.mxu0 %v519
  %v549 = vpop.f32.mrf.mxu0
  %v550 = vadd.f32 %v58, %v549
  %551 = vmatmul.f32.gmra.mxu0 %v521
  %v552 = vpop.f32.mrf.mxu0
  %v553 = vadd.f32 %v59, %v552
  %554 = vdwg.mxu0
  %v555 = vsel %vm381, %v541, -inf
  %556 = vmax.xlane.f32.xlu0 %v555
  %v557 = vpop.xlane.xlu0 %556
  %v558 = vsel %vm381, %v544, -inf
  %559 = vmax.xlane.f32.xlu0 %v558
  %v560 = vpop.xlane.xlu0 %559
  %v561 = vsel %vm381, %v547, -inf
  %562 = vmax.xlane.f32.xlu0 %v561
  %v563 = vpop.xlane.xlu0 %562
  %v564 = vsel %vm381, %v550, -inf
  %565 = vmax.xlane.f32.xlu0 %v564
  %v566 = vpop.xlane.xlu0 %565
  %v567 = vsel %vm394, %v553, -inf
  %568 = vmax.xlane.f32.xlu0 %v567
  %v569 = vpop.xlane.xlu0 %568
  %v570 = vsub.f32 %v541, %v557
  %v571 = vsub.f32 %v544, %v560
  %v572 = vsub.f32 %v547, %v563
  %v573 = vsub.f32 %v550, %v566
  %v574 = vsub.f32 %v553, %v569
  %v575 = vmul.f32 %v570, 1.442695
  %v576 = vpow.pop %v575
  %v577 = vmul.f32 %v571, 1.442695
  %v578 = vpow.pop %v577
  %v579 = vmul.f32 %v572, 1.442695
  %v580 = vpow.pop %v579
  %v581 = vmul.f32 %v573, 1.442695
  %v582 = vpow.pop %v581
  %v583 = vmul.f32 %v574, 1.442695
  %v584 = vpow.pop %v583
  %v585 = vsel %vm381, %v576, 0.0
  %586 = vadd.xlane.f32.xlu0 %v585
  %v587 = vpop.xlane.xlu0 %586
  %v588 = vsel %vm381, %v578, 0.0
  %589 = vadd.xlane.f32.xlu0 %v588
  %v590 = vpop.xlane.xlu0 %589
  %v591 = vsel %vm381, %v580, 0.0
  %592 = vadd.xlane.f32.xlu0 %v591
  %v593 = vpop.xlane.xlu0 %592
  %v594 = vsel %vm381, %v582, 0.0
  %595 = vadd.xlane.f32.xlu0 %v594
  %v596 = vpop.xlane.xlu0 %595
  %v597 = vsel %vm394, %v584, 0.0
  %598 = vadd.xlane.f32.xlu0 %v597
  %v599 = vpop.xlane.xlu0 %598
  %v600 = vrcp.pop %v587
  %v601 = vmul.f32 %v587, %v600
  %v602 = vsub.f32 1.0, %v601
  %v603 = vmul.f32 %v600, %v602
  %v604 = vadd.f32 %v600, %v603
  %vm605 = vweird.f32 %v587
  %vm606 = vweird.f32 %v600
  %vm607 = vmor %vm605, %vm606
  %v608 = vsel %vm607, %v600, %v604
  %v609 = vand.u32 2147483647, %v587
  %vm610 = vcmp.eq.f32.partialorder %v609, 8.507059e+37
  %v611 = vand.u32 %v587, 2147483648
  %v612 = vor.u32 1.1754944e-38, %v611
  %v613 = vsel %vm610, %v612, %v608
  %v614 = vmul.f32 %v576, %v613
  %v615 = vrcp.pop %v590
  %v616 = vmul.f32 %v590, %v615
  %v617 = vsub.f32 1.0, %v616
  %v618 = vmul.f32 %v615, %v617
  %v619 = vadd.f32 %v615, %v618
  %vm620 = vweird.f32 %v590
  %vm621 = vweird.f32 %v615
  %vm622 = vmor %vm620, %vm621
  %v623 = vsel %vm622, %v615, %v619
  %v624 = vand.u32 2147483647, %v590
  %vm625 = vcmp.eq.f32.partialorder %v624, 8.507059e+37
  %v626 = vand.u32 %v590, 2147483648
  %v627 = vor.u32 1.1754944e-38, %v626
  %v628 = vsel %vm625, %v627, %v623
  %v629 = vmul.f32 %v578, %v628
  %v630 = vrcp.pop %v593
  %v631 = vmul.f32 %v593, %v630
  %v632 = vsub.f32 1.0, %v631
  %v633 = vmul.f32 %v630, %v632
  %v634 = vadd.f32 %v630, %v633
  %vm635 = vweird.f32 %v593
  %vm636 = vweird.f32 %v630
  %vm637 = vmor %vm635, %vm636
  %v638 = vsel %vm637, %v630, %v634
  %v639 = vand.u32 2147483647, %v593
  %vm640 = vcmp.eq.f32.partialorder %v639, 8.507059e+37
  %v641 = vand.u32 %v593, 2147483648
  %v642 = vor.u32 1.1754944e-38, %v641
  %v643 = vsel %vm640, %v642, %v638
  %v644 = vmul.f32 %v580, %v643
  %v645 = vrcp.pop %v596
  %v646 = vmul.f32 %v596, %v645
  %v647 = vsub.f32 1.0, %v646
  %v648 = vmul.f32 %v645, %v647
  %v649 = vadd.f32 %v645, %v648
  %vm650 = vweird.f32 %v596
  %vm651 = vweird.f32 %v645
  %vm652 = vmor %vm650, %vm651
  %v653 = vsel %vm652, %v645, %v649
  %v654 = vand.u32 2147483647, %v596
  %vm655 = vcmp.eq.f32.partialorder %v654, 8.507059e+37
  %v656 = vand.u32 %v596, 2147483648
  %v657 = vor.u32 1.1754944e-38, %v656
  %v658 = vsel %vm655, %v657, %v653
  %v659 = vmul.f32 %v582, %v658
  %v660 = vrcp.pop %v599
  %v661 = vmul.f32 %v599, %v660
  %v662 = vsub.f32 1.0, %v661
  %v663 = vmul.f32 %v660, %v662
  %v664 = vadd.f32 %v660, %v663
  %vm665 = vweird.f32 %v599
  %vm666 = vweird.f32 %v660
  %vm667 = vmor %vm665, %vm666
  %v668 = vsel %vm667, %v660, %v664
  %v669 = vand.u32 2147483647, %v599
  %vm670 = vcmp.eq.f32.partialorder %v669, 8.507059e+37
  %v671 = vand.u32 %v599, 2147483648
  %v672 = vor.u32 1.1754944e-38, %v671
  %v673 = vsel %vm670, %v672, %v668
  %v674 = vmul.f32 %v584, %v673
  %680 = vrot.lane.b32.xlu0 %v320, 96
  %v681 = vpop.permute.xlu0 %680
  %682 = vrot.lane.b32.xlu0 %v323, 96
  %v683 = vpop.permute.xlu0 %682
  %684 = vrot.lane.b32.xlu0 %v326, 96
  %v685 = vpop.permute.xlu0 %684
  %686 = vrot.lane.b32.xlu0 %v329, 96
  %v687 = vpop.permute.xlu0 %686
  %688 = vrot.lane.b32.xlu0 %v332, 96
  %v689 = vpop.permute.xlu0 %688
  %v695 = vsel %vm381, %v614, 0
  %v698 = vsel %vm381, %v629, 0
  %v701 = vsel %vm381, %v644, 0
  %v704 = vsel %vm381, %v659, 0
  %v707 = vsel %vm381, %v674, 0
  %vm709 = vcmask 1041408
  %v710 = vsel %vm709, %v689, 0
  %712 = vmatpush.msra.mxu0 0.0
  %713 = vmatpush.msra.mxu0 0.0
  %714 = vmatpush.msra.mxu0 0.0
  %715 = vmatpush.msra.mxu0 0.0
  %716 = vmatpush.msra.mxu0 0.0
  %717 = vmatpush.msra.mxu0 0.0
  %718 = vmatpush.msra.mxu0 0.0
  %719 = vmatpush.msra.mxu0 0.0
  %720 = vmatpush.msra.mxu0 0.0
  %721 = vmatpush.msra.mxu0 0.0
  %722 = vmatpush.msra.mxu0 0.0
  %723 = vmatpush.msra.mxu0 %v710
  %724 = vmatpush.msra.mxu0 %v687
  %725 = vmatpush.msra.mxu0 %v685
  %726 = vmatpush.msra.mxu0 %v683
  %727 = vmatpush.msra.mxu0 %v681
  %728 = vmatmul.f32.gmra.mxu0 %v695
  %v729 = vpop.f32.mrf.mxu0
  %v730 = vadd.f32 0.0, %v729
  %731 = vmatmul.f32.gmra.mxu0 %v698
  %v732 = vpop.f32.mrf.mxu0
  %v733 = vadd.f32 0.0, %v732
  %734 = vmatmul.f32.gmra.mxu0 %v701
  %v735 = vpop.f32.mrf.mxu0
  %v736 = vadd.f32 0.0, %v735
  %737 = vmatmul.f32.gmra.mxu0 %v704
  %v738 = vpop.f32.mrf.mxu0
  %v739 = vadd.f32 0.0, %v738
  %740 = vmatmul.f32.gmra.mxu0 %v707
  %v741 = vpop.f32.mrf.mxu0
  %v742 = vadd.f32 0.0, %v741
  %743 = vdwg.mxu0
  %v745 = vsel %vm381, %v442, 0
  %v748 = vsel %vm381, %v457, 0
  %v751 = vsel %vm381, %v472, 0
  %v754 = vsel %vm381, %v487, 0
  %v757 = vsel %vm381, %v502, 0
  %v759 = vsel %vm709, %v332, 0
  %761 = vmatpush.msra.mxu0 0.0
  %762 = vmatpush.msra.mxu0 0.0
  %763 = vmatpush.msra.mxu0 0.0
  %764 = vmatpush.msra.mxu0 0.0
  %765 = vmatpush.msra.mxu0 0.0
  %766 = vmatpush.msra.mxu0 0.0
  %767 = vmatpush.msra.mxu0 0.0
  %768 = vmatpush.msra.mxu0 0.0
  %769 = vmatpush.msra.mxu0 0.0
  %770 = vmatpush.msra.mxu0 0.0
  %771 = vmatpush.msra.mxu0 0.0
  %772 = vmatpush.msra.mxu0 %v759
  %773 = vmatpush.msra.mxu0 %v329
  %774 = vmatpush.msra.mxu0 %v326
  %775 = vmatpush.msra.mxu0 %v323
  %776 = vmatpush.msra.mxu0 %v320
  %777 = vmatmul.f32.gmra.mxu0 %v745
  %v778 = vpop.f32.mrf.mxu0
  %v779 = vadd.f32 %v730, %v778
  %780 = vmatmul.f32.gmra.mxu0 %v748
  %v781 = vpop.f32.mrf.mxu0
  %v782 = vadd.f32 %v733, %v781
  %783 = vmatmul.f32.gmra.mxu0 %v751
  %v784 = vpop.f32.mrf.mxu0
  %v785 = vadd.f32 %v736, %v784
  %786 = vmatmul.f32.gmra.mxu0 %v754
  %v787 = vpop.f32.mrf.mxu0
  %v788 = vadd.f32 %v739, %v787
  %789 = vmatmul.f32.gmra.mxu0 %v757
  %v790 = vpop.f32.mrf.mxu0
  %v791 = vadd.f32 %v742, %v790
  %792 = vdwg.mxu0
  %793 = vrot.lane.b32.xlu0 %v288, 64
  %v794 = vpop.permute.xlu0 %793
  %795 = vrot.lane.b32.xlu0 %v291, 64
  %v796 = vpop.permute.xlu0 %795
  %797 = vrot.lane.b32.xlu0 %v294, 64
  %v798 = vpop.permute.xlu0 %797
  %799 = vrot.lane.b32.xlu0 %v297, 64
  %v800 = vpop.permute.xlu0 %799
  %801 = vrot.lane.b32.xlu0 %v300, 64
  %v802 = vpop.permute.xlu0 %801
  %v803 = vsel %vm126, %v794, 0
  %v805 = vsel %vm126, %v796, 0
  %v807 = vsel %vm126, %v798, 0
  %v809 = vsel %vm126, %v800, 0
  %v811 = vsel %vm126, %v802, 0
  %813 = vmatpush.xpose.msra.mxu0 0.0
  %814 = vmatpush.xpose.msra.mxu0 0.0
  %815 = vmatpush.xpose.msra.mxu0 0.0
  %816 = vmatpush.xpose.msra.mxu0 0.0
  %817 = vmatpush.xpose.msra.mxu0 0.0
  %818 = vmatpush.xpose.msra.mxu0 0.0
  %819 = vmatpush.xpose.msra.mxu0 0.0
  %820 = vmatpush.xpose.msra.mxu0 0.0
  %821 = vmatpush.xpose.msra.mxu0 0.0
  %822 = vmatpush.xpose.msra.mxu0 0.0
  %823 = vmatpush.xpose.msra.mxu0 0.0
  %824 = vmatpush.xpose.msra.mxu0 %v268
  %825 = vmatpush.xpose.msra.mxu0 %v265
  %826 = vmatpush.xpose.msra.mxu0 %v262
  %827 = vmatpush.xpose.msra.mxu0 %v259
  %828 = vmatpush.xpose.msra.mxu0 %v256
  %829 = vmatmul.f32.gmra.mxu0 %v803
  %v830 = vpop.f32.mrf.mxu0
  %v831 = vadd.f32 %v55, %v830
  %832 = vmatmul.f32.gmra.mxu0 %v805
  %v833 = vpop.f32.mrf.mxu0
  %v834 = vadd.f32 %v56, %v833
  %835 = vmatmul.f32.gmra.mxu0 %v807
  %v836 = vpop.f32.mrf.mxu0
  %v837 = vadd.f32 %v57, %v836
  %838 = vmatmul.f32.gmra.mxu0 %v809
  %v839 = vpop.f32.mrf.mxu0
  %v840 = vadd.f32 %v58, %v839
  %841 = vmatmul.f32.gmra.mxu0 %v811
  %v842 = vpop.f32.mrf.mxu0
  %v843 = vadd.f32 %v59, %v842
  %844 = vdwg.mxu0
  %v845 = vsel %vm381, %v831, -inf
  %846 = vmax.xlane.f32.xlu0 %v845
  %v847 = vpop.xlane.xlu0 %846
  %v848 = vsel %vm381, %v834, -inf
  %849 = vmax.xlane.f32.xlu0 %v848
  %v850 = vpop.xlane.xlu0 %849
  %v851 = vsel %vm381, %v837, -inf
  %852 = vmax.xlane.f32.xlu0 %v851
  %v853 = vpop.xlane.xlu0 %852
  %v854 = vsel %vm381, %v840, -inf
  %855 = vmax.xlane.f32.xlu0 %v854
  %v856 = vpop.xlane.xlu0 %855
  %v857 = vsel %vm394, %v843, -inf
  %858 = vmax.xlane.f32.xlu0 %v857
  %v859 = vpop.xlane.xlu0 %858
  %v860 = vsub.f32 %v831, %v847
  %v861 = vsub.f32 %v834, %v850
  %v862 = vsub.f32 %v837, %v853
  %v863 = vsub.f32 %v840, %v856
  %v864 = vsub.f32 %v843, %v859
  %v865 = vmul.f32 %v860, 1.442695
  %v866 = vpow.pop %v865
  %v867 = vmul.f32 %v861, 1.442695
  %v868 = vpow.pop %v867
  %v869 = vmul.f32 %v862, 1.442695
  %v870 = vpow.pop %v869
  %v871 = vmul.f32 %v863, 1.442695
  %v872 = vpow.pop %v871
  %v873 = vmul.f32 %v864, 1.442695
  %v874 = vpow.pop %v873
  %v875 = vsel %vm381, %v866, 0.0
  %876 = vadd.xlane.f32.xlu0 %v875
  %v877 = vpop.xlane.xlu0 %876
  %v878 = vsel %vm381, %v868, 0.0
  %879 = vadd.xlane.f32.xlu0 %v878
  %v880 = vpop.xlane.xlu0 %879
  %v881 = vsel %vm381, %v870, 0.0
  %882 = vadd.xlane.f32.xlu0 %v881
  %v883 = vpop.xlane.xlu0 %882
  %v884 = vsel %vm381, %v872, 0.0
  %885 = vadd.xlane.f32.xlu0 %v884
  %v886 = vpop.xlane.xlu0 %885
  %v887 = vsel %vm394, %v874, 0.0
  %888 = vadd.xlane.f32.xlu0 %v887
  %v889 = vpop.xlane.xlu0 %888
  %v890 = vrcp.pop %v877
  %v891 = vmul.f32 %v877, %v890
  %v892 = vsub.f32 1.0, %v891
  %v893 = vmul.f32 %v890, %v892
  %v894 = vadd.f32 %v890, %v893
  %vm895 = vweird.f32 %v877
  %vm896 = vweird.f32 %v890
  %vm897 = vmor %vm895, %vm896
  %v898 = vsel %vm897, %v890, %v894
  %v899 = vand.u32 2147483647, %v877
  %vm900 = vcmp.eq.f32.partialorder %v899, 8.507059e+37
  %v901 = vand.u32 %v877, 2147483648
  %v902 = vor.u32 1.1754944e-38, %v901
  %v903 = vsel %vm900, %v902, %v898
  %v904 = vmul.f32 %v866, %v903
  %v905 = vrcp.pop %v880
  %v906 = vmul.f32 %v880, %v905
  %v907 = vsub.f32 1.0, %v906
  %v908 = vmul.f32 %v905, %v907
  %v909 = vadd.f32 %v905, %v908
  %vm910 = vweird.f32 %v880
  %vm911 = vweird.f32 %v905
  %vm912 = vmor %vm910, %vm911
  %v913 = vsel %vm912, %v905, %v909
  %v914 = vand.u32 2147483647, %v880
  %vm915 = vcmp.eq.f32.partialorder %v914, 8.507059e+37
  %v916 = vand.u32 %v880, 2147483648
  %v917 = vor.u32 1.1754944e-38, %v916
  %v918 = vsel %vm915, %v917, %v913
  %v919 = vmul.f32 %v868, %v918
  %v920 = vrcp.pop %v883
  %v921 = vmul.f32 %v883, %v920
  %v922 = vsub.f32 1.0, %v921
  %v923 = vmul.f32 %v920, %v922
  %v924 = vadd.f32 %v920, %v923
  %vm925 = vweird.f32 %v883
  %vm926 = vweird.f32 %v920
  %vm927 = vmor %vm925, %vm926
  %v928 = vsel %vm927, %v920, %v924
  %v929 = vand.u32 2147483647, %v883
  %vm930 = vcmp.eq.f32.partialorder %v929, 8.507059e+37
  %v931 = vand.u32 %v883, 2147483648
  %v932 = vor.u32 1.1754944e-38, %v931
  %v933 = vsel %vm930, %v932, %v928
  %v934 = vmul.f32 %v870, %v933
  %v935 = vrcp.pop %v886
  %v936 = vmul.f32 %v886, %v935
  %v937 = vsub.f32 1.0, %v936
  %v938 = vmul.f32 %v935, %v937
  %v939 = vadd.f32 %v935, %v938
  %vm940 = vweird.f32 %v886
  %vm941 = vweird.f32 %v935
  %vm942 = vmor %vm940, %vm941
  %v943 = vsel %vm942, %v935, %v939
  %v944 = vand.u32 2147483647, %v886
  %vm945 = vcmp.eq.f32.partialorder %v944, 8.507059e+37
  %v946 = vand.u32 %v886, 2147483648
  %v947 = vor.u32 1.1754944e-38, %v946
  %v948 = vsel %vm945, %v947, %v943
  %v949 = vmul.f32 %v872, %v948
  %v950 = vrcp.pop %v889
  %v951 = vmul.f32 %v889, %v950
  %v952 = vsub.f32 1.0, %v951
  %v953 = vmul.f32 %v950, %v952
  %v954 = vadd.f32 %v950, %v953
  %vm955 = vweird.f32 %v889
  %vm956 = vweird.f32 %v950
  %vm957 = vmor %vm955, %vm956
  %v958 = vsel %vm957, %v950, %v954
  %v959 = vand.u32 2147483647, %v889
  %vm960 = vcmp.eq.f32.partialorder %v959, 8.507059e+37
  %v961 = vand.u32 %v889, 2147483648
  %v962 = vor.u32 1.1754944e-38, %v961
  %v963 = vsel %vm960, %v962, %v958
  %v964 = vmul.f32 %v874, %v963
  %965 = vrot.lane.b32.xlu0 %v320, 64
  %v966 = vpop.permute.xlu0 %965
  %967 = vrot.lane.b32.xlu0 %v323, 64
  %v968 = vpop.permute.xlu0 %967
  %969 = vrot.lane.b32.xlu0 %v326, 64
  %v970 = vpop.permute.xlu0 %969
  %971 = vrot.lane.b32.xlu0 %v329, 64
  %v972 = vpop.permute.xlu0 %971
  %973 = vrot.lane.b32.xlu0 %v332, 64
  %v974 = vpop.permute.xlu0 %973
  %v980 = vsel %vm381, %v904, 0
  %v983 = vsel %vm381, %v919, 0
  %v986 = vsel %vm381, %v934, 0
  %v989 = vsel %vm381, %v949, 0
  %v992 = vsel %vm381, %v964, 0
  %v994 = vsel %vm709, %v974, 0
  %996 = vmatpush.msra.mxu0 0.0
  %997 = vmatpush.msra.mxu0 0.0
  %998 = vmatpush.msra.mxu0 0.0
  %999 = vmatpush.msra.mxu0 0.0
  %1000 = vmatpush.msra.mxu0 0.0
  %1001 = vmatpush.msra.mxu0 0.0
  %1002 = vmatpush.msra.mxu0 0.0
  %1003 = vmatpush.msra.mxu0 0.0
  %1004 = vmatpush.msra.mxu0 0.0
  %1005 = vmatpush.msra.mxu0 0.0
  %1006 = vmatpush.msra.mxu0 0.0
  %1007 = vmatpush.msra.mxu0 %v994
  %1008 = vmatpush.msra.mxu0 %v972
  %1009 = vmatpush.msra.mxu0 %v970
  %1010 = vmatpush.msra.mxu0 %v968
  %1011 = vmatpush.msra.mxu0 %v966
  %1012 = vmatmul.f32.gmra.mxu0 %v980
  %v1013 = vpop.f32.mrf.mxu0
  %v1014 = vadd.f32 0.0, %v1013
  %1015 = vmatmul.f32.gmra.mxu0 %v983
  %v1016 = vpop.f32.mrf.mxu0
  %v1017 = vadd.f32 0.0, %v1016
  %1018 = vmatmul.f32.gmra.mxu0 %v986
  %v1019 = vpop.f32.mrf.mxu0
  %v1020 = vadd.f32 0.0, %v1019
  %1021 = vmatmul.f32.gmra.mxu0 %v989
  %v1022 = vpop.f32.mrf.mxu0
  %v1023 = vadd.f32 0.0, %v1022
  %1024 = vmatmul.f32.gmra.mxu0 %v992
  %v1025 = vpop.f32.mrf.mxu0
  %v1026 = vadd.f32 0.0, %v1025
  %1027 = vdwg.mxu0
  %v1028 = vadd.f32 %v779, %v1014
  %v1029 = vadd.f32 %v782, %v1017
  %v1030 = vadd.f32 %v785, %v1020
  %v1031 = vadd.f32 %v788, %v1023
  %v1032 = vadd.f32 %v791, %v1026
  %1033 = vrot.lane.b32.xlu0 %v288, 32
  %v1034 = vpop.permute.xlu0 %1033
  %1035 = vrot.lane.b32.xlu0 %v291, 32
  %v1036 = vpop.permute.xlu0 %1035
  %1037 = vrot.lane.b32.xlu0 %v294, 32
  %v1038 = vpop.permute.xlu0 %1037
  %1039 = vrot.lane.b32.xlu0 %v297, 32
  %v1040 = vpop.permute.xlu0 %1039
  %1041 = vrot.lane.b32.xlu0 %v300, 32
  %v1042 = vpop.permute.xlu0 %1041
  %v1043 = vsel %vm126, %v1034, 0
  %v1045 = vsel %vm126, %v1036, 0
  %v1047 = vsel %vm126, %v1038, 0
  %v1049 = vsel %vm126, %v1040, 0
  %v1051 = vsel %vm126, %v1042, 0
  %1053 = vmatpush.xpose.msra.mxu0 0.0
  %1054 = vmatpush.xpose.msra.mxu0 0.0
  %1055 = vmatpush.xpose.msra.mxu0 0.0
  %1056 = vmatpush.xpose.msra.mxu0 0.0
  %1057 = vmatpush.xpose.msra.mxu0 0.0
  %1058 = vmatpush.xpose.msra.mxu0 0.0
  %1059 = vmatpush.xpose.msra.mxu0 0.0
  %1060 = vmatpush.xpose.msra.mxu0 0.0
  %1061 = vmatpush.xpose.msra.mxu0 0.0
  %1062 = vmatpush.xpose.msra.mxu0 0.0
  %1063 = vmatpush.xpose.msra.mxu0 0.0
  %1064 = vmatpush.xpose.msra.mxu0 %v268
  %1065 = vmatpush.xpose.msra.mxu0 %v265
  %1066 = vmatpush.xpose.msra.mxu0 %v262
  %1067 = vmatpush.xpose.msra.mxu0 %v259
  %1068 = vmatpush.xpose.msra.mxu0 %v256
  %1069 = vmatmul.f32.gmra.mxu0 %v1043
  %v1070 = vpop.f32.mrf.mxu0
  %v1071 = vadd.f32 %v55, %v1070
  %1072 = vmatmul.f32.gmra.mxu0 %v1045
  %v1073 = vpop.f32.mrf.mxu0
  %v1074 = vadd.f32 %v56, %v1073
  %1075 = vmatmul.f32.gmra.mxu0 %v1047
  %v1076 = vpop.f32.mrf.mxu0
  %v1077 = vadd.f32 %v57, %v1076
  %1078 = vmatmul.f32.gmra.mxu0 %v1049
  %v1079 = vpop.f32.mrf.mxu0
  %v1080 = vadd.f32 %v58, %v1079
  %1081 = vmatmul.f32.gmra.mxu0 %v1051
  %v1082 = vpop.f32.mrf.mxu0
  %v1083 = vadd.f32 %v59, %v1082
  %1084 = vdwg.mxu0
  %v1085 = vsel %vm381, %v1071, -inf
  %1086 = vmax.xlane.f32.xlu0 %v1085
  %v1087 = vpop.xlane.xlu0 %1086
  %v1088 = vsel %vm381, %v1074, -inf
  %1089 = vmax.xlane.f32.xlu0 %v1088
  %v1090 = vpop.xlane.xlu0 %1089
  %v1091 = vsel %vm381, %v1077, -inf
  %1092 = vmax.xlane.f32.xlu0 %v1091
  %v1093 = vpop.xlane.xlu0 %1092
  %v1094 = vsel %vm381, %v1080, -inf
  %1095 = vmax.xlane.f32.xlu0 %v1094
  %v1096 = vpop.xlane.xlu0 %1095
  %v1097 = vsel %vm394, %v1083, -inf
  %1098 = vmax.xlane.f32.xlu0 %v1097
  %v1099 = vpop.xlane.xlu0 %1098
  %v1100 = vsub.f32 %v1071, %v1087
  %v1101 = vsub.f32 %v1074, %v1090
  %v1102 = vsub.f32 %v1077, %v1093
  %v1103 = vsub.f32 %v1080, %v1096
  %v1104 = vsub.f32 %v1083, %v1099
  %v1105 = vmul.f32 %v1100, 1.442695
  %v1106 = vpow.pop %v1105
  %v1107 = vmul.f32 %v1101, 1.442695
  %v1108 = vpow.pop %v1107
  %v1109 = vmul.f32 %v1102, 1.442695
  %v1110 = vpow.pop %v1109
  %v1111 = vmul.f32 %v1103, 1.442695
  %v1112 = vpow.pop %v1111
  %v1113 = vmul.f32 %v1104, 1.442695
  %v1114 = vpow.pop %v1113
  %v1115 = vsel %vm381, %v1106, 0.0
  %1116 = vadd.xlane.f32.xlu0 %v1115
  %v1117 = vpop.xlane.xlu0 %1116
  %v1118 = vsel %vm381, %v1108, 0.0
  %1119 = vadd.xlane.f32.xlu0 %v1118
  %v1120 = vpop.xlane.xlu0 %1119
  %v1121 = vsel %vm381, %v1110, 0.0
  %1122 = vadd.xlane.f32.xlu0 %v1121
  %v1123 = vpop.xlane.xlu0 %1122
  %v1124 = vsel %vm381, %v1112, 0.0
  %1125 = vadd.xlane.f32.xlu0 %v1124
  %v1126 = vpop.xlane.xlu0 %1125
  %v1127 = vsel %vm394, %v1114, 0.0
  %1128 = vadd.xlane.f32.xlu0 %v1127
  %v1129 = vpop.xlane.xlu0 %1128
  %v1130 = vrcp.pop %v1117
  %v1131 = vmul.f32 %v1117, %v1130
  %v1132 = vsub.f32 1.0, %v1131
  %v1133 = vmul.f32 %v1130, %v1132
  %v1134 = vadd.f32 %v1130, %v1133
  %vm1135 = vweird.f32 %v1117
  %vm1136 = vweird.f32 %v1130
  %vm1137 = vmor %vm1135, %vm1136
  %v1138 = vsel %vm1137, %v1130, %v1134
  %v1139 = vand.u32 2147483647, %v1117
  %vm1140 = vcmp.eq.f32.partialorder %v1139, 8.507059e+37
  %v1141 = vand.u32 %v1117, 2147483648
  %v1142 = vor.u32 1.1754944e-38, %v1141
  %v1143 = vsel %vm1140, %v1142, %v1138
  %v1144 = vmul.f32 %v1106, %v1143
  %v1145 = vrcp.pop %v1120
  %v1146 = vmul.f32 %v1120, %v1145
  %v1147 = vsub.f32 1.0, %v1146
  %v1148 = vmul.f32 %v1145, %v1147
  %v1149 = vadd.f32 %v1145, %v1148
  %vm1150 = vweird.f32 %v1120
  %vm1151 = vweird.f32 %v1145
  %vm1152 = vmor %vm1150, %vm1151
  %v1153 = vsel %vm1152, %v1145, %v1149
  %v1154 = vand.u32 2147483647, %v1120
  %vm1155 = vcmp.eq.f32.partialorder %v1154, 8.507059e+37
  %v1156 = vand.u32 %v1120, 2147483648
  %v1157 = vor.u32 1.1754944e-38, %v1156
  %v1158 = vsel %vm1155, %v1157, %v1153
  %v1159 = vmul.f32 %v1108, %v1158
  %v1160 = vrcp.pop %v1123
  %v1161 = vmul.f32 %v1123, %v1160
  %v1162 = vsub.f32 1.0, %v1161
  %v1163 = vmul.f32 %v1160, %v1162
  %v1164 = vadd.f32 %v1160, %v1163
  %vm1165 = vweird.f32 %v1123
  %vm1166 = vweird.f32 %v1160
  %vm1167 = vmor %vm1165, %vm1166
  %v1168 = vsel %vm1167, %v1160, %v1164
  %v1169 = vand.u32 2147483647, %v1123
  %vm1170 = vcmp.eq.f32.partialorder %v1169, 8.507059e+37
  %v1171 = vand.u32 %v1123, 2147483648
  %v1172 = vor.u32 1.1754944e-38, %v1171
  %v1173 = vsel %vm1170, %v1172, %v1168
  %v1174 = vmul.f32 %v1110, %v1173
  %v1175 = vrcp.pop %v1126
  %v1176 = vmul.f32 %v1126, %v1175
  %v1177 = vsub.f32 1.0, %v1176
  %v1178 = vmul.f32 %v1175, %v1177
  %v1179 = vadd.f32 %v1175, %v1178
  %vm1180 = vweird.f32 %v1126
  %vm1181 = vweird.f32 %v1175
  %vm1182 = vmor %vm1180, %vm1181
  %v1183 = vsel %vm1182, %v1175, %v1179
  %v1184 = vand.u32 2147483647, %v1126
  %vm1185 = vcmp.eq.f32.partialorder %v1184, 8.507059e+37
  %v1186 = vand.u32 %v1126, 2147483648
  %v1187 = vor.u32 1.1754944e-38, %v1186
  %v1188 = vsel %vm1185, %v1187, %v1183
  %v1189 = vmul.f32 %v1112, %v1188
  %v1190 = vrcp.pop %v1129
  %v1191 = vmul.f32 %v1129, %v1190
  %v1192 = vsub.f32 1.0, %v1191
  %v1193 = vmul.f32 %v1190, %v1192
  %v1194 = vadd.f32 %v1190, %v1193
  %vm1195 = vweird.f32 %v1129
  %vm1196 = vweird.f32 %v1190
  %vm1197 = vmor %vm1195, %vm1196
  %v1198 = vsel %vm1197, %v1190, %v1194
  %v1199 = vand.u32 2147483647, %v1129
  %vm1200 = vcmp.eq.f32.partialorder %v1199, 8.507059e+37
  %v1201 = vand.u32 %v1129, 2147483648
  %v1202 = vor.u32 1.1754944e-38, %v1201
  %v1203 = vsel %vm1200, %v1202, %v1198
  %v1204 = vmul.f32 %v1114, %v1203
  %1205 = vrot.lane.b32.xlu0 %v320, 32
  %v1206 = vpop.permute.xlu0 %1205
  %1207 = vrot.lane.b32.xlu0 %v323, 32
  %v1208 = vpop.permute.xlu0 %1207
  %1209 = vrot.lane.b32.xlu0 %v326, 32
  %v1210 = vpop.permute.xlu0 %1209
  %1211 = vrot.lane.b32.xlu0 %v329, 32
  %v1212 = vpop.permute.xlu0 %1211
  %1213 = vrot.lane.b32.xlu0 %v332, 32
  %v1214 = vpop.permute.xlu0 %1213
  %v1220 = vsel %vm381, %v1144, 0
  %v1223 = vsel %vm381, %v1159, 0
  %v1226 = vsel %vm381, %v1174, 0
  %v1229 = vsel %vm381, %v1189, 0
  %v1232 = vsel %vm381, %v1204, 0
  %v1234 = vsel %vm709, %v1214, 0
  %1236 = vmatpush.msra.mxu0 0.0
  %1237 = vmatpush.msra.mxu0 0.0
  %1238 = vmatpush.msra.mxu0 0.0
  %1239 = vmatpush.msra.mxu0 0.0
  %1240 = vmatpush.msra.mxu0 0.0
  %1241 = vmatpush.msra.mxu0 0.0
  %1242 = vmatpush.msra.mxu0 0.0
  %1243 = vmatpush.msra.mxu0 0.0
  %1244 = vmatpush.msra.mxu0 0.0
  %1245 = vmatpush.msra.mxu0 0.0
  %1246 = vmatpush.msra.mxu0 0.0
  %1247 = vmatpush.msra.mxu0 %v1234
  %1248 = vmatpush.msra.mxu0 %v1212
  %1249 = vmatpush.msra.mxu0 %v1210
  %1250 = vmatpush.msra.mxu0 %v1208
  %1251 = vmatpush.msra.mxu0 %v1206
  %1252 = vmatmul.f32.gmra.mxu0 %v1220
  %v1253 = vpop.f32.mrf.mxu0
  %v1254 = vadd.f32 0.0, %v1253
  %1255 = vmatmul.f32.gmra.mxu0 %v1223
  %v1256 = vpop.f32.mrf.mxu0
  %v1257 = vadd.f32 0.0, %v1256
  %1258 = vmatmul.f32.gmra.mxu0 %v1226
  %v1259 = vpop.f32.mrf.mxu0
  %v1260 = vadd.f32 0.0, %v1259
  %1261 = vmatmul.f32.gmra.mxu0 %v1229
  %v1262 = vpop.f32.mrf.mxu0
  %v1263 = vadd.f32 0.0, %v1262
  %1264 = vmatmul.f32.gmra.mxu0 %v1232
  %v1265 = vpop.f32.mrf.mxu0
  %v1266 = vadd.f32 0.0, %v1265
  %1267 = vdwg.mxu0
  %v1268 = vadd.f32 %v1028, %v1254
  %v1269 = vadd.f32 %v1029, %v1257
  %v1270 = vadd.f32 %v1030, %v1260
  %v1271 = vadd.f32 %v1031, %v1263
  %v1272 = vadd.f32 %v1032, %v1266
  %v1273 = vadd.f32 %v112, %v1268
  %v1274 = vadd.f32 %v115, %v1269
  %v1275 = vadd.f32 %v118, %v1270
  %v1276 = vadd.f32 %v121, %v1271
  %v1277 = vadd.f32 %v124, %v1272
  %v1278 = vadd.f32 %v1273, %v65
  %v1279 = vadd.f32 %v1274, %v65
  %v1280 = vadd.f32 %v1275, %v65
  %v1281 = vadd.f32 %v1276, %v65
  %v1282 = vadd.f32 %v1277, %v65
  %v1283 = vsel %vm126, %v1278, 0.0
  %1284 = vadd.xlane.f32.xlu0 %v1283
  %v1285 = vpop.xlane.xlu0 %1284
  %v1286 = vsel %vm126, %v1279, 0.0
  %1287 = vadd.xlane.f32.xlu0 %v1286
  %v1288 = vpop.xlane.xlu0 %1287
  %v1289 = vsel %vm126, %v1280, 0.0
  %1290 = vadd.xlane.f32.xlu0 %v1289
  %v1291 = vpop.xlane.xlu0 %1290
  %v1292 = vsel %vm126, %v1281, 0.0
  %1293 = vadd.xlane.f32.xlu0 %v1292
  %v1294 = vpop.xlane.xlu0 %1293
  %v1295 = vsel %vm139, %v1282, 0.0
  %1296 = vadd.xlane.f32.xlu0 %v1295
  %v1297 = vpop.xlane.xlu0 %1296
  %v1298 = vmul.f32 %v1285, %v149
  %v1299 = vmul.f32 %v1288, %v149
  %v1300 = vmul.f32 %v1291, %v149
  %v1301 = vmul.f32 %v1294, %v149
  %v1302 = vmul.f32 %v1297, %v149
  %v1303 = vsub.f32 %v1278, %v1298
  %v1304 = vsub.f32 %v1279, %v1299
  %v1305 = vsub.f32 %v1280, %v1300
  %v1306 = vsub.f32 %v1281, %v1301
  %v1307 = vsub.f32 %v1282, %v1302
  %v1308 = vmul.f32 %v1303, %v1303
  %v1309 = vmul.f32 %v1304, %v1304
  %v1310 = vmul.f32 %v1305, %v1305
  %v1311 = vmul.f32 %v1306, %v1306
  %v1312 = vmul.f32 %v1307, %v1307
  %v1313 = vsel %vm126, %v1308, 0.0
  %1314 = vadd.xlane.f32.xlu0 %v1313
  %v1315 = vpop.xlane.xlu0 %1314
  %v1316 = vsel %vm126, %v1309, 0.0
  %1317 = vadd.xlane.f32.xlu0 %v1316
  %v1318 = vpop.xlane.xlu0 %1317
  %v1319 = vsel %vm126, %v1310, 0.0
  %1320 = vadd.xlane.f32.xlu0 %v1319
  %v1321 = vpop.xlane.xlu0 %1320
  %v1322 = vsel %vm126, %v1311, 0.0
  %1323 = vadd.xlane.f32.xlu0 %v1322
  %v1324 = vpop.xlane.xlu0 %1323
  %v1325 = vsel %vm139, %v1312, 0.0
  %1326 = vadd.xlane.f32.xlu0 %v1325
  %v1327 = vpop.xlane.xlu0 %1326
  %v1328 = vmul.f32 %v1315, %v149
  %v1329 = vmul.f32 %v1318, %v149
  %v1330 = vmul.f32 %v1321, %v149
  %v1331 = vmul.f32 %v1324, %v149
  %v1332 = vmul.f32 %v1327, %v149
  %v1333 = vadd.f32 %v1328, 1e-05
  %v1334 = vadd.f32 %v1329, 1e-05
  %v1335 = vadd.f32 %v1330, 1e-05
  %v1336 = vadd.f32 %v1331, 1e-05
  %v1337 = vadd.f32 %v1332, 1e-05
  %v1338 = vrsqrt.pop %v1333
  %v1339 = vmul.f32 %v1338, %v1333
  %v1340 = vmul.f32 %v1339, %v1338
  %v1341 = vmul.f32 0.5, %v1340
  %v1342 = vsub.f32 1.5, %v1341
  %v1343 = vmul.f32 %v1338, %v1342
  %vm1344 = vweird.f32 %v1333
  %vm1345 = vweird.f32 %v1338
  %vm1346 = vmor %vm1344, %vm1345
  %v1347 = vsel %vm1346, %v1338, %v1343
  %v1348 = vrsqrt.pop %v1334
  %v1349 = vmul.f32 %v1348, %v1334
  %v1350 = vmul.f32 %v1349, %v1348
  %v1351 = vmul.f32 0.5, %v1350
  %v1352 = vsub.f32 1.5, %v1351
  %v1353 = vmul.f32 %v1348, %v1352
  %vm1354 = vweird.f32 %v1334
  %vm1355 = vweird.f32 %v1348
  %vm1356 = vmor %vm1354, %vm1355
  %v1357 = vsel %vm1356, %v1348, %v1353
  %v1358 = vrsqrt.pop %v1335
  %v1359 = vmul.f32 %v1358, %v1335
  %v1360 = vmul.f32 %v1359, %v1358
  %v1361 = vmul.f32 0.5, %v1360
  %v1362 = vsub.f32 1.5, %v1361
  %v1363 = vmul.f32 %v1358, %v1362
  %vm1364 = vweird.f32 %v1335
  %vm1365 = vweird.f32 %v1358
  %vm1366 = vmor %vm1364, %vm1365
  %v1367 = vsel %vm1366, %v1358, %v1363
  %v1368 = vrsqrt.pop %v1336
  %v1369 = vmul.f32 %v1368, %v1336
  %v1370 = vmul.f32 %v1369, %v1368
  %v1371 = vmul.f32 0.5, %v1370
  %v1372 = vsub.f32 1.5, %v1371
  %v1373 = vmul.f32 %v1368, %v1372
  %vm1374 = vweird.f32 %v1336
  %vm1375 = vweird.f32 %v1368
  %vm1376 = vmor %vm1374, %vm1375
  %v1377 = vsel %vm1376, %v1368, %v1373
  %v1378 = vrsqrt.pop %v1337
  %v1379 = vmul.f32 %v1378, %v1337
  %v1380 = vmul.f32 %v1379, %v1378
  %v1381 = vmul.f32 0.5, %v1380
  %v1382 = vsub.f32 1.5, %v1381
  %v1383 = vmul.f32 %v1378, %v1382
  %vm1384 = vweird.f32 %v1337
  %vm1385 = vweird.f32 %v1378
  %vm1386 = vmor %vm1384, %vm1385
  %v1387 = vsel %vm1386, %v1378, %v1383
  %v1388 = vmul.f32 %v1303, %v1347
  %v1389 = vmul.f32 %v1304, %v1357
  %v1390 = vmul.f32 %v1305, %v1367
  %v1391 = vmul.f32 %v1306, %v1377
  %v1392 = vmul.f32 %v1307, %v1387
  %v1393 = vmul.f32 %v1388, %v63
  %v1394 = vmul.f32 %v1389, %v63
  %v1395 = vmul.f32 %v1390, %v63
  %v1396 = vmul.f32 %v1391, %v63
  %v1397 = vmul.f32 %v1392, %v63
  %v1398 = vadd.f32 %v1393, %v64
  %v1399 = vadd.f32 %v1394, %v64
  %v1400 = vadd.f32 %v1395, %v64
  %v1401 = vadd.f32 %v1396, %v64
  %v1402 = vadd.f32 %v1397, %v64
  %v1404 = vsel %vm126, %v1398, 0
  %v1407 = vsel %vm126, %v1399, 0
  %v1410 = vsel %vm126, %v1400, 0
  %v1413 = vsel %vm126, %v1401, 0
  %v1416 = vsel %vm126, %v1402, 0
  %1418 = vmatpush.msra.mxu0 0.0
  %1419 = vmatpush.msra.mxu0 0.0
  %1420 = vmatpush.msra.mxu0 0.0
  %1421 = vmatpush.msra.mxu0 0.0
  %1422 = vmatpush.msra.mxu0 0.0
  %1423 = vmatpush.msra.mxu0 0.0
  %1424 = vmatpush.msra.mxu0 0.0
  %1425 = vmatpush.msra.mxu0 0.0
  %1426 = vmatpush.msra.mxu0 0.0
  %1427 = vmatpush.msra.mxu0 0.0
  %1428 = vmatpush.msra.mxu0 0.0
  %1429 = vmatpush.msra.mxu0 0.0
  %1430 = vmatpush.msra.mxu0 %v38
  %1431 = vmatpush.msra.mxu0 %v37
  %1432 = vmatpush.msra.mxu0 %v36
  %1433 = vmatpush.msra.mxu0 %v35
  %1434 = vmatmul.f32.gmra.mxu0 %v1404
  %v1435 = vpop.f32.mrf.mxu0
  %v1436 = vadd.f32 %v67, %v1435
  %1437 = vmatmul.f32.gmra.mxu0 %v1407
  %v1438 = vpop.f32.mrf.mxu0
  %v1439 = vadd.f32 %v67, %v1438
  %1440 = vmatmul.f32.gmra.mxu0 %v1410
  %v1441 = vpop.f32.mrf.mxu0
  %v1442 = vadd.f32 %v67, %v1441
  %1443 = vmatmul.f32.gmra.mxu0 %v1413
  %v1444 = vpop.f32.mrf.mxu0
  %v1445 = vadd.f32 %v67, %v1444
  %1446 = vmatmul.f32.gmra.mxu0 %v1416
  %v1447 = vpop.f32.mrf.mxu0
  %v1448 = vadd.f32 %v67, %v1447
  %1449 = vdwg.mxu0
  %v1450 = vmul.f32 %v1436, 0.5
  %v1451 = vmul.f32 %v1439, 0.5
  %v1452 = vmul.f32 %v1442, 0.5
  %v1453 = vmul.f32 %v1445, 0.5
  %v1454 = vmul.f32 %v1448, 0.5
  %v1455 = vmul.f32 %v1436, 0.70710677
  %v1456 = vmul.f32 %v1439, 0.70710677
  %v1457 = vmul.f32 %v1442, 0.70710677
  %v1458 = vmul.f32 %v1445, 0.70710677
  %v1459 = vmul.f32 %v1448, 0.70710677
  %v1460 = vmax.f32 %v1455, -4.0
  %v1461 = vmax.f32 %v1456, -4.0
  %v1462 = vmax.f32 %v1457, -4.0
  %v1463 = vmax.f32 %v1458, -4.0
  %v1464 = vmax.f32 %v1459, -4.0
  %v1465 = vmin.f32 %v1460, 4.0
  %v1466 = vmin.f32 %v1461, 4.0
  %v1467 = vmin.f32 %v1462, 4.0
  %v1468 = vmin.f32 %v1463, 4.0
  %v1469 = vmin.f32 %v1464, 4.0
  %v1470 = vmul.f32 %v1465, %v1465
  %v1471 = vmul.f32 %v1466, %v1466
  %v1472 = vmul.f32 %v1467, %v1467
  %v1473 = vmul.f32 %v1468, %v1468
  %v1474 = vmul.f32 %v1469, %v1469
  %v1475 = vmul.f32 %v1470, -2.7261424e-10
  %v1476 = vmul.f32 %v1471, -2.7261424e-10
  %v1477 = vmul.f32 %v1472, -2.7261424e-10
  %v1478 = vmul.f32 %v1473, -2.7261424e-10
  %v1479 = vmul.f32 %v1474, -2.7261424e-10
  %v1480 = vadd.f32 %v1475, 2.7706815e-08
  %v1481 = vadd.f32 %v1476, 2.7706815e-08
  %v1482 = vadd.f32 %v1477, 2.7706815e-08
  %v1483 = vadd.f32 %v1478, 2.7706815e-08
  %v1484 = vadd.f32 %v1479, 2.7706815e-08
  %v1485 = vmul.f32 %v1480, %v1470
  %v1486 = vmul.f32 %v1481, %v1471
  %v1487 = vmul.f32 %v1482, %v1472
  %v1488 = vmul.f32 %v1483, %v1473
  %v1489 = vmul.f32 %v1484, %v1474
  %v1490 = vadd.f32 %v1485, -2.101024e-06
  %v1491 = vadd.f32 %v1486, -2.101024e-06
  %v1492 = vadd.f32 %v1487, -2.101024e-06
  %v1493 = vadd.f32 %v1488, -2.101024e-06
  %v1494 = vadd.f32 %v1489, -2.101024e-06
  %v1495 = vmul.f32 %v1490, %v1470
  %v1496 = vmul.f32 %v1491, %v1471
  %v1497 = vmul.f32 %v1492, %v1472
  %v1498 = vmul.f32 %v1493, %v1473
  %v1499 = vmul.f32 %v1494, %v1474
  %v1500 = vadd.f32 %v1495, -5.6925062e-05
  %v1501 = vadd.f32 %v1496, -5.6925062e-05
  %v1502 = vadd.f32 %v1497, -5.6925062e-05
  %v1503 = vadd.f32 %v1498, -5.6925062e-05
  %v1504 = vadd.f32 %v1499, -5.6925062e-05
  %v1505 = vmul.f32 %v1500, %v1470
  %v1506 = vmul.f32 %v1501, %v1471
  %v1507 = vmul.f32 %v1502, %v1472
  %v1508 = vmul.f32 %v1503, %v1473
  %v1509 = vmul.f32 %v1504, %v1474
  %v1510 = vadd.f32 %v1505, -0.00073499064
  %v1511 = vadd.f32 %v1506, -0.00073499064
  %v1512 = vadd.f32 %v1507, -0.00073499064
  %v1513 = vadd.f32 %v1508, -0.00073499064
  %v1514 = vadd.f32 %v1509, -0.00073499064
  %v1515 = vmul.f32 %v1510, %v1470
  %v1516 = vmul.f32 %v1511, %v1471
  %v1517 = vmul.f32 %v1512, %v1472
  %v1518 = vmul.f32 %v1513, %v1473
  %v1519 = vmul.f32 %v1514, %v1474
  %v1520 = vadd.f32 %v1515, -0.0029546
  %v1521 = vadd.f32 %v1516, -0.0029546
  %v1522 = vadd.f32 %v1517, -0.0029546
  %v1523 = vadd.f32 %v1518, -0.0029546
  %v1524 = vadd.f32 %v1519, -0.0029546
  %v1525 = vmul.f32 %v1520, %v1470
  %v1526 = vmul.f32 %v1521, %v1471
  %v1527 = vmul.f32 %v1522, %v1472
  %v1528 = vmul.f32 %v1523, %v1473
  %v1529 = vmul.f32 %v1524, %v1474
  %v1530 = vadd.f32 %v1525, -0.016096033
  %v1531 = vadd.f32 %v1526, -0.016096033
  %v1532 = vadd.f32 %v1527, -0.016096033
  %v1533 = vadd.f32 %v1528, -0.016096033
  %v1534 = vadd.f32 %v1529, -0.016096033
  %v1535 = vmul.f32 %v1530, %v1465
  %v1536 = vmul.f32 %v1531, %v1466
  %v1537 = vmul.f32 %v1532, %v1467
  %v1538 = vmul.f32 %v1533, %v1468
  %v1539 = vmul.f32 %v1534, %v1469
  %v1540 = vmul.f32 %v1470, -1.45660715e-05
  %v1541 = vmul.f32 %v1471, -1.45660715e-05
  %v1542 = vmul.f32 %v1472, -1.45660715e-05
  %v1543 = vmul.f32 %v1473, -1.45660715e-05
  %v1544 = vmul.f32 %v1474, -1.45660715e-05
  %v1545 = vadd.f32 %v1540, -0.00021337405
  %v1546 = vadd.f32 %v1541, -0.00021337405
  %v1547 = vadd.f32 %v1542, -0.00021337405
  %v1548 = vadd.f32 %v1543, -0.00021337405
  %v1549 = vadd.f32 %v1544, -0.00021337405
  %v1550 = vmul.f32 %v1545, %v1470
  %v1551 = vmul.f32 %v1546, %v1471
  %v1552 = vmul.f32 %v1547, %v1472
  %v1553 = vmul.f32 %v1548, %v1473
  %v1554 = vmul.f32 %v1549, %v1474
  %v1555 = vadd.f32 %v1550, -0.001682827
  %v1556 = vadd.f32 %v1551, -0.001682827
  %v1557 = vadd.f32 %v1552, -0.001682827
  %v1558 = vadd.f32 %v1553, -0.001682827
  %v1559 = vadd.f32 %v1554, -0.001682827
  %v1560 = vmul.f32 %v1555, %v1470
  %v1561 = vmul.f32 %v1556, %v1471
  %v1562 = vmul.f32 %v1557, %v1472
  %v1563 = vmul.f32 %v1558, %v1473
  %v1564 = vmul.f32 %v1559, %v1474
  %v1565 = vadd.f32 %v1560, -0.0073733293
  %v1566 = vadd.f32 %v1561, -0.0073733293
  %v1567 = vadd.f32 %v1562, -0.0073733293
  %v1568 = vadd.f32 %v1563, -0.0073733293
  %v1569 = vadd.f32 %v1564, -0.0073733293
  %v1570 = vmul.f32 %v1565, %v1470
  %v1571 = vmul.f32 %v1566, %v1471
  %v1572 = vmul.f32 %v1567, %v1472
  %v1573 = vmul.f32 %v1568, %v1473
  %v1574 = vmul.f32 %v1569, %v1474
  %v1575 = vadd.f32 %v1570, -0.014264739
  %v1576 = vadd.f32 %v1571, -0.014264739
  %v1577 = vadd.f32 %v1572, -0.014264739
  %v1578 = vadd.f32 %v1573, -0.014264739
  %v1579 = vadd.f32 %v1574, -0.014264739
  %v1580 = vrcp.pop %v1575
  %v1581 = vmul.f32 %v1575, %v1580
  %v1582 = vsub.f32 1.0, %v1581
  %v1583 = vmul.f32 %v1580, %v1582
  %v1584 = vadd.f32 %v1580, %v1583
  %vm1585 = vweird.f32 %v1575
  %vm1586 = vweird.f32 %v1580
  %vm1587 = vmor %vm1585, %vm1586
  %v1588 = vsel %vm1587, %v1580, %v1584
  %v1589 = vand.u32 2147483647, %v1575
  %vm1590 = vcmp.eq.f32.partialorder %v1589, 8.507059e+37
  %v1591 = vand.u32 %v1575, 2147483648
  %v1592 = vor.u32 1.1754944e-38, %v1591
  %v1593 = vsel %vm1590, %v1592, %v1588
  %v1594 = vmul.f32 %v1535, %v1593
  %v1595 = vrcp.pop %v1576
  %v1596 = vmul.f32 %v1576, %v1595
  %v1597 = vsub.f32 1.0, %v1596
  %v1598 = vmul.f32 %v1595, %v1597
  %v1599 = vadd.f32 %v1595, %v1598
  %vm1600 = vweird.f32 %v1576
  %vm1601 = vweird.f32 %v1595
  %vm1602 = vmor %vm1600, %vm1601
  %v1603 = vsel %vm1602, %v1595, %v1599
  %v1604 = vand.u32 2147483647, %v1576
  %vm1605 = vcmp.eq.f32.partialorder %v1604, 8.507059e+37
  %v1606 = vand.u32 %v1576, 2147483648
  %v1607 = vor.u32 1.1754944e-38, %v1606
  %v1608 = vsel %vm1605, %v1607, %v1603
  %v1609 = vmul.f32 %v1536, %v1608
  %v1610 = vrcp.pop %v1577
  %v1611 = vmul.f32 %v1577, %v1610
  %v1612 = vsub.f32 1.0, %v1611
  %v1613 = vmul.f32 %v1610, %v1612
  %v1614 = vadd.f32 %v1610, %v1613
  %vm1615 = vweird.f32 %v1577
  %vm1616 = vweird.f32 %v1610
  %vm1617 = vmor %vm1615, %vm1616
  %v1618 = vsel %vm1617, %v1610, %v1614
  %v1619 = vand.u32 2147483647, %v1577
  %vm1620 = vcmp.eq.f32.partialorder %v1619, 8.507059e+37
  %v1621 = vand.u32 %v1577, 2147483648
  %v1622 = vor.u32 1.1754944e-38, %v1621
  %v1623 = vsel %vm1620, %v1622, %v1618
  %v1624 = vmul.f32 %v1537, %v1623
  %v1625 = vrcp.pop %v1578
  %v1626 = vmul.f32 %v1578, %v1625
  %v1627 = vsub.f32 1.0, %v1626
  %v1628 = vmul.f32 %v1625, %v1627
  %v1629 = vadd.f32 %v1625, %v1628
  %vm1630 = vweird.f32 %v1578
  %vm1631 = vweird.f32 %v1625
  %vm1632 = vmor %vm1630, %vm1631
  %v1633 = vsel %vm1632, %v1625, %v1629
  %v1634 = vand.u32 2147483647, %v1578
  %vm1635 = vcmp.eq.f32.partialorder %v1634, 8.507059e+37
  %v1636 = vand.u32 %v1578, 2147483648
  %v1637 = vor.u32 1.1754944e-38, %v1636
  %v1638 = vsel %vm1635, %v1637, %v1633
  %v1639 = vmul.f32 %v1538, %v1638
  %v1640 = vrcp.pop %v1579
  %v1641 = vmul.f32 %v1579, %v1640
  %v1642 = vsub.f32 1.0, %v1641
  %v1643 = vmul.f32 %v1640, %v1642
  %v1644 = vadd.f32 %v1640, %v1643
  %vm1645 = vweird.f32 %v1579
  %vm1646 = vweird.f32 %v1640
  %vm1647 = vmor %vm1645, %vm1646
  %v1648 = vsel %vm1647, %v1640, %v1644
  %v1649 = vand.u32 2147483647, %v1579
  %vm1650 = vcmp.eq.f32.partialorder %v1649, 8.507059e+37
  %v1651 = vand.u32 %v1579, 2147483648
  %v1652 = vor.u32 1.1754944e-38, %v1651
  %v1653 = vsel %vm1650, %v1652, %v1648
  %v1654 = vmul.f32 %v1539, %v1653
  %v1655 = vadd.f32 %v1594, 1.0
  %v1656 = vadd.f32 %v1609, 1.0
  %v1657 = vadd.f32 %v1624, 1.0
  %v1658 = vadd.f32 %v1639, 1.0
  %v1659 = vadd.f32 %v1654, 1.0
  %v1660 = vmul.f32 %v1450, %v1655
  %v1661 = vmul.f32 %v1451, %v1656
  %v1662 = vmul.f32 %v1452, %v1657
  %v1663 = vmul.f32 %v1453, %v1658
  %v1664 = vmul.f32 %v1454, %v1659
  %vm1665 = vcmask 523264
  %v1667 = vsel %vm1665, %v1660, 0
  %v1670 = vsel %vm1665, %v1661, 0
  %v1673 = vsel %vm1665, %v1662, 0
  %v1676 = vsel %vm1665, %v1663, 0
  %v1679 = vsel %vm1665, %v1664, 0
  %1681 = vmatpush.msra.mxu0 0.0
  %1682 = vmatpush.msra.mxu0 0.0
  %1683 = vmatpush.msra.mxu0 0.0
  %1684 = vmatpush.msra.mxu0 0.0
  %1685 = vmatpush.msra.mxu0 0.0
  %1686 = vmatpush.msra.mxu0 0.0
  %1687 = vmatpush.msra.mxu0 0.0
  %1688 = vmatpush.msra.mxu0 0.0
  %1689 = vmatpush.msra.mxu0 %v46
  %1690 = vmatpush.msra.mxu0 %v45
  %1691 = vmatpush.msra.mxu0 %v44
  %1692 = vmatpush.msra.mxu0 %v43
  %1693 = vmatpush.msra.mxu0 %v42
  %1694 = vmatpush.msra.mxu0 %v41
  %1695 = vmatpush.msra.mxu0 %v40
  %1696 = vmatpush.msra.mxu0 %v39
  %1697 = vmatmul.f32.gmra.mxu0 %v1667
  %v1698 = vpop.f32.mrf.mxu0
  %v1699 = vadd.f32 0.0, %v1698
  %1700 = vmatmul.f32.gmra.mxu0 %v1670
  %v1701 = vpop.f32.mrf.mxu0
  %v1702 = vadd.f32 0.0, %v1701
  %1703 = vmatmul.f32.gmra.mxu0 %v1673
  %v1704 = vpop.f32.mrf.mxu0
  %v1705 = vadd.f32 0.0, %v1704
  %1706 = vmatmul.f32.gmra.mxu0 %v1676
  %v1707 = vpop.f32.mrf.mxu0
  %v1708 = vadd.f32 0.0, %v1707
  %1709 = vmatmul.f32.gmra.mxu0 %v1679
  %v1710 = vpop.f32.mrf.mxu0
  %v1711 = vadd.f32 0.0, %v1710
  %1712 = vdwg.mxu0
  %v1713 = vadd.f32 %v1278, %v1699
  %v1714 = vadd.f32 %v1279, %v1702
  %v1715 = vadd.f32 %v1280, %v1705
  %v1716 = vadd.f32 %v1281, %v1708
  %v1717 = vadd.f32 %v1282, %v1711
  %v1718 = vadd.f32 %v1713, %v66
  %v1719 = vadd.f32 %v1714, %v66
  %v1720 = vadd.f32 %v1715, %v66
  %v1721 = vadd.f32 %v1716, %v66
  %v1722 = vadd.f32 %v1717, %v66
  %v1723 = vsel %vm126, %v1718, 0.0
  %1724 = vadd.xlane.f32.xlu0 %v1723
  %v1725 = vpop.xlane.xlu0 %1724
  %v1726 = vsel %vm126, %v1719, 0.0
  %1727 = vadd.xlane.f32.xlu0 %v1726
  %v1728 = vpop.xlane.xlu0 %1727
  %v1729 = vsel %vm126, %v1720, 0.0
  %1730 = vadd.xlane.f32.xlu0 %v1729
  %v1731 = vpop.xlane.xlu0 %1730
  %v1732 = vsel %vm126, %v1721, 0.0
  %1733 = vadd.xlane.f32.xlu0 %v1732
  %v1734 = vpop.xlane.xlu0 %1733
  %v1735 = vsel %vm139, %v1722, 0.0
  %1736 = vadd.xlane.f32.xlu0 %v1735
  %v1737 = vpop.xlane.xlu0 %1736
  %v1738 = vmul.f32 %v1725, %v149
  %v1739 = vmul.f32 %v1728, %v149
  %v1740 = vmul.f32 %v1731, %v149
  %v1741 = vmul.f32 %v1734, %v149
  %v1742 = vmul.f32 %v1737, %v149
  %v1743 = vsub.f32 %v1718, %v1738
  %v1744 = vsub.f32 %v1719, %v1739
  %v1745 = vsub.f32 %v1720, %v1740
  %v1746 = vsub.f32 %v1721, %v1741
  %v1747 = vsub.f32 %v1722, %v1742
  %v1748 = vmul.f32 %v1743, %v1743
  %v1749 = vmul.f32 %v1744, %v1744
  %v1750 = vmul.f32 %v1745, %v1745
  %v1751 = vmul.f32 %v1746, %v1746
  %v1752 = vmul.f32 %v1747, %v1747
  %v1753 = vsel %vm126, %v1748, 0.0
  %1754 = vadd.xlane.f32.xlu0 %v1753
  %v1755 = vpop.xlane.xlu0 %1754
  %v1756 = vsel %vm126, %v1749, 0.0
  %1757 = vadd.xlane.f32.xlu0 %v1756
  %v1758 = vpop.xlane.xlu0 %1757
  %v1759 = vsel %vm126, %v1750, 0.0
  %1760 = vadd.xlane.f32.xlu0 %v1759
  %v1761 = vpop.xlane.xlu0 %1760
  %v1762 = vsel %vm126, %v1751, 0.0
  %1763 = vadd.xlane.f32.xlu0 %v1762
  %v1764 = vpop.xlane.xlu0 %1763
  %v1765 = vsel %vm139, %v1752, 0.0
  %1766 = vadd.xlane.f32.xlu0 %v1765
  %v1767 = vpop.xlane.xlu0 %1766
  %v1768 = vmul.f32 %v1755, %v149
  %v1769 = vmul.f32 %v1758, %v149
  %v1770 = vmul.f32 %v1761, %v149
  %v1771 = vmul.f32 %v1764, %v149
  %v1772 = vmul.f32 %v1767, %v149
  %v1773 = vadd.f32 %v1768, 1e-05
  %v1774 = vadd.f32 %v1769, 1e-05
  %v1775 = vadd.f32 %v1770, 1e-05
  %v1776 = vadd.f32 %v1771, 1e-05
  %v1777 = vadd.f32 %v1772, 1e-05
  %v1778 = vrsqrt.pop %v1773
  %v1779 = vmul.f32 %v1778, %v1773
  %v1780 = vmul.f32 %v1779, %v1778
  %v1781 = vmul.f32 0.5, %v1780
  %v1782 = vsub.f32 1.5, %v1781
  %v1783 = vmul.f32 %v1778, %v1782
  %vm1784 = vweird.f32 %v1773
  %vm1785 = vweird.f32 %v1778
  %vm1786 = vmor %vm1784, %vm1785
  %v1787 = vsel %vm1786, %v1778, %v1783
  %v1788 = vrsqrt.pop %v1774
  %v1789 = vmul.f32 %v1788, %v1774
  %v1790 = vmul.f32 %v1789, %v1788
  %v1791 = vmul.f32 0.5, %v1790
  %v1792 = vsub.f32 1.5, %v1791
  %v1793 = vmul.f32 %v1788, %v1792
  %vm1794 = vweird.f32 %v1774
  %vm1795 = vweird.f32 %v1788
  %vm1796 = vmor %vm1794, %vm1795
  %v1797 = vsel %vm1796, %v1788, %v1793
  %v1798 = vrsqrt.pop %v1775
  %v1799 = vmul.f32 %v1798, %v1775
  %v1800 = vmul.f32 %v1799, %v1798
  %v1801 = vmul.f32 0.5, %v1800
  %v1802 = vsub.f32 1.5, %v1801
  %v1803 = vmul.f32 %v1798, %v1802
  %vm1804 = vweird.f32 %v1775
  %vm1805 = vweird.f32 %v1798
  %vm1806 = vmor %vm1804, %vm1805
  %v1807 = vsel %vm1806, %v1798, %v1803
  %v1808 = vrsqrt.pop %v1776
  %v1809 = vmul.f32 %v1808, %v1776
  %v1810 = vmul.f32 %v1809, %v1808
  %v1811 = vmul.f32 0.5, %v1810
  %v1812 = vsub.f32 1.5, %v1811
  %v1813 = vmul.f32 %v1808, %v1812
  %vm1814 = vweird.f32 %v1776
  %vm1815 = vweird.f32 %v1808
  %vm1816 = vmor %vm1814, %vm1815
  %v1817 = vsel %vm1816, %v1808, %v1813
  %v1818 = vrsqrt.pop %v1777
  %v1819 = vmul.f32 %v1818, %v1777
  %v1820 = vmul.f32 %v1819, %v1818
  %v1821 = vmul.f32 0.5, %v1820
  %v1822 = vsub.f32 1.5, %v1821
  %v1823 = vmul.f32 %v1818, %v1822
  %vm1824 = vweird.f32 %v1777
  %vm1825 = vweird.f32 %v1818
  %vm1826 = vmor %vm1824, %vm1825
  %v1827 = vsel %vm1826, %v1818, %v1823
  %v1828 = vmul.f32 %v1743, %v1787
  %v1829 = vmul.f32 %v1744, %v1797
  %v1830 = vmul.f32 %v1745, %v1807
  %v1831 = vmul.f32 %v1746, %v1817
  %v1832 = vmul.f32 %v1747, %v1827
  %v1833 = vmul.f32 %v1828, %v61
  %v1834 = vmul.f32 %v1829, %v61
  %v1835 = vmul.f32 %v1830, %v61
  %v1836 = vmul.f32 %v1831, %v61
  %v1837 = vmul.f32 %v1832, %v61
  %v1838 = vadd.f32 %v1833, %v62
  %v1839 = vadd.f32 %v1834, %v62
  %v1840 = vadd.f32 %v1835, %v62
  %v1841 = vadd.f32 %v1836, %v62
  %v1842 = vadd.f32 %v1837, %v62
  %v1844 = vsel %vm126, %v1838, 0
  %v1847 = vsel %vm126, %v1839, 0
  %v1850 = vsel %vm126, %v1840, 0
  %v1853 = vsel %vm126, %v1841, 0
  %v1856 = vsel %vm126, %v1842, 0
  %1858 = vmatpush.msra.mxu0 0.0
  %1859 = vmatpush.msra.mxu0 0.0
  %1860 = vmatpush.msra.mxu0 0.0
  %1861 = vmatpush.msra.mxu0 0.0
  %1862 = vmatpush.msra.mxu0 0.0
  %1863 = vmatpush.msra.mxu0 0.0
  %1864 = vmatpush.msra.mxu0 0.0
  %1865 = vmatpush.msra.mxu0 0.0
  %1866 = vmatpush.msra.mxu0 0.0
  %1867 = vmatpush.msra.mxu0 0.0
  %1868 = vmatpush.msra.mxu0 0.0
  %1869 = vmatpush.msra.mxu0 0.0
  %1870 = vmatpush.msra.mxu0 %v50
  %1871 = vmatpush.msra.mxu0 %v49
  %1872 = vmatpush.msra.mxu0 %v48
  %1873 = vmatpush.msra.mxu0 %v47
  %1874 = vmatmul.f32.gmra.mxu0 %v1844
  %v1875 = vpop.f32.mrf.mxu0
  %v1876 = vadd.f32 0.0, %v1875
  %1877 = vmatmul.f32.gmra.mxu0 %v1847
  %v1878 = vpop.f32.mrf.mxu0
  %v1879 = vadd.f32 0.0, %v1878
  %1880 = vmatmul.f32.gmra.mxu0 %v1850
  %v1881 = vpop.f32.mrf.mxu0
  %v1882 = vadd.f32 0.0, %v1881
  %1883 = vmatmul.f32.gmra.mxu0 %v1853
  %v1884 = vpop.f32.mrf.mxu0
  %v1885 = vadd.f32 0.0, %v1884
  %1886 = vmatmul.f32.gmra.mxu0 %v1856
  %v1887 = vpop.f32.mrf.mxu0
  %v1888 = vadd.f32 0.0, %v1887
  %1889 = vdwg.mxu0
  %1890 = vmatpush.msra.mxu0 0.0
  %1891 = vmatpush.msra.mxu0 0.0
  %1892 = vmatpush.msra.mxu0 0.0
  %1893 = vmatpush.msra.mxu0 0.0
  %1894 = vmatpush.msra.mxu0 0.0
  %1895 = vmatpush.msra.mxu0 0.0
  %1896 = vmatpush.msra.mxu0 0.0
  %1897 = vmatpush.msra.mxu0 0.0
  %1898 = vmatpush.msra.mxu0 0.0
  %1899 = vmatpush.msra.mxu0 0.0
  %1900 = vmatpush.msra.mxu0 0.0
  %1901 = vmatpush.msra.mxu0 0.0
  %1902 = vmatpush.msra.mxu0 %v54
  %1903 = vmatpush.msra.mxu0 %v53
  %1904 = vmatpush.msra.mxu0 %v52
  %1905 = vmatpush.msra.mxu0 %v51
  %1906 = vmatmul.f32.gmra.mxu0 %v1844
  %v1907 = vpop.f32.mrf.mxu0
  %v1908 = vadd.f32 0.0, %v1907
  %1909 = vmatmul.f32.gmra.mxu0 %v1847
  %v1910 = vpop.f32.mrf.mxu0
  %v1911 = vadd.f32 0.0, %v1910
  %1912 = vmatmul.f32.gmra.mxu0 %v1850
  %v1913 = vpop.f32.mrf.mxu0
  %v1914 = vadd.f32 0.0, %v1913
  %1915 = vmatmul.f32.gmra.mxu0 %v1853
  %v1916 = vpop.f32.mrf.mxu0
  %v1917 = vadd.f32 0.0, %v1916
  %1918 = vmatmul.f32.gmra.mxu0 %v1856
  %v1919 = vpop.f32.mrf.mxu0
  %v1920 = vadd.f32 0.0, %v1919
  %1921 = vdwg.mxu0
  %v1923 = vsel %vm126, %v1876, 0
  %v1926 = vsel %vm126, %v1879, 0
  %v1929 = vsel %vm126, %v1882, 0
  %v1932 = vsel %vm126, %v1885, 0
  %v1935 = vsel %vm126, %v1888, 0
  %1937 = vmatpush.xpose.msra.mxu0 0.0
  %1938 = vmatpush.xpose.msra.mxu0 0.0
  %1939 = vmatpush.xpose.msra.mxu0 0.0
  %1940 = vmatpush.xpose.msra.mxu0 0.0
  %1941 = vmatpush.xpose.msra.mxu0 0.0
  %1942 = vmatpush.xpose.msra.mxu0 0.0
  %1943 = vmatpush.xpose.msra.mxu0 0.0
  %1944 = vmatpush.xpose.msra.mxu0 0.0
  %1945 = vmatpush.xpose.msra.mxu0 0.0
  %1946 = vmatpush.xpose.msra.mxu0 0.0
  %1947 = vmatpush.xpose.msra.mxu0 0.0
  %1948 = vmatpush.xpose.msra.mxu0 %v1856
  %1949 = vmatpush.xpose.msra.mxu0 %v1853
  %1950 = vmatpush.xpose.msra.mxu0 %v1850
  %1951 = vmatpush.xpose.msra.mxu0 %v1847
  %1952 = vmatpush.xpose.msra.mxu0 %v1844
  %1953 = vmatmul.f32.gmra.mxu0 %v1923
  %v1954 = vpop.f32.mrf.mxu0
  %v1955 = vadd.f32 %v55, %v1954
  %1956 = vmatmul.f32.gmra.mxu0 %v1926
  %v1957 = vpop.f32.mrf.mxu0
  %v1958 = vadd.f32 %v56, %v1957
  %1959 = vmatmul.f32.gmra.mxu0 %v1929
  %v1960 = vpop.f32.mrf.mxu0
  %v1961 = vadd.f32 %v57, %v1960
  %1962 = vmatmul.f32.gmra.mxu0 %v1932
  %v1963 = vpop.f32.mrf.mxu0
  %v1964 = vadd.f32 %v58, %v1963
  %1965 = vmatmul.f32.gmra.mxu0 %v1935
  %v1966 = vpop.f32.mrf.mxu0
  %v1967 = vadd.f32 %v59, %v1966
  %1968 = vdwg.mxu0
  %v1969 = vsel %vm381, %v1955, -inf
  %1970 = vmax.xlane.f32.xlu0 %v1969
  %v1971 = vpop.xlane.xlu0 %1970
  %v1972 = vsel %vm381, %v1958, -inf
  %1973 = vmax.xlane.f32.xlu0 %v1972
  %v1974 = vpop.xlane.xlu0 %1973
  %v1975 = vsel %vm381, %v1961, -inf
  %1976 = vmax.xlane.f32.xlu0 %v1975
  %v1977 = vpop.xlane.xlu0 %1976
  %v1978 = vsel %vm381, %v1964, -inf
  %1979 = vmax.xlane.f32.xlu0 %v1978
  %v1980 = vpop.xlane.xlu0 %1979
  %v1981 = vsel %vm394, %v1967, -inf
  %1982 = vmax.xlane.f32.xlu0 %v1981
  %v1983 = vpop.xlane.xlu0 %1982
  %v1984 = vsub.f32 %v1955, %v1971
  %v1985 = vsub.f32 %v1958, %v1974
  %v1986 = vsub.f32 %v1961, %v1977
  %v1987 = vsub.f32 %v1964, %v1980
  %v1988 = vsub.f32 %v1967, %v1983
  %v1989 = vmul.f32 %v1984, 1.442695
  %v1990 = vpow.pop %v1989
  %v1991 = vmul.f32 %v1985, 1.442695
  %v1992 = vpow.pop %v1991
  %v1993 = vmul.f32 %v1986, 1.442695
  %v1994 = vpow.pop %v1993
  %v1995 = vmul.f32 %v1987, 1.442695
  %v1996 = vpow.pop %v1995
  %v1997 = vmul.f32 %v1988, 1.442695
  %v1998 = vpow.pop %v1997
  %v1999 = vsel %vm381, %v1990, 0.0
  %2000 = vadd.xlane.f32.xlu0 %v1999
  %v2001 = vpop.xlane.xlu0 %2000
  %v2002 = vsel %vm381, %v1992, 0.0
  %2003 = vadd.xlane.f32.xlu0 %v2002
  %v2004 = vpop.xlane.xlu0 %2003
  %v2005 = vsel %vm381, %v1994, 0.0
  %2006 = vadd.xlane.f32.xlu0 %v2005
  %v2007 = vpop.xlane.xlu0 %2006
  %v2008 = vsel %vm381, %v1996, 0.0
  %2009 = vadd.xlane.f32.xlu0 %v2008
  %v2010 = vpop.xlane.xlu0 %2009
  %v2011 = vsel %vm394, %v1998, 0.0
  %2012 = vadd.xlane.f32.xlu0 %v2011
  %v2013 = vpop.xlane.xlu0 %2012
  %v2014 = vrcp.pop %v2001
  %v2015 = vmul.f32 %v2001, %v2014
  %v2016 = vsub.f32 1.0, %v2015
  %v2017 = vmul.f32 %v2014, %v2016
  %v2018 = vadd.f32 %v2014, %v2017
  %vm2019 = vweird.f32 %v2001
  %vm2020 = vweird.f32 %v2014
  %vm2021 = vmor %vm2019, %vm2020
  %v2022 = vsel %vm2021, %v2014, %v2018
  %v2023 = vand.u32 2147483647, %v2001
  %vm2024 = vcmp.eq.f32.partialorder %v2023, 8.507059e+37
  %v2025 = vand.u32 %v2001, 2147483648
  %v2026 = vor.u32 1.1754944e-38, %v2025
  %v2027 = vsel %vm2024, %v2026, %v2022
  %v2028 = vmul.f32 %v1990, %v2027
  %v2029 = vrcp.pop %v2004
  %v2030 = vmul.f32 %v2004, %v2029
  %v2031 = vsub.f32 1.0, %v2030
  %v2032 = vmul.f32 %v2029, %v2031
  %v2033 = vadd.f32 %v2029, %v2032
  %vm2034 = vweird.f32 %v2004
  %vm2035 = vweird.f32 %v2029
  %vm2036 = vmor %vm2034, %vm2035
  %v2037 = vsel %vm2036, %v2029, %v2033
  %v2038 = vand.u32 2147483647, %v2004
  %vm2039 = vcmp.eq.f32.partialorder %v2038, 8.507059e+37
  %v2040 = vand.u32 %v2004, 2147483648
  %v2041 = vor.u32 1.1754944e-38, %v2040
  %v2042 = vsel %vm2039, %v2041, %v2037
  %v2043 = vmul.f32 %v1992, %v2042
  %v2044 = vrcp.pop %v2007
  %v2045 = vmul.f32 %v2007, %v2044
  %v2046 = vsub.f32 1.0, %v2045
  %v2047 = vmul.f32 %v2044, %v2046
  %v2048 = vadd.f32 %v2044, %v2047
  %vm2049 = vweird.f32 %v2007
  %vm2050 = vweird.f32 %v2044
  %vm2051 = vmor %vm2049, %vm2050
  %v2052 = vsel %vm2051, %v2044, %v2048
  %v2053 = vand.u32 2147483647, %v2007
  %vm2054 = vcmp.eq.f32.partialorder %v2053, 8.507059e+37
  %v2055 = vand.u32 %v2007, 2147483648
  %v2056 = vor.u32 1.1754944e-38, %v2055
  %v2057 = vsel %vm2054, %v2056, %v2052
  %v2058 = vmul.f32 %v1994, %v2057
  %v2059 = vrcp.pop %v2010
  %v2060 = vmul.f32 %v2010, %v2059
  %v2061 = vsub.f32 1.0, %v2060
  %v2062 = vmul.f32 %v2059, %v2061
  %v2063 = vadd.f32 %v2059, %v2062
  %vm2064 = vweird.f32 %v2010
  %vm2065 = vweird.f32 %v2059
  %vm2066 = vmor %vm2064, %vm2065
  %v2067 = vsel %vm2066, %v2059, %v2063
  %v2068 = vand.u32 2147483647, %v2010
  %vm2069 = vcmp.eq.f32.partialorder %v2068, 8.507059e+37
  %v2070 = vand.u32 %v2010, 2147483648
  %v2071 = vor.u32 1.1754944e-38, %v2070
  %v2072 = vsel %vm2069, %v2071, %v2067
  %v2073 = vmul.f32 %v1996, %v2072
  %v2074 = vrcp.pop %v2013
  %v2075 = vmul.f32 %v2013, %v2074
  %v2076 = vsub.f32 1.0, %v2075
  %v2077 = vmul.f32 %v2074, %v2076
  %v2078 = vadd.f32 %v2074, %v2077
  %vm2079 = vweird.f32 %v2013
  %vm2080 = vweird.f32 %v2074
  %vm2081 = vmor %vm2079, %vm2080
  %v2082 = vsel %vm2081, %v2074, %v2078
  %v2083 = vand.u32 2147483647, %v2013
  %vm2084 = vcmp.eq.f32.partialorder %v2083, 8.507059e+37
  %v2085 = vand.u32 %v2013, 2147483648
  %v2086 = vor.u32 1.1754944e-38, %v2085
  %v2087 = vsel %vm2084, %v2086, %v2082
  %v2088 = vmul.f32 %v1998, %v2087
  %2089 = vrot.lane.b32.xlu0 %v1876, 96
  %v2090 = vpop.permute.xlu0 %2089
  %2091 = vrot.lane.b32.xlu0 %v1879, 96
  %v2092 = vpop.permute.xlu0 %2091
  %2093 = vrot.lane.b32.xlu0 %v1882, 96
  %v2094 = vpop.permute.xlu0 %2093
  %2095 = vrot.lane.b32.xlu0 %v1885, 96
  %v2096 = vpop.permute.xlu0 %2095
  %2097 = vrot.lane.b32.xlu0 %v1888, 96
  %v2098 = vpop.permute.xlu0 %2097
  %v2099 = vsel %vm126, %v2090, 0
  %v2101 = vsel %vm126, %v2092, 0
  %v2103 = vsel %vm126, %v2094, 0
  %v2105 = vsel %vm126, %v2096, 0
  %v2107 = vsel %vm126, %v2098, 0
  %2109 = vmatpush.xpose.msra.mxu0 0.0
  %2110 = vmatpush.xpose.msra.mxu0 0.0
  %2111 = vmatpush.xpose.msra.mxu0 0.0
  %2112 = vmatpush.xpose.msra.mxu0 0.0
  %2113 = vmatpush.xpose.msra.mxu0 0.0
  %2114 = vmatpush.xpose.msra.mxu0 0.0
  %2115 = vmatpush.xpose.msra.mxu0 0.0
  %2116 = vmatpush.xpose.msra.mxu0 0.0
  %2117 = vmatpush.xpose.msra.mxu0 0.0
  %2118 = vmatpush.xpose.msra.mxu0 0.0
  %2119 = vmatpush.xpose.msra.mxu0 0.0
  %2120 = vmatpush.xpose.msra.mxu0 %v1856
  %2121 = vmatpush.xpose.msra.mxu0 %v1853
  %2122 = vmatpush.xpose.msra.mxu0 %v1850
  %2123 = vmatpush.xpose.msra.mxu0 %v1847
  %2124 = vmatpush.xpose.msra.mxu0 %v1844
  %2125 = vmatmul.f32.gmra.mxu0 %v2099
  %v2126 = vpop.f32.mrf.mxu0
  %v2127 = vadd.f32 %v55, %v2126
  %2128 = vmatmul.f32.gmra.mxu0 %v2101
  %v2129 = vpop.f32.mrf.mxu0
  %v2130 = vadd.f32 %v56, %v2129
  %2131 = vmatmul.f32.gmra.mxu0 %v2103
  %v2132 = vpop.f32.mrf.mxu0
  %v2133 = vadd.f32 %v57, %v2132
  %2134 = vmatmul.f32.gmra.mxu0 %v2105
  %v2135 = vpop.f32.mrf.mxu0
  %v2136 = vadd.f32 %v58, %v2135
  %2137 = vmatmul.f32.gmra.mxu0 %v2107
  %v2138 = vpop.f32.mrf.mxu0
  %v2139 = vadd.f32 %v59, %v2138
  %2140 = vdwg.mxu0
  %v2141 = vsel %vm381, %v2127, -inf
  %2142 = vmax.xlane.f32.xlu0 %v2141
  %v2143 = vpop.xlane.xlu0 %2142
  %v2144 = vsel %vm381, %v2130, -inf
  %2145 = vmax.xlane.f32.xlu0 %v2144
  %v2146 = vpop.xlane.xlu0 %2145
  %v2147 = vsel %vm381, %v2133, -inf
  %2148 = vmax.xlane.f32.xlu0 %v2147
  %v2149 = vpop.xlane.xlu0 %2148
  %v2150 = vsel %vm381, %v2136, -inf
  %2151 = vmax.xlane.f32.xlu0 %v2150
  %v2152 = vpop.xlane.xlu0 %2151
  %v2153 = vsel %vm394, %v2139, -inf
  %2154 = vmax.xlane.f32.xlu0 %v2153
  %v2155 = vpop.xlane.xlu0 %2154
  %v2156 = vsub.f32 %v2127, %v2143
  %v2157 = vsub.f32 %v2130, %v2146
  %v2158 = vsub.f32 %v2133, %v2149
  %v2159 = vsub.f32 %v2136, %v2152
  %v2160 = vsub.f32 %v2139, %v2155
  %v2161 = vmul.f32 %v2156, 1.442695
  %v2162 = vpow.pop %v2161
  %v2163 = vmul.f32 %v2157, 1.442695
  %v2164 = vpow.pop %v2163
  %v2165 = vmul.f32 %v2158, 1.442695
  %v2166 = vpow.pop %v2165
  %v2167 = vmul.f32 %v2159, 1.442695
  %v2168 = vpow.pop %v2167
  %v2169 = vmul.f32 %v2160, 1.442695
  %v2170 = vpow.pop %v2169
  %v2171 = vsel %vm381, %v2162, 0.0
  %2172 = vadd.xlane.f32.xlu0 %v2171
  %v2173 = vpop.xlane.xlu0 %2172
  %v2174 = vsel %vm381, %v2164, 0.0
  %2175 = vadd.xlane.f32.xlu0 %v2174
  %v2176 = vpop.xlane.xlu0 %2175
  %v2177 = vsel %vm381, %v2166, 0.0
  %2178 = vadd.xlane.f32.xlu0 %v2177
  %v2179 = vpop.xlane.xlu0 %2178
  %v2180 = vsel %vm381, %v2168, 0.0
  %2181 = vadd.xlane.f32.xlu0 %v2180
  %v2182 = vpop.xlane.xlu0 %2181
  %v2183 = vsel %vm394, %v2170, 0.0
  %2184 = vadd.xlane.f32.xlu0 %v2183
  %v2185 = vpop.xlane.xlu0 %2184
  %v2186 = vrcp.pop %v2173
  %v2187 = vmul.f32 %v2173, %v2186
  %v2188 = vsub.f32 1.0, %v2187
  %v2189 = vmul.f32 %v2186, %v2188
  %v2190 = vadd.f32 %v2186, %v2189
  %vm2191 = vweird.f32 %v2173
  %vm2192 = vweird.f32 %v2186
  %vm2193 = vmor %vm2191, %vm2192
  %v2194 = vsel %vm2193, %v2186, %v2190
  %v2195 = vand.u32 2147483647, %v2173
  %vm2196 = vcmp.eq.f32.partialorder %v2195, 8.507059e+37
  %v2197 = vand.u32 %v2173, 2147483648
  %v2198 = vor.u32 1.1754944e-38, %v2197
  %v2199 = vsel %vm2196, %v2198, %v2194
  %v2200 = vmul.f32 %v2162, %v2199
  %v2201 = vrcp.pop %v2176
  %v2202 = vmul.f32 %v2176, %v2201
  %v2203 = vsub.f32 1.0, %v2202
  %v2204 = vmul.f32 %v2201, %v2203
  %v2205 = vadd.f32 %v2201, %v2204
  %vm2206 = vweird.f32 %v2176
  %vm2207 = vweird.f32 %v2201
  %vm2208 = vmor %vm2206, %vm2207
  %v2209 = vsel %vm2208, %v2201, %v2205
  %v2210 = vand.u32 2147483647, %v2176
  %vm2211 = vcmp.eq.f32.partialorder %v2210, 8.507059e+37
  %v2212 = vand.u32 %v2176, 2147483648
  %v2213 = vor.u32 1.1754944e-38, %v2212
  %v2214 = vsel %vm2211, %v2213, %v2209
  %v2215 = vmul.f32 %v2164, %v2214
  %v2216 = vrcp.pop %v2179
  %v2217 = vmul.f32 %v2179, %v2216
  %v2218 = vsub.f32 1.0, %v2217
  %v2219 = vmul.f32 %v2216, %v2218
  %v2220 = vadd.f32 %v2216, %v2219
  %vm2221 = vweird.f32 %v2179
  %vm2222 = vweird.f32 %v2216
  %vm2223 = vmor %vm2221, %vm2222
  %v2224 = vsel %vm2223, %v2216, %v2220
  %v2225 = vand.u32 2147483647, %v2179
  %vm2226 = vcmp.eq.f32.partialorder %v2225, 8.507059e+37
  %v2227 = vand.u32 %v2179, 2147483648
  %v2228 = vor.u32 1.1754944e-38, %v2227
  %v2229 = vsel %vm2226, %v2228, %v2224
  %v2230 = vmul.f32 %v2166, %v2229
  %v2231 = vrcp.pop %v2182
  %v2232 = vmul.f32 %v2182, %v2231
  %v2233 = vsub.f32 1.0, %v2232
  %v2234 = vmul.f32 %v2231, %v2233
  %v2235 = vadd.f32 %v2231, %v2234
  %vm2236 = vweird.f32 %v2182
  %vm2237 = vweird.f32 %v2231
  %vm2238 = vmor %vm2236, %vm2237
  %v2239 = vsel %vm2238, %v2231, %v2235
  %v2240 = vand.u32 2147483647, %v2182
  %vm2241 = vcmp.eq.f32.partialorder %v2240, 8.507059e+37
  %v2242 = vand.u32 %v2182, 2147483648
  %v2243 = vor.u32 1.1754944e-38, %v2242
  %v2244 = vsel %vm2241, %v2243, %v2239
  %v2245 = vmul.f32 %v2168, %v2244
  %v2246 = vrcp.pop %v2185
  %v2247 = vmul.f32 %v2185, %v2246
  %v2248 = vsub.f32 1.0, %v2247
  %v2249 = vmul.f32 %v2246, %v2248
  %v2250 = vadd.f32 %v2246, %v2249
  %vm2251 = vweird.f32 %v2185
  %vm2252 = vweird.f32 %v2246
  %vm2253 = vmor %vm2251, %vm2252
  %v2254 = vsel %vm2253, %v2246, %v2250
  %v2255 = vand.u32 2147483647, %v2185
  %vm2256 = vcmp.eq.f32.partialorder %v2255, 8.507059e+37
  %v2257 = vand.u32 %v2185, 2147483648
  %v2258 = vor.u32 1.1754944e-38, %v2257
  %v2259 = vsel %vm2256, %v2258, %v2254
  %v2260 = vmul.f32 %v2170, %v2259
  %2266 = vrot.lane.b32.xlu0 %v1908, 96
  %v2267 = vpop.permute.xlu0 %2266
  %2268 = vrot.lane.b32.xlu0 %v1911, 96
  %v2269 = vpop.permute.xlu0 %2268
  %2270 = vrot.lane.b32.xlu0 %v1914, 96
  %v2271 = vpop.permute.xlu0 %2270
  %2272 = vrot.lane.b32.xlu0 %v1917, 96
  %v2273 = vpop.permute.xlu0 %2272
  %2274 = vrot.lane.b32.xlu0 %v1920, 96
  %v2275 = vpop.permute.xlu0 %2274
  %v2281 = vsel %vm381, %v2200, 0
  %v2284 = vsel %vm381, %v2215, 0
  %v2287 = vsel %vm381, %v2230, 0
  %v2290 = vsel %vm381, %v2245, 0
  %v2293 = vsel %vm381, %v2260, 0
  %v2295 = vsel %vm709, %v2275, 0
  %2297 = vmatpush.msra.mxu0 0.0
  %2298 = vmatpush.msra.mxu0 0.0
  %2299 = vmatpush.msra.mxu0 0.0
  %2300 = vmatpush.msra.mxu0 0.0
  %2301 = vmatpush.msra.mxu0 0.0
  %2302 = vmatpush.msra.mxu0 0.0
  %2303 = vmatpush.msra.mxu0 0.0
  %2304 = vmatpush.msra.mxu0 0.0
  %2305 = vmatpush.msra.mxu0 0.0
  %2306 = vmatpush.msra.mxu0 0.0
  %2307 = vmatpush.msra.mxu0 0.0
  %2308 = vmatpush.msra.mxu0 %v2295
  %2309 = vmatpush.msra.mxu0 %v2273
  %2310 = vmatpush.msra.mxu0 %v2271
  %2311 = vmatpush.msra.mxu0 %v2269
  %2312 = vmatpush.msra.mxu0 %v2267
  %2313 = vmatmul.f32.gmra.mxu0 %v2281
  %v2314 = vpop.f32.mrf.mxu0
  %v2315 = vadd.f32 0.0, %v2314
  %2316 = vmatmul.f32.gmra.mxu0 %v2284
  %v2317 = vpop.f32.mrf.mxu0
  %v2318 = vadd.f32 0.0, %v2317
  %2319 = vmatmul.f32.gmra.mxu0 %v2287
  %v2320 = vpop.f32.mrf.mxu0
  %v2321 = vadd.f32 0.0, %v2320
  %2322 = vmatmul.f32.gmra.mxu0 %v2290
  %v2323 = vpop.f32.mrf.mxu0
  %v2324 = vadd.f32 0.0, %v2323
  %2325 = vmatmul.f32.gmra.mxu0 %v2293
  %v2326 = vpop.f32.mrf.mxu0
  %v2327 = vadd.f32 0.0, %v2326
  %2328 = vdwg.mxu0
  %v2330 = vsel %vm381, %v2028, 0
  %v2333 = vsel %vm381, %v2043, 0
  %v2336 = vsel %vm381, %v2058, 0
  %v2339 = vsel %vm381, %v2073, 0
  %v2342 = vsel %vm381, %v2088, 0
  %v2344 = vsel %vm709, %v1920, 0
  %2346 = vmatpush.msra.mxu0 0.0
  %2347 = vmatpush.msra.mxu0 0.0
  %2348 = vmatpush.msra.mxu0 0.0
  %2349 = vmatpush.msra.mxu0 0.0
  %2350 = vmatpush.msra.mxu0 0.0
  %2351 = vmatpush.msra.mxu0 0.0
  %2352 = vmatpush.msra.mxu0 0.0
  %2353 = vmatpush.msra.mxu0 0.0
  %2354 = vmatpush.msra.mxu0 0.0
  %2355 = vmatpush.msra.mxu0 0.0
  %2356 = vmatpush.msra.mxu0 0.0
  %2357 = vmatpush.msra.mxu0 %v2344
  %2358 = vmatpush.msra.mxu0 %v1917
  %2359 = vmatpush.msra.mxu0 %v1914
  %2360 = vmatpush.msra.mxu0 %v1911
  %2361 = vmatpush.msra.mxu0 %v1908
  %2362 = vmatmul.f32.gmra.mxu0 %v2330
  %v2363 = vpop.f32.mrf.mxu0
  %v2364 = vadd.f32 %v2315, %v2363
  %2365 = vmatmul.f32.gmra.mxu0 %v2333
  %v2366 = vpop.f32.mrf.mxu0
  %v2367 = vadd.f32 %v2318, %v2366
  %2368 = vmatmul.f32.gmra.mxu0 %v2336
  %v2369 = vpop.f32.mrf.mxu0
  %v2370 = vadd.f32 %v2321, %v2369
  %2371 = vmatmul.f32.gmra.mxu0 %v2339
  %v2372 = vpop.f32.mrf.mxu0
  %v2373 = vadd.f32 %v2324, %v2372
  %2374 = vmatmul.f32.gmra.mxu0 %v2342
  %v2375 = vpop.f32.mrf.mxu0
  %v2376 = vadd.f32 %v2327, %v2375
  %2377 = vdwg.mxu0
  %2378 = vrot.lane.b32.xlu0 %v1876, 64
  %v2379 = vpop.permute.xlu0 %2378
  %2380 = vrot.lane.b32.xlu0 %v1879, 64
  %v2381 = vpop.permute.xlu0 %2380
  %2382 = vrot.lane.b32.xlu0 %v1882, 64
  %v2383 = vpop.permute.xlu0 %2382
  %2384 = vrot.lane.b32.xlu0 %v1885, 64
  %v2385 = vpop.permute.xlu0 %2384
  %2386 = vrot.lane.b32.xlu0 %v1888, 64
  %v2387 = vpop.permute.xlu0 %2386
  %v2388 = vsel %vm126, %v2379, 0
  %v2390 = vsel %vm126, %v2381, 0
  %v2392 = vsel %vm126, %v2383, 0
  %v2394 = vsel %vm126, %v2385, 0
  %v2396 = vsel %vm126, %v2387, 0
  %2398 = vmatpush.xpose.msra.mxu0 0.0
  %2399 = vmatpush.xpose.msra.mxu0 0.0
  %2400 = vmatpush.xpose.msra.mxu0 0.0
  %2401 = vmatpush.xpose.msra.mxu0 0.0
  %2402 = vmatpush.xpose.msra.mxu0 0.0
  %2403 = vmatpush.xpose.msra.mxu0 0.0
  %2404 = vmatpush.xpose.msra.mxu0 0.0
  %2405 = vmatpush.xpose.msra.mxu0 0.0
  %2406 = vmatpush.xpose.msra.mxu0 0.0
  %2407 = vmatpush.xpose.msra.mxu0 0.0
  %2408 = vmatpush.xpose.msra.mxu0 0.0
  %2409 = vmatpush.xpose.msra.mxu0 %v1856
  %2410 = vmatpush.xpose.msra.mxu0 %v1853
  %2411 = vmatpush.xpose.msra.mxu0 %v1850
  %2412 = vmatpush.xpose.msra.mxu0 %v1847
  %2413 = vmatpush.xpose.msra.mxu0 %v1844
  %2414 = vmatmul.f32.gmra.mxu0 %v2388
  %v2415 = vpop.f32.mrf.mxu0
  %v2416 = vadd.f32 %v55, %v2415
  %2417 = vmatmul.f32.gmra.mxu0 %v2390
  %v2418 = vpop.f32.mrf.mxu0
  %v2419 = vadd.f32 %v56, %v2418
  %2420 = vmatmul.f32.gmra.mxu0 %v2392
  %v2421 = vpop.f32.mrf.mxu0
  %v2422 = vadd.f32 %v57, %v2421
  %2423 = vmatmul.f32.gmra.mxu0 %v2394
  %v2424 = vpop.f32.mrf.mxu0
  %v2425 = vadd.f32 %v58, %v2424
  %2426 = vmatmul.f32.gmra.mxu0 %v2396
  %v2427 = vpop.f32.mrf.mxu0
  %v2428 = vadd.f32 %v59, %v2427
  %2429 = vdwg.mxu0
  %v2430 = vsel %vm381, %v2416, -inf
  %2431 = vmax.xlane.f32.xlu0 %v2430
  %v2432 = vpop.xlane.xlu0 %2431
  %v2433 = vsel %vm381, %v2419, -inf
  %2434 = vmax.xlane.f32.xlu0 %v2433
  %v2435 = vpop.xlane.xlu0 %2434
  %v2436 = vsel %vm381, %v2422, -inf
  %2437 = vmax.xlane.f32.xlu0 %v2436
  %v2438 = vpop.xlane.xlu0 %2437
  %v2439 = vsel %vm381, %v2425, -inf
  %2440 = vmax.xlane.f32.xlu0 %v2439
  %v2441 = vpop.xlane.xlu0 %2440
  %v2442 = vsel %vm394, %v2428, -inf
  %2443 = vmax.xlane.f32.xlu0 %v2442
  %v2444 = vpop.xlane.xlu0 %2443
  %v2445 = vsub.f32 %v2416, %v2432
  %v2446 = vsub.f32 %v2419, %v2435
  %v2447 = vsub.f32 %v2422, %v2438
  %v2448 = vsub.f32 %v2425, %v2441
  %v2449 = vsub.f32 %v2428, %v2444
  %v2450 = vmul.f32 %v2445, 1.442695
  %v2451 = vpow.pop %v2450
  %v2452 = vmul.f32 %v2446, 1.442695
  %v2453 = vpow.pop %v2452
  %v2454 = vmul.f32 %v2447, 1.442695
  %v2455 = vpow.pop %v2454
  %v2456 = vmul.f32 %v2448, 1.442695
  %v2457 = vpow.pop %v2456
  %v2458 = vmul.f32 %v2449, 1.442695
  %v2459 = vpow.pop %v2458
  %v2460 = vsel %vm381, %v2451, 0.0
  %2461 = vadd.xlane.f32.xlu0 %v2460
  %v2462 = vpop.xlane.xlu0 %2461
  %v2463 = vsel %vm381, %v2453, 0.0
  %2464 = vadd.xlane.f32.xlu0 %v2463
  %v2465 = vpop.xlane.xlu0 %2464
  %v2466 = vsel %vm381, %v2455, 0.0
  %2467 = vadd.xlane.f32.xlu0 %v2466
  %v2468 = vpop.xlane.xlu0 %2467
  %v2469 = vsel %vm381, %v2457, 0.0
  %2470 = vadd.xlane.f32.xlu0 %v2469
  %v2471 = vpop.xlane.xlu0 %2470
  %v2472 = vsel %vm394, %v2459, 0.0
  %2473 = vadd.xlane.f32.xlu0 %v2472
  %v2474 = vpop.xlane.xlu0 %2473
  %v2475 = vrcp.pop %v2462
  %v2476 = vmul.f32 %v2462, %v2475
  %v2477 = vsub.f32 1.0, %v2476
  %v2478 = vmul.f32 %v2475, %v2477
  %v2479 = vadd.f32 %v2475, %v2478
  %vm2480 = vweird.f32 %v2462
  %vm2481 = vweird.f32 %v2475
  %vm2482 = vmor %vm2480, %vm2481
  %v2483 = vsel %vm2482, %v2475, %v2479
  %v2484 = vand.u32 2147483647, %v2462
  %vm2485 = vcmp.eq.f32.partialorder %v2484, 8.507059e+37
  %v2486 = vand.u32 %v2462, 2147483648
  %v2487 = vor.u32 1.1754944e-38, %v2486
  %v2488 = vsel %vm2485, %v2487, %v2483
  %v2489 = vmul.f32 %v2451, %v2488
  %v2490 = vrcp.pop %v2465
  %v2491 = vmul.f32 %v2465, %v2490
  %v2492 = vsub.f32 1.0, %v2491
  %v2493 = vmul.f32 %v2490, %v2492
  %v2494 = vadd.f32 %v2490, %v2493
  %vm2495 = vweird.f32 %v2465
  %vm2496 = vweird.f32 %v2490
  %vm2497 = vmor %vm2495, %vm2496
  %v2498 = vsel %vm2497, %v2490, %v2494
  %v2499 = vand.u32 2147483647, %v2465
  %vm2500 = vcmp.eq.f32.partialorder %v2499, 8.507059e+37
  %v2501 = vand.u32 %v2465, 2147483648
  %v2502 = vor.u32 1.1754944e-38, %v2501
  %v2503 = vsel %vm2500, %v2502, %v2498
  %v2504 = vmul.f32 %v2453, %v2503
  %v2505 = vrcp.pop %v2468
  %v2506 = vmul.f32 %v2468, %v2505
  %v2507 = vsub.f32 1.0, %v2506
  %v2508 = vmul.f32 %v2505, %v2507
  %v2509 = vadd.f32 %v2505, %v2508
  %vm2510 = vweird.f32 %v2468
  %vm2511 = vweird.f32 %v2505
  %vm2512 = vmor %vm2510, %vm2511
  %v2513 = vsel %vm2512, %v2505, %v2509
  %v2514 = vand.u32 2147483647, %v2468
  %vm2515 = vcmp.eq.f32.partialorder %v2514, 8.507059e+37
  %v2516 = vand.u32 %v2468, 2147483648
  %v2517 = vor.u32 1.1754944e-38, %v2516
  %v2518 = vsel %vm2515, %v2517, %v2513
  %v2519 = vmul.f32 %v2455, %v2518
  %v2520 = vrcp.pop %v2471
  %v2521 = vmul.f32 %v2471, %v2520
  %v2522 = vsub.f32 1.0, %v2521
  %v2523 = vmul.f32 %v2520, %v2522
  %v2524 = vadd.f32 %v2520, %v2523
  %vm2525 = vweird.f32 %v2471
  %vm2526 = vweird.f32 %v2520
  %vm2527 = vmor %vm2525, %vm2526
  %v2528 = vsel %vm2527, %v2520, %v2524
  %v2529 = vand.u32 2147483647, %v2471
  %vm2530 = vcmp.eq.f32.partialorder %v2529, 8.507059e+37
  %v2531 = vand.u32 %v2471, 2147483648
  %v2532 = vor.u32 1.1754944e-38, %v2531
  %v2533 = vsel %vm2530, %v2532, %v2528
  %v2534 = vmul.f32 %v2457, %v2533
  %v2535 = vrcp.pop %v2474
  %v2536 = vmul.f32 %v2474, %v2535
  %v2537 = vsub.f32 1.0, %v2536
  %v2538 = vmul.f32 %v2535, %v2537
  %v2539 = vadd.f32 %v2535, %v2538
  %vm2540 = vweird.f32 %v2474
  %vm2541 = vweird.f32 %v2535
  %vm2542 = vmor %vm2540, %vm2541
  %v2543 = vsel %vm2542, %v2535, %v2539
  %v2544 = vand.u32 2147483647, %v2474
  %vm2545 = vcmp.eq.f32.partialorder %v2544, 8.507059e+37
  %v2546 = vand.u32 %v2474, 2147483648
  %v2547 = vor.u32 1.1754944e-38, %v2546
  %v2548 = vsel %vm2545, %v2547, %v2543
  %v2549 = vmul.f32 %v2459, %v2548
  %2550 = vrot.lane.b32.xlu0 %v1908, 64
  %v2551 = vpop.permute.xlu0 %2550
  %2552 = vrot.lane.b32.xlu0 %v1911, 64
  %v2553 = vpop.permute.xlu0 %2552
  %2554 = vrot.lane.b32.xlu0 %v1914, 64
  %v2555 = vpop.permute.xlu0 %2554
  %2556 = vrot.lane.b32.xlu0 %v1917, 64
  %v2557 = vpop.permute.xlu0 %2556
  %2558 = vrot.lane.b32.xlu0 %v1920, 64
  %v2559 = vpop.permute.xlu0 %2558
  %v2565 = vsel %vm381, %v2489, 0
  %v2568 = vsel %vm381, %v2504, 0
  %v2571 = vsel %vm381, %v2519, 0
  %v2574 = vsel %vm381, %v2534, 0
  %v2577 = vsel %vm381, %v2549, 0
  %v2579 = vsel %vm709, %v2559, 0
  %2581 = vmatpush.msra.mxu0 0.0
  %2582 = vmatpush.msra.mxu0 0.0
  %2583 = vmatpush.msra.mxu0 0.0
  %2584 = vmatpush.msra.mxu0 0.0
  %2585 = vmatpush.msra.mxu0 0.0
  %2586 = vmatpush.msra.mxu0 0.0
  %2587 = vmatpush.msra.mxu0 0.0
  %2588 = vmatpush.msra.mxu0 0.0
  %2589 = vmatpush.msra.mxu0 0.0
  %2590 = vmatpush.msra.mxu0 0.0
  %2591 = vmatpush.msra.mxu0 0.0
  %2592 = vmatpush.msra.mxu0 %v2579
  %2593 = vmatpush.msra.mxu0 %v2557
  %2594 = vmatpush.msra.mxu0 %v2555
  %2595 = vmatpush.msra.mxu0 %v2553
  %2596 = vmatpush.msra.mxu0 %v2551
  %2597 = vmatmul.f32.gmra.mxu0 %v2565
  %v2598 = vpop.f32.mrf.mxu0
  %v2599 = vadd.f32 0.0, %v2598
  %2600 = vmatmul.f32.gmra.mxu0 %v2568
  %v2601 = vpop.f32.mrf.mxu0
  %v2602 = vadd.f32 0.0, %v2601
  %2603 = vmatmul.f32.gmra.mxu0 %v2571
  %v2604 = vpop.f32.mrf.mxu0
  %v2605 = vadd.f32 0.0, %v2604
  %2606 = vmatmul.f32.gmra.mxu0 %v2574
  %v2607 = vpop.f32.mrf.mxu0
  %v2608 = vadd.f32 0.0, %v2607
  %2609 = vmatmul.f32.gmra.mxu0 %v2577
  %v2610 = vpop.f32.mrf.mxu0
  %v2611 = vadd.f32 0.0, %v2610
  %2612 = vdwg.mxu0
  %v2613 = vadd.f32 %v2364, %v2599
  %v2614 = vadd.f32 %v2367, %v2602
  %v2615 = vadd.f32 %v2370, %v2605
  %v2616 = vadd.f32 %v2373, %v2608
  %v2617 = vadd.f32 %v2376, %v2611
  %2618 = vrot.lane.b32.xlu0 %v1876, 32
  %v2619 = vpop.permute.xlu0 %2618
  %2620 = vrot.lane.b32.xlu0 %v1879, 32
  %v2621 = vpop.permute.xlu0 %2620
  %2622 = vrot.lane.b32.xlu0 %v1882, 32
  %v2623 = vpop.permute.xlu0 %2622
  %2624 = vrot.lane.b32.xlu0 %v1885, 32
  %v2625 = vpop.permute.xlu0 %2624
  %2626 = vrot.lane.b32.xlu0 %v1888, 32
  %v2627 = vpop.permute.xlu0 %2626
  %v2628 = vsel %vm126, %v2619, 0
  %v2630 = vsel %vm126, %v2621, 0
  %v2632 = vsel %vm126, %v2623, 0
  %v2634 = vsel %vm126, %v2625, 0
  %v2636 = vsel %vm126, %v2627, 0
  %2638 = vmatpush.xpose.msra.mxu0 0.0
  %2639 = vmatpush.xpose.msra.mxu0 0.0
  %2640 = vmatpush.xpose.msra.mxu0 0.0
  %2641 = vmatpush.xpose.msra.mxu0 0.0
  %2642 = vmatpush.xpose.msra.mxu0 0.0
  %2643 = vmatpush.xpose.msra.mxu0 0.0
  %2644 = vmatpush.xpose.msra.mxu0 0.0
  %2645 = vmatpush.xpose.msra.mxu0 0.0
  %2646 = vmatpush.xpose.msra.mxu0 0.0
  %2647 = vmatpush.xpose.msra.mxu0 0.0
  %2648 = vmatpush.xpose.msra.mxu0 0.0
  %2649 = vmatpush.xpose.msra.mxu0 %v1856
  %2650 = vmatpush.xpose.msra.mxu0 %v1853
  %2651 = vmatpush.xpose.msra.mxu0 %v1850
  %2652 = vmatpush.xpose.msra.mxu0 %v1847
  %2653 = vmatpush.xpose.msra.mxu0 %v1844
  %2654 = vmatmul.f32.gmra.mxu0 %v2628
  %v2655 = vpop.f32.mrf.mxu0
  %v2656 = vadd.f32 %v55, %v2655
  %2657 = vmatmul.f32.gmra.mxu0 %v2630
  %v2658 = vpop.f32.mrf.mxu0
  %v2659 = vadd.f32 %v56, %v2658
  %2660 = vmatmul.f32.gmra.mxu0 %v2632
  %v2661 = vpop.f32.mrf.mxu0
  %v2662 = vadd.f32 %v57, %v2661
  %2663 = vmatmul.f32.gmra.mxu0 %v2634
  %v2664 = vpop.f32.mrf.mxu0
  %v2665 = vadd.f32 %v58, %v2664
  %2666 = vmatmul.f32.gmra.mxu0 %v2636
  %v2667 = vpop.f32.mrf.mxu0
  %v2668 = vadd.f32 %v59, %v2667
  %2669 = vdwg.mxu0
  %v2670 = vsel %vm381, %v2656, -inf
  %2671 = vmax.xlane.f32.xlu0 %v2670
  %v2672 = vpop.xlane.xlu0 %2671
  %v2673 = vsel %vm381, %v2659, -inf
  %2674 = vmax.xlane.f32.xlu0 %v2673
  %v2675 = vpop.xlane.xlu0 %2674
  %v2676 = vsel %vm381, %v2662, -inf
  %2677 = vmax.xlane.f32.xlu0 %v2676
  %v2678 = vpop.xlane.xlu0 %2677
  %v2679 = vsel %vm381, %v2665, -inf
  %2680 = vmax.xlane.f32.xlu0 %v2679
  %v2681 = vpop.xlane.xlu0 %2680
  %v2682 = vsel %vm394, %v2668, -inf
  %2683 = vmax.xlane.f32.xlu0 %v2682
  %v2684 = vpop.xlane.xlu0 %2683
  %v2685 = vsub.f32 %v2656, %v2672
  %v2686 = vsub.f32 %v2659, %v2675
  %v2687 = vsub.f32 %v2662, %v2678
  %v2688 = vsub.f32 %v2665, %v2681
  %v2689 = vsub.f32 %v2668, %v2684
  %v2690 = vmul.f32 %v2685, 1.442695
  %v2691 = vpow.pop %v2690
  %v2692 = vmul.f32 %v2686, 1.442695
  %v2693 = vpow.pop %v2692
  %v2694 = vmul.f32 %v2687, 1.442695
  %v2695 = vpow.pop %v2694
  %v2696 = vmul.f32 %v2688, 1.442695
  %v2697 = vpow.pop %v2696
  %v2698 = vmul.f32 %v2689, 1.442695
  %v2699 = vpow.pop %v2698
  %v2700 = vsel %vm381, %v2691, 0.0
  %2701 = vadd.xlane.f32.xlu0 %v2700
  %v2702 = vpop.xlane.xlu0 %2701
  %v2703 = vsel %vm381, %v2693, 0.0
  %2704 = vadd.xlane.f32.xlu0 %v2703
  %v2705 = vpop.xlane.xlu0 %2704
  %v2706 = vsel %vm381, %v2695, 0.0
  %2707 = vadd.xlane.f32.xlu0 %v2706
  %v2708 = vpop.xlane.xlu0 %2707
  %v2709 = vsel %vm381, %v2697, 0.0
  %2710 = vadd.xlane.f32.xlu0 %v2709
  %v2711 = vpop.xlane.xlu0 %2710
  %v2712 = vsel %vm394, %v2699, 0.0
  %2713 = vadd.xlane.f32.xlu0 %v2712
  %v2714 = vpop.xlane.xlu0 %2713
  %v2715 = vrcp.pop %v2702
  %v2716 = vmul.f32 %v2702, %v2715
  %v2717 = vsub.f32 1.0, %v2716
  %v2718 = vmul.f32 %v2715, %v2717
  %v2719 = vadd.f32 %v2715, %v2718
  %vm2720 = vweird.f32 %v2702
  %vm2721 = vweird.f32 %v2715
  %vm2722 = vmor %vm2720, %vm2721
  %v2723 = vsel %vm2722, %v2715, %v2719
  %v2724 = vand.u32 2147483647, %v2702
  %vm2725 = vcmp.eq.f32.partialorder %v2724, 8.507059e+37
  %v2726 = vand.u32 %v2702, 2147483648
  %v2727 = vor.u32 1.1754944e-38, %v2726
  %v2728 = vsel %vm2725, %v2727, %v2723
  %v2729 = vmul.f32 %v2691, %v2728
  %v2730 = vrcp.pop %v2705
  %v2731 = vmul.f32 %v2705, %v2730
  %v2732 = vsub.f32 1.0, %v2731
  %v2733 = vmul.f32 %v2730, %v2732
  %v2734 = vadd.f32 %v2730, %v2733
  %vm2735 = vweird.f32 %v2705
  %vm2736 = vweird.f32 %v2730
  %vm2737 = vmor %vm2735, %vm2736
  %v2738 = vsel %vm2737, %v2730, %v2734
  %v2739 = vand.u32 2147483647, %v2705
  %vm2740 = vcmp.eq.f32.partialorder %v2739, 8.507059e+37
  %v2741 = vand.u32 %v2705, 2147483648
  %v2742 = vor.u32 1.1754944e-38, %v2741
  %v2743 = vsel %vm2740, %v2742, %v2738
  %v2744 = vmul.f32 %v2693, %v2743
  %v2745 = vrcp.pop %v2708
  %v2746 = vmul.f32 %v2708, %v2745
  %v2747 = vsub.f32 1.0, %v2746
  %v2748 = vmul.f32 %v2745, %v2747
  %v2749 = vadd.f32 %v2745, %v2748
  %vm2750 = vweird.f32 %v2708
  %vm2751 = vweird.f32 %v2745
  %vm2752 = vmor %vm2750, %vm2751
  %v2753 = vsel %vm2752, %v2745, %v2749
  %v2754 = vand.u32 2147483647, %v2708
  %vm2755 = vcmp.eq.f32.partialorder %v2754, 8.507059e+37
  %v2756 = vand.u32 %v2708, 2147483648
  %v2757 = vor.u32 1.1754944e-38, %v2756
  %v2758 = vsel %vm2755, %v2757, %v2753
  %v2759 = vmul.f32 %v2695, %v2758
  %v2760 = vrcp.pop %v2711
  %v2761 = vmul.f32 %v2711, %v2760
  %v2762 = vsub.f32 1.0, %v2761
  %v2763 = vmul.f32 %v2760, %v2762
  %v2764 = vadd.f32 %v2760, %v2763
  %vm2765 = vweird.f32 %v2711
  %vm2766 = vweird.f32 %v2760
  %vm2767 = vmor %vm2765, %vm2766
  %v2768 = vsel %vm2767, %v2760, %v2764
  %v2769 = vand.u32 2147483647, %v2711
  %vm2770 = vcmp.eq.f32.partialorder %v2769, 8.507059e+37
  %v2771 = vand.u32 %v2711, 2147483648
  %v2772 = vor.u32 1.1754944e-38, %v2771
  %v2773 = vsel %vm2770, %v2772, %v2768
  %v2774 = vmul.f32 %v2697, %v2773
  %v2775 = vrcp.pop %v2714
  %v2776 = vmul.f32 %v2714, %v2775
  %v2777 = vsub.f32 1.0, %v2776
  %v2778 = vmul.f32 %v2775, %v2777
  %v2779 = vadd.f32 %v2775, %v2778
  %vm2780 = vweird.f32 %v2714
  %vm2781 = vweird.f32 %v2775
  %vm2782 = vmor %vm2780, %vm2781
  %v2783 = vsel %vm2782, %v2775, %v2779
  %v2784 = vand.u32 2147483647, %v2714
  %vm2785 = vcmp.eq.f32.partialorder %v2784, 8.507059e+37
  %v2786 = vand.u32 %v2714, 2147483648
  %v2787 = vor.u32 1.1754944e-38, %v2786
  %v2788 = vsel %vm2785, %v2787, %v2783
  %v2789 = vmul.f32 %v2699, %v2788
  %2790 = vrot.lane.b32.xlu0 %v1908, 32
  %v2791 = vpop.permute.xlu0 %2790
  %2792 = vrot.lane.b32.xlu0 %v1911, 32
  %v2793 = vpop.permute.xlu0 %2792
  %2794 = vrot.lane.b32.xlu0 %v1914, 32
  %v2795 = vpop.permute.xlu0 %2794
  %2796 = vrot.lane.b32.xlu0 %v1917, 32
  %v2797 = vpop.permute.xlu0 %2796
  %2798 = vrot.lane.b32.xlu0 %v1920, 32
  %v2799 = vpop.permute.xlu0 %2798
  %v2805 = vsel %vm381, %v2729, 0
  %v2808 = vsel %vm381, %v2744, 0
  %v2811 = vsel %vm381, %v2759, 0
  %v2814 = vsel %vm381, %v2774, 0
  %v2817 = vsel %vm381, %v2789, 0
  %v2819 = vsel %vm709, %v2799, 0
  %2821 = vmatpush.msra.mxu0 0.0
  %2822 = vmatpush.msra.mxu0 0.0
  %2823 = vmatpush.msra.mxu0 0.0
  %2824 = vmatpush.msra.mxu0 0.0
  %2825 = vmatpush.msra.mxu0 0.0
  %2826 = vmatpush.msra.mxu0 0.0
  %2827 = vmatpush.msra.mxu0 0.0
  %2828 = vmatpush.msra.mxu0 0.0
  %2829 = vmatpush.msra.mxu0 0.0
  %2830 = vmatpush.msra.mxu0 0.0
  %2831 = vmatpush.msra.mxu0 0.0
  %2832 = vmatpush.msra.mxu0 %v2819
  %2833 = vmatpush.msra.mxu0 %v2797
  %2834 = vmatpush.msra.mxu0 %v2795
  %2835 = vmatpush.msra.mxu0 %v2793
  %2836 = vmatpush.msra.mxu0 %v2791
  %2837 = vmatmul.f32.gmra.mxu0 %v2805
  %v2838 = vpop.f32.mrf.mxu0
  %v2839 = vadd.f32 0.0, %v2838
  %2840 = vmatmul.f32.gmra.mxu0 %v2808
  %v2841 = vpop.f32.mrf.mxu0
  %v2842 = vadd.f32 0.0, %v2841
  %2843 = vmatmul.f32.gmra.mxu0 %v2811
  %v2844 = vpop.f32.mrf.mxu0
  %v2845 = vadd.f32 0.0, %v2844
  %2846 = vmatmul.f32.gmra.mxu0 %v2814
  %v2847 = vpop.f32.mrf.mxu0
  %v2848 = vadd.f32 0.0, %v2847
  %2849 = vmatmul.f32.gmra.mxu0 %v2817
  %v2850 = vpop.f32.mrf.mxu0
  %v2851 = vadd.f32 0.0, %v2850
  %2852 = vdwg.mxu0
  %v2853 = vadd.f32 %v2613, %v2839
  %v2854 = vadd.f32 %v2614, %v2842
  %v2855 = vadd.f32 %v2615, %v2845
  %v2856 = vadd.f32 %v2616, %v2848
  %v2857 = vadd.f32 %v2617, %v2851
  %v2858 = vadd.f32 %v1718, %v2853
  %v2859 = vadd.f32 %v1719, %v2854
  %v2860 = vadd.f32 %v1720, %v2855
  %v2861 = vadd.f32 %v1721, %v2856
  %v2862 = vadd.f32 %v1722, %v2857
  %v2863 = vadd.f32 %v2858, %v65
  %v2864 = vadd.f32 %v2859, %v65
  %v2865 = vadd.f32 %v2860, %v65
  %v2866 = vadd.f32 %v2861, %v65
  %v2867 = vadd.f32 %v2862, %v65
  %v2868 = vsel %vm126, %v2863, 0.0
  %2869 = vadd.xlane.f32.xlu0 %v2868
  %v2870 = vpop.xlane.xlu0 %2869
  %v2871 = vsel %vm126, %v2864, 0.0
  %2872 = vadd.xlane.f32.xlu0 %v2871
  %v2873 = vpop.xlane.xlu0 %2872
  %v2874 = vsel %vm126, %v2865, 0.0
  %2875 = vadd.xlane.f32.xlu0 %v2874
  %v2876 = vpop.xlane.xlu0 %2875
  %v2877 = vsel %vm126, %v2866, 0.0
  %2878 = vadd.xlane.f32.xlu0 %v2877
  %v2879 = vpop.xlane.xlu0 %2878
  %v2880 = vsel %vm139, %v2867, 0.0
  %2881 = vadd.xlane.f32.xlu0 %v2880
  %v2882 = vpop.xlane.xlu0 %2881
  %v2883 = vmul.f32 %v2870, %v149
  %v2884 = vmul.f32 %v2873, %v149
  %v2885 = vmul.f32 %v2876, %v149
  %v2886 = vmul.f32 %v2879, %v149
  %v2887 = vmul.f32 %v2882, %v149
  %v2888 = vsub.f32 %v2863, %v2883
  %v2889 = vsub.f32 %v2864, %v2884
  %v2890 = vsub.f32 %v2865, %v2885
  %v2891 = vsub.f32 %v2866, %v2886
  %v2892 = vsub.f32 %v2867, %v2887
  %v2893 = vmul.f32 %v2888, %v2888
  %v2894 = vmul.f32 %v2889, %v2889
  %v2895 = vmul.f32 %v2890, %v2890
  %v2896 = vmul.f32 %v2891, %v2891
  %v2897 = vmul.f32 %v2892, %v2892
  %v2898 = vsel %vm126, %v2893, 0.0
  %2899 = vadd.xlane.f32.xlu0 %v2898
  %v2900 = vpop.xlane.xlu0 %2899
  %v2901 = vsel %vm126, %v2894, 0.0
  %2902 = vadd.xlane.f32.xlu0 %v2901
  %v2903 = vpop.xlane.xlu0 %2902
  %v2904 = vsel %vm126, %v2895, 0.0
  %2905 = vadd.xlane.f32.xlu0 %v2904
  %v2906 = vpop.xlane.xlu0 %2905
  %v2907 = vsel %vm126, %v2896, 0.0
  %2908 = vadd.xlane.f32.xlu0 %v2907
  %v2909 = vpop.xlane.xlu0 %2908
  %v2910 = vsel %vm139, %v2897, 0.0
  %2911 = vadd.xlane.f32.xlu0 %v2910
  %v2912 = vpop.xlane.xlu0 %2911
  %v2913 = vmul.f32 %v2900, %v149
  %v2914 = vmul.f32 %v2903, %v149
  %v2915 = vmul.f32 %v2906, %v149
  %v2916 = vmul.f32 %v2909, %v149
  %v2917 = vmul.f32 %v2912, %v149
  %v2918 = vadd.f32 %v2913, 1e-05
  %v2919 = vadd.f32 %v2914, 1e-05
  %v2920 = vadd.f32 %v2915, 1e-05
  %v2921 = vadd.f32 %v2916, 1e-05
  %v2922 = vadd.f32 %v2917, 1e-05
  %v2923 = vrsqrt.pop %v2918
  %v2924 = vmul.f32 %v2923, %v2918
  %v2925 = vmul.f32 %v2924, %v2923
  %v2926 = vmul.f32 0.5, %v2925
  %v2927 = vsub.f32 1.5, %v2926
  %v2928 = vmul.f32 %v2923, %v2927
  %vm2929 = vweird.f32 %v2918
  %vm2930 = vweird.f32 %v2923
  %vm2931 = vmor %vm2929, %vm2930
  %v2932 = vsel %vm2931, %v2923, %v2928
  %v2933 = vrsqrt.pop %v2919
  %v2934 = vmul.f32 %v2933, %v2919
  %v2935 = vmul.f32 %v2934, %v2933
  %v2936 = vmul.f32 0.5, %v2935
  %v2937 = vsub.f32 1.5, %v2936
  %v2938 = vmul.f32 %v2933, %v2937
  %vm2939 = vweird.f32 %v2919
  %vm2940 = vweird.f32 %v2933
  %vm2941 = vmor %vm2939, %vm2940
  %v2942 = vsel %vm2941, %v2933, %v2938
  %v2943 = vrsqrt.pop %v2920
  %v2944 = vmul.f32 %v2943, %v2920
  %v2945 = vmul.f32 %v2944, %v2943
  %v2946 = vmul.f32 0.5, %v2945
  %v2947 = vsub.f32 1.5, %v2946
  %v2948 = vmul.f32 %v2943, %v2947
  %vm2949 = vweird.f32 %v2920
  %vm2950 = vweird.f32 %v2943
  %vm2951 = vmor %vm2949, %vm2950
  %v2952 = vsel %vm2951, %v2943, %v2948
  %v2953 = vrsqrt.pop %v2921
  %v2954 = vmul.f32 %v2953, %v2921
  %v2955 = vmul.f32 %v2954, %v2953
  %v2956 = vmul.f32 0.5, %v2955
  %v2957 = vsub.f32 1.5, %v2956
  %v2958 = vmul.f32 %v2953, %v2957
  %vm2959 = vweird.f32 %v2921
  %vm2960 = vweird.f32 %v2953
  %vm2961 = vmor %vm2959, %vm2960
  %v2962 = vsel %vm2961, %v2953, %v2958
  %v2963 = vrsqrt.pop %v2922
  %v2964 = vmul.f32 %v2963, %v2922
  %v2965 = vmul.f32 %v2964, %v2963
  %v2966 = vmul.f32 0.5, %v2965
  %v2967 = vsub.f32 1.5, %v2966
  %v2968 = vmul.f32 %v2963, %v2967
  %vm2969 = vweird.f32 %v2922
  %vm2970 = vweird.f32 %v2963
  %vm2971 = vmor %vm2969, %vm2970
  %v2972 = vsel %vm2971, %v2963, %v2968
  %v2973 = vmul.f32 %v2888, %v2932
  %v2974 = vmul.f32 %v2889, %v2942
  %v2975 = vmul.f32 %v2890, %v2952
  %v2976 = vmul.f32 %v2891, %v2962
  %v2977 = vmul.f32 %v2892, %v2972
  %v2978 = vmul.f32 %v2973, %v63
  %v2979 = vmul.f32 %v2974, %v63
  %v2980 = vmul.f32 %v2975, %v63
  %v2981 = vmul.f32 %v2976, %v63
  %v2982 = vmul.f32 %v2977, %v63
  %v2983 = vadd.f32 %v2978, %v64
  %v2984 = vadd.f32 %v2979, %v64
  %v2985 = vadd.f32 %v2980, %v64
  %v2986 = vadd.f32 %v2981, %v64
  %v2987 = vadd.f32 %v2982, %v64
  %v2989 = vsel %vm126, %v2983, 0
  %v2992 = vsel %vm126, %v2984, 0
  %v2995 = vsel %vm126, %v2985, 0
  %v2998 = vsel %vm126, %v2986, 0
  %v3001 = vsel %vm126, %v2987, 0
  %3003 = vmatpush.msra.mxu0 0.0
  %3004 = vmatpush.msra.mxu0 0.0
  %3005 = vmatpush.msra.mxu0 0.0
  %3006 = vmatpush.msra.mxu0 0.0
  %3007 = vmatpush.msra.mxu0 0.0
  %3008 = vmatpush.msra.mxu0 0.0
  %3009 = vmatpush.msra.mxu0 0.0
  %3010 = vmatpush.msra.mxu0 0.0
  %3011 = vmatpush.msra.mxu0 0.0
  %3012 = vmatpush.msra.mxu0 0.0
  %3013 = vmatpush.msra.mxu0 0.0
  %3014 = vmatpush.msra.mxu0 0.0
  %3015 = vmatpush.msra.mxu0 %v38
  %3016 = vmatpush.msra.mxu0 %v37
  %3017 = vmatpush.msra.mxu0 %v36
  %3018 = vmatpush.msra.mxu0 %v35
  %3019 = vmatmul.f32.gmra.mxu0 %v2989
  %v3020 = vpop.f32.mrf.mxu0
  %v3021 = vadd.f32 %v67, %v3020
  %3022 = vmatmul.f32.gmra.mxu0 %v2992
  %v3023 = vpop.f32.mrf.mxu0
  %v3024 = vadd.f32 %v67, %v3023
  %3025 = vmatmul.f32.gmra.mxu0 %v2995
  %v3026 = vpop.f32.mrf.mxu0
  %v3027 = vadd.f32 %v67, %v3026
  %3028 = vmatmul.f32.gmra.mxu0 %v2998
  %v3029 = vpop.f32.mrf.mxu0
  %v3030 = vadd.f32 %v67, %v3029
  %3031 = vmatmul.f32.gmra.mxu0 %v3001
  %v3032 = vpop.f32.mrf.mxu0
  %v3033 = vadd.f32 %v67, %v3032
  %3034 = vdwg.mxu0
  %v3035 = vmul.f32 %v3021, 0.5
  %v3036 = vmul.f32 %v3024, 0.5
  %v3037 = vmul.f32 %v3027, 0.5
  %v3038 = vmul.f32 %v3030, 0.5
  %v3039 = vmul.f32 %v3033, 0.5
  %v3040 = vmul.f32 %v3021, 0.70710677
  %v3041 = vmul.f32 %v3024, 0.70710677
  %v3042 = vmul.f32 %v3027, 0.70710677
  %v3043 = vmul.f32 %v3030, 0.70710677
  %v3044 = vmul.f32 %v3033, 0.70710677
  %v3045 = vmax.f32 %v3040, -4.0
  %v3046 = vmax.f32 %v3041, -4.0
  %v3047 = vmax.f32 %v3042, -4.0
  %v3048 = vmax.f32 %v3043, -4.0
  %v3049 = vmax.f32 %v3044, -4.0
  %v3050 = vmin.f32 %v3045, 4.0
  %v3051 = vmin.f32 %v3046, 4.0
  %v3052 = vmin.f32 %v3047, 4.0
  %v3053 = vmin.f32 %v3048, 4.0
  %v3054 = vmin.f32 %v3049, 4.0
  %v3055 = vmul.f32 %v3050, %v3050
  %v3056 = vmul.f32 %v3051, %v3051
  %v3057 = vmul.f32 %v3052, %v3052
  %v3058 = vmul.f32 %v3053, %v3053
  %v3059 = vmul.f32 %v3054, %v3054
  %v3060 = vmul.f32 %v3055, -2.7261424e-10
  %v3061 = vmul.f32 %v3056, -2.7261424e-10
  %v3062 = vmul.f32 %v3057, -2.7261424e-10
  %v3063 = vmul.f32 %v3058, -2.7261424e-10
  %v3064 = vmul.f32 %v3059, -2.7261424e-10
  %v3065 = vadd.f32 %v3060, 2.7706815e-08
  %v3066 = vadd.f32 %v3061, 2.7706815e-08
  %v3067 = vadd.f32 %v3062, 2.7706815e-08
  %v3068 = vadd.f32 %v3063, 2.7706815e-08
  %v3069 = vadd.f32 %v3064, 2.7706815e-08
  %v3070 = vmul.f32 %v3065, %v3055
  %v3071 = vmul.f32 %v3066, %v3056
  %v3072 = vmul.f32 %v3067, %v3057
  %v3073 = vmul.f32 %v3068, %v3058
  %v3074 = vmul.f32 %v3069, %v3059
  %v3075 = vadd.f32 %v3070, -2.101024e-06
  %v3076 = vadd.f32 %v3071, -2.101024e-06
  %v3077 = vadd.f32 %v3072, -2.101024e-06
  %v3078 = vadd.f32 %v3073, -2.101024e-06
  %v3079 = vadd.f32 %v3074, -2.101024e-06
  %v3080 = vmul.f32 %v3075, %v3055
  %v3081 = vmul.f32 %v3076, %v3056
  %v3082 = vmul.f32 %v3077, %v3057
  %v3083 = vmul.f32 %v3078, %v3058
  %v3084 = vmul.f32 %v3079, %v3059
  %v3085 = vadd.f32 %v3080, -5.6925062e-05
  %v3086 = vadd.f32 %v3081, -5.6925062e-05
  %v3087 = vadd.f32 %v3082, -5.6925062e-05
  %v3088 = vadd.f32 %v3083, -5.6925062e-05
  %v3089 = vadd.f32 %v3084, -5.6925062e-05
  %v3090 = vmul.f32 %v3085, %v3055
  %v3091 = vmul.f32 %v3086, %v3056
  %v3092 = vmul.f32 %v3087, %v3057
  %v3093 = vmul.f32 %v3088, %v3058
  %v3094 = vmul.f32 %v3089, %v3059
  %v3095 = vadd.f32 %v3090, -0.00073499064
  %v3096 = vadd.f32 %v3091, -0.00073499064
  %v3097 = vadd.f32 %v3092, -0.00073499064
  %v3098 = vadd.f32 %v3093, -0.00073499064
  %v3099 = vadd.f32 %v3094, -0.00073499064
  %v3100 = vmul.f32 %v3095, %v3055
  %v3101 = vmul.f32 %v3096, %v3056
  %v3102 = vmul.f32 %v3097, %v3057
  %v3103 = vmul.f32 %v3098, %v3058
  %v3104 = vmul.f32 %v3099, %v3059
  %v3105 = vadd.f32 %v3100, -0.0029546
  %v3106 = vadd.f32 %v3101, -0.0029546
  %v3107 = vadd.f32 %v3102, -0.0029546
  %v3108 = vadd.f32 %v3103, -0.0029546
  %v3109 = vadd.f32 %v3104, -0.0029546
  %v3110 = vmul.f32 %v3105, %v3055
  %v3111 = vmul.f32 %v3106, %v3056
  %v3112 = vmul.f32 %v3107, %v3057
  %v3113 = vmul.f32 %v3108, %v3058
  %v3114 = vmul.f32 %v3109, %v3059
  %v3115 = vadd.f32 %v3110, -0.016096033
  %v3116 = vadd.f32 %v3111, -0.016096033
  %v3117 = vadd.f32 %v3112, -0.016096033
  %v3118 = vadd.f32 %v3113, -0.016096033
  %v3119 = vadd.f32 %v3114, -0.016096033
  %v3120 = vmul.f32 %v3115, %v3050
  %v3121 = vmul.f32 %v3116, %v3051
  %v3122 = vmul.f32 %v3117, %v3052
  %v3123 = vmul.f32 %v3118, %v3053
  %v3124 = vmul.f32 %v3119, %v3054
  %v3125 = vmul.f32 %v3055, -1.45660715e-05
  %v3126 = vmul.f32 %v3056, -1.45660715e-05
  %v3127 = vmul.f32 %v3057, -1.45660715e-05
  %v3128 = vmul.f32 %v3058, -1.45660715e-05
  %v3129 = vmul.f32 %v3059, -1.45660715e-05
  %v3130 = vadd.f32 %v3125, -0.00021337405
  %v3131 = vadd.f32 %v3126, -0.00021337405
  %v3132 = vadd.f32 %v3127, -0.00021337405
  %v3133 = vadd.f32 %v3128, -0.00021337405
  %v3134 = vadd.f32 %v3129, -0.00021337405
  %v3135 = vmul.f32 %v3130, %v3055
  %v3136 = vmul.f32 %v3131, %v3056
  %v3137 = vmul.f32 %v3132, %v3057
  %v3138 = vmul.f32 %v3133, %v3058
  %v3139 = vmul.f32 %v3134, %v3059
  %v3140 = vadd.f32 %v3135, -0.001682827
  %v3141 = vadd.f32 %v3136, -0.001682827
  %v3142 = vadd.f32 %v3137, -0.001682827
  %v3143 = vadd.f32 %v3138, -0.001682827
  %v3144 = vadd.f32 %v3139, -0.001682827
  %v3145 = vmul.f32 %v3140, %v3055
  %v3146 = vmul.f32 %v3141, %v3056
  %v3147 = vmul.f32 %v3142, %v3057
  %v3148 = vmul.f32 %v3143, %v3058
  %v3149 = vmul.f32 %v3144, %v3059
  %v3150 = vadd.f32 %v3145, -0.0073733293
  %v3151 = vadd.f32 %v3146, -0.0073733293
  %v3152 = vadd.f32 %v3147, -0.0073733293
  %v3153 = vadd.f32 %v3148, -0.0073733293
  %v3154 = vadd.f32 %v3149, -0.0073733293
  %v3155 = vmul.f32 %v3150, %v3055
  %v3156 = vmul.f32 %v3151, %v3056
  %v3157 = vmul.f32 %v3152, %v3057
  %v3158 = vmul.f32 %v3153, %v3058
  %v3159 = vmul.f32 %v3154, %v3059
  %v3160 = vadd.f32 %v3155, -0.014264739
  %v3161 = vadd.f32 %v3156, -0.014264739
  %v3162 = vadd.f32 %v3157, -0.014264739
  %v3163 = vadd.f32 %v3158, -0.014264739
  %v3164 = vadd.f32 %v3159, -0.014264739
  %v3165 = vrcp.pop %v3160
  %v3166 = vmul.f32 %v3160, %v3165
  %v3167 = vsub.f32 1.0, %v3166
  %v3168 = vmul.f32 %v3165, %v3167
  %v3169 = vadd.f32 %v3165, %v3168
  %vm3170 = vweird.f32 %v3160
  %vm3171 = vweird.f32 %v3165
  %vm3172 = vmor %vm3170, %vm3171
  %v3173 = vsel %vm3172, %v3165, %v3169
  %v3174 = vand.u32 2147483647, %v3160
  %vm3175 = vcmp.eq.f32.partialorder %v3174, 8.507059e+37
  %v3176 = vand.u32 %v3160, 2147483648
  %v3177 = vor.u32 1.1754944e-38, %v3176
  %v3178 = vsel %vm3175, %v3177, %v3173
  %v3179 = vmul.f32 %v3120, %v3178
  %v3180 = vrcp.pop %v3161
  %v3181 = vmul.f32 %v3161, %v3180
  %v3182 = vsub.f32 1.0, %v3181
  %v3183 = vmul.f32 %v3180, %v3182
  %v3184 = vadd.f32 %v3180, %v3183
  %vm3185 = vweird.f32 %v3161
  %vm3186 = vweird.f32 %v3180
  %vm3187 = vmor %vm3185, %vm3186
  %v3188 = vsel %vm3187, %v3180, %v3184
  %v3189 = vand.u32 2147483647, %v3161
  %vm3190 = vcmp.eq.f32.partialorder %v3189, 8.507059e+37
  %v3191 = vand.u32 %v3161, 2147483648
  %v3192 = vor.u32 1.1754944e-38, %v3191
  %v3193 = vsel %vm3190, %v3192, %v3188
  %v3194 = vmul.f32 %v3121, %v3193
  %v3195 = vrcp.pop %v3162
  %v3196 = vmul.f32 %v3162, %v3195
  %v3197 = vsub.f32 1.0, %v3196
  %v3198 = vmul.f32 %v3195, %v3197
  %v3199 = vadd.f32 %v3195, %v3198
  %vm3200 = vweird.f32 %v3162
  %vm3201 = vweird.f32 %v3195
  %vm3202 = vmor %vm3200, %vm3201
  %v3203 = vsel %vm3202, %v3195, %v3199
  %v3204 = vand.u32 2147483647, %v3162
  %vm3205 = vcmp.eq.f32.partialorder %v3204, 8.507059e+37
  %v3206 = vand.u32 %v3162, 2147483648
  %v3207 = vor.u32 1.1754944e-38, %v3206
  %v3208 = vsel %vm3205, %v3207, %v3203
  %v3209 = vmul.f32 %v3122, %v3208
  %v3210 = vrcp.pop %v3163
  %v3211 = vmul.f32 %v3163, %v3210
  %v3212 = vsub.f32 1.0, %v3211
  %v3213 = vmul.f32 %v3210, %v3212
  %v3214 = vadd.f32 %v3210, %v3213
  %vm3215 = vweird.f32 %v3163
  %vm3216 = vweird.f32 %v3210
  %vm3217 = vmor %vm3215, %vm3216
  %v3218 = vsel %vm3217, %v3210, %v3214
  %v3219 = vand.u32 2147483647, %v3163
  %vm3220 = vcmp.eq.f32.partialorder %v3219, 8.507059e+37
  %v3221 = vand.u32 %v3163, 2147483648
  %v3222 = vor.u32 1.1754944e-38, %v3221
  %v3223 = vsel %vm3220, %v3222, %v3218
  %v3224 = vmul.f32 %v3123, %v3223
  %v3225 = vrcp.pop %v3164
  %v3226 = vmul.f32 %v3164, %v3225
  %v3227 = vsub.f32 1.0, %v3226
  %v3228 = vmul.f32 %v3225, %v3227
  %v3229 = vadd.f32 %v3225, %v3228
  %vm3230 = vweird.f32 %v3164
  %vm3231 = vweird.f32 %v3225
  %vm3232 = vmor %vm3230, %vm3231
  %v3233 = vsel %vm3232, %v3225, %v3229
  %v3234 = vand.u32 2147483647, %v3164
  %vm3235 = vcmp.eq.f32.partialorder %v3234, 8.507059e+37
  %v3236 = vand.u32 %v3164, 2147483648
  %v3237 = vor.u32 1.1754944e-38, %v3236
  %v3238 = vsel %vm3235, %v3237, %v3233
  %v3239 = vmul.f32 %v3124, %v3238
  %v3240 = vadd.f32 %v3179, 1.0
  %v3241 = vadd.f32 %v3194, 1.0
  %v3242 = vadd.f32 %v3209, 1.0
  %v3243 = vadd.f32 %v3224, 1.0
  %v3244 = vadd.f32 %v3239, 1.0
  %v3245 = vmul.f32 %v3035, %v3240
  %v3246 = vmul.f32 %v3036, %v3241
  %v3247 = vmul.f32 %v3037, %v3242
  %v3248 = vmul.f32 %v3038, %v3243
  %v3249 = vmul.f32 %v3039, %v3244
  %v3251 = vsel %vm1665, %v3245, 0
  %v3254 = vsel %vm1665, %v3246, 0
  %v3257 = vsel %vm1665, %v3247, 0
  %v3260 = vsel %vm1665, %v3248, 0
  %v3263 = vsel %vm1665, %v3249, 0
  %3265 = vmatpush.msra.mxu0 0.0
  %3266 = vmatpush.msra.mxu0 0.0
  %3267 = vmatpush.msra.mxu0 0.0
  %3268 = vmatpush.msra.mxu0 0.0
  %3269 = vmatpush.msra.mxu0 0.0
  %3270 = vmatpush.msra.mxu0 0.0
  %3271 = vmatpush.msra.mxu0 0.0
  %3272 = vmatpush.msra.mxu0 0.0
  %3273 = vmatpush.msra.mxu0 %v46
  %3274 = vmatpush.msra.mxu0 %v45
  %3275 = vmatpush.msra.mxu0 %v44
  %3276 = vmatpush.msra.mxu0 %v43
  %3277 = vmatpush.msra.mxu0 %v42
  %3278 = vmatpush.msra.mxu0 %v41
  %3279 = vmatpush.msra.mxu0 %v40
  %3280 = vmatpush.msra.mxu0 %v39
  %3281 = vmatmul.f32.gmra.mxu0 %v3251
  %v3282 = vpop.f32.mrf.mxu0
  %v3283 = vadd.f32 0.0, %v3282
  %3284 = vmatmul.f32.gmra.mxu0 %v3254
  %v3285 = vpop.f32.mrf.mxu0
  %v3286 = vadd.f32 0.0, %v3285
  %3287 = vmatmul.f32.gmra.mxu0 %v3257
  %v3288 = vpop.f32.mrf.mxu0
  %v3289 = vadd.f32 0.0, %v3288
  %3290 = vmatmul.f32.gmra.mxu0 %v3260
  %v3291 = vpop.f32.mrf.mxu0
  %v3292 = vadd.f32 0.0, %v3291
  %3293 = vmatmul.f32.gmra.mxu0 %v3263
  %v3294 = vpop.f32.mrf.mxu0
  %v3295 = vadd.f32 0.0, %v3294
  %3296 = vdwg.mxu0
  %v3297 = vadd.f32 %v2863, %v3283
  %v3298 = vadd.f32 %v2864, %v3286
  %v3299 = vadd.f32 %v2865, %v3289
  %v3300 = vadd.f32 %v2866, %v3292
  %v3301 = vadd.f32 %v2867, %v3295
  %v3302 = vadd.f32 %v3297, %v66
  %v3303 = vadd.f32 %v3298, %v66
  %v3304 = vadd.f32 %v3299, %v66
  %v3305 = vadd.f32 %v3300, %v66
  %v3306 = vadd.f32 %v3301, %v66
  %v3307 = vsel %vm126, %v3302, 0.0
  %3308 = vadd.xlane.f32.xlu0 %v3307
  %v3309 = vpop.xlane.xlu0 %3308
  %v3310 = vsel %vm126, %v3303, 0.0
  %3311 = vadd.xlane.f32.xlu0 %v3310
  %v3312 = vpop.xlane.xlu0 %3311
  %v3313 = vsel %vm126, %v3304, 0.0
  %3314 = vadd.xlane.f32.xlu0 %v3313
  %v3315 = vpop.xlane.xlu0 %3314
  %v3316 = vsel %vm126, %v3305, 0.0
  %3317 = vadd.xlane.f32.xlu0 %v3316
  %v3318 = vpop.xlane.xlu0 %3317
  %v3319 = vsel %vm139, %v3306, 0.0
  %3320 = vadd.xlane.f32.xlu0 %v3319
  %v3321 = vpop.xlane.xlu0 %3320
  %v3322 = vmul.f32 %v3309, %v149
  %v3323 = vmul.f32 %v3312, %v149
  %v3324 = vmul.f32 %v3315, %v149
  %v3325 = vmul.f32 %v3318, %v149
  %v3326 = vmul.f32 %v3321, %v149
  %v3327 = vsub.f32 %v3302, %v3322
  %v3328 = vsub.f32 %v3303, %v3323
  %v3329 = vsub.f32 %v3304, %v3324
  %v3330 = vsub.f32 %v3305, %v3325
  %v3331 = vsub.f32 %v3306, %v3326
  %v3332 = vmul.f32 %v3327, %v3327
  %v3333 = vmul.f32 %v3328, %v3328
  %v3334 = vmul.f32 %v3329, %v3329
  %v3335 = vmul.f32 %v3330, %v3330
  %v3336 = vmul.f32 %v3331, %v3331
  %v3337 = vsel %vm126, %v3332, 0.0
  %3338 = vadd.xlane.f32.xlu0 %v3337
  %v3339 = vpop.xlane.xlu0 %3338
  %v3340 = vsel %vm126, %v3333, 0.0
  %3341 = vadd.xlane.f32.xlu0 %v3340
  %v3342 = vpop.xlane.xlu0 %3341
  %v3343 = vsel %vm126, %v3334, 0.0
  %3344 = vadd.xlane.f32.xlu0 %v3343
  %v3345 = vpop.xlane.xlu0 %3344
  %v3346 = vsel %vm126, %v3335, 0.0
  %3347 = vadd.xlane.f32.xlu0 %v3346
  %v3348 = vpop.xlane.xlu0 %3347
  %v3349 = vsel %vm139, %v3336, 0.0
  %3350 = vadd.xlane.f32.xlu0 %v3349
  %v3351 = vpop.xlane.xlu0 %3350
  %v3352 = vmul.f32 %v3339, %v149
  %v3353 = vmul.f32 %v3342, %v149
  %v3354 = vmul.f32 %v3345, %v149
  %v3355 = vmul.f32 %v3348, %v149
  %v3356 = vmul.f32 %v3351, %v149
  %v3357 = vadd.f32 %v3352, 1e-05
  %v3358 = vadd.f32 %v3353, 1e-05
  %v3359 = vadd.f32 %v3354, 1e-05
  %v3360 = vadd.f32 %v3355, 1e-05
  %v3361 = vadd.f32 %v3356, 1e-05
  %v3362 = vrsqrt.pop %v3357
  %v3363 = vmul.f32 %v3362, %v3357
  %v3364 = vmul.f32 %v3363, %v3362
  %v3365 = vmul.f32 0.5, %v3364
  %v3366 = vsub.f32 1.5, %v3365
  %v3367 = vmul.f32 %v3362, %v3366
  %vm3368 = vweird.f32 %v3357
  %vm3369 = vweird.f32 %v3362
  %vm3370 = vmor %vm3368, %vm3369
  %v3371 = vsel %vm3370, %v3362, %v3367
  %v3372 = vrsqrt.pop %v3358
  %v3373 = vmul.f32 %v3372, %v3358
  %v3374 = vmul.f32 %v3373, %v3372
  %v3375 = vmul.f32 0.5, %v3374
  %v3376 = vsub.f32 1.5, %v3375
  %v3377 = vmul.f32 %v3372, %v3376
  %vm3378 = vweird.f32 %v3358
  %vm3379 = vweird.f32 %v3372
  %vm3380 = vmor %vm3378, %vm3379
  %v3381 = vsel %vm3380, %v3372, %v3377
  %v3382 = vrsqrt.pop %v3359
  %v3383 = vmul.f32 %v3382, %v3359
  %v3384 = vmul.f32 %v3383, %v3382
  %v3385 = vmul.f32 0.5, %v3384
  %v3386 = vsub.f32 1.5, %v3385
  %v3387 = vmul.f32 %v3382, %v3386
  %vm3388 = vweird.f32 %v3359
  %vm3389 = vweird.f32 %v3382
  %vm3390 = vmor %vm3388, %vm3389
  %v3391 = vsel %vm3390, %v3382, %v3387
  %v3392 = vrsqrt.pop %v3360
  %v3393 = vmul.f32 %v3392, %v3360
  %v3394 = vmul.f32 %v3393, %v3392
  %v3395 = vmul.f32 0.5, %v3394
  %v3396 = vsub.f32 1.5, %v3395
  %v3397 = vmul.f32 %v3392, %v3396
  %vm3398 = vweird.f32 %v3360
  %vm3399 = vweird.f32 %v3392
  %vm3400 = vmor %vm3398, %vm3399
  %v3401 = vsel %vm3400, %v3392, %v3397
  %v3402 = vrsqrt.pop %v3361
  %v3403 = vmul.f32 %v3402, %v3361
  %v3404 = vmul.f32 %v3403, %v3402
  %v3405 = vmul.f32 0.5, %v3404
  %v3406 = vsub.f32 1.5, %v3405
  %v3407 = vmul.f32 %v3402, %v3406
  %vm3408 = vweird.f32 %v3361
  %vm3409 = vweird.f32 %v3402
  %vm3410 = vmor %vm3408, %vm3409
  %v3411 = vsel %vm3410, %v3402, %v3407
  %v3412 = vmul.f32 %v3327, %v3371
  %v3413 = vmul.f32 %v3328, %v3381
  %v3414 = vmul.f32 %v3329, %v3391
  %v3415 = vmul.f32 %v3330, %v3401
  %v3416 = vmul.f32 %v3331, %v3411
  %v3417 = vmul.f32 %v3412, %v61
  %v3418 = vmul.f32 %v3413, %v61
  %v3419 = vmul.f32 %v3414, %v61
  %v3420 = vmul.f32 %v3415, %v61
  %v3421 = vmul.f32 %v3416, %v61
  %v3422 = vadd.f32 %v3417, %v62
  %v3423 = vadd.f32 %v3418, %v62
  %v3424 = vadd.f32 %v3419, %v62
  %v3425 = vadd.f32 %v3420, %v62
  %v3426 = vadd.f32 %v3421, %v62
  %v3428 = vsel %vm126, %v3422, 0
  %v3431 = vsel %vm126, %v3423, 0
  %v3434 = vsel %vm126, %v3424, 0
  %v3437 = vsel %vm126, %v3425, 0
  %v3440 = vsel %vm126, %v3426, 0
  %3442 = vmatpush.msra.mxu0 0.0
  %3443 = vmatpush.msra.mxu0 0.0
  %3444 = vmatpush.msra.mxu0 0.0
  %3445 = vmatpush.msra.mxu0 0.0
  %3446 = vmatpush.msra.mxu0 0.0
  %3447 = vmatpush.msra.mxu0 0.0
  %3448 = vmatpush.msra.mxu0 0.0
  %3449 = vmatpush.msra.mxu0 0.0
  %3450 = vmatpush.msra.mxu0 0.0
  %3451 = vmatpush.msra.mxu0 0.0
  %3452 = vmatpush.msra.mxu0 0.0
  %3453 = vmatpush.msra.mxu0 0.0
  %3454 = vmatpush.msra.mxu0 %v50
  %3455 = vmatpush.msra.mxu0 %v49
  %3456 = vmatpush.msra.mxu0 %v48
  %3457 = vmatpush.msra.mxu0 %v47
  %3458 = vmatmul.f32.gmra.mxu0 %v3428
  %v3459 = vpop.f32.mrf.mxu0
  %v3460 = vadd.f32 0.0, %v3459
  %3461 = vmatmul.f32.gmra.mxu0 %v3431
  %v3462 = vpop.f32.mrf.mxu0
  %v3463 = vadd.f32 0.0, %v3462
  %3464 = vmatmul.f32.gmra.mxu0 %v3434
  %v3465 = vpop.f32.mrf.mxu0
  %v3466 = vadd.f32 0.0, %v3465
  %3467 = vmatmul.f32.gmra.mxu0 %v3437
  %v3468 = vpop.f32.mrf.mxu0
  %v3469 = vadd.f32 0.0, %v3468
  %3470 = vmatmul.f32.gmra.mxu0 %v3440
  %v3471 = vpop.f32.mrf.mxu0
  %v3472 = vadd.f32 0.0, %v3471
  %3473 = vdwg.mxu0
  %3474 = vmatpush.msra.mxu0 0.0
  %3475 = vmatpush.msra.mxu0 0.0
  %3476 = vmatpush.msra.mxu0 0.0
  %3477 = vmatpush.msra.mxu0 0.0
  %3478 = vmatpush.msra.mxu0 0.0
  %3479 = vmatpush.msra.mxu0 0.0
  %3480 = vmatpush.msra.mxu0 0.0
  %3481 = vmatpush.msra.mxu0 0.0
  %3482 = vmatpush.msra.mxu0 0.0
  %3483 = vmatpush.msra.mxu0 0.0
  %3484 = vmatpush.msra.mxu0 0.0
  %3485 = vmatpush.msra.mxu0 0.0
  %3486 = vmatpush.msra.mxu0 %v54
  %3487 = vmatpush.msra.mxu0 %v53
  %3488 = vmatpush.msra.mxu0 %v52
  %3489 = vmatpush.msra.mxu0 %v51
  %3490 = vmatmul.f32.gmra.mxu0 %v3428
  %v3491 = vpop.f32.mrf.mxu0
  %v3492 = vadd.f32 0.0, %v3491
  %3493 = vmatmul.f32.gmra.mxu0 %v3431
  %v3494 = vpop.f32.mrf.mxu0
  %v3495 = vadd.f32 0.0, %v3494
  %3496 = vmatmul.f32.gmra.mxu0 %v3434
  %v3497 = vpop.f32.mrf.mxu0
  %v3498 = vadd.f32 0.0, %v3497
  %3499 = vmatmul.f32.gmra.mxu0 %v3437
  %v3500 = vpop.f32.mrf.mxu0
  %v3501 = vadd.f32 0.0, %v3500
  %3502 = vmatmul.f32.gmra.mxu0 %v3440
  %v3503 = vpop.f32.mrf.mxu0
  %v3504 = vadd.f32 0.0, %v3503
  %3505 = vdwg.mxu0
  %v3507 = vsel %vm126, %v3460, 0
  %v3510 = vsel %vm126, %v3463, 0
  %v3513 = vsel %vm126, %v3466, 0
  %v3516 = vsel %vm126, %v3469, 0
  %v3519 = vsel %vm126, %v3472, 0
  %3521 = vmatpush.xpose.msra.mxu0 0.0
  %3522 = vmatpush.xpose.msra.mxu0 0.0
  %3523 = vmatpush.xpose.msra.mxu0 0.0
  %3524 = vmatpush.xpose.msra.mxu0 0.0
  %3525 = vmatpush.xpose.msra.mxu0 0.0
  %3526 = vmatpush.xpose.msra.mxu0 0.0
  %3527 = vmatpush.xpose.msra.mxu0 0.0
  %3528 = vmatpush.xpose.msra.mxu0 0.0
  %3529 = vmatpush.xpose.msra.mxu0 0.0
  %3530 = vmatpush.xpose.msra.mxu0 0.0
  %3531 = vmatpush.xpose.msra.mxu0 0.0
  %3532 = vmatpush.xpose.msra.mxu0 %v3440
  %3533 = vmatpush.xpose.msra.mxu0 %v3437
  %3534 = vmatpush.xpose.msra.mxu0 %v3434
  %3535 = vmatpush.xpose.msra.mxu0 %v3431
  %3536 = vmatpush.xpose.msra.mxu0 %v3428
  %3537 = vmatmul.f32.gmra.mxu0 %v3507
  %v3538 = vpop.f32.mrf.mxu0
  %v3539 = vadd.f32 %v55, %v3538
  %3540 = vmatmul.f32.gmra.mxu0 %v3510
  %v3541 = vpop.f32.mrf.mxu0
  %v3542 = vadd.f32 %v56, %v3541
  %3543 = vmatmul.f32.gmra.mxu0 %v3513
  %v3544 = vpop.f32.mrf.mxu0
  %v3545 = vadd.f32 %v57, %v3544
  %3546 = vmatmul.f32.gmra.mxu0 %v3516
  %v3547 = vpop.f32.mrf.mxu0
  %v3548 = vadd.f32 %v58, %v3547
  %3549 = vmatmul.f32.gmra.mxu0 %v3519
  %v3550 = vpop.f32.mrf.mxu0
  %v3551 = vadd.f32 %v59, %v3550
  %3552 = vdwg.mxu0
  %v3553 = vsel %vm381, %v3539, -inf
  %3554 = vmax.xlane.f32.xlu0 %v3553
  %v3555 = vpop.xlane.xlu0 %3554
  %v3556 = vsel %vm381, %v3542, -inf
  %3557 = vmax.xlane.f32.xlu0 %v3556
  %v3558 = vpop.xlane.xlu0 %3557
  %v3559 = vsel %vm381, %v3545, -inf
  %3560 = vmax.xlane.f32.xlu0 %v3559
  %v3561 = vpop.xlane.xlu0 %3560
  %v3562 = vsel %vm381, %v3548, -inf
  %3563 = vmax.xlane.f32.xlu0 %v3562
  %v3564 = vpop.xlane.xlu0 %3563
  %v3565 = vsel %vm394, %v3551, -inf
  %3566 = vmax.xlane.f32.xlu0 %v3565
  %v3567 = vpop.xlane.xlu0 %3566
  %v3568 = vsub.f32 %v3539, %v3555
  %v3569 = vsub.f32 %v3542, %v3558
  %v3570 = vsub.f32 %v3545, %v3561
  %v3571 = vsub.f32 %v3548, %v3564
  %v3572 = vsub.f32 %v3551, %v3567
  %v3573 = vmul.f32 %v3568, 1.442695
  %v3574 = vpow.pop %v3573
  %v3575 = vmul.f32 %v3569, 1.442695
  %v3576 = vpow.pop %v3575
  %v3577 = vmul.f32 %v3570, 1.442695
  %v3578 = vpow.pop %v3577
  %v3579 = vmul.f32 %v3571, 1.442695
  %v3580 = vpow.pop %v3579
  %v3581 = vmul.f32 %v3572, 1.442695
  %v3582 = vpow.pop %v3581
  %v3583 = vsel %vm381, %v3574, 0.0
  %3584 = vadd.xlane.f32.xlu0 %v3583
  %v3585 = vpop.xlane.xlu0 %3584
  %v3586 = vsel %vm381, %v3576, 0.0
  %3587 = vadd.xlane.f32.xlu0 %v3586
  %v3588 = vpop.xlane.xlu0 %3587
  %v3589 = vsel %vm381, %v3578, 0.0
  %3590 = vadd.xlane.f32.xlu0 %v3589
  %v3591 = vpop.xlane.xlu0 %3590
  %v3592 = vsel %vm381, %v3580, 0.0
  %3593 = vadd.xlane.f32.xlu0 %v3592
  %v3594 = vpop.xlane.xlu0 %3593
  %v3595 = vsel %vm394, %v3582, 0.0
  %3596 = vadd.xlane.f32.xlu0 %v3595
  %v3597 = vpop.xlane.xlu0 %3596
  %v3598 = vrcp.pop %v3585
  %v3599 = vmul.f32 %v3585, %v3598
  %v3600 = vsub.f32 1.0, %v3599
  %v3601 = vmul.f32 %v3598, %v3600
  %v3602 = vadd.f32 %v3598, %v3601
  %vm3603 = vweird.f32 %v3585
  %vm3604 = vweird.f32 %v3598
  %vm3605 = vmor %vm3603, %vm3604
  %v3606 = vsel %vm3605, %v3598, %v3602
  %v3607 = vand.u32 2147483647, %v3585
  %vm3608 = vcmp.eq.f32.partialorder %v3607, 8.507059e+37
  %v3609 = vand.u32 %v3585, 2147483648
  %v3610 = vor.u32 1.1754944e-38, %v3609
  %v3611 = vsel %vm3608, %v3610, %v3606
  %v3612 = vmul.f32 %v3574, %v3611
  %v3613 = vrcp.pop %v3588
  %v3614 = vmul.f32 %v3588, %v3613
  %v3615 = vsub.f32 1.0, %v3614
  %v3616 = vmul.f32 %v3613, %v3615
  %v3617 = vadd.f32 %v3613, %v3616
  %vm3618 = vweird.f32 %v3588
  %vm3619 = vweird.f32 %v3613
  %vm3620 = vmor %vm3618, %vm3619
  %v3621 = vsel %vm3620, %v3613, %v3617
  %v3622 = vand.u32 2147483647, %v3588
  %vm3623 = vcmp.eq.f32.partialorder %v3622, 8.507059e+37
  %v3624 = vand.u32 %v3588, 2147483648
  %v3625 = vor.u32 1.1754944e-38, %v3624
  %v3626 = vsel %vm3623, %v3625, %v3621
  %v3627 = vmul.f32 %v3576, %v3626
  %v3628 = vrcp.pop %v3591
  %v3629 = vmul.f32 %v3591, %v3628
  %v3630 = vsub.f32 1.0, %v3629
  %v3631 = vmul.f32 %v3628, %v3630
  %v3632 = vadd.f32 %v3628, %v3631
  %vm3633 = vweird.f32 %v3591
  %vm3634 = vweird.f32 %v3628
  %vm3635 = vmor %vm3633, %vm3634
  %v3636 = vsel %vm3635, %v3628, %v3632
  %v3637 = vand.u32 2147483647, %v3591
  %vm3638 = vcmp.eq.f32.partialorder %v3637, 8.507059e+37
  %v3639 = vand.u32 %v3591, 2147483648
  %v3640 = vor.u32 1.1754944e-38, %v3639
  %v3641 = vsel %vm3638, %v3640, %v3636
  %v3642 = vmul.f32 %v3578, %v3641
  %v3643 = vrcp.pop %v3594
  %v3644 = vmul.f32 %v3594, %v3643
  %v3645 = vsub.f32 1.0, %v3644
  %v3646 = vmul.f32 %v3643, %v3645
  %v3647 = vadd.f32 %v3643, %v3646
  %vm3648 = vweird.f32 %v3594
  %vm3649 = vweird.f32 %v3643
  %vm3650 = vmor %vm3648, %vm3649
  %v3651 = vsel %vm3650, %v3643, %v3647
  %v3652 = vand.u32 2147483647, %v3594
  %vm3653 = vcmp.eq.f32.partialorder %v3652, 8.507059e+37
  %v3654 = vand.u32 %v3594, 2147483648
  %v3655 = vor.u32 1.1754944e-38, %v3654
  %v3656 = vsel %vm3653, %v3655, %v3651
  %v3657 = vmul.f32 %v3580, %v3656
  %v3658 = vrcp.pop %v3597
  %v3659 = vmul.f32 %v3597, %v3658
  %v3660 = vsub.f32 1.0, %v3659
  %v3661 = vmul.f32 %v3658, %v3660
  %v3662 = vadd.f32 %v3658, %v3661
  %vm3663 = vweird.f32 %v3597
  %vm3664 = vweird.f32 %v3658
  %vm3665 = vmor %vm3663, %vm3664
  %v3666 = vsel %vm3665, %v3658, %v3662
  %v3667 = vand.u32 2147483647, %v3597
  %vm3668 = vcmp.eq.f32.partialorder %v3667, 8.507059e+37
  %v3669 = vand.u32 %v3597, 2147483648
  %v3670 = vor.u32 1.1754944e-38, %v3669
  %v3671 = vsel %vm3668, %v3670, %v3666
  %v3672 = vmul.f32 %v3582, %v3671
  %3673 = vrot.lane.b32.xlu0 %v3460, 96
  %v3674 = vpop.permute.xlu0 %3673
  %3675 = vrot.lane.b32.xlu0 %v3463, 96
  %v3676 = vpop.permute.xlu0 %3675
  %3677 = vrot.lane.b32.xlu0 %v3466, 96
  %v3678 = vpop.permute.xlu0 %3677
  %3679 = vrot.lane.b32.xlu0 %v3469, 96
  %v3680 = vpop.permute.xlu0 %3679
  %3681 = vrot.lane.b32.xlu0 %v3472, 96
  %v3682 = vpop.permute.xlu0 %3681
  %v3683 = vsel %vm126, %v3674, 0
  %v3685 = vsel %vm126, %v3676, 0
  %v3687 = vsel %vm126, %v3678, 0
  %v3689 = vsel %vm126, %v3680, 0
  %v3691 = vsel %vm126, %v3682, 0
  %3693 = vmatpush.xpose.msra.mxu0 0.0
  %3694 = vmatpush.xpose.msra.mxu0 0.0
  %3695 = vmatpush.xpose.msra.mxu0 0.0
  %3696 = vmatpush.xpose.msra.mxu0 0.0
  %3697 = vmatpush.xpose.msra.mxu0 0.0
  %3698 = vmatpush.xpose.msra.mxu0 0.0
  %3699 = vmatpush.xpose.msra.mxu0 0.0
  %3700 = vmatpush.xpose.msra.mxu0 0.0
  %3701 = vmatpush.xpose.msra.mxu0 0.0
  %3702 = vmatpush.xpose.msra.mxu0 0.0
  %3703 = vmatpush.xpose.msra.mxu0 0.0
  %3704 = vmatpush.xpose.msra.mxu0 %v3440
  %3705 = vmatpush.xpose.msra.mxu0 %v3437
  %3706 = vmatpush.xpose.msra.mxu0 %v3434
  %3707 = vmatpush.xpose.msra.mxu0 %v3431
  %3708 = vmatpush.xpose.msra.mxu0 %v3428
  %3709 = vmatmul.f32.gmra.mxu0 %v3683
  %v3710 = vpop.f32.mrf.mxu0
  %v3711 = vadd.f32 %v55, %v3710
  %3712 = vmatmul.f32.gmra.mxu0 %v3685
  %v3713 = vpop.f32.mrf.mxu0
  %v3714 = vadd.f32 %v56, %v3713
  %3715 = vmatmul.f32.gmra.mxu0 %v3687
  %v3716 = vpop.f32.mrf.mxu0
  %v3717 = vadd.f32 %v57, %v3716
  %3718 = vmatmul.f32.gmra.mxu0 %v3689
  %v3719 = vpop.f32.mrf.mxu0
  %v3720 = vadd.f32 %v58, %v3719
  %3721 = vmatmul.f32.gmra.mxu0 %v3691
  %v3722 = vpop.f32.mrf.mxu0
  %v3723 = vadd.f32 %v59, %v3722
  %3724 = vdwg.mxu0
  %v3725 = vsel %vm381, %v3711, -inf
  %3726 = vmax.xlane.f32.xlu0 %v3725
  %v3727 = vpop.xlane.xlu0 %3726
  %v3728 = vsel %vm381, %v3714, -inf
  %3729 = vmax.xlane.f32.xlu0 %v3728
  %v3730 = vpop.xlane.xlu0 %3729
  %v3731 = vsel %vm381, %v3717, -inf
  %3732 = vmax.xlane.f32.xlu0 %v3731
  %v3733 = vpop.xlane.xlu0 %3732
  %v3734 = vsel %vm381, %v3720, -inf
  %3735 = vmax.xlane.f32.xlu0 %v3734
  %v3736 = vpop.xlane.xlu0 %3735
  %v3737 = vsel %vm394, %v3723, -inf
  %3738 = vmax.xlane.f32.xlu0 %v3737
  %v3739 = vpop.xlane.xlu0 %3738
  %v3740 = vsub.f32 %v3711, %v3727
  %v3741 = vsub.f32 %v3714, %v3730
  %v3742 = vsub.f32 %v3717, %v3733
  %v3743 = vsub.f32 %v3720, %v3736
  %v3744 = vsub.f32 %v3723, %v3739
  %v3745 = vmul.f32 %v3740, 1.442695
  %v3746 = vpow.pop %v3745
  %v3747 = vmul.f32 %v3741, 1.442695
  %v3748 = vpow.pop %v3747
  %v3749 = vmul.f32 %v3742, 1.442695
  %v3750 = vpow.pop %v3749
  %v3751 = vmul.f32 %v3743, 1.442695
  %v3752 = vpow.pop %v3751
  %v3753 = vmul.f32 %v3744, 1.442695
  %v3754 = vpow.pop %v3753
  %v3755 = vsel %vm381, %v3746, 0.0
  %3756 = vadd.xlane.f32.xlu0 %v3755
  %v3757 = vpop.xlane.xlu0 %3756
  %v3758 = vsel %vm381, %v3748, 0.0
  %3759 = vadd.xlane.f32.xlu0 %v3758
  %v3760 = vpop.xlane.xlu0 %3759
  %v3761 = vsel %vm381, %v3750, 0.0
  %3762 = vadd.xlane.f32.xlu0 %v3761
  %v3763 = vpop.xlane.xlu0 %3762
  %v3764 = vsel %vm381, %v3752, 0.0
  %3765 = vadd.xlane.f32.xlu0 %v3764
  %v3766 = vpop.xlane.xlu0 %3765
  %v3767 = vsel %vm394, %v3754, 0.0
  %3768 = vadd.xlane.f32.xlu0 %v3767
  %v3769 = vpop.xlane.xlu0 %3768
  %v3770 = vrcp.pop %v3757
  %v3771 = vmul.f32 %v3757, %v3770
  %v3772 = vsub.f32 1.0, %v3771
  %v3773 = vmul.f32 %v3770, %v3772
  %v3774 = vadd.f32 %v3770, %v3773
  %vm3775 = vweird.f32 %v3757
  %vm3776 = vweird.f32 %v3770
  %vm3777 = vmor %vm3775, %vm3776
  %v3778 = vsel %vm3777, %v3770, %v3774
  %v3779 = vand.u32 2147483647, %v3757
  %vm3780 = vcmp.eq.f32.partialorder %v3779, 8.507059e+37
  %v3781 = vand.u32 %v3757, 2147483648
  %v3782 = vor.u32 1.1754944e-38, %v3781
  %v3783 = vsel %vm3780, %v3782, %v3778
  %v3784 = vmul.f32 %v3746, %v3783
  %v3785 = vrcp.pop %v3760
  %v3786 = vmul.f32 %v3760, %v3785
  %v3787 = vsub.f32 1.0, %v3786
  %v3788 = vmul.f32 %v3785, %v3787
  %v3789 = vadd.f32 %v3785, %v3788
  %vm3790 = vweird.f32 %v3760
  %vm3791 = vweird.f32 %v3785
  %vm3792 = vmor %vm3790, %vm3791
  %v3793 = vsel %vm3792, %v3785, %v3789
  %v3794 = vand.u32 2147483647, %v3760
  %vm3795 = vcmp.eq.f32.partialorder %v3794, 8.507059e+37
  %v3796 = vand.u32 %v3760, 2147483648
  %v3797 = vor.u32 1.1754944e-38, %v3796
  %v3798 = vsel %vm3795, %v3797, %v3793
  %v3799 = vmul.f32 %v3748, %v3798
  %v3800 = vrcp.pop %v3763
  %v3801 = vmul.f32 %v3763, %v3800
  %v3802 = vsub.f32 1.0, %v3801
  %v3803 = vmul.f32 %v3800, %v3802
  %v3804 = vadd.f32 %v3800, %v3803
  %vm3805 = vweird.f32 %v3763
  %vm3806 = vweird.f32 %v3800
  %vm3807 = vmor %vm3805, %vm3806
  %v3808 = vsel %vm3807, %v3800, %v3804
  %v3809 = vand.u32 2147483647, %v3763
  %vm3810 = vcmp.eq.f32.partialorder %v3809, 8.507059e+37
  %v3811 = vand.u32 %v3763, 2147483648
  %v3812 = vor.u32 1.1754944e-38, %v3811
  %v3813 = vsel %vm3810, %v3812, %v3808
  %v3814 = vmul.f32 %v3750, %v3813
  %v3815 = vrcp.pop %v3766
  %v3816 = vmul.f32 %v3766, %v3815
  %v3817 = vsub.f32 1.0, %v3816
  %v3818 = vmul.f32 %v3815, %v3817
  %v3819 = vadd.f32 %v3815, %v3818
  %vm3820 = vweird.f32 %v3766
  %vm3821 = vweird.f32 %v3815
  %vm3822 = vmor %vm3820, %vm3821
  %v3823 = vsel %vm3822, %v3815, %v3819
  %v3824 = vand.u32 2147483647, %v3766
  %vm3825 = vcmp.eq.f32.partialorder %v3824, 8.507059e+37
  %v3826 = vand.u32 %v3766, 2147483648
  %v3827 = vor.u32 1.1754944e-38, %v3826
  %v3828 = vsel %vm3825, %v3827, %v3823
  %v3829 = vmul.f32 %v3752, %v3828
  %v3830 = vrcp.pop %v3769
  %v3831 = vmul.f32 %v3769, %v3830
  %v3832 = vsub.f32 1.0, %v3831
  %v3833 = vmul.f32 %v3830, %v3832
  %v3834 = vadd.f32 %v3830, %v3833
  %vm3835 = vweird.f32 %v3769
  %vm3836 = vweird.f32 %v3830
  %vm3837 = vmor %vm3835, %vm3836
  %v3838 = vsel %vm3837, %v3830, %v3834
  %v3839 = vand.u32 2147483647, %v3769
  %vm3840 = vcmp.eq.f32.partialorder %v3839, 8.507059e+37
  %v3841 = vand.u32 %v3769, 2147483648
  %v3842 = vor.u32 1.1754944e-38, %v3841
  %v3843 = vsel %vm3840, %v3842, %v3838
  %v3844 = vmul.f32 %v3754, %v3843
  %3850 = vrot.lane.b32.xlu0 %v3492, 96
  %v3851 = vpop.permute.xlu0 %3850
  %3852 = vrot.lane.b32.xlu0 %v3495, 96
  %v3853 = vpop.permute.xlu0 %3852
  %3854 = vrot.lane.b32.xlu0 %v3498, 96
  %v3855 = vpop.permute.xlu0 %3854
  %3856 = vrot.lane.b32.xlu0 %v3501, 96
  %v3857 = vpop.permute.xlu0 %3856
  %3858 = vrot.lane.b32.xlu0 %v3504, 96
  %v3859 = vpop.permute.xlu0 %3858
  %v3865 = vsel %vm381, %v3784, 0
  %v3868 = vsel %vm381, %v3799, 0
  %v3871 = vsel %vm381, %v3814, 0
  %v3874 = vsel %vm381, %v3829, 0
  %v3877 = vsel %vm381, %v3844, 0
  %v3879 = vsel %vm709, %v3859, 0
  %3881 = vmatpush.msra.mxu0 0.0
  %3882 = vmatpush.msra.mxu0 0.0
  %3883 = vmatpush.msra.mxu0 0.0
  %3884 = vmatpush.msra.mxu0 0.0
  %3885 = vmatpush.msra.mxu0 0.0
  %3886 = vmatpush.msra.mxu0 0.0
  %3887 = vmatpush.msra.mxu0 0.0
  %3888 = vmatpush.msra.mxu0 0.0
  %3889 = vmatpush.msra.mxu0 0.0
  %3890 = vmatpush.msra.mxu0 0.0
  %3891 = vmatpush.msra.mxu0 0.0
  %3892 = vmatpush.msra.mxu0 %v3879
  %3893 = vmatpush.msra.mxu0 %v3857
  %3894 = vmatpush.msra.mxu0 %v3855
  %3895 = vmatpush.msra.mxu0 %v3853
  %3896 = vmatpush.msra.mxu0 %v3851
  %3897 = vmatmul.f32.gmra.mxu0 %v3865
  %v3898 = vpop.f32.mrf.mxu0
  %v3899 = vadd.f32 0.0, %v3898
  %3900 = vmatmul.f32.gmra.mxu0 %v3868
  %v3901 = vpop.f32.mrf.mxu0
  %v3902 = vadd.f32 0.0, %v3901
  %3903 = vmatmul.f32.gmra.mxu0 %v3871
  %v3904 = vpop.f32.mrf.mxu0
  %v3905 = vadd.f32 0.0, %v3904
  %3906 = vmatmul.f32.gmra.mxu0 %v3874
  %v3907 = vpop.f32.mrf.mxu0
  %v3908 = vadd.f32 0.0, %v3907
  %3909 = vmatmul.f32.gmra.mxu0 %v3877
  %v3910 = vpop.f32.mrf.mxu0
  %v3911 = vadd.f32 0.0, %v3910
  %3912 = vdwg.mxu0
  %v3914 = vsel %vm381, %v3612, 0
  %v3917 = vsel %vm381, %v3627, 0
  %v3920 = vsel %vm381, %v3642, 0
  %v3923 = vsel %vm381, %v3657, 0
  %v3926 = vsel %vm381, %v3672, 0
  %v3928 = vsel %vm709, %v3504, 0
  %3930 = vmatpush.msra.mxu0 0.0
  %3931 = vmatpush.msra.mxu0 0.0
  %3932 = vmatpush.msra.mxu0 0.0
  %3933 = vmatpush.msra.mxu0 0.0
  %3934 = vmatpush.msra.mxu0 0.0
  %3935 = vmatpush.msra.mxu0 0.0
  %3936 = vmatpush.msra.mxu0 0.0
  %3937 = vmatpush.msra.mxu0 0.0
  %3938 = vmatpush.msra.mxu0 0.0
  %3939 = vmatpush.msra.mxu0 0.0
  %3940 = vmatpush.msra.mxu0 0.0
  %3941 = vmatpush.msra.mxu0 %v3928
  %3942 = vmatpush.msra.mxu0 %v3501
  %3943 = vmatpush.msra.mxu0 %v3498
  %3944 = vmatpush.msra.mxu0 %v3495
  %3945 = vmatpush.msra.mxu0 %v3492
  %3946 = vmatmul.f32.gmra.mxu0 %v3914
  %v3947 = vpop.f32.mrf.mxu0
  %v3948 = vadd.f32 %v3899, %v3947
  %3949 = vmatmul.f32.gmra.mxu0 %v3917
  %v3950 = vpop.f32.mrf.mxu0
  %v3951 = vadd.f32 %v3902, %v3950
  %3952 = vmatmul.f32.gmra.mxu0 %v3920
  %v3953 = vpop.f32.mrf.mxu0
  %v3954 = vadd.f32 %v3905, %v3953
  %3955 = vmatmul.f32.gmra.mxu0 %v3923
  %v3956 = vpop.f32.mrf.mxu0
  %v3957 = vadd.f32 %v3908, %v3956
  %3958 = vmatmul.f32.gmra.mxu0 %v3926
  %v3959 = vpop.f32.mrf.mxu0
  %v3960 = vadd.f32 %v3911, %v3959
  %3961 = vdwg.mxu0
  %3962 = vrot.lane.b32.xlu0 %v3460, 64
  %v3963 = vpop.permute.xlu0 %3962
  %3964 = vrot.lane.b32.xlu0 %v3463, 64
  %v3965 = vpop.permute.xlu0 %3964
  %3966 = vrot.lane.b32.xlu0 %v3466, 64
  %v3967 = vpop.permute.xlu0 %3966
  %3968 = vrot.lane.b32.xlu0 %v3469, 64
  %v3969 = vpop.permute.xlu0 %3968
  %3970 = vrot.lane.b32.xlu0 %v3472, 64
  %v3971 = vpop.permute.xlu0 %3970
  %v3972 = vsel %vm126, %v3963, 0
  %v3974 = vsel %vm126, %v3965, 0
  %v3976 = vsel %vm126, %v3967, 0
  %v3978 = vsel %vm126, %v3969, 0
  %v3980 = vsel %vm126, %v3971, 0
  %3982 = vmatpush.xpose.msra.mxu0 0.0
  %3983 = vmatpush.xpose.msra.mxu0 0.0
  %3984 = vmatpush.xpose.msra.mxu0 0.0
  %3985 = vmatpush.xpose.msra.mxu0 0.0
  %3986 = vmatpush.xpose.msra.mxu0 0.0
  %3987 = vmatpush.xpose.msra.mxu0 0.0
  %3988 = vmatpush.xpose.msra.mxu0 0.0
  %3989 = vmatpush.xpose.msra.mxu0 0.0
  %3990 = vmatpush.xpose.msra.mxu0 0.0
  %3991 = vmatpush.xpose.msra.mxu0 0.0
  %3992 = vmatpush.xpose.msra.mxu0 0.0
  %3993 = vmatpush.xpose.msra.mxu0 %v3440
  %3994 = vmatpush.xpose.msra.mxu0 %v3437
  %3995 = vmatpush.xpose.msra.mxu0 %v3434
  %3996 = vmatpush.xpose.msra.mxu0 %v3431
  %3997 = vmatpush.xpose.msra.mxu0 %v3428
  %3998 = vmatmul.f32.gmra.mxu0 %v3972
  %v3999 = vpop.f32.mrf.mxu0
  %v4000 = vadd.f32 %v55, %v3999
  %4001 = vmatmul.f32.gmra.mxu0 %v3974
  %v4002 = vpop.f32.mrf.mxu0
  %v4003 = vadd.f32 %v56, %v4002
  %4004 = vmatmul.f32.gmra.mxu0 %v3976
  %v4005 = vpop.f32.mrf.mxu0
  %v4006 = vadd.f32 %v57, %v4005
  %4007 = vmatmul.f32.gmra.mxu0 %v3978
  %v4008 = vpop.f32.mrf.mxu0
  %v4009 = vadd.f32 %v58, %v4008
  %4010 = vmatmul.f32.gmra.mxu0 %v3980
  %v4011 = vpop.f32.mrf.mxu0
  %v4012 = vadd.f32 %v59, %v4011
  %4013 = vdwg.mxu0
  %v4014 = vsel %vm381, %v4000, -inf
  %4015 = vmax.xlane.f32.xlu0 %v4014
  %v4016 = vpop.xlane.xlu0 %4015
  %v4017 = vsel %vm381, %v4003, -inf
  %4018 = vmax.xlane.f32.xlu0 %v4017
  %v4019 = vpop.xlane.xlu0 %4018
  %v4020 = vsel %vm381, %v4006, -inf
  %4021 = vmax.xlane.f32.xlu0 %v4020
  %v4022 = vpop.xlane.xlu0 %4021
  %v4023 = vsel %vm381, %v4009, -inf
  %4024 = vmax.xlane.f32.xlu0 %v4023
  %v4025 = vpop.xlane.xlu0 %4024
  %v4026 = vsel %vm394, %v4012, -inf
  %4027 = vmax.xlane.f32.xlu0 %v4026
  %v4028 = vpop.xlane.xlu0 %4027
  %v4029 = vsub.f32 %v4000, %v4016
  %v4030 = vsub.f32 %v4003, %v4019
  %v4031 = vsub.f32 %v4006, %v4022
  %v4032 = vsub.f32 %v4009, %v4025
  %v4033 = vsub.f32 %v4012, %v4028
  %v4034 = vmul.f32 %v4029, 1.442695
  %v4035 = vpow.pop %v4034
  %v4036 = vmul.f32 %v4030, 1.442695
  %v4037 = vpow.pop %v4036
  %v4038 = vmul.f32 %v4031, 1.442695
  %v4039 = vpow.pop %v4038
  %v4040 = vmul.f32 %v4032, 1.442695
  %v4041 = vpow.pop %v4040
  %v4042 = vmul.f32 %v4033, 1.442695
  %v4043 = vpow.pop %v4042
  %v4044 = vsel %vm381, %v4035, 0.0
  %4045 = vadd.xlane.f32.xlu0 %v4044
  %v4046 = vpop.xlane.xlu0 %4045
  %v4047 = vsel %vm381, %v4037, 0.0
  %4048 = vadd.xlane.f32.xlu0 %v4047
  %v4049 = vpop.xlane.xlu0 %4048
  %v4050 = vsel %vm381, %v4039, 0.0
  %4051 = vadd.xlane.f32.xlu0 %v4050
  %v4052 = vpop.xlane.xlu0 %4051
  %v4053 = vsel %vm381, %v4041, 0.0
  %4054 = vadd.xlane.f32.xlu0 %v4053
  %v4055 = vpop.xlane.xlu0 %4054
  %v4056 = vsel %vm394, %v4043, 0.0
  %4057 = vadd.xlane.f32.xlu0 %v4056
  %v4058 = vpop.xlane.xlu0 %4057
  %v4059 = vrcp.pop %v4046
  %v4060 = vmul.f32 %v4046, %v4059
  %v4061 = vsub.f32 1.0, %v4060
  %v4062 = vmul.f32 %v4059, %v4061
  %v4063 = vadd.f32 %v4059, %v4062
  %vm4064 = vweird.f32 %v4046
  %vm4065 = vweird.f32 %v4059
  %vm4066 = vmor %vm4064, %vm4065
  %v4067 = vsel %vm4066, %v4059, %v4063
  %v4068 = vand.u32 2147483647, %v4046
  %vm4069 = vcmp.eq.f32.partialorder %v4068, 8.507059e+37
  %v4070 = vand.u32 %v4046, 2147483648
  %v4071 = vor.u32 1.1754944e-38, %v4070
  %v4072 = vsel %vm4069, %v4071, %v4067
  %v4073 = vmul.f32 %v4035, %v4072
  %v4074 = vrcp.pop %v4049
  %v4075 = vmul.f32 %v4049, %v4074
  %v4076 = vsub.f32 1.0, %v4075
  %v4077 = vmul.f32 %v4074, %v4076
  %v4078 = vadd.f32 %v4074, %v4077
  %vm4079 = vweird.f32 %v4049
  %vm4080 = vweird.f32 %v4074
  %vm4081 = vmor %vm4079, %vm4080
  %v4082 = vsel %vm4081, %v4074, %v4078
  %v4083 = vand.u32 2147483647, %v4049
  %vm4084 = vcmp.eq.f32.partialorder %v4083, 8.507059e+37
  %v4085 = vand.u32 %v4049, 2147483648
  %v4086 = vor.u32 1.1754944e-38, %v4085
  %v4087 = vsel %vm4084, %v4086, %v4082
  %v4088 = vmul.f32 %v4037, %v4087
  %v4089 = vrcp.pop %v4052
  %v4090 = vmul.f32 %v4052, %v4089
  %v4091 = vsub.f32 1.0, %v4090
  %v4092 = vmul.f32 %v4089, %v4091
  %v4093 = vadd.f32 %v4089, %v4092
  %vm4094 = vweird.f32 %v4052
  %vm4095 = vweird.f32 %v4089
  %vm4096 = vmor %vm4094, %vm4095
  %v4097 = vsel %vm4096, %v4089, %v4093
  %v4098 = vand.u32 2147483647, %v4052
  %vm4099 = vcmp.eq.f32.partialorder %v4098, 8.507059e+37
  %v4100 = vand.u32 %v4052, 2147483648
  %v4101 = vor.u32 1.1754944e-38, %v4100
  %v4102 = vsel %vm4099, %v4101, %v4097
  %v4103 = vmul.f32 %v4039, %v4102
  %v4104 = vrcp.pop %v4055
  %v4105 = vmul.f32 %v4055, %v4104
  %v4106 = vsub.f32 1.0, %v4105
  %v4107 = vmul.f32 %v4104, %v4106
  %v4108 = vadd.f32 %v4104, %v4107
  %vm4109 = vweird.f32 %v4055
  %vm4110 = vweird.f32 %v4104
  %vm4111 = vmor %vm4109, %vm4110
  %v4112 = vsel %vm4111, %v4104, %v4108
  %v4113 = vand.u32 2147483647, %v4055
  %vm4114 = vcmp.eq.f32.partialorder %v4113, 8.507059e+37
  %v4115 = vand.u32 %v4055, 2147483648
  %v4116 = vor.u32 1.1754944e-38, %v4115
  %v4117 = vsel %vm4114, %v4116, %v4112
  %v4118 = vmul.f32 %v4041, %v4117
  %v4119 = vrcp.pop %v4058
  %v4120 = vmul.f32 %v4058, %v4119
  %v4121 = vsub.f32 1.0, %v4120
  %v4122 = vmul.f32 %v4119, %v4121
  %v4123 = vadd.f32 %v4119, %v4122
  %vm4124 = vweird.f32 %v4058
  %vm4125 = vweird.f32 %v4119
  %vm4126 = vmor %vm4124, %vm4125
  %v4127 = vsel %vm4126, %v4119, %v4123
  %v4128 = vand.u32 2147483647, %v4058
  %vm4129 = vcmp.eq.f32.partialorder %v4128, 8.507059e+37
  %v4130 = vand.u32 %v4058, 2147483648
  %v4131 = vor.u32 1.1754944e-38, %v4130
  %v4132 = vsel %vm4129, %v4131, %v4127
  %v4133 = vmul.f32 %v4043, %v4132
  %4134 = vrot.lane.b32.xlu0 %v3492, 64
  %v4135 = vpop.permute.xlu0 %4134
  %4136 = vrot.lane.b32.xlu0 %v3495, 64
  %v4137 = vpop.permute.xlu0 %4136
  %4138 = vrot.lane.b32.xlu0 %v3498, 64
  %v4139 = vpop.permute.xlu0 %4138
  %4140 = vrot.lane.b32.xlu0 %v3501, 64
  %v4141 = vpop.permute.xlu0 %4140
  %4142 = vrot.lane.b32.xlu0 %v3504, 64
  %v4143 = vpop.permute.xlu0 %4142
  %v4149 = vsel %vm381, %v4073, 0
  %v4152 = vsel %vm381, %v4088, 0
  %v4155 = vsel %vm381, %v4103, 0
  %v4158 = vsel %vm381, %v4118, 0
  %v4161 = vsel %vm381, %v4133, 0
  %v4163 = vsel %vm709, %v4143, 0
  %4165 = vmatpush.msra.mxu0 0.0
  %4166 = vmatpush.msra.mxu0 0.0
  %4167 = vmatpush.msra.mxu0 0.0
  %4168 = vmatpush.msra.mxu0 0.0
  %4169 = vmatpush.msra.mxu0 0.0
  %4170 = vmatpush.msra.mxu0 0.0
  %4171 = vmatpush.msra.mxu0 0.0
  %4172 = vmatpush.msra.mxu0 0.0
  %4173 = vmatpush.msra.mxu0 0.0
  %4174 = vmatpush.msra.mxu0 0.0
  %4175 = vmatpush.msra.mxu0 0.0
  %4176 = vmatpush.msra.mxu0 %v4163
  %4177 = vmatpush.msra.mxu0 %v4141
  %4178 = vmatpush.msra.mxu0 %v4139
  %4179 = vmatpush.msra.mxu0 %v4137
  %4180 = vmatpush.msra.mxu0 %v4135
  %4181 = vmatmul.f32.gmra.mxu0 %v4149
  %v4182 = vpop.f32.mrf.mxu0
  %v4183 = vadd.f32 0.0, %v4182
  %4184 = vmatmul.f32.gmra.mxu0 %v4152
  %v4185 = vpop.f32.mrf.mxu0
  %v4186 = vadd.f32 0.0, %v4185
  %4187 = vmatmul.f32.gmra.mxu0 %v4155
  %v4188 = vpop.f32.mrf.mxu0
  %v4189 = vadd.f32 0.0, %v4188
  %4190 = vmatmul.f32.gmra.mxu0 %v4158
  %v4191 = vpop.f32.mrf.mxu0
  %v4192 = vadd.f32 0.0, %v4191
  %4193 = vmatmul.f32.gmra.mxu0 %v4161
  %v4194 = vpop.f32.mrf.mxu0
  %v4195 = vadd.f32 0.0, %v4194
  %4196 = vdwg.mxu0
  %v4197 = vadd.f32 %v3948, %v4183
  %v4198 = vadd.f32 %v3951, %v4186
  %v4199 = vadd.f32 %v3954, %v4189
  %v4200 = vadd.f32 %v3957, %v4192
  %v4201 = vadd.f32 %v3960, %v4195
  %4202 = vrot.lane.b32.xlu0 %v3460, 32
  %v4203 = vpop.permute.xlu0 %4202
  %4204 = vrot.lane.b32.xlu0 %v3463, 32
  %v4205 = vpop.permute.xlu0 %4204
  %4206 = vrot.lane.b32.xlu0 %v3466, 32
  %v4207 = vpop.permute.xlu0 %4206
  %4208 = vrot.lane.b32.xlu0 %v3469, 32
  %v4209 = vpop.permute.xlu0 %4208
  %4210 = vrot.lane.b32.xlu0 %v3472, 32
  %v4211 = vpop.permute.xlu0 %4210
  %v4212 = vsel %vm126, %v4203, 0
  %v4214 = vsel %vm126, %v4205, 0
  %v4216 = vsel %vm126, %v4207, 0
  %v4218 = vsel %vm126, %v4209, 0
  %v4220 = vsel %vm126, %v4211, 0
  %4222 = vmatpush.xpose.msra.mxu0 0.0
  %4223 = vmatpush.xpose.msra.mxu0 0.0
  %4224 = vmatpush.xpose.msra.mxu0 0.0
  %4225 = vmatpush.xpose.msra.mxu0 0.0
  %4226 = vmatpush.xpose.msra.mxu0 0.0
  %4227 = vmatpush.xpose.msra.mxu0 0.0
  %4228 = vmatpush.xpose.msra.mxu0 0.0
  %4229 = vmatpush.xpose.msra.mxu0 0.0
  %4230 = vmatpush.xpose.msra.mxu0 0.0
  %4231 = vmatpush.xpose.msra.mxu0 0.0
  %4232 = vmatpush.xpose.msra.mxu0 0.0
  %4233 = vmatpush.xpose.msra.mxu0 %v3440
  %4234 = vmatpush.xpose.msra.mxu0 %v3437
  %4235 = vmatpush.xpose.msra.mxu0 %v3434
  %4236 = vmatpush.xpose.msra.mxu0 %v3431
  %4237 = vmatpush.xpose.msra.mxu0 %v3428
  %4238 = vmatmul.f32.gmra.mxu0 %v4212
  %v4239 = vpop.f32.mrf.mxu0
  %v4240 = vadd.f32 %v55, %v4239
  %4241 = vmatmul.f32.gmra.mxu0 %v4214
  %v4242 = vpop.f32.mrf.mxu0
  %v4243 = vadd.f32 %v56, %v4242
  %4244 = vmatmul.f32.gmra.mxu0 %v4216
  %v4245 = vpop.f32.mrf.mxu0
  %v4246 = vadd.f32 %v57, %v4245
  %4247 = vmatmul.f32.gmra.mxu0 %v4218
  %v4248 = vpop.f32.mrf.mxu0
  %v4249 = vadd.f32 %v58, %v4248
  %4250 = vmatmul.f32.gmra.mxu0 %v4220
  %v4251 = vpop.f32.mrf.mxu0
  %v4252 = vadd.f32 %v59, %v4251
  %4253 = vdwg.mxu0
  %v4254 = vsel %vm381, %v4240, -inf
  %4255 = vmax.xlane.f32.xlu0 %v4254
  %v4256 = vpop.xlane.xlu0 %4255
  %v4257 = vsel %vm381, %v4243, -inf
  %4258 = vmax.xlane.f32.xlu0 %v4257
  %v4259 = vpop.xlane.xlu0 %4258
  %v4260 = vsel %vm381, %v4246, -inf
  %4261 = vmax.xlane.f32.xlu0 %v4260
  %v4262 = vpop.xlane.xlu0 %4261
  %v4263 = vsel %vm381, %v4249, -inf
  %4264 = vmax.xlane.f32.xlu0 %v4263
  %v4265 = vpop.xlane.xlu0 %4264
  %v4266 = vsel %vm394, %v4252, -inf
  %4267 = vmax.xlane.f32.xlu0 %v4266
  %v4268 = vpop.xlane.xlu0 %4267
  %v4269 = vsub.f32 %v4240, %v4256
  %v4270 = vsub.f32 %v4243, %v4259
  %v4271 = vsub.f32 %v4246, %v4262
  %v4272 = vsub.f32 %v4249, %v4265
  %v4273 = vsub.f32 %v4252, %v4268
  %v4274 = vmul.f32 %v4269, 1.442695
  %v4275 = vpow.pop %v4274
  %v4276 = vmul.f32 %v4270, 1.442695
  %v4277 = vpow.pop %v4276
  %v4278 = vmul.f32 %v4271, 1.442695
  %v4279 = vpow.pop %v4278
  %v4280 = vmul.f32 %v4272, 1.442695
  %v4281 = vpow.pop %v4280
  %v4282 = vmul.f32 %v4273, 1.442695
  %v4283 = vpow.pop %v4282
  %v4284 = vsel %vm381, %v4275, 0.0
  %4285 = vadd.xlane.f32.xlu0 %v4284
  %v4286 = vpop.xlane.xlu0 %4285
  %v4287 = vsel %vm381, %v4277, 0.0
  %4288 = vadd.xlane.f32.xlu0 %v4287
  %v4289 = vpop.xlane.xlu0 %4288
  %v4290 = vsel %vm381, %v4279, 0.0
  %4291 = vadd.xlane.f32.xlu0 %v4290
  %v4292 = vpop.xlane.xlu0 %4291
  %v4293 = vsel %vm381, %v4281, 0.0
  %4294 = vadd.xlane.f32.xlu0 %v4293
  %v4295 = vpop.xlane.xlu0 %4294
  %v4296 = vsel %vm394, %v4283, 0.0
  %4297 = vadd.xlane.f32.xlu0 %v4296
  %v4298 = vpop.xlane.xlu0 %4297
  %v4299 = vrcp.pop %v4286
  %v4300 = vmul.f32 %v4286, %v4299
  %v4301 = vsub.f32 1.0, %v4300
  %v4302 = vmul.f32 %v4299, %v4301
  %v4303 = vadd.f32 %v4299, %v4302
  %vm4304 = vweird.f32 %v4286
  %vm4305 = vweird.f32 %v4299
  %vm4306 = vmor %vm4304, %vm4305
  %v4307 = vsel %vm4306, %v4299, %v4303
  %v4308 = vand.u32 2147483647, %v4286
  %vm4309 = vcmp.eq.f32.partialorder %v4308, 8.507059e+37
  %v4310 = vand.u32 %v4286, 2147483648
  %v4311 = vor.u32 1.1754944e-38, %v4310
  %v4312 = vsel %vm4309, %v4311, %v4307
  %v4313 = vmul.f32 %v4275, %v4312
  %v4314 = vrcp.pop %v4289
  %v4315 = vmul.f32 %v4289, %v4314
  %v4316 = vsub.f32 1.0, %v4315
  %v4317 = vmul.f32 %v4314, %v4316
  %v4318 = vadd.f32 %v4314, %v4317
  %vm4319 = vweird.f32 %v4289
  %vm4320 = vweird.f32 %v4314
  %vm4321 = vmor %vm4319, %vm4320
  %v4322 = vsel %vm4321, %v4314, %v4318
  %v4323 = vand.u32 2147483647, %v4289
  %vm4324 = vcmp.eq.f32.partialorder %v4323, 8.507059e+37
  %v4325 = vand.u32 %v4289, 2147483648
  %v4326 = vor.u32 1.1754944e-38, %v4325
  %v4327 = vsel %vm4324, %v4326, %v4322
  %v4328 = vmul.f32 %v4277, %v4327
  %v4329 = vrcp.pop %v4292
  %v4330 = vmul.f32 %v4292, %v4329
  %v4331 = vsub.f32 1.0, %v4330
  %v4332 = vmul.f32 %v4329, %v4331
  %v4333 = vadd.f32 %v4329, %v4332
  %vm4334 = vweird.f32 %v4292
  %vm4335 = vweird.f32 %v4329
  %vm4336 = vmor %vm4334, %vm4335
  %v4337 = vsel %vm4336, %v4329, %v4333
  %v4338 = vand.u32 2147483647, %v4292
  %vm4339 = vcmp.eq.f32.partialorder %v4338, 8.507059e+37
  %v4340 = vand.u32 %v4292, 2147483648
  %v4341 = vor.u32 1.1754944e-38, %v4340
  %v4342 = vsel %vm4339, %v4341, %v4337
  %v4343 = vmul.f32 %v4279, %v4342
  %v4344 = vrcp.pop %v4295
  %v4345 = vmul.f32 %v4295, %v4344
  %v4346 = vsub.f32 1.0, %v4345
  %v4347 = vmul.f32 %v4344, %v4346
  %v4348 = vadd.f32 %v4344, %v4347
  %vm4349 = vweird.f32 %v4295
  %vm4350 = vweird.f32 %v4344
  %vm4351 = vmor %vm4349, %vm4350
  %v4352 = vsel %vm4351, %v4344, %v4348
  %v4353 = vand.u32 2147483647, %v4295
  %vm4354 = vcmp.eq.f32.partialorder %v4353, 8.507059e+37
  %v4355 = vand.u32 %v4295, 2147483648
  %v4356 = vor.u32 1.1754944e-38, %v4355
  %v4357 = vsel %vm4354, %v4356, %v4352
  %v4358 = vmul.f32 %v4281, %v4357
  %v4359 = vrcp.pop %v4298
  %v4360 = vmul.f32 %v4298, %v4359
  %v4361 = vsub.f32 1.0, %v4360
  %v4362 = vmul.f32 %v4359, %v4361
  %v4363 = vadd.f32 %v4359, %v4362
  %vm4364 = vweird.f32 %v4298
  %vm4365 = vweird.f32 %v4359
  %vm4366 = vmor %vm4364, %vm4365
  %v4367 = vsel %vm4366, %v4359, %v4363
  %v4368 = vand.u32 2147483647, %v4298
  %vm4369 = vcmp.eq.f32.partialorder %v4368, 8.507059e+37
  %v4370 = vand.u32 %v4298, 2147483648
  %v4371 = vor.u32 1.1754944e-38, %v4370
  %v4372 = vsel %vm4369, %v4371, %v4367
  %v4373 = vmul.f32 %v4283, %v4372
  %4374 = vrot.lane.b32.xlu0 %v3492, 32
  %v4375 = vpop.permute.xlu0 %4374
  %4376 = vrot.lane.b32.xlu0 %v3495, 32
  %v4377 = vpop.permute.xlu0 %4376
  %4378 = vrot.lane.b32.xlu0 %v3498, 32
  %v4379 = vpop.permute.xlu0 %4378
  %4380 = vrot.lane.b32.xlu0 %v3501, 32
  %v4381 = vpop.permute.xlu0 %4380
  %4382 = vrot.lane.b32.xlu0 %v3504, 32
  %v4383 = vpop.permute.xlu0 %4382
  %v4389 = vsel %vm381, %v4313, 0
  %v4392 = vsel %vm381, %v4328, 0
  %v4395 = vsel %vm381, %v4343, 0
  %v4398 = vsel %vm381, %v4358, 0
  %v4401 = vsel %vm381, %v4373, 0
  %v4403 = vsel %vm709, %v4383, 0
  %4405 = vmatpush.msra.mxu0 0.0
  %4406 = vmatpush.msra.mxu0 0.0
  %4407 = vmatpush.msra.mxu0 0.0
  %4408 = vmatpush.msra.mxu0 0.0
  %4409 = vmatpush.msra.mxu0 0.0
  %4410 = vmatpush.msra.mxu0 0.0
  %4411 = vmatpush.msra.mxu0 0.0
  %4412 = vmatpush.msra.mxu0 0.0
  %4413 = vmatpush.msra.mxu0 0.0
  %4414 = vmatpush.msra.mxu0 0.0
  %4415 = vmatpush.msra.mxu0 0.0
  %4416 = vmatpush.msra.mxu0 %v4403
  %4417 = vmatpush.msra.mxu0 %v4381
  %4418 = vmatpush.msra.mxu0 %v4379
  %4419 = vmatpush.msra.mxu0 %v4377
  %4420 = vmatpush.msra.mxu0 %v4375
  %4421 = vmatmul.f32.gmra.mxu0 %v4389
  %v4422 = vpop.f32.mrf.mxu0
  %v4423 = vadd.f32 0.0, %v4422
  %4424 = vmatmul.f32.gmra.mxu0 %v4392
  %v4425 = vpop.f32.mrf.mxu0
  %v4426 = vadd.f32 0.0, %v4425
  %4427 = vmatmul.f32.gmra.mxu0 %v4395
  %v4428 = vpop.f32.mrf.mxu0
  %v4429 = vadd.f32 0.0, %v4428
  %4430 = vmatmul.f32.gmra.mxu0 %v4398
  %v4431 = vpop.f32.mrf.mxu0
  %v4432 = vadd.f32 0.0, %v4431
  %4433 = vmatmul.f32.gmra.mxu0 %v4401
  %v4434 = vpop.f32.mrf.mxu0
  %v4435 = vadd.f32 0.0, %v4434
  %4436 = vdwg.mxu0
  %v4437 = vadd.f32 %v4197, %v4423
  %v4438 = vadd.f32 %v4198, %v4426
  %v4439 = vadd.f32 %v4199, %v4429
  %v4440 = vadd.f32 %v4200, %v4432
  %v4441 = vadd.f32 %v4201, %v4435
  %v4442 = vadd.f32 %v3302, %v4437
  %v4443 = vadd.f32 %v3303, %v4438
  %v4444 = vadd.f32 %v3304, %v4439
  %v4445 = vadd.f32 %v3305, %v4440
  %v4446 = vadd.f32 %v3306, %v4441
  %v4447 = vadd.f32 %v4442, %v65
  %v4448 = vadd.f32 %v4443, %v65
  %v4449 = vadd.f32 %v4444, %v65
  %v4450 = vadd.f32 %v4445, %v65
  %v4451 = vadd.f32 %v4446, %v65
  %v4452 = vsel %vm126, %v4447, 0.0
  %4453 = vadd.xlane.f32.xlu0 %v4452
  %v4454 = vpop.xlane.xlu0 %4453
  %v4455 = vsel %vm126, %v4448, 0.0
  %4456 = vadd.xlane.f32.xlu0 %v4455
  %v4457 = vpop.xlane.xlu0 %4456
  %v4458 = vsel %vm126, %v4449, 0.0
  %4459 = vadd.xlane.f32.xlu0 %v4458
  %v4460 = vpop.xlane.xlu0 %4459
  %v4461 = vsel %vm126, %v4450, 0.0
  %4462 = vadd.xlane.f32.xlu0 %v4461
  %v4463 = vpop.xlane.xlu0 %4462
  %v4464 = vsel %vm139, %v4451, 0.0
  %4465 = vadd.xlane.f32.xlu0 %v4464
  %v4466 = vpop.xlane.xlu0 %4465
  %v4467 = vmul.f32 %v4454, %v149
  %v4468 = vmul.f32 %v4457, %v149
  %v4469 = vmul.f32 %v4460, %v149
  %v4470 = vmul.f32 %v4463, %v149
  %v4471 = vmul.f32 %v4466, %v149
  %v4472 = vsub.f32 %v4447, %v4467
  %v4473 = vsub.f32 %v4448, %v4468
  %v4474 = vsub.f32 %v4449, %v4469
  %v4475 = vsub.f32 %v4450, %v4470
  %v4476 = vsub.f32 %v4451, %v4471
  %v4477 = vmul.f32 %v4472, %v4472
  %v4478 = vmul.f32 %v4473, %v4473
  %v4479 = vmul.f32 %v4474, %v4474
  %v4480 = vmul.f32 %v4475, %v4475
  %v4481 = vmul.f32 %v4476, %v4476
  %v4482 = vsel %vm126, %v4477, 0.0
  %4483 = vadd.xlane.f32.xlu0 %v4482
  %v4484 = vpop.xlane.xlu0 %4483
  %v4485 = vsel %vm126, %v4478, 0.0
  %4486 = vadd.xlane.f32.xlu0 %v4485
  %v4487 = vpop.xlane.xlu0 %4486
  %v4488 = vsel %vm126, %v4479, 0.0
  %4489 = vadd.xlane.f32.xlu0 %v4488
  %v4490 = vpop.xlane.xlu0 %4489
  %v4491 = vsel %vm126, %v4480, 0.0
  %4492 = vadd.xlane.f32.xlu0 %v4491
  %v4493 = vpop.xlane.xlu0 %4492
  %v4494 = vsel %vm139, %v4481, 0.0
  %4495 = vadd.xlane.f32.xlu0 %v4494
  %v4496 = vpop.xlane.xlu0 %4495
  %v4497 = vmul.f32 %v4484, %v149
  %v4498 = vmul.f32 %v4487, %v149
  %v4499 = vmul.f32 %v4490, %v149
  %v4500 = vmul.f32 %v4493, %v149
  %v4501 = vmul.f32 %v4496, %v149
  %v4502 = vadd.f32 %v4497, 1e-05
  %v4503 = vadd.f32 %v4498, 1e-05
  %v4504 = vadd.f32 %v4499, 1e-05
  %v4505 = vadd.f32 %v4500, 1e-05
  %v4506 = vadd.f32 %v4501, 1e-05
  %v4507 = vrsqrt.pop %v4502
  %v4508 = vmul.f32 %v4507, %v4502
  %v4509 = vmul.f32 %v4508, %v4507
  %v4510 = vmul.f32 0.5, %v4509
  %v4511 = vsub.f32 1.5, %v4510
  %v4512 = vmul.f32 %v4507, %v4511
  %vm4513 = vweird.f32 %v4502
  %vm4514 = vweird.f32 %v4507
  %vm4515 = vmor %vm4513, %vm4514
  %v4516 = vsel %vm4515, %v4507, %v4512
  %v4517 = vrsqrt.pop %v4503
  %v4518 = vmul.f32 %v4517, %v4503
  %v4519 = vmul.f32 %v4518, %v4517
  %v4520 = vmul.f32 0.5, %v4519
  %v4521 = vsub.f32 1.5, %v4520
  %v4522 = vmul.f32 %v4517, %v4521
  %vm4523 = vweird.f32 %v4503
  %vm4524 = vweird.f32 %v4517
  %vm4525 = vmor %vm4523, %vm4524
  %v4526 = vsel %vm4525, %v4517, %v4522
  %v4527 = vrsqrt.pop %v4504
  %v4528 = vmul.f32 %v4527, %v4504
  %v4529 = vmul.f32 %v4528, %v4527
  %v4530 = vmul.f32 0.5, %v4529
  %v4531 = vsub.f32 1.5, %v4530
  %v4532 = vmul.f32 %v4527, %v4531
  %vm4533 = vweird.f32 %v4504
  %vm4534 = vweird.f32 %v4527
  %vm4535 = vmor %vm4533, %vm4534
  %v4536 = vsel %vm4535, %v4527, %v4532
  %v4537 = vrsqrt.pop %v4505
  %v4538 = vmul.f32 %v4537, %v4505
  %v4539 = vmul.f32 %v4538, %v4537
  %v4540 = vmul.f32 0.5, %v4539
  %v4541 = vsub.f32 1.5, %v4540
  %v4542 = vmul.f32 %v4537, %v4541
  %vm4543 = vweird.f32 %v4505
  %vm4544 = vweird.f32 %v4537
  %vm4545 = vmor %vm4543, %vm4544
  %v4546 = vsel %vm4545, %v4537, %v4542
  %v4547 = vrsqrt.pop %v4506
  %v4548 = vmul.f32 %v4547, %v4506
  %v4549 = vmul.f32 %v4548, %v4547
  %v4550 = vmul.f32 0.5, %v4549
  %v4551 = vsub.f32 1.5, %v4550
  %v4552 = vmul.f32 %v4547, %v4551
  %vm4553 = vweird.f32 %v4506
  %vm4554 = vweird.f32 %v4547
  %vm4555 = vmor %vm4553, %vm4554
  %v4556 = vsel %vm4555, %v4547, %v4552
  %v4557 = vmul.f32 %v4472, %v4516
  %v4558 = vmul.f32 %v4473, %v4526
  %v4559 = vmul.f32 %v4474, %v4536
  %v4560 = vmul.f32 %v4475, %v4546
  %v4561 = vmul.f32 %v4476, %v4556
  %v4562 = vmul.f32 %v4557, %v63
  %v4563 = vmul.f32 %v4558, %v63
  %v4564 = vmul.f32 %v4559, %v63
  %v4565 = vmul.f32 %v4560, %v63
  %v4566 = vmul.f32 %v4561, %v63
  %v4567 = vadd.f32 %v4562, %v64
  %v4568 = vadd.f32 %v4563, %v64
  %v4569 = vadd.f32 %v4564, %v64
  %v4570 = vadd.f32 %v4565, %v64
  %v4571 = vadd.f32 %v4566, %v64
  %v4573 = vsel %vm126, %v4567, 0
  %v4576 = vsel %vm126, %v4568, 0
  %v4579 = vsel %vm126, %v4569, 0
  %v4582 = vsel %vm126, %v4570, 0
  %v4585 = vsel %vm126, %v4571, 0
  %4587 = vmatpush.msra.mxu0 0.0
  %4588 = vmatpush.msra.mxu0 0.0
  %4589 = vmatpush.msra.mxu0 0.0
  %4590 = vmatpush.msra.mxu0 0.0
  %4591 = vmatpush.msra.mxu0 0.0
  %4592 = vmatpush.msra.mxu0 0.0
  %4593 = vmatpush.msra.mxu0 0.0
  %4594 = vmatpush.msra.mxu0 0.0
  %4595 = vmatpush.msra.mxu0 0.0
  %4596 = vmatpush.msra.mxu0 0.0
  %4597 = vmatpush.msra.mxu0 0.0
  %4598 = vmatpush.msra.mxu0 0.0
  %4599 = vmatpush.msra.mxu0 %v38
  %4600 = vmatpush.msra.mxu0 %v37
  %4601 = vmatpush.msra.mxu0 %v36
  %4602 = vmatpush.msra.mxu0 %v35
  %4603 = vmatmul.f32.gmra.mxu0 %v4573
  %v4604 = vpop.f32.mrf.mxu0
  %v4605 = vadd.f32 %v67, %v4604
  %4606 = vmatmul.f32.gmra.mxu0 %v4576
  %v4607 = vpop.f32.mrf.mxu0
  %v4608 = vadd.f32 %v67, %v4607
  %4609 = vmatmul.f32.gmra.mxu0 %v4579
  %v4610 = vpop.f32.mrf.mxu0
  %v4611 = vadd.f32 %v67, %v4610
  %4612 = vmatmul.f32.gmra.mxu0 %v4582
  %v4613 = vpop.f32.mrf.mxu0
  %v4614 = vadd.f32 %v67, %v4613
  %4615 = vmatmul.f32.gmra.mxu0 %v4585
  %v4616 = vpop.f32.mrf.mxu0
  %v4617 = vadd.f32 %v67, %v4616
  %4618 = vdwg.mxu0
  %v4619 = vmul.f32 %v4605, 0.5
  %v4620 = vmul.f32 %v4608, 0.5
  %v4621 = vmul.f32 %v4611, 0.5
  %v4622 = vmul.f32 %v4614, 0.5
  %v4623 = vmul.f32 %v4617, 0.5
  %v4624 = vmul.f32 %v4605, 0.70710677
  %v4625 = vmul.f32 %v4608, 0.70710677
  %v4626 = vmul.f32 %v4611, 0.70710677
  %v4627 = vmul.f32 %v4614, 0.70710677
  %v4628 = vmul.f32 %v4617, 0.70710677
  %v4629 = vmax.f32 %v4624, -4.0
  %v4630 = vmax.f32 %v4625, -4.0
  %v4631 = vmax.f32 %v4626, -4.0
  %v4632 = vmax.f32 %v4627, -4.0
  %v4633 = vmax.f32 %v4628, -4.0
  %v4634 = vmin.f32 %v4629, 4.0
  %v4635 = vmin.f32 %v4630, 4.0
  %v4636 = vmin.f32 %v4631, 4.0
  %v4637 = vmin.f32 %v4632, 4.0
  %v4638 = vmin.f32 %v4633, 4.0
  %v4639 = vmul.f32 %v4634, %v4634
  %v4640 = vmul.f32 %v4635, %v4635
  %v4641 = vmul.f32 %v4636, %v4636
  %v4642 = vmul.f32 %v4637, %v4637
  %v4643 = vmul.f32 %v4638, %v4638
  %v4644 = vmul.f32 %v4639, -2.7261424e-10
  %v4645 = vmul.f32 %v4640, -2.7261424e-10
  %v4646 = vmul.f32 %v4641, -2.7261424e-10
  %v4647 = vmul.f32 %v4642, -2.7261424e-10
  %v4648 = vmul.f32 %v4643, -2.7261424e-10
  %v4649 = vadd.f32 %v4644, 2.7706815e-08
  %v4650 = vadd.f32 %v4645, 2.7706815e-08
  %v4651 = vadd.f32 %v4646, 2.7706815e-08
  %v4652 = vadd.f32 %v4647, 2.7706815e-08
  %v4653 = vadd.f32 %v4648, 2.7706815e-08
  %v4654 = vmul.f32 %v4649, %v4639
  %v4655 = vmul.f32 %v4650, %v4640
  %v4656 = vmul.f32 %v4651, %v4641
  %v4657 = vmul.f32 %v4652, %v4642
  %v4658 = vmul.f32 %v4653, %v4643
  %v4659 = vadd.f32 %v4654, -2.101024e-06
  %v4660 = vadd.f32 %v4655, -2.101024e-06
  %v4661 = vadd.f32 %v4656, -2.101024e-06
  %v4662 = vadd.f32 %v4657, -2.101024e-06
  %v4663 = vadd.f32 %v4658, -2.101024e-06
  %v4664 = vmul.f32 %v4659, %v4639
  %v4665 = vmul.f32 %v4660, %v4640
  %v4666 = vmul.f32 %v4661, %v4641
  %v4667 = vmul.f32 %v4662, %v4642
  %v4668 = vmul.f32 %v4663, %v4643
  %v4669 = vadd.f32 %v4664, -5.6925062e-05
  %v4670 = vadd.f32 %v4665, -5.6925062e-05
  %v4671 = vadd.f32 %v4666, -5.6925062e-05
  %v4672 = vadd.f32 %v4667, -5.6925062e-05
  %v4673 = vadd.f32 %v4668, -5.6925062e-05
  %v4674 = vmul.f32 %v4669, %v4639
  %v4675 = vmul.f32 %v4670, %v4640
  %v4676 = vmul.f32 %v4671, %v4641
  %v4677 = vmul.f32 %v4672, %v4642
  %v4678 = vmul.f32 %v4673, %v4643
  %v4679 = vadd.f32 %v4674, -0.00073499064
  %v4680 = vadd.f32 %v4675, -0.00073499064
  %v4681 = vadd.f32 %v4676, -0.00073499064
  %v4682 = vadd.f32 %v4677, -0.00073499064
  %v4683 = vadd.f32 %v4678, -0.00073499064
  %v4684 = vmul.f32 %v4679, %v4639
  %v4685 = vmul.f32 %v4680, %v4640
  %v4686 = vmul.f32 %v4681, %v4641
  %v4687 = vmul.f32 %v4682, %v4642
  %v4688 = vmul.f32 %v4683, %v4643
  %v4689 = vadd.f32 %v4684, -0.0029546
  %v4690 = vadd.f32 %v4685, -0.0029546
  %v4691 = vadd.f32 %v4686, -0.0029546
  %v4692 = vadd.f32 %v4687, -0.0029546
  %v4693 = vadd.f32 %v4688, -0.0029546
  %v4694 = vmul.f32 %v4689, %v4639
  %v4695 = vmul.f32 %v4690, %v4640
  %v4696 = vmul.f32 %v4691, %v4641
  %v4697 = vmul.f32 %v4692, %v4642
  %v4698 = vmul.f32 %v4693, %v4643
  %v4699 = vadd.f32 %v4694, -0.016096033
  %v4700 = vadd.f32 %v4695, -0.016096033
  %v4701 = vadd.f32 %v4696, -0.016096033
  %v4702 = vadd.f32 %v4697, -0.016096033
  %v4703 = vadd.f32 %v4698, -0.016096033
  %v4704 = vmul.f32 %v4699, %v4634
  %v4705 = vmul.f32 %v4700, %v4635
  %v4706 = vmul.f32 %v4701, %v4636
  %v4707 = vmul.f32 %v4702, %v4637
  %v4708 = vmul.f32 %v4703, %v4638
  %v4709 = vmul.f32 %v4639, -1.45660715e-05
  %v4710 = vmul.f32 %v4640, -1.45660715e-05
  %v4711 = vmul.f32 %v4641, -1.45660715e-05
  %v4712 = vmul.f32 %v4642, -1.45660715e-05
  %v4713 = vmul.f32 %v4643, -1.45660715e-05
  %v4714 = vadd.f32 %v4709, -0.00021337405
  %v4715 = vadd.f32 %v4710, -0.00021337405
  %v4716 = vadd.f32 %v4711, -0.00021337405
  %v4717 = vadd.f32 %v4712, -0.00021337405
  %v4718 = vadd.f32 %v4713, -0.00021337405
  %v4719 = vmul.f32 %v4714, %v4639
  %v4720 = vmul.f32 %v4715, %v4640
  %v4721 = vmul.f32 %v4716, %v4641
  %v4722 = vmul.f32 %v4717, %v4642
  %v4723 = vmul.f32 %v4718, %v4643
  %v4724 = vadd.f32 %v4719, -0.001682827
  %v4725 = vadd.f32 %v4720, -0.001682827
  %v4726 = vadd.f32 %v4721, -0.001682827
  %v4727 = vadd.f32 %v4722, -0.001682827
  %v4728 = vadd.f32 %v4723, -0.001682827
  %v4729 = vmul.f32 %v4724, %v4639
  %v4730 = vmul.f32 %v4725, %v4640
  %v4731 = vmul.f32 %v4726, %v4641
  %v4732 = vmul.f32 %v4727, %v4642
  %v4733 = vmul.f32 %v4728, %v4643
  %v4734 = vadd.f32 %v4729, -0.0073733293
  %v4735 = vadd.f32 %v4730, -0.0073733293
  %v4736 = vadd.f32 %v4731, -0.0073733293
  %v4737 = vadd.f32 %v4732, -0.0073733293
  %v4738 = vadd.f32 %v4733, -0.0073733293
  %v4739 = vmul.f32 %v4734, %v4639
  %v4740 = vmul.f32 %v4735, %v4640
  %v4741 = vmul.f32 %v4736, %v4641
  %v4742 = vmul.f32 %v4737, %v4642
  %v4743 = vmul.f32 %v4738, %v4643
  %v4744 = vadd.f32 %v4739, -0.014264739
  %v4745 = vadd.f32 %v4740, -0.014264739
  %v4746 = vadd.f32 %v4741, -0.014264739
  %v4747 = vadd.f32 %v4742, -0.014264739
  %v4748 = vadd.f32 %v4743, -0.014264739
  %v4749 = vrcp.pop %v4744
  %v4750 = vmul.f32 %v4744, %v4749
  %v4751 = vsub.f32 1.0, %v4750
  %v4752 = vmul.f32 %v4749, %v4751
  %v4753 = vadd.f32 %v4749, %v4752
  %vm4754 = vweird.f32 %v4744
  %vm4755 = vweird.f32 %v4749
  %vm4756 = vmor %vm4754, %vm4755
  %v4757 = vsel %vm4756, %v4749, %v4753
  %v4758 = vand.u32 2147483647, %v4744
  %vm4759 = vcmp.eq.f32.partialorder %v4758, 8.507059e+37
  %v4760 = vand.u32 %v4744, 2147483648
  %v4761 = vor.u32 1.1754944e-38, %v4760
  %v4762 = vsel %vm4759, %v4761, %v4757
  %v4763 = vmul.f32 %v4704, %v4762
  %v4764 = vrcp.pop %v4745
  %v4765 = vmul.f32 %v4745, %v4764
  %v4766 = vsub.f32 1.0, %v4765
  %v4767 = vmul.f32 %v4764, %v4766
  %v4768 = vadd.f32 %v4764, %v4767
  %vm4769 = vweird.f32 %v4745
  %vm4770 = vweird.f32 %v4764
  %vm4771 = vmor %vm4769, %vm4770
  %v4772 = vsel %vm4771, %v4764, %v4768
  %v4773 = vand.u32 2147483647, %v4745
  %vm4774 = vcmp.eq.f32.partialorder %v4773, 8.507059e+37
  %v4775 = vand.u32 %v4745, 2147483648
  %v4776 = vor.u32 1.1754944e-38, %v4775
  %v4777 = vsel %vm4774, %v4776, %v4772
  %v4778 = vmul.f32 %v4705, %v4777
  %v4779 = vrcp.pop %v4746
  %v4780 = vmul.f32 %v4746, %v4779
  %v4781 = vsub.f32 1.0, %v4780
  %v4782 = vmul.f32 %v4779, %v4781
  %v4783 = vadd.f32 %v4779, %v4782
  %vm4784 = vweird.f32 %v4746
  %vm4785 = vweird.f32 %v4779
  %vm4786 = vmor %vm4784, %vm4785
  %v4787 = vsel %vm4786, %v4779, %v4783
  %v4788 = vand.u32 2147483647, %v4746
  %vm4789 = vcmp.eq.f32.partialorder %v4788, 8.507059e+37
  %v4790 = vand.u32 %v4746, 2147483648
  %v4791 = vor.u32 1.1754944e-38, %v4790
  %v4792 = vsel %vm4789, %v4791, %v4787
  %v4793 = vmul.f32 %v4706, %v4792
  %v4794 = vrcp.pop %v4747
  %v4795 = vmul.f32 %v4747, %v4794
  %v4796 = vsub.f32 1.0, %v4795
  %v4797 = vmul.f32 %v4794, %v4796
  %v4798 = vadd.f32 %v4794, %v4797
  %vm4799 = vweird.f32 %v4747
  %vm4800 = vweird.f32 %v4794
  %vm4801 = vmor %vm4799, %vm4800
  %v4802 = vsel %vm4801, %v4794, %v4798
  %v4803 = vand.u32 2147483647, %v4747
  %vm4804 = vcmp.eq.f32.partialorder %v4803, 8.507059e+37
  %v4805 = vand.u32 %v4747, 2147483648
  %v4806 = vor.u32 1.1754944e-38, %v4805
  %v4807 = vsel %vm4804, %v4806, %v4802
  %v4808 = vmul.f32 %v4707, %v4807
  %v4809 = vrcp.pop %v4748
  %v4810 = vmul.f32 %v4748, %v4809
  %v4811 = vsub.f32 1.0, %v4810
  %v4812 = vmul.f32 %v4809, %v4811
  %v4813 = vadd.f32 %v4809, %v4812
  %vm4814 = vweird.f32 %v4748
  %vm4815 = vweird.f32 %v4809
  %vm4816 = vmor %vm4814, %vm4815
  %v4817 = vsel %vm4816, %v4809, %v4813
  %v4818 = vand.u32 2147483647, %v4748
  %vm4819 = vcmp.eq.f32.partialorder %v4818, 8.507059e+37
  %v4820 = vand.u32 %v4748, 2147483648
  %v4821 = vor.u32 1.1754944e-38, %v4820
  %v4822 = vsel %vm4819, %v4821, %v4817
  %v4823 = vmul.f32 %v4708, %v4822
  %v4824 = vadd.f32 %v4763, 1.0
  %v4825 = vadd.f32 %v4778, 1.0
  %v4826 = vadd.f32 %v4793, 1.0
  %v4827 = vadd.f32 %v4808, 1.0
  %v4828 = vadd.f32 %v4823, 1.0
  %v4829 = vmul.f32 %v4619, %v4824
  %v4830 = vmul.f32 %v4620, %v4825
  %v4831 = vmul.f32 %v4621, %v4826
  %v4832 = vmul.f32 %v4622, %v4827
  %v4833 = vmul.f32 %v4623, %v4828
  %v4835 = vsel %vm1665, %v4829, 0
  %v4838 = vsel %vm1665, %v4830, 0
  %v4841 = vsel %vm1665, %v4831, 0
  %v4844 = vsel %vm1665, %v4832, 0
  %v4847 = vsel %vm1665, %v4833, 0
  %4849 = vmatpush.msra.mxu0 0.0
  %4850 = vmatpush.msra.mxu0 0.0
  %4851 = vmatpush.msra.mxu0 0.0
  %4852 = vmatpush.msra.mxu0 0.0
  %4853 = vmatpush.msra.mxu0 0.0
  %4854 = vmatpush.msra.mxu0 0.0
  %4855 = vmatpush.msra.mxu0 0.0
  %4856 = vmatpush.msra.mxu0 0.0
  %4857 = vmatpush.msra.mxu0 %v46
  %4858 = vmatpush.msra.mxu0 %v45
  %4859 = vmatpush.msra.mxu0 %v44
  %4860 = vmatpush.msra.mxu0 %v43
  %4861 = vmatpush.msra.mxu0 %v42
  %4862 = vmatpush.msra.mxu0 %v41
  %4863 = vmatpush.msra.mxu0 %v40
  %4864 = vmatpush.msra.mxu0 %v39
  %4865 = vmatmul.f32.gmra.mxu0 %v4835
  %v4866 = vpop.f32.mrf.mxu0
  %v4867 = vadd.f32 0.0, %v4866
  %4868 = vmatmul.f32.gmra.mxu0 %v4838
  %v4869 = vpop.f32.mrf.mxu0
  %v4870 = vadd.f32 0.0, %v4869
  %4871 = vmatmul.f32.gmra.mxu0 %v4841
  %v4872 = vpop.f32.mrf.mxu0
  %v4873 = vadd.f32 0.0, %v4872
  %4874 = vmatmul.f32.gmra.mxu0 %v4844
  %v4875 = vpop.f32.mrf.mxu0
  %v4876 = vadd.f32 0.0, %v4875
  %4877 = vmatmul.f32.gmra.mxu0 %v4847
  %v4878 = vpop.f32.mrf.mxu0
  %v4879 = vadd.f32 0.0, %v4878
  %4880 = vdwg.mxu0
  %v4881 = vadd.f32 %v4447, %v4867
  %v4882 = vadd.f32 %v4448, %v4870
  %v4883 = vadd.f32 %v4449, %v4873
  %v4884 = vadd.f32 %v4450, %v4876
  %v4885 = vadd.f32 %v4451, %v4879
  %v4886 = vadd.f32 %v4881, %v66
  %v4887 = vadd.f32 %v4882, %v66
  %v4888 = vadd.f32 %v4883, %v66
  %v4889 = vadd.f32 %v4884, %v66
  %v4890 = vadd.f32 %v4885, %v66
  %v4891 = vsel %vm126, %v4886, 0.0
  %4892 = vadd.xlane.f32.xlu0 %v4891
  %v4893 = vpop.xlane.xlu0 %4892
  %v4894 = vsel %vm126, %v4887, 0.0
  %4895 = vadd.xlane.f32.xlu0 %v4894
  %v4896 = vpop.xlane.xlu0 %4895
  %v4897 = vsel %vm126, %v4888, 0.0
  %4898 = vadd.xlane.f32.xlu0 %v4897
  %v4899 = vpop.xlane.xlu0 %4898
  %v4900 = vsel %vm126, %v4889, 0.0
  %4901 = vadd.xlane.f32.xlu0 %v4900
  %v4902 = vpop.xlane.xlu0 %4901
  %v4903 = vsel %vm139, %v4890, 0.0
  %4904 = vadd.xlane.f32.xlu0 %v4903
  %v4905 = vpop.xlane.xlu0 %4904
  %v4906 = vmul.f32 %v4893, %v149
  %v4907 = vmul.f32 %v4896, %v149
  %v4908 = vmul.f32 %v4899, %v149
  %v4909 = vmul.f32 %v4902, %v149
  %v4910 = vmul.f32 %v4905, %v149
  %v4911 = vsub.f32 %v4886, %v4906
  %v4912 = vsub.f32 %v4887, %v4907
  %v4913 = vsub.f32 %v4888, %v4908
  %v4914 = vsub.f32 %v4889, %v4909
  %v4915 = vsub.f32 %v4890, %v4910
  %v4916 = vmul.f32 %v4911, %v4911
  %v4917 = vmul.f32 %v4912, %v4912
  %v4918 = vmul.f32 %v4913, %v4913
  %v4919 = vmul.f32 %v4914, %v4914
  %v4920 = vmul.f32 %v4915, %v4915
  %v4921 = vsel %vm126, %v4916, 0.0
  %4922 = vadd.xlane.f32.xlu0 %v4921
  %v4923 = vpop.xlane.xlu0 %4922
  %v4924 = vsel %vm126, %v4917, 0.0
  %4925 = vadd.xlane.f32.xlu0 %v4924
  %v4926 = vpop.xlane.xlu0 %4925
  %v4927 = vsel %vm126, %v4918, 0.0
  %4928 = vadd.xlane.f32.xlu0 %v4927
  %v4929 = vpop.xlane.xlu0 %4928
  %v4930 = vsel %vm126, %v4919, 0.0
  %4931 = vadd.xlane.f32.xlu0 %v4930
  %v4932 = vpop.xlane.xlu0 %4931
  %v4933 = vsel %vm139, %v4920, 0.0
  %4934 = vadd.xlane.f32.xlu0 %v4933
  %v4935 = vpop.xlane.xlu0 %4934
  %v4936 = vmul.f32 %v4923, %v149
  %v4937 = vmul.f32 %v4926, %v149
  %v4938 = vmul.f32 %v4929, %v149
  %v4939 = vmul.f32 %v4932, %v149
  %v4940 = vmul.f32 %v4935, %v149
  %v4941 = vadd.f32 %v4936, 1e-05
  %v4942 = vadd.f32 %v4937, 1e-05
  %v4943 = vadd.f32 %v4938, 1e-05
  %v4944 = vadd.f32 %v4939, 1e-05
  %v4945 = vadd.f32 %v4940, 1e-05
  %v4946 = vrsqrt.pop %v4941
  %v4947 = vmul.f32 %v4946, %v4941
  %v4948 = vmul.f32 %v4947, %v4946
  %v4949 = vmul.f32 0.5, %v4948
  %v4950 = vsub.f32 1.5, %v4949
  %v4951 = vmul.f32 %v4946, %v4950
  %vm4952 = vweird.f32 %v4941
  %vm4953 = vweird.f32 %v4946
  %vm4954 = vmor %vm4952, %vm4953
  %v4955 = vsel %vm4954, %v4946, %v4951
  %v4956 = vrsqrt.pop %v4942
  %v4957 = vmul.f32 %v4956, %v4942
  %v4958 = vmul.f32 %v4957, %v4956
  %v4959 = vmul.f32 0.5, %v4958
  %v4960 = vsub.f32 1.5, %v4959
  %v4961 = vmul.f32 %v4956, %v4960
  %vm4962 = vweird.f32 %v4942
  %vm4963 = vweird.f32 %v4956
  %vm4964 = vmor %vm4962, %vm4963
  %v4965 = vsel %vm4964, %v4956, %v4961
  %v4966 = vrsqrt.pop %v4943
  %v4967 = vmul.f32 %v4966, %v4943
  %v4968 = vmul.f32 %v4967, %v4966
  %v4969 = vmul.f32 0.5, %v4968
  %v4970 = vsub.f32 1.5, %v4969
  %v4971 = vmul.f32 %v4966, %v4970
  %vm4972 = vweird.f32 %v4943
  %vm4973 = vweird.f32 %v4966
  %vm4974 = vmor %vm4972, %vm4973
  %v4975 = vsel %vm4974, %v4966, %v4971
  %v4976 = vrsqrt.pop %v4944
  %v4977 = vmul.f32 %v4976, %v4944
  %v4978 = vmul.f32 %v4977, %v4976
  %v4979 = vmul.f32 0.5, %v4978
  %v4980 = vsub.f32 1.5, %v4979
  %v4981 = vmul.f32 %v4976, %v4980
  %vm4982 = vweird.f32 %v4944
  %vm4983 = vweird.f32 %v4976
  %vm4984 = vmor %vm4982, %vm4983
  %v4985 = vsel %vm4984, %v4976, %v4981
  %v4986 = vrsqrt.pop %v4945
  %v4987 = vmul.f32 %v4986, %v4945
  %v4988 = vmul.f32 %v4987, %v4986
  %v4989 = vmul.f32 0.5, %v4988
  %v4990 = vsub.f32 1.5, %v4989
  %v4991 = vmul.f32 %v4986, %v4990
  %vm4992 = vweird.f32 %v4945
  %vm4993 = vweird.f32 %v4986
  %vm4994 = vmor %vm4992, %vm4993
  %v4995 = vsel %vm4994, %v4986, %v4991
  %v4996 = vmul.f32 %v4911, %v4955
  %v4997 = vmul.f32 %v4912, %v4965
  %v4998 = vmul.f32 %v4913, %v4975
  %v4999 = vmul.f32 %v4914, %v4985
  %v5000 = vmul.f32 %v4915, %v4995
  %v5001 = vmul.f32 %v4996, %v61
  %v5002 = vmul.f32 %v4997, %v61
  %v5003 = vmul.f32 %v4998, %v61
  %v5004 = vmul.f32 %v4999, %v61
  %v5005 = vmul.f32 %v5000, %v61
  %v5006 = vadd.f32 %v5001, %v62
  %v5007 = vadd.f32 %v5002, %v62
  %v5008 = vadd.f32 %v5003, %v62
  %v5009 = vadd.f32 %v5004, %v62
  %v5010 = vadd.f32 %v5005, %v62
  %v5012 = vsel %vm126, %v5006, 0
  %v5015 = vsel %vm126, %v5007, 0
  %v5018 = vsel %vm126, %v5008, 0
  %v5021 = vsel %vm126, %v5009, 0
  %v5024 = vsel %vm126, %v5010, 0
  %5026 = vmatpush.msra.mxu0 0.0
  %5027 = vmatpush.msra.mxu0 0.0
  %5028 = vmatpush.msra.mxu0 0.0
  %5029 = vmatpush.msra.mxu0 0.0
  %5030 = vmatpush.msra.mxu0 0.0
  %5031 = vmatpush.msra.mxu0 0.0
  %5032 = vmatpush.msra.mxu0 0.0
  %5033 = vmatpush.msra.mxu0 0.0
  %5034 = vmatpush.msra.mxu0 0.0
  %5035 = vmatpush.msra.mxu0 0.0
  %5036 = vmatpush.msra.mxu0 0.0
  %5037 = vmatpush.msra.mxu0 0.0
  %5038 = vmatpush.msra.mxu0 %v50
  %5039 = vmatpush.msra.mxu0 %v49
  %5040 = vmatpush.msra.mxu0 %v48
  %5041 = vmatpush.msra.mxu0 %v47
  %5042 = vmatmul.f32.gmra.mxu0 %v5012
  %v5043 = vpop.f32.mrf.mxu0
  %v5044 = vadd.f32 0.0, %v5043
  %5045 = vmatmul.f32.gmra.mxu0 %v5015
  %v5046 = vpop.f32.mrf.mxu0
  %v5047 = vadd.f32 0.0, %v5046
  %5048 = vmatmul.f32.gmra.mxu0 %v5018
  %v5049 = vpop.f32.mrf.mxu0
  %v5050 = vadd.f32 0.0, %v5049
  %5051 = vmatmul.f32.gmra.mxu0 %v5021
  %v5052 = vpop.f32.mrf.mxu0
  %v5053 = vadd.f32 0.0, %v5052
  %5054 = vmatmul.f32.gmra.mxu0 %v5024
  %v5055 = vpop.f32.mrf.mxu0
  %v5056 = vadd.f32 0.0, %v5055
  %5057 = vdwg.mxu0
  %5058 = vmatpush.msra.mxu0 0.0
  %5059 = vmatpush.msra.mxu0 0.0
  %5060 = vmatpush.msra.mxu0 0.0
  %5061 = vmatpush.msra.mxu0 0.0
  %5062 = vmatpush.msra.mxu0 0.0
  %5063 = vmatpush.msra.mxu0 0.0
  %5064 = vmatpush.msra.mxu0 0.0
  %5065 = vmatpush.msra.mxu0 0.0
  %5066 = vmatpush.msra.mxu0 0.0
  %5067 = vmatpush.msra.mxu0 0.0
  %5068 = vmatpush.msra.mxu0 0.0
  %5069 = vmatpush.msra.mxu0 0.0
  %5070 = vmatpush.msra.mxu0 %v54
  %5071 = vmatpush.msra.mxu0 %v53
  %5072 = vmatpush.msra.mxu0 %v52
  %5073 = vmatpush.msra.mxu0 %v51
  %5074 = vmatmul.f32.gmra.mxu0 %v5012
  %v5075 = vpop.f32.mrf.mxu0
  %v5076 = vadd.f32 0.0, %v5075
  %5077 = vmatmul.f32.gmra.mxu0 %v5015
  %v5078 = vpop.f32.mrf.mxu0
  %v5079 = vadd.f32 0.0, %v5078
  %5080 = vmatmul.f32.gmra.mxu0 %v5018
  %v5081 = vpop.f32.mrf.mxu0
  %v5082 = vadd.f32 0.0, %v5081
  %5083 = vmatmul.f32.gmra.mxu0 %v5021
  %v5084 = vpop.f32.mrf.mxu0
  %v5085 = vadd.f32 0.0, %v5084
  %5086 = vmatmul.f32.gmra.mxu0 %v5024
  %v5087 = vpop.f32.mrf.mxu0
  %v5088 = vadd.f32 0.0, %v5087
  %5089 = vdwg.mxu0
  %v5091 = vsel %vm126, %v5044, 0
  %v5094 = vsel %vm126, %v5047, 0
  %v5097 = vsel %vm126, %v5050, 0
  %v5100 = vsel %vm126, %v5053, 0
  %v5103 = vsel %vm126, %v5056, 0
  %5105 = vmatpush.xpose.msra.mxu0 0.0
  %5106 = vmatpush.xpose.msra.mxu0 0.0
  %5107 = vmatpush.xpose.msra.mxu0 0.0
  %5108 = vmatpush.xpose.msra.mxu0 0.0
  %5109 = vmatpush.xpose.msra.mxu0 0.0
  %5110 = vmatpush.xpose.msra.mxu0 0.0
  %5111 = vmatpush.xpose.msra.mxu0 0.0
  %5112 = vmatpush.xpose.msra.mxu0 0.0
  %5113 = vmatpush.xpose.msra.mxu0 0.0
  %5114 = vmatpush.xpose.msra.mxu0 0.0
  %5115 = vmatpush.xpose.msra.mxu0 0.0
  %5116 = vmatpush.xpose.msra.mxu0 %v5024
  %5117 = vmatpush.xpose.msra.mxu0 %v5021
  %5118 = vmatpush.xpose.msra.mxu0 %v5018
  %5119 = vmatpush.xpose.msra.mxu0 %v5015
  %5120 = vmatpush.xpose.msra.mxu0 %v5012
  %5121 = vmatmul.f32.gmra.mxu0 %v5091
  %v5122 = vpop.f32.mrf.mxu0
  %v5123 = vadd.f32 %v55, %v5122
  %5124 = vmatmul.f32.gmra.mxu0 %v5094
  %v5125 = vpop.f32.mrf.mxu0
  %v5126 = vadd.f32 %v56, %v5125
  %5127 = vmatmul.f32.gmra.mxu0 %v5097
  %v5128 = vpop.f32.mrf.mxu0
  %v5129 = vadd.f32 %v57, %v5128
  %5130 = vmatmul.f32.gmra.mxu0 %v5100
  %v5131 = vpop.f32.mrf.mxu0
  %v5132 = vadd.f32 %v58, %v5131
  %5133 = vmatmul.f32.gmra.mxu0 %v5103
  %v5134 = vpop.f32.mrf.mxu0
  %v5135 = vadd.f32 %v59, %v5134
  %5136 = vdwg.mxu0
  %v5137 = vsel %vm381, %v5123, -inf
  %5138 = vmax.xlane.f32.xlu0 %v5137
  %v5139 = vpop.xlane.xlu0 %5138
  %v5140 = vsel %vm381, %v5126, -inf
  %5141 = vmax.xlane.f32.xlu0 %v5140
  %v5142 = vpop.xlane.xlu0 %5141
  %v5143 = vsel %vm381, %v5129, -inf
  %5144 = vmax.xlane.f32.xlu0 %v5143
  %v5145 = vpop.xlane.xlu0 %5144
  %v5146 = vsel %vm381, %v5132, -inf
  %5147 = vmax.xlane.f32.xlu0 %v5146
  %v5148 = vpop.xlane.xlu0 %5147
  %v5149 = vsel %vm394, %v5135, -inf
  %5150 = vmax.xlane.f32.xlu0 %v5149
  %v5151 = vpop.xlane.xlu0 %5150
  %v5152 = vsub.f32 %v5123, %v5139
  %v5153 = vsub.f32 %v5126, %v5142
  %v5154 = vsub.f32 %v5129, %v5145
  %v5155 = vsub.f32 %v5132, %v5148
  %v5156 = vsub.f32 %v5135, %v5151
  %v5157 = vmul.f32 %v5152, 1.442695
  %v5158 = vpow.pop %v5157
  %v5159 = vmul.f32 %v5153, 1.442695
  %v5160 = vpow.pop %v5159
  %v5161 = vmul.f32 %v5154, 1.442695
  %v5162 = vpow.pop %v5161
  %v5163 = vmul.f32 %v5155, 1.442695
  %v5164 = vpow.pop %v5163
  %v5165 = vmul.f32 %v5156, 1.442695
  %v5166 = vpow.pop %v5165
  %v5167 = vsel %vm381, %v5158, 0.0
  %5168 = vadd.xlane.f32.xlu0 %v5167
  %v5169 = vpop.xlane.xlu0 %5168
  %v5170 = vsel %vm381, %v5160, 0.0
  %5171 = vadd.xlane.f32.xlu0 %v5170
  %v5172 = vpop.xlane.xlu0 %5171
  %v5173 = vsel %vm381, %v5162, 0.0
  %5174 = vadd.xlane.f32.xlu0 %v5173
  %v5175 = vpop.xlane.xlu0 %5174
  %v5176 = vsel %vm381, %v5164, 0.0
  %5177 = vadd.xlane.f32.xlu0 %v5176
  %v5178 = vpop.xlane.xlu0 %5177
  %v5179 = vsel %vm394, %v5166, 0.0
  %5180 = vadd.xlane.f32.xlu0 %v5179
  %v5181 = vpop.xlane.xlu0 %5180
  %v5182 = vrcp.pop %v5169
  %v5183 = vmul.f32 %v5169, %v5182
  %v5184 = vsub.f32 1.0, %v5183
  %v5185 = vmul.f32 %v5182, %v5184
  %v5186 = vadd.f32 %v5182, %v5185
  %vm5187 = vweird.f32 %v5169
  %vm5188 = vweird.f32 %v5182
  %vm5189 = vmor %vm5187, %vm5188
  %v5190 = vsel %vm5189, %v5182, %v5186
  %v5191 = vand.u32 2147483647, %v5169
  %vm5192 = vcmp.eq.f32.partialorder %v5191, 8.507059e+37
  %v5193 = vand.u32 %v5169, 2147483648
  %v5194 = vor.u32 1.1754944e-38, %v5193
  %v5195 = vsel %vm5192, %v5194, %v5190
  %v5196 = vmul.f32 %v5158, %v5195
  %v5197 = vrcp.pop %v5172
  %v5198 = vmul.f32 %v5172, %v5197
  %v5199 = vsub.f32 1.0, %v5198
  %v5200 = vmul.f32 %v5197, %v5199
  %v5201 = vadd.f32 %v5197, %v5200
  %vm5202 = vweird.f32 %v5172
  %vm5203 = vweird.f32 %v5197
  %vm5204 = vmor %vm5202, %vm5203
  %v5205 = vsel %vm5204, %v5197, %v5201
  %v5206 = vand.u32 2147483647, %v5172
  %vm5207 = vcmp.eq.f32.partialorder %v5206, 8.507059e+37
  %v5208 = vand.u32 %v5172, 2147483648
  %v5209 = vor.u32 1.1754944e-38, %v5208
  %v5210 = vsel %vm5207, %v5209, %v5205
  %v5211 = vmul.f32 %v5160, %v5210
  %v5212 = vrcp.pop %v5175
  %v5213 = vmul.f32 %v5175, %v5212
  %v5214 = vsub.f32 1.0, %v5213
  %v5215 = vmul.f32 %v5212, %v5214
  %v5216 = vadd.f32 %v5212, %v5215
  %vm5217 = vweird.f32 %v5175
  %vm5218 = vweird.f32 %v5212
  %vm5219 = vmor %vm5217, %vm5218
  %v5220 = vsel %vm5219, %v5212, %v5216
  %v5221 = vand.u32 2147483647, %v5175
  %vm5222 = vcmp.eq.f32.partialorder %v5221, 8.507059e+37
  %v5223 = vand.u32 %v5175, 2147483648
  %v5224 = vor.u32 1.1754944e-38, %v5223
  %v5225 = vsel %vm5222, %v5224, %v5220
  %v5226 = vmul.f32 %v5162, %v5225
  %v5227 = vrcp.pop %v5178
  %v5228 = vmul.f32 %v5178, %v5227
  %v5229 = vsub.f32 1.0, %v5228
  %v5230 = vmul.f32 %v5227, %v5229
  %v5231 = vadd.f32 %v5227, %v5230
  %vm5232 = vweird.f32 %v5178
  %vm5233 = vweird.f32 %v5227
  %vm5234 = vmor %vm5232, %vm5233
  %v5235 = vsel %vm5234, %v5227, %v5231
  %v5236 = vand.u32 2147483647, %v5178
  %vm5237 = vcmp.eq.f32.partialorder %v5236, 8.507059e+37
  %v5238 = vand.u32 %v5178, 2147483648
  %v5239 = vor.u32 1.1754944e-38, %v5238
  %v5240 = vsel %vm5237, %v5239, %v5235
  %v5241 = vmul.f32 %v5164, %v5240
  %v5242 = vrcp.pop %v5181
  %v5243 = vmul.f32 %v5181, %v5242
  %v5244 = vsub.f32 1.0, %v5243
  %v5245 = vmul.f32 %v5242, %v5244
  %v5246 = vadd.f32 %v5242, %v5245
  %vm5247 = vweird.f32 %v5181
  %vm5248 = vweird.f32 %v5242
  %vm5249 = vmor %vm5247, %vm5248
  %v5250 = vsel %vm5249, %v5242, %v5246
  %v5251 = vand.u32 2147483647, %v5181
  %vm5252 = vcmp.eq.f32.partialorder %v5251, 8.507059e+37
  %v5253 = vand.u32 %v5181, 2147483648
  %v5254 = vor.u32 1.1754944e-38, %v5253
  %v5255 = vsel %vm5252, %v5254, %v5250
  %v5256 = vmul.f32 %v5166, %v5255
  %5257 = vrot.lane.b32.xlu0 %v5044, 96
  %v5258 = vpop.permute.xlu0 %5257
  %5259 = vrot.lane.b32.xlu0 %v5047, 96
  %v5260 = vpop.permute.xlu0 %5259
  %5261 = vrot.lane.b32.xlu0 %v5050, 96
  %v5262 = vpop.permute.xlu0 %5261
  %5263 = vrot.lane.b32.xlu0 %v5053, 96
  %v5264 = vpop.permute.xlu0 %5263
  %5265 = vrot.lane.b32.xlu0 %v5056, 96
  %v5266 = vpop.permute.xlu0 %5265
  %v5267 = vsel %vm126, %v5258, 0
  %v5269 = vsel %vm126, %v5260, 0
  %v5271 = vsel %vm126, %v5262, 0
  %v5273 = vsel %vm126, %v5264, 0
  %v5275 = vsel %vm126, %v5266, 0
  %5277 = vmatpush.xpose.msra.mxu0 0.0
  %5278 = vmatpush.xpose.msra.mxu0 0.0
  %5279 = vmatpush.xpose.msra.mxu0 0.0
  %5280 = vmatpush.xpose.msra.mxu0 0.0
  %5281 = vmatpush.xpose.msra.mxu0 0.0
  %5282 = vmatpush.xpose.msra.mxu0 0.0
  %5283 = vmatpush.xpose.msra.mxu0 0.0
  %5284 = vmatpush.xpose.msra.mxu0 0.0
  %5285 = vmatpush.xpose.msra.mxu0 0.0
  %5286 = vmatpush.xpose.msra.mxu0 0.0
  %5287 = vmatpush.xpose.msra.mxu0 0.0
  %5288 = vmatpush.xpose.msra.mxu0 %v5024
  %5289 = vmatpush.xpose.msra.mxu0 %v5021
  %5290 = vmatpush.xpose.msra.mxu0 %v5018
  %5291 = vmatpush.xpose.msra.mxu0 %v5015
  %5292 = vmatpush.xpose.msra.mxu0 %v5012
  %5293 = vmatmul.f32.gmra.mxu0 %v5267
  %v5294 = vpop.f32.mrf.mxu0
  %v5295 = vadd.f32 %v55, %v5294
  %5296 = vmatmul.f32.gmra.mxu0 %v5269
  %v5297 = vpop.f32.mrf.mxu0
  %v5298 = vadd.f32 %v56, %v5297
  %5299 = vmatmul.f32.gmra.mxu0 %v5271
  %v5300 = vpop.f32.mrf.mxu0
  %v5301 = vadd.f32 %v57, %v5300
  %5302 = vmatmul.f32.gmra.mxu0 %v5273
  %v5303 = vpop.f32.mrf.mxu0
  %v5304 = vadd.f32 %v58, %v5303
  %5305 = vmatmul.f32.gmra.mxu0 %v5275
  %v5306 = vpop.f32.mrf.mxu0
  %v5307 = vadd.f32 %v59, %v5306
  %5308 = vdwg.mxu0
  %v5309 = vsel %vm381, %v5295, -inf
  %5310 = vmax.xlane.f32.xlu0 %v5309
  %v5311 = vpop.xlane.xlu0 %5310
  %v5312 = vsel %vm381, %v5298, -inf
  %5313 = vmax.xlane.f32.xlu0 %v5312
  %v5314 = vpop.xlane.xlu0 %5313
  %v5315 = vsel %vm381, %v5301, -inf
  %5316 = vmax.xlane.f32.xlu0 %v5315
  %v5317 = vpop.xlane.xlu0 %5316
  %v5318 = vsel %vm381, %v5304, -inf
  %5319 = vmax.xlane.f32.xlu0 %v5318
  %v5320 = vpop.xlane.xlu0 %5319
  %v5321 = vsel %vm394, %v5307, -inf
  %5322 = vmax.xlane.f32.xlu0 %v5321
  %v5323 = vpop.xlane.xlu0 %5322
  %v5324 = vsub.f32 %v5295, %v5311
  %v5325 = vsub.f32 %v5298, %v5314
  %v5326 = vsub.f32 %v5301, %v5317
  %v5327 = vsub.f32 %v5304, %v5320
  %v5328 = vsub.f32 %v5307, %v5323
  %v5329 = vmul.f32 %v5324, 1.442695
  %v5330 = vpow.pop %v5329
  %v5331 = vmul.f32 %v5325, 1.442695
  %v5332 = vpow.pop %v5331
  %v5333 = vmul.f32 %v5326, 1.442695
  %v5334 = vpow.pop %v5333
  %v5335 = vmul.f32 %v5327, 1.442695
  %v5336 = vpow.pop %v5335
  %v5337 = vmul.f32 %v5328, 1.442695
  %v5338 = vpow.pop %v5337
  %v5339 = vsel %vm381, %v5330, 0.0
  %5340 = vadd.xlane.f32.xlu0 %v5339
  %v5341 = vpop.xlane.xlu0 %5340
  %v5342 = vsel %vm381, %v5332, 0.0
  %5343 = vadd.xlane.f32.xlu0 %v5342
  %v5344 = vpop.xlane.xlu0 %5343
  %v5345 = vsel %vm381, %v5334, 0.0
  %5346 = vadd.xlane.f32.xlu0 %v5345
  %v5347 = vpop.xlane.xlu0 %5346
  %v5348 = vsel %vm381, %v5336, 0.0
  %5349 = vadd.xlane.f32.xlu0 %v5348
  %v5350 = vpop.xlane.xlu0 %5349
  %v5351 = vsel %vm394, %v5338, 0.0
  %5352 = vadd.xlane.f32.xlu0 %v5351
  %v5353 = vpop.xlane.xlu0 %5352
  %v5354 = vrcp.pop %v5341
  %v5355 = vmul.f32 %v5341, %v5354
  %v5356 = vsub.f32 1.0, %v5355
  %v5357 = vmul.f32 %v5354, %v5356
  %v5358 = vadd.f32 %v5354, %v5357
  %vm5359 = vweird.f32 %v5341
  %vm5360 = vweird.f32 %v5354
  %vm5361 = vmor %vm5359, %vm5360
  %v5362 = vsel %vm5361, %v5354, %v5358
  %v5363 = vand.u32 2147483647, %v5341
  %vm5364 = vcmp.eq.f32.partialorder %v5363, 8.507059e+37
  %v5365 = vand.u32 %v5341, 2147483648
  %v5366 = vor.u32 1.1754944e-38, %v5365
  %v5367 = vsel %vm5364, %v5366, %v5362
  %v5368 = vmul.f32 %v5330, %v5367
  %v5369 = vrcp.pop %v5344
  %v5370 = vmul.f32 %v5344, %v5369
  %v5371 = vsub.f32 1.0, %v5370
  %v5372 = vmul.f32 %v5369, %v5371
  %v5373 = vadd.f32 %v5369, %v5372
  %vm5374 = vweird.f32 %v5344
  %vm5375 = vweird.f32 %v5369
  %vm5376 = vmor %vm5374, %vm5375
  %v5377 = vsel %vm5376, %v5369, %v5373
  %v5378 = vand.u32 2147483647, %v5344
  %vm5379 = vcmp.eq.f32.partialorder %v5378, 8.507059e+37
  %v5380 = vand.u32 %v5344, 2147483648
  %v5381 = vor.u32 1.1754944e-38, %v5380
  %v5382 = vsel %vm5379, %v5381, %v5377
  %v5383 = vmul.f32 %v5332, %v5382
  %v5384 = vrcp.pop %v5347
  %v5385 = vmul.f32 %v5347, %v5384
  %v5386 = vsub.f32 1.0, %v5385
  %v5387 = vmul.f32 %v5384, %v5386
  %v5388 = vadd.f32 %v5384, %v5387
  %vm5389 = vweird.f32 %v5347
  %vm5390 = vweird.f32 %v5384
  %vm5391 = vmor %vm5389, %vm5390
  %v5392 = vsel %vm5391, %v5384, %v5388
  %v5393 = vand.u32 2147483647, %v5347
  %vm5394 = vcmp.eq.f32.partialorder %v5393, 8.507059e+37
  %v5395 = vand.u32 %v5347, 2147483648
  %v5396 = vor.u32 1.1754944e-38, %v5395
  %v5397 = vsel %vm5394, %v5396, %v5392
  %v5398 = vmul.f32 %v5334, %v5397
  %v5399 = vrcp.pop %v5350
  %v5400 = vmul.f32 %v5350, %v5399
  %v5401 = vsub.f32 1.0, %v5400
  %v5402 = vmul.f32 %v5399, %v5401
  %v5403 = vadd.f32 %v5399, %v5402
  %vm5404 = vweird.f32 %v5350
  %vm5405 = vweird.f32 %v5399
  %vm5406 = vmor %vm5404, %vm5405
  %v5407 = vsel %vm5406, %v5399, %v5403
  %v5408 = vand.u32 2147483647, %v5350
  %vm5409 = vcmp.eq.f32.partialorder %v5408, 8.507059e+37
  %v5410 = vand.u32 %v5350, 2147483648
  %v5411 = vor.u32 1.1754944e-38, %v5410
  %v5412 = vsel %vm5409, %v5411, %v5407
  %v5413 = vmul.f32 %v5336, %v5412
  %v5414 = vrcp.pop %v5353
  %v5415 = vmul.f32 %v5353, %v5414
  %v5416 = vsub.f32 1.0, %v5415
  %v5417 = vmul.f32 %v5414, %v5416
  %v5418 = vadd.f32 %v5414, %v5417
  %vm5419 = vweird.f32 %v5353
  %vm5420 = vweird.f32 %v5414
  %vm5421 = vmor %vm5419, %vm5420
  %v5422 = vsel %vm5421, %v5414, %v5418
  %v5423 = vand.u32 2147483647, %v5353
  %vm5424 = vcmp.eq.f32.partialorder %v5423, 8.507059e+37
  %v5425 = vand.u32 %v5353, 2147483648
  %v5426 = vor.u32 1.1754944e-38, %v5425
  %v5427 = vsel %vm5424, %v5426, %v5422
  %v5428 = vmul.f32 %v5338, %v5427
  %5434 = vrot.lane.b32.xlu0 %v5076, 96
  %v5435 = vpop.permute.xlu0 %5434
  %5436 = vrot.lane.b32.xlu0 %v5079, 96
  %v5437 = vpop.permute.xlu0 %5436
  %5438 = vrot.lane.b32.xlu0 %v5082, 96
  %v5439 = vpop.permute.xlu0 %5438
  %5440 = vrot.lane.b32.xlu0 %v5085, 96
  %v5441 = vpop.permute.xlu0 %5440
  %5442 = vrot.lane.b32.xlu0 %v5088, 96
  %v5443 = vpop.permute.xlu0 %5442
  %v5449 = vsel %vm381, %v5368, 0
  %v5452 = vsel %vm381, %v5383, 0
  %v5455 = vsel %vm381, %v5398, 0
  %v5458 = vsel %vm381, %v5413, 0
  %v5461 = vsel %vm381, %v5428, 0
  %v5463 = vsel %vm709, %v5443, 0
  %5465 = vmatpush.msra.mxu0 0.0
  %5466 = vmatpush.msra.mxu0 0.0
  %5467 = vmatpush.msra.mxu0 0.0
  %5468 = vmatpush.msra.mxu0 0.0
  %5469 = vmatpush.msra.mxu0 0.0
  %5470 = vmatpush.msra.mxu0 0.0
  %5471 = vmatpush.msra.mxu0 0.0
  %5472 = vmatpush.msra.mxu0 0.0
  %5473 = vmatpush.msra.mxu0 0.0
  %5474 = vmatpush.msra.mxu0 0.0
  %5475 = vmatpush.msra.mxu0 0.0
  %5476 = vmatpush.msra.mxu0 %v5463
  %5477 = vmatpush.msra.mxu0 %v5441
  %5478 = vmatpush.msra.mxu0 %v5439
  %5479 = vmatpush.msra.mxu0 %v5437
  %5480 = vmatpush.msra.mxu0 %v5435
  %5481 = vmatmul.f32.gmra.mxu0 %v5449
  %v5482 = vpop.f32.mrf.mxu0
  %v5483 = vadd.f32 0.0, %v5482
  %5484 = vmatmul.f32.gmra.mxu0 %v5452
  %v5485 = vpop.f32.mrf.mxu0
  %v5486 = vadd.f32 0.0, %v5485
  %5487 = vmatmul.f32.gmra.mxu0 %v5455
  %v5488 = vpop.f32.mrf.mxu0
  %v5489 = vadd.f32 0.0, %v5488
  %5490 = vmatmul.f32.gmra.mxu0 %v5458
  %v5491 = vpop.f32.mrf.mxu0
  %v5492 = vadd.f32 0.0, %v5491
  %5493 = vmatmul.f32.gmra.mxu0 %v5461
  %v5494 = vpop.f32.mrf.mxu0
  %v5495 = vadd.f32 0.0, %v5494
  %5496 = vdwg.mxu0
  %v5498 = vsel %vm381, %v5196, 0
  %v5501 = vsel %vm381, %v5211, 0
  %v5504 = vsel %vm381, %v5226, 0
  %v5507 = vsel %vm381, %v5241, 0
  %v5510 = vsel %vm381, %v5256, 0
  %v5512 = vsel %vm709, %v5088, 0
  %5514 = vmatpush.msra.mxu0 0.0
  %5515 = vmatpush.msra.mxu0 0.0
  %5516 = vmatpush.msra.mxu0 0.0
  %5517 = vmatpush.msra.mxu0 0.0
  %5518 = vmatpush.msra.mxu0 0.0
  %5519 = vmatpush.msra.mxu0 0.0
  %5520 = vmatpush.msra.mxu0 0.0
  %5521 = vmatpush.msra.mxu0 0.0
  %5522 = vmatpush.msra.mxu0 0.0
  %5523 = vmatpush.msra.mxu0 0.0
  %5524 = vmatpush.msra.mxu0 0.0
  %5525 = vmatpush.msra.mxu0 %v5512
  %5526 = vmatpush.msra.mxu0 %v5085
  %5527 = vmatpush.msra.mxu0 %v5082
  %5528 = vmatpush.msra.mxu0 %v5079
  %5529 = vmatpush.msra.mxu0 %v5076
  %5530 = vmatmul.f32.gmra.mxu0 %v5498
  %v5531 = vpop.f32.mrf.mxu0
  %v5532 = vadd.f32 %v5483, %v5531
  %5533 = vmatmul.f32.gmra.mxu0 %v5501
  %v5534 = vpop.f32.mrf.mxu0
  %v5535 = vadd.f32 %v5486, %v5534
  %5536 = vmatmul.f32.gmra.mxu0 %v5504
  %v5537 = vpop.f32.mrf.mxu0
  %v5538 = vadd.f32 %v5489, %v5537
  %5539 = vmatmul.f32.gmra.mxu0 %v5507
  %v5540 = vpop.f32.mrf.mxu0
  %v5541 = vadd.f32 %v5492, %v5540
  %5542 = vmatmul.f32.gmra.mxu0 %v5510
  %v5543 = vpop.f32.mrf.mxu0
  %v5544 = vadd.f32 %v5495, %v5543
  %5545 = vdwg.mxu0
  %5546 = vrot.lane.b32.xlu0 %v5044, 64
  %v5547 = vpop.permute.xlu0 %5546
  %5548 = vrot.lane.b32.xlu0 %v5047, 64
  %v5549 = vpop.permute.xlu0 %5548
  %5550 = vrot.lane.b32.xlu0 %v5050, 64
  %v5551 = vpop.permute.xlu0 %5550
  %5552 = vrot.lane.b32.xlu0 %v5053, 64
  %v5553 = vpop.permute.xlu0 %5552
  %5554 = vrot.lane.b32.xlu0 %v5056, 64
  %v5555 = vpop.permute.xlu0 %5554
  %v5556 = vsel %vm126, %v5547, 0
  %v5558 = vsel %vm126, %v5549, 0
  %v5560 = vsel %vm126, %v5551, 0
  %v5562 = vsel %vm126, %v5553, 0
  %v5564 = vsel %vm126, %v5555, 0
  %5566 = vmatpush.xpose.msra.mxu0 0.0
  %5567 = vmatpush.xpose.msra.mxu0 0.0
  %5568 = vmatpush.xpose.msra.mxu0 0.0
  %5569 = vmatpush.xpose.msra.mxu0 0.0
  %5570 = vmatpush.xpose.msra.mxu0 0.0
  %5571 = vmatpush.xpose.msra.mxu0 0.0
  %5572 = vmatpush.xpose.msra.mxu0 0.0
  %5573 = vmatpush.xpose.msra.mxu0 0.0
  %5574 = vmatpush.xpose.msra.mxu0 0.0
  %5575 = vmatpush.xpose.msra.mxu0 0.0
  %5576 = vmatpush.xpose.msra.mxu0 0.0
  %5577 = vmatpush.xpose.msra.mxu0 %v5024
  %5578 = vmatpush.xpose.msra.mxu0 %v5021
  %5579 = vmatpush.xpose.msra.mxu0 %v5018
  %5580 = vmatpush.xpose.msra.mxu0 %v5015
  %5581 = vmatpush.xpose.msra.mxu0 %v5012
  %5582 = vmatmul.f32.gmra.mxu0 %v5556
  %v5583 = vpop.f32.mrf.mxu0
  %v5584 = vadd.f32 %v55, %v5583
  %5585 = vmatmul.f32.gmra.mxu0 %v5558
  %v5586 = vpop.f32.mrf.mxu0
  %v5587 = vadd.f32 %v56, %v5586
  %5588 = vmatmul.f32.gmra.mxu0 %v5560
  %v5589 = vpop.f32.mrf.mxu0
  %v5590 = vadd.f32 %v57, %v5589
  %5591 = vmatmul.f32.gmra.mxu0 %v5562
  %v5592 = vpop.f32.mrf.mxu0
  %v5593 = vadd.f32 %v58, %v5592
  %5594 = vmatmul.f32.gmra.mxu0 %v5564
  %v5595 = vpop.f32.mrf.mxu0
  %v5596 = vadd.f32 %v59, %v5595
  %5597 = vdwg.mxu0
  %v5598 = vsel %vm381, %v5584, -inf
  %5599 = vmax.xlane.f32.xlu0 %v5598
  %v5600 = vpop.xlane.xlu0 %5599
  %v5601 = vsel %vm381, %v5587, -inf
  %5602 = vmax.xlane.f32.xlu0 %v5601
  %v5603 = vpop.xlane.xlu0 %5602
  %v5604 = vsel %vm381, %v5590, -inf
  %5605 = vmax.xlane.f32.xlu0 %v5604
  %v5606 = vpop.xlane.xlu0 %5605
  %v5607 = vsel %vm381, %v5593, -inf
  %5608 = vmax.xlane.f32.xlu0 %v5607
  %v5609 = vpop.xlane.xlu0 %5608
  %v5610 = vsel %vm394, %v5596, -inf
  %5611 = vmax.xlane.f32.xlu0 %v5610
  %v5612 = vpop.xlane.xlu0 %5611
  %v5613 = vsub.f32 %v5584, %v5600
  %v5614 = vsub.f32 %v5587, %v5603
  %v5615 = vsub.f32 %v5590, %v5606
  %v5616 = vsub.f32 %v5593, %v5609
  %v5617 = vsub.f32 %v5596, %v5612
  %v5618 = vmul.f32 %v5613, 1.442695
  %v5619 = vpow.pop %v5618
  %v5620 = vmul.f32 %v5614, 1.442695
  %v5621 = vpow.pop %v5620
  %v5622 = vmul.f32 %v5615, 1.442695
  %v5623 = vpow.pop %v5622
  %v5624 = vmul.f32 %v5616, 1.442695
  %v5625 = vpow.pop %v5624
  %v5626 = vmul.f32 %v5617, 1.442695
  %v5627 = vpow.pop %v5626
  %v5628 = vsel %vm381, %v5619, 0.0
  %5629 = vadd.xlane.f32.xlu0 %v5628
  %v5630 = vpop.xlane.xlu0 %5629
  %v5631 = vsel %vm381, %v5621, 0.0
  %5632 = vadd.xlane.f32.xlu0 %v5631
  %v5633 = vpop.xlane.xlu0 %5632
  %v5634 = vsel %vm381, %v5623, 0.0
  %5635 = vadd.xlane.f32.xlu0 %v5634
  %v5636 = vpop.xlane.xlu0 %5635
  %v5637 = vsel %vm381, %v5625, 0.0
  %5638 = vadd.xlane.f32.xlu0 %v5637
  %v5639 = vpop.xlane.xlu0 %5638
  %v5640 = vsel %vm394, %v5627, 0.0
  %5641 = vadd.xlane.f32.xlu0 %v5640
  %v5642 = vpop.xlane.xlu0 %5641
  %v5643 = vrcp.pop %v5630
  %v5644 = vmul.f32 %v5630, %v5643
  %v5645 = vsub.f32 1.0, %v5644
  %v5646 = vmul.f32 %v5643, %v5645
  %v5647 = vadd.f32 %v5643, %v5646
  %vm5648 = vweird.f32 %v5630
  %vm5649 = vweird.f32 %v5643
  %vm5650 = vmor %vm5648, %vm5649
  %v5651 = vsel %vm5650, %v5643, %v5647
  %v5652 = vand.u32 2147483647, %v5630
  %vm5653 = vcmp.eq.f32.partialorder %v5652, 8.507059e+37
  %v5654 = vand.u32 %v5630, 2147483648
  %v5655 = vor.u32 1.1754944e-38, %v5654
  %v5656 = vsel %vm5653, %v5655, %v5651
  %v5657 = vmul.f32 %v5619, %v5656
  %v5658 = vrcp.pop %v5633
  %v5659 = vmul.f32 %v5633, %v5658
  %v5660 = vsub.f32 1.0, %v5659
  %v5661 = vmul.f32 %v5658, %v5660
  %v5662 = vadd.f32 %v5658, %v5661
  %vm5663 = vweird.f32 %v5633
  %vm5664 = vweird.f32 %v5658
  %vm5665 = vmor %vm5663, %vm5664
  %v5666 = vsel %vm5665, %v5658, %v5662
  %v5667 = vand.u32 2147483647, %v5633
  %vm5668 = vcmp.eq.f32.partialorder %v5667, 8.507059e+37
  %v5669 = vand.u32 %v5633, 2147483648
  %v5670 = vor.u32 1.1754944e-38, %v5669
  %v5671 = vsel %vm5668, %v5670, %v5666
  %v5672 = vmul.f32 %v5621, %v5671
  %v5673 = vrcp.pop %v5636
  %v5674 = vmul.f32 %v5636, %v5673
  %v5675 = vsub.f32 1.0, %v5674
  %v5676 = vmul.f32 %v5673, %v5675
  %v5677 = vadd.f32 %v5673, %v5676
  %vm5678 = vweird.f32 %v5636
  %vm5679 = vweird.f32 %v5673
  %vm5680 = vmor %vm5678, %vm5679
  %v5681 = vsel %vm5680, %v5673, %v5677
  %v5682 = vand.u32 2147483647, %v5636
  %vm5683 = vcmp.eq.f32.partialorder %v5682, 8.507059e+37
  %v5684 = vand.u32 %v5636, 2147483648
  %v5685 = vor.u32 1.1754944e-38, %v5684
  %v5686 = vsel %vm5683, %v5685, %v5681
  %v5687 = vmul.f32 %v5623, %v5686
  %v5688 = vrcp.pop %v5639
  %v5689 = vmul.f32 %v5639, %v5688
  %v5690 = vsub.f32 1.0, %v5689
  %v5691 = vmul.f32 %v5688, %v5690
  %v5692 = vadd.f32 %v5688, %v5691
  %vm5693 = vweird.f32 %v5639
  %vm5694 = vweird.f32 %v5688
  %vm5695 = vmor %vm5693, %vm5694
  %v5696 = vsel %vm5695, %v5688, %v5692
  %v5697 = vand.u32 2147483647, %v5639
  %vm5698 = vcmp.eq.f32.partialorder %v5697, 8.507059e+37
  %v5699 = vand.u32 %v5639, 2147483648
  %v5700 = vor.u32 1.1754944e-38, %v5699
  %v5701 = vsel %vm5698, %v5700, %v5696
  %v5702 = vmul.f32 %v5625, %v5701
  %v5703 = vrcp.pop %v5642
  %v5704 = vmul.f32 %v5642, %v5703
  %v5705 = vsub.f32 1.0, %v5704
  %v5706 = vmul.f32 %v5703, %v5705
  %v5707 = vadd.f32 %v5703, %v5706
  %vm5708 = vweird.f32 %v5642
  %vm5709 = vweird.f32 %v5703
  %vm5710 = vmor %vm5708, %vm5709
  %v5711 = vsel %vm5710, %v5703, %v5707
  %v5712 = vand.u32 2147483647, %v5642
  %vm5713 = vcmp.eq.f32.partialorder %v5712, 8.507059e+37
  %v5714 = vand.u32 %v5642, 2147483648
  %v5715 = vor.u32 1.1754944e-38, %v5714
  %v5716 = vsel %vm5713, %v5715, %v5711
  %v5717 = vmul.f32 %v5627, %v5716
  %5718 = vrot.lane.b32.xlu0 %v5076, 64
  %v5719 = vpop.permute.xlu0 %5718
  %5720 = vrot.lane.b32.xlu0 %v5079, 64
  %v5721 = vpop.permute.xlu0 %5720
  %5722 = vrot.lane.b32.xlu0 %v5082, 64
  %v5723 = vpop.permute.xlu0 %5722
  %5724 = vrot.lane.b32.xlu0 %v5085, 64
  %v5725 = vpop.permute.xlu0 %5724
  %5726 = vrot.lane.b32.xlu0 %v5088, 64
  %v5727 = vpop.permute.xlu0 %5726
  %v5733 = vsel %vm381, %v5657, 0
  %v5736 = vsel %vm381, %v5672, 0
  %v5739 = vsel %vm381, %v5687, 0
  %v5742 = vsel %vm381, %v5702, 0
  %v5745 = vsel %vm381, %v5717, 0
  %v5747 = vsel %vm709, %v5727, 0
  %5749 = vmatpush.msra.mxu0 0.0
  %5750 = vmatpush.msra.mxu0 0.0
  %5751 = vmatpush.msra.mxu0 0.0
  %5752 = vmatpush.msra.mxu0 0.0
  %5753 = vmatpush.msra.mxu0 0.0
  %5754 = vmatpush.msra.mxu0 0.0
  %5755 = vmatpush.msra.mxu0 0.0
  %5756 = vmatpush.msra.mxu0 0.0
  %5757 = vmatpush.msra.mxu0 0.0
  %5758 = vmatpush.msra.mxu0 0.0
  %5759 = vmatpush.msra.mxu0 0.0
  %5760 = vmatpush.msra.mxu0 %v5747
  %5761 = vmatpush.msra.mxu0 %v5725
  %5762 = vmatpush.msra.mxu0 %v5723
  %5763 = vmatpush.msra.mxu0 %v5721
  %5764 = vmatpush.msra.mxu0 %v5719
  %5765 = vmatmul.f32.gmra.mxu0 %v5733
  %v5766 = vpop.f32.mrf.mxu0
  %v5767 = vadd.f32 0.0, %v5766
  %5768 = vmatmul.f32.gmra.mxu0 %v5736
  %v5769 = vpop.f32.mrf.mxu0
  %v5770 = vadd.f32 0.0, %v5769
  %5771 = vmatmul.f32.gmra.mxu0 %v5739
  %v5772 = vpop.f32.mrf.mxu0
  %v5773 = vadd.f32 0.0, %v5772
  %5774 = vmatmul.f32.gmra.mxu0 %v5742
  %v5775 = vpop.f32.mrf.mxu0
  %v5776 = vadd.f32 0.0, %v5775
  %5777 = vmatmul.f32.gmra.mxu0 %v5745
  %v5778 = vpop.f32.mrf.mxu0
  %v5779 = vadd.f32 0.0, %v5778
  %5780 = vdwg.mxu0
  %v5781 = vadd.f32 %v5532, %v5767
  %v5782 = vadd.f32 %v5535, %v5770
  %v5783 = vadd.f32 %v5538, %v5773
  %v5784 = vadd.f32 %v5541, %v5776
  %v5785 = vadd.f32 %v5544, %v5779
  %5786 = vrot.lane.b32.xlu0 %v5044, 32
  %v5787 = vpop.permute.xlu0 %5786
  %5788 = vrot.lane.b32.xlu0 %v5047, 32
  %v5789 = vpop.permute.xlu0 %5788
  %5790 = vrot.lane.b32.xlu0 %v5050, 32
  %v5791 = vpop.permute.xlu0 %5790
  %5792 = vrot.lane.b32.xlu0 %v5053, 32
  %v5793 = vpop.permute.xlu0 %5792
  %5794 = vrot.lane.b32.xlu0 %v5056, 32
  %v5795 = vpop.permute.xlu0 %5794
  %v5796 = vsel %vm126, %v5787, 0
  %v5798 = vsel %vm126, %v5789, 0
  %v5800 = vsel %vm126, %v5791, 0
  %v5802 = vsel %vm126, %v5793, 0
  %v5804 = vsel %vm126, %v5795, 0
  %5806 = vmatpush.xpose.msra.mxu0 0.0
  %5807 = vmatpush.xpose.msra.mxu0 0.0
  %5808 = vmatpush.xpose.msra.mxu0 0.0
  %5809 = vmatpush.xpose.msra.mxu0 0.0
  %5810 = vmatpush.xpose.msra.mxu0 0.0
  %5811 = vmatpush.xpose.msra.mxu0 0.0
  %5812 = vmatpush.xpose.msra.mxu0 0.0
  %5813 = vmatpush.xpose.msra.mxu0 0.0
  %5814 = vmatpush.xpose.msra.mxu0 0.0
  %5815 = vmatpush.xpose.msra.mxu0 0.0
  %5816 = vmatpush.xpose.msra.mxu0 0.0
  %5817 = vmatpush.xpose.msra.mxu0 %v5024
  %5818 = vmatpush.xpose.msra.mxu0 %v5021
  %5819 = vmatpush.xpose.msra.mxu0 %v5018
  %5820 = vmatpush.xpose.msra.mxu0 %v5015
  %5821 = vmatpush.xpose.msra.mxu0 %v5012
  %5822 = vmatmul.f32.gmra.mxu0 %v5796
  %v5823 = vpop.f32.mrf.mxu0
  %v5824 = vadd.f32 %v55, %v5823
  %5825 = vmatmul.f32.gmra.mxu0 %v5798
  %v5826 = vpop.f32.mrf.mxu0
  %v5827 = vadd.f32 %v56, %v5826
  %5828 = vmatmul.f32.gmra.mxu0 %v5800
  %v5829 = vpop.f32.mrf.mxu0
  %v5830 = vadd.f32 %v57, %v5829
  %5831 = vmatmul.f32.gmra.mxu0 %v5802
  %v5832 = vpop.f32.mrf.mxu0
  %v5833 = vadd.f32 %v58, %v5832
  %5834 = vmatmul.f32.gmra.mxu0 %v5804
  %v5835 = vpop.f32.mrf.mxu0
  %v5836 = vadd.f32 %v59, %v5835
  %5837 = vdwg.mxu0
  %v5838 = vsel %vm381, %v5824, -inf
  %5839 = vmax.xlane.f32.xlu0 %v5838
  %v5840 = vpop.xlane.xlu0 %5839
  %v5841 = vsel %vm381, %v5827, -inf
  %5842 = vmax.xlane.f32.xlu0 %v5841
  %v5843 = vpop.xlane.xlu0 %5842
  %v5844 = vsel %vm381, %v5830, -inf
  %5845 = vmax.xlane.f32.xlu0 %v5844
  %v5846 = vpop.xlane.xlu0 %5845
  %v5847 = vsel %vm381, %v5833, -inf
  %5848 = vmax.xlane.f32.xlu0 %v5847
  %v5849 = vpop.xlane.xlu0 %5848
  %v5850 = vsel %vm394, %v5836, -inf
  %5851 = vmax.xlane.f32.xlu0 %v5850
  %v5852 = vpop.xlane.xlu0 %5851
  %v5853 = vsub.f32 %v5824, %v5840
  %v5854 = vsub.f32 %v5827, %v5843
  %v5855 = vsub.f32 %v5830, %v5846
  %v5856 = vsub.f32 %v5833, %v5849
  %v5857 = vsub.f32 %v5836, %v5852
  %v5858 = vmul.f32 %v5853, 1.442695
  %v5859 = vpow.pop %v5858
  %v5860 = vmul.f32 %v5854, 1.442695
  %v5861 = vpow.pop %v5860
  %v5862 = vmul.f32 %v5855, 1.442695
  %v5863 = vpow.pop %v5862
  %v5864 = vmul.f32 %v5856, 1.442695
  %v5865 = vpow.pop %v5864
  %v5866 = vmul.f32 %v5857, 1.442695
  %v5867 = vpow.pop %v5866
  %v5868 = vsel %vm381, %v5859, 0.0
  %5869 = vadd.xlane.f32.xlu0 %v5868
  %v5870 = vpop.xlane.xlu0 %5869
  %v5871 = vsel %vm381, %v5861, 0.0
  %5872 = vadd.xlane.f32.xlu0 %v5871
  %v5873 = vpop.xlane.xlu0 %5872
  %v5874 = vsel %vm381, %v5863, 0.0
  %5875 = vadd.xlane.f32.xlu0 %v5874
  %v5876 = vpop.xlane.xlu0 %5875
  %v5877 = vsel %vm381, %v5865, 0.0
  %5878 = vadd.xlane.f32.xlu0 %v5877
  %v5879 = vpop.xlane.xlu0 %5878
  %v5880 = vsel %vm394, %v5867, 0.0
  %5881 = vadd.xlane.f32.xlu0 %v5880
  %v5882 = vpop.xlane.xlu0 %5881
  %v5883 = vrcp.pop %v5870
  %v5884 = vmul.f32 %v5870, %v5883
  %v5885 = vsub.f32 1.0, %v5884
  %v5886 = vmul.f32 %v5883, %v5885
  %v5887 = vadd.f32 %v5883, %v5886
  %vm5888 = vweird.f32 %v5870
  %vm5889 = vweird.f32 %v5883
  %vm5890 = vmor %vm5888, %vm5889
  %v5891 = vsel %vm5890, %v5883, %v5887
  %v5892 = vand.u32 2147483647, %v5870
  %vm5893 = vcmp.eq.f32.partialorder %v5892, 8.507059e+37
  %v5894 = vand.u32 %v5870, 2147483648
  %v5895 = vor.u32 1.1754944e-38, %v5894
  %v5896 = vsel %vm5893, %v5895, %v5891
  %v5897 = vmul.f32 %v5859, %v5896
  %v5898 = vrcp.pop %v5873
  %v5899 = vmul.f32 %v5873, %v5898
  %v5900 = vsub.f32 1.0, %v5899
  %v5901 = vmul.f32 %v5898, %v5900
  %v5902 = vadd.f32 %v5898, %v5901
  %vm5903 = vweird.f32 %v5873
  %vm5904 = vweird.f32 %v5898
  %vm5905 = vmor %vm5903, %vm5904
  %v5906 = vsel %vm5905, %v5898, %v5902
  %v5907 = vand.u32 2147483647, %v5873
  %vm5908 = vcmp.eq.f32.partialorder %v5907, 8.507059e+37
  %v5909 = vand.u32 %v5873, 2147483648
  %v5910 = vor.u32 1.1754944e-38, %v5909
  %v5911 = vsel %vm5908, %v5910, %v5906
  %v5912 = vmul.f32 %v5861, %v5911
  %v5913 = vrcp.pop %v5876
  %v5914 = vmul.f32 %v5876, %v5913
  %v5915 = vsub.f32 1.0, %v5914
  %v5916 = vmul.f32 %v5913, %v5915
  %v5917 = vadd.f32 %v5913, %v5916
  %vm5918 = vweird.f32 %v5876
  %vm5919 = vweird.f32 %v5913
  %vm5920 = vmor %vm5918, %vm5919
  %v5921 = vsel %vm5920, %v5913, %v5917
  %v5922 = vand.u32 2147483647, %v5876
  %vm5923 = vcmp.eq.f32.partialorder %v5922, 8.507059e+37
  %v5924 = vand.u32 %v5876, 2147483648
  %v5925 = vor.u32 1.1754944e-38, %v5924
  %v5926 = vsel %vm5923, %v5925, %v5921
  %v5927 = vmul.f32 %v5863, %v5926
  %v5928 = vrcp.pop %v5879
  %v5929 = vmul.f32 %v5879, %v5928
  %v5930 = vsub.f32 1.0, %v5929
  %v5931 = vmul.f32 %v5928, %v5930
  %v5932 = vadd.f32 %v5928, %v5931
  %vm5933 = vweird.f32 %v5879
  %vm5934 = vweird.f32 %v5928
  %vm5935 = vmor %vm5933, %vm5934
  %v5936 = vsel %vm5935, %v5928, %v5932
  %v5937 = vand.u32 2147483647, %v5879
  %vm5938 = vcmp.eq.f32.partialorder %v5937, 8.507059e+37
  %v5939 = vand.u32 %v5879, 2147483648
  %v5940 = vor.u32 1.1754944e-38, %v5939
  %v5941 = vsel %vm5938, %v5940, %v5936
  %v5942 = vmul.f32 %v5865, %v5941
  %v5943 = vrcp.pop %v5882
  %v5944 = vmul.f32 %v5882, %v5943
  %v5945 = vsub.f32 1.0, %v5944
  %v5946 = vmul.f32 %v5943, %v5945
  %v5947 = vadd.f32 %v5943, %v5946
  %vm5948 = vweird.f32 %v5882
  %vm5949 = vweird.f32 %v5943
  %vm5950 = vmor %vm5948, %vm5949
  %v5951 = vsel %vm5950, %v5943, %v5947
  %v5952 = vand.u32 2147483647, %v5882
  %vm5953 = vcmp.eq.f32.partialorder %v5952, 8.507059e+37
  %v5954 = vand.u32 %v5882, 2147483648
  %v5955 = vor.u32 1.1754944e-38, %v5954
  %v5956 = vsel %vm5953, %v5955, %v5951
  %v5957 = vmul.f32 %v5867, %v5956
  %5958 = vrot.lane.b32.xlu0 %v5076, 32
  %v5959 = vpop.permute.xlu0 %5958
  %5960 = vrot.lane.b32.xlu0 %v5079, 32
  %v5961 = vpop.permute.xlu0 %5960
  %5962 = vrot.lane.b32.xlu0 %v5082, 32
  %v5963 = vpop.permute.xlu0 %5962
  %5964 = vrot.lane.b32.xlu0 %v5085, 32
  %v5965 = vpop.permute.xlu0 %5964
  %5966 = vrot.lane.b32.xlu0 %v5088, 32
  %v5967 = vpop.permute.xlu0 %5966
  %v5973 = vsel %vm381, %v5897, 0
  %v5976 = vsel %vm381, %v5912, 0
  %v5979 = vsel %vm381, %v5927, 0
  %v5982 = vsel %vm381, %v5942, 0
  %v5985 = vsel %vm381, %v5957, 0
  %v5987 = vsel %vm709, %v5967, 0
  %5989 = vmatpush.msra.mxu0 0.0
  %5990 = vmatpush.msra.mxu0 0.0
  %5991 = vmatpush.msra.mxu0 0.0
  %5992 = vmatpush.msra.mxu0 0.0
  %5993 = vmatpush.msra.mxu0 0.0
  %5994 = vmatpush.msra.mxu0 0.0
  %5995 = vmatpush.msra.mxu0 0.0
  %5996 = vmatpush.msra.mxu0 0.0
  %5997 = vmatpush.msra.mxu0 0.0
  %5998 = vmatpush.msra.mxu0 0.0
  %5999 = vmatpush.msra.mxu0 0.0
  %6000 = vmatpush.msra.mxu0 %v5987
  %6001 = vmatpush.msra.mxu0 %v5965
  %6002 = vmatpush.msra.mxu0 %v5963
  %6003 = vmatpush.msra.mxu0 %v5961
  %6004 = vmatpush.msra.mxu0 %v5959
  %6005 = vmatmul.f32.gmra.mxu0 %v5973
  %v6006 = vpop.f32.mrf.mxu0
  %v6007 = vadd.f32 0.0, %v6006
  %6008 = vmatmul.f32.gmra.mxu0 %v5976
  %v6009 = vpop.f32.mrf.mxu0
  %v6010 = vadd.f32 0.0, %v6009
  %6011 = vmatmul.f32.gmra.mxu0 %v5979
  %v6012 = vpop.f32.mrf.mxu0
  %v6013 = vadd.f32 0.0, %v6012
  %6014 = vmatmul.f32.gmra.mxu0 %v5982
  %v6015 = vpop.f32.mrf.mxu0
  %v6016 = vadd.f32 0.0, %v6015
  %6017 = vmatmul.f32.gmra.mxu0 %v5985
  %v6018 = vpop.f32.mrf.mxu0
  %v6019 = vadd.f32 0.0, %v6018
  %6020 = vdwg.mxu0
  %v6021 = vadd.f32 %v5781, %v6007
  %v6022 = vadd.f32 %v5782, %v6010
  %v6023 = vadd.f32 %v5783, %v6013
  %v6024 = vadd.f32 %v5784, %v6016
  %v6025 = vadd.f32 %v5785, %v6019
  %v6026 = vadd.f32 %v4886, %v6021
  %v6027 = vadd.f32 %v4887, %v6022
  %v6028 = vadd.f32 %v4888, %v6023
  %v6029 = vadd.f32 %v4889, %v6024
  %v6030 = vadd.f32 %v4890, %v6025
  %v6031 = vadd.f32 %v6026, %v65
  %v6032 = vadd.f32 %v6027, %v65
  %v6033 = vadd.f32 %v6028, %v65
  %v6034 = vadd.f32 %v6029, %v65
  %v6035 = vadd.f32 %v6030, %v65
  %v6036 = vsel %vm126, %v6031, 0.0
  %6037 = vadd.xlane.f32.xlu0 %v6036
  %v6038 = vpop.xlane.xlu0 %6037
  %v6039 = vsel %vm126, %v6032, 0.0
  %6040 = vadd.xlane.f32.xlu0 %v6039
  %v6041 = vpop.xlane.xlu0 %6040
  %v6042 = vsel %vm126, %v6033, 0.0
  %6043 = vadd.xlane.f32.xlu0 %v6042
  %v6044 = vpop.xlane.xlu0 %6043
  %v6045 = vsel %vm126, %v6034, 0.0
  %6046 = vadd.xlane.f32.xlu0 %v6045
  %v6047 = vpop.xlane.xlu0 %6046
  %v6048 = vsel %vm139, %v6035, 0.0
  %6049 = vadd.xlane.f32.xlu0 %v6048
  %v6050 = vpop.xlane.xlu0 %6049
  %v6051 = vmul.f32 %v6038, %v149
  %v6052 = vmul.f32 %v6041, %v149
  %v6053 = vmul.f32 %v6044, %v149
  %v6054 = vmul.f32 %v6047, %v149
  %v6055 = vmul.f32 %v6050, %v149
  %v6056 = vsub.f32 %v6031, %v6051
  %v6057 = vsub.f32 %v6032, %v6052
  %v6058 = vsub.f32 %v6033, %v6053
  %v6059 = vsub.f32 %v6034, %v6054
  %v6060 = vsub.f32 %v6035, %v6055
  %v6061 = vmul.f32 %v6056, %v6056
  %v6062 = vmul.f32 %v6057, %v6057
  %v6063 = vmul.f32 %v6058, %v6058
  %v6064 = vmul.f32 %v6059, %v6059
  %v6065 = vmul.f32 %v6060, %v6060
  %v6066 = vsel %vm126, %v6061, 0.0
  %6067 = vadd.xlane.f32.xlu0 %v6066
  %v6068 = vpop.xlane.xlu0 %6067
  %v6069 = vsel %vm126, %v6062, 0.0
  %6070 = vadd.xlane.f32.xlu0 %v6069
  %v6071 = vpop.xlane.xlu0 %6070
  %v6072 = vsel %vm126, %v6063, 0.0
  %6073 = vadd.xlane.f32.xlu0 %v6072
  %v6074 = vpop.xlane.xlu0 %6073
  %v6075 = vsel %vm126, %v6064, 0.0
  %6076 = vadd.xlane.f32.xlu0 %v6075
  %v6077 = vpop.xlane.xlu0 %6076
  %v6078 = vsel %vm139, %v6065, 0.0
  %6079 = vadd.xlane.f32.xlu0 %v6078
  %v6080 = vpop.xlane.xlu0 %6079
  %v6081 = vmul.f32 %v6068, %v149
  %v6082 = vmul.f32 %v6071, %v149
  %v6083 = vmul.f32 %v6074, %v149
  %v6084 = vmul.f32 %v6077, %v149
  %v6085 = vmul.f32 %v6080, %v149
  %v6086 = vadd.f32 %v6081, 1e-05
  %v6087 = vadd.f32 %v6082, 1e-05
  %v6088 = vadd.f32 %v6083, 1e-05
  %v6089 = vadd.f32 %v6084, 1e-05
  %v6090 = vadd.f32 %v6085, 1e-05
  %v6091 = vrsqrt.pop %v6086
  %v6092 = vmul.f32 %v6091, %v6086
  %v6093 = vmul.f32 %v6092, %v6091
  %v6094 = vmul.f32 0.5, %v6093
  %v6095 = vsub.f32 1.5, %v6094
  %v6096 = vmul.f32 %v6091, %v6095
  %vm6097 = vweird.f32 %v6086
  %vm6098 = vweird.f32 %v6091
  %vm6099 = vmor %vm6097, %vm6098
  %v6100 = vsel %vm6099, %v6091, %v6096
  %v6101 = vrsqrt.pop %v6087
  %v6102 = vmul.f32 %v6101, %v6087
  %v6103 = vmul.f32 %v6102, %v6101
  %v6104 = vmul.f32 0.5, %v6103
  %v6105 = vsub.f32 1.5, %v6104
  %v6106 = vmul.f32 %v6101, %v6105
  %vm6107 = vweird.f32 %v6087
  %vm6108 = vweird.f32 %v6101
  %vm6109 = vmor %vm6107, %vm6108
  %v6110 = vsel %vm6109, %v6101, %v6106
  %v6111 = vrsqrt.pop %v6088
  %v6112 = vmul.f32 %v6111, %v6088
  %v6113 = vmul.f32 %v6112, %v6111
  %v6114 = vmul.f32 0.5, %v6113
  %v6115 = vsub.f32 1.5, %v6114
  %v6116 = vmul.f32 %v6111, %v6115
  %vm6117 = vweird.f32 %v6088
  %vm6118 = vweird.f32 %v6111
  %vm6119 = vmor %vm6117, %vm6118
  %v6120 = vsel %vm6119, %v6111, %v6116
  %v6121 = vrsqrt.pop %v6089
  %v6122 = vmul.f32 %v6121, %v6089
  %v6123 = vmul.f32 %v6122, %v6121
  %v6124 = vmul.f32 0.5, %v6123
  %v6125 = vsub.f32 1.5, %v6124
  %v6126 = vmul.f32 %v6121, %v6125
  %vm6127 = vweird.f32 %v6089
  %vm6128 = vweird.f32 %v6121
  %vm6129 = vmor %vm6127, %vm6128
  %v6130 = vsel %vm6129, %v6121, %v6126
  %v6131 = vrsqrt.pop %v6090
  %v6132 = vmul.f32 %v6131, %v6090
  %v6133 = vmul.f32 %v6132, %v6131
  %v6134 = vmul.f32 0.5, %v6133
  %v6135 = vsub.f32 1.5, %v6134
  %v6136 = vmul.f32 %v6131, %v6135
  %vm6137 = vweird.f32 %v6090
  %vm6138 = vweird.f32 %v6131
  %vm6139 = vmor %vm6137, %vm6138
  %v6140 = vsel %vm6139, %v6131, %v6136
  %v6141 = vmul.f32 %v6056, %v6100
  %v6142 = vmul.f32 %v6057, %v6110
  %v6143 = vmul.f32 %v6058, %v6120
  %v6144 = vmul.f32 %v6059, %v6130
  %v6145 = vmul.f32 %v6060, %v6140
  %v6146 = vmul.f32 %v6141, %v63
  %v6147 = vmul.f32 %v6142, %v63
  %v6148 = vmul.f32 %v6143, %v63
  %v6149 = vmul.f32 %v6144, %v63
  %v6150 = vmul.f32 %v6145, %v63
  %v6151 = vadd.f32 %v6146, %v64
  %v6152 = vadd.f32 %v6147, %v64
  %v6153 = vadd.f32 %v6148, %v64
  %v6154 = vadd.f32 %v6149, %v64
  %v6155 = vadd.f32 %v6150, %v64
  %v6157 = vsel %vm126, %v6151, 0
  %v6160 = vsel %vm126, %v6152, 0
  %v6163 = vsel %vm126, %v6153, 0
  %v6166 = vsel %vm126, %v6154, 0
  %v6169 = vsel %vm126, %v6155, 0
  %6171 = vmatpush.msra.mxu0 0.0
  %6172 = vmatpush.msra.mxu0 0.0
  %6173 = vmatpush.msra.mxu0 0.0
  %6174 = vmatpush.msra.mxu0 0.0
  %6175 = vmatpush.msra.mxu0 0.0
  %6176 = vmatpush.msra.mxu0 0.0
  %6177 = vmatpush.msra.mxu0 0.0
  %6178 = vmatpush.msra.mxu0 0.0
  %6179 = vmatpush.msra.mxu0 0.0
  %6180 = vmatpush.msra.mxu0 0.0
  %6181 = vmatpush.msra.mxu0 0.0
  %6182 = vmatpush.msra.mxu0 0.0
  %6183 = vmatpush.msra.mxu0 %v38
  %6184 = vmatpush.msra.mxu0 %v37
  %6185 = vmatpush.msra.mxu0 %v36
  %6186 = vmatpush.msra.mxu0 %v35
  %6187 = vmatmul.f32.gmra.mxu0 %v6157
  %v6188 = vpop.f32.mrf.mxu0
  %v6189 = vadd.f32 %v67, %v6188
  %6190 = vmatmul.f32.gmra.mxu0 %v6160
  %v6191 = vpop.f32.mrf.mxu0
  %v6192 = vadd.f32 %v67, %v6191
  %6193 = vmatmul.f32.gmra.mxu0 %v6163
  %v6194 = vpop.f32.mrf.mxu0
  %v6195 = vadd.f32 %v67, %v6194
  %6196 = vmatmul.f32.gmra.mxu0 %v6166
  %v6197 = vpop.f32.mrf.mxu0
  %v6198 = vadd.f32 %v67, %v6197
  %6199 = vmatmul.f32.gmra.mxu0 %v6169
  %v6200 = vpop.f32.mrf.mxu0
  %v6201 = vadd.f32 %v67, %v6200
  %6202 = vdwg.mxu0
  %v6203 = vmul.f32 %v6189, 0.5
  %v6204 = vmul.f32 %v6192, 0.5
  %v6205 = vmul.f32 %v6195, 0.5
  %v6206 = vmul.f32 %v6198, 0.5
  %v6207 = vmul.f32 %v6201, 0.5
  %v6208 = vmul.f32 %v6189, 0.70710677
  %v6209 = vmul.f32 %v6192, 0.70710677
  %v6210 = vmul.f32 %v6195, 0.70710677
  %v6211 = vmul.f32 %v6198, 0.70710677
  %v6212 = vmul.f32 %v6201, 0.70710677
  %v6213 = vmax.f32 %v6208, -4.0
  %v6214 = vmax.f32 %v6209, -4.0
  %v6215 = vmax.f32 %v6210, -4.0
  %v6216 = vmax.f32 %v6211, -4.0
  %v6217 = vmax.f32 %v6212, -4.0
  %v6218 = vmin.f32 %v6213, 4.0
  %v6219 = vmin.f32 %v6214, 4.0
  %v6220 = vmin.f32 %v6215, 4.0
  %v6221 = vmin.f32 %v6216, 4.0
  %v6222 = vmin.f32 %v6217, 4.0
  %v6223 = vmul.f32 %v6218, %v6218
  %v6224 = vmul.f32 %v6219, %v6219
  %v6225 = vmul.f32 %v6220, %v6220
  %v6226 = vmul.f32 %v6221, %v6221
  %v6227 = vmul.f32 %v6222, %v6222
  %v6228 = vmul.f32 %v6223, -2.7261424e-10
  %v6229 = vmul.f32 %v6224, -2.7261424e-10
  %v6230 = vmul.f32 %v6225, -2.7261424e-10
  %v6231 = vmul.f32 %v6226, -2.7261424e-10
  %v6232 = vmul.f32 %v6227, -2.7261424e-10
  %v6233 = vadd.f32 %v6228, 2.7706815e-08
  %v6234 = vadd.f32 %v6229, 2.7706815e-08
  %v6235 = vadd.f32 %v6230, 2.7706815e-08
  %v6236 = vadd.f32 %v6231, 2.7706815e-08
  %v6237 = vadd.f32 %v6232, 2.7706815e-08
  %v6238 = vmul.f32 %v6233, %v6223
  %v6239 = vmul.f32 %v6234, %v6224
  %v6240 = vmul.f32 %v6235, %v6225
  %v6241 = vmul.f32 %v6236, %v6226
  %v6242 = vmul.f32 %v6237, %v6227
  %v6243 = vadd.f32 %v6238, -2.101024e-06
  %v6244 = vadd.f32 %v6239, -2.101024e-06
  %v6245 = vadd.f32 %v6240, -2.101024e-06
  %v6246 = vadd.f32 %v6241, -2.101024e-06
  %v6247 = vadd.f32 %v6242, -2.101024e-06
  %v6248 = vmul.f32 %v6243, %v6223
  %v6249 = vmul.f32 %v6244, %v6224
  %v6250 = vmul.f32 %v6245, %v6225
  %v6251 = vmul.f32 %v6246, %v6226
  %v6252 = vmul.f32 %v6247, %v6227
  %v6253 = vadd.f32 %v6248, -5.6925062e-05
  %v6254 = vadd.f32 %v6249, -5.6925062e-05
  %v6255 = vadd.f32 %v6250, -5.6925062e-05
  %v6256 = vadd.f32 %v6251, -5.6925062e-05
  %v6257 = vadd.f32 %v6252, -5.6925062e-05
  %v6258 = vmul.f32 %v6253, %v6223
  %v6259 = vmul.f32 %v6254, %v6224
  %v6260 = vmul.f32 %v6255, %v6225
  %v6261 = vmul.f32 %v6256, %v6226
  %v6262 = vmul.f32 %v6257, %v6227
  %v6263 = vadd.f32 %v6258, -0.00073499064
  %v6264 = vadd.f32 %v6259, -0.00073499064
  %v6265 = vadd.f32 %v6260, -0.00073499064
  %v6266 = vadd.f32 %v6261, -0.00073499064
  %v6267 = vadd.f32 %v6262, -0.00073499064
  %v6268 = vmul.f32 %v6263, %v6223
  %v6269 = vmul.f32 %v6264, %v6224
  %v6270 = vmul.f32 %v6265, %v6225
  %v6271 = vmul.f32 %v6266, %v6226
  %v6272 = vmul.f32 %v6267, %v6227
  %v6273 = vadd.f32 %v6268, -0.0029546
  %v6274 = vadd.f32 %v6269, -0.0029546
  %v6275 = vadd.f32 %v6270, -0.0029546
  %v6276 = vadd.f32 %v6271, -0.0029546
  %v6277 = vadd.f32 %v6272, -0.0029546
  %v6278 = vmul.f32 %v6273, %v6223
  %v6279 = vmul.f32 %v6274, %v6224
  %v6280 = vmul.f32 %v6275, %v6225
  %v6281 = vmul.f32 %v6276, %v6226
  %v6282 = vmul.f32 %v6277, %v6227
  %v6283 = vadd.f32 %v6278, -0.016096033
  %v6284 = vadd.f32 %v6279, -0.016096033
  %v6285 = vadd.f32 %v6280, -0.016096033
  %v6286 = vadd.f32 %v6281, -0.016096033
  %v6287 = vadd.f32 %v6282, -0.016096033
  %v6288 = vmul.f32 %v6283, %v6218
  %v6289 = vmul.f32 %v6284, %v6219
  %v6290 = vmul.f32 %v6285, %v6220
  %v6291 = vmul.f32 %v6286, %v6221
  %v6292 = vmul.f32 %v6287, %v6222
  %v6293 = vmul.f32 %v6223, -1.45660715e-05
  %v6294 = vmul.f32 %v6224, -1.45660715e-05
  %v6295 = vmul.f32 %v6225, -1.45660715e-05
  %v6296 = vmul.f32 %v6226, -1.45660715e-05
  %v6297 = vmul.f32 %v6227, -1.45660715e-05
  %v6298 = vadd.f32 %v6293, -0.00021337405
  %v6299 = vadd.f32 %v6294, -0.00021337405
  %v6300 = vadd.f32 %v6295, -0.00021337405
  %v6301 = vadd.f32 %v6296, -0.00021337405
  %v6302 = vadd.f32 %v6297, -0.00021337405
  %v6303 = vmul.f32 %v6298, %v6223
  %v6304 = vmul.f32 %v6299, %v6224
  %v6305 = vmul.f32 %v6300, %v6225
  %v6306 = vmul.f32 %v6301, %v6226
  %v6307 = vmul.f32 %v6302, %v6227
  %v6308 = vadd.f32 %v6303, -0.001682827
  %v6309 = vadd.f32 %v6304, -0.001682827
  %v6310 = vadd.f32 %v6305, -0.001682827
  %v6311 = vadd.f32 %v6306, -0.001682827
  %v6312 = vadd.f32 %v6307, -0.001682827
  %v6313 = vmul.f32 %v6308, %v6223
  %v6314 = vmul.f32 %v6309, %v6224
  %v6315 = vmul.f32 %v6310, %v6225
  %v6316 = vmul.f32 %v6311, %v6226
  %v6317 = vmul.f32 %v6312, %v6227
  %v6318 = vadd.f32 %v6313, -0.0073733293
  %v6319 = vadd.f32 %v6314, -0.0073733293
  %v6320 = vadd.f32 %v6315, -0.0073733293
  %v6321 = vadd.f32 %v6316, -0.0073733293
  %v6322 = vadd.f32 %v6317, -0.0073733293
  %v6323 = vmul.f32 %v6318, %v6223
  %v6324 = vmul.f32 %v6319, %v6224
  %v6325 = vmul.f32 %v6320, %v6225
  %v6326 = vmul.f32 %v6321, %v6226
  %v6327 = vmul.f32 %v6322, %v6227
  %v6328 = vadd.f32 %v6323, -0.014264739
  %v6329 = vadd.f32 %v6324, -0.014264739
  %v6330 = vadd.f32 %v6325, -0.014264739
  %v6331 = vadd.f32 %v6326, -0.014264739
  %v6332 = vadd.f32 %v6327, -0.014264739
  %v6333 = vrcp.pop %v6328
  %v6334 = vmul.f32 %v6328, %v6333
  %v6335 = vsub.f32 1.0, %v6334
  %v6336 = vmul.f32 %v6333, %v6335
  %v6337 = vadd.f32 %v6333, %v6336
  %vm6338 = vweird.f32 %v6328
  %vm6339 = vweird.f32 %v6333
  %vm6340 = vmor %vm6338, %vm6339
  %v6341 = vsel %vm6340, %v6333, %v6337
  %v6342 = vand.u32 2147483647, %v6328
  %vm6343 = vcmp.eq.f32.partialorder %v6342, 8.507059e+37
  %v6344 = vand.u32 %v6328, 2147483648
  %v6345 = vor.u32 1.1754944e-38, %v6344
  %v6346 = vsel %vm6343, %v6345, %v6341
  %v6347 = vmul.f32 %v6288, %v6346
  %v6348 = vrcp.pop %v6329
  %v6349 = vmul.f32 %v6329, %v6348
  %v6350 = vsub.f32 1.0, %v6349
  %v6351 = vmul.f32 %v6348, %v6350
  %v6352 = vadd.f32 %v6348, %v6351
  %vm6353 = vweird.f32 %v6329
  %vm6354 = vweird.f32 %v6348
  %vm6355 = vmor %vm6353, %vm6354
  %v6356 = vsel %vm6355, %v6348, %v6352
  %v6357 = vand.u32 2147483647, %v6329
  %vm6358 = vcmp.eq.f32.partialorder %v6357, 8.507059e+37
  %v6359 = vand.u32 %v6329, 2147483648
  %v6360 = vor.u32 1.1754944e-38, %v6359
  %v6361 = vsel %vm6358, %v6360, %v6356
  %v6362 = vmul.f32 %v6289, %v6361
  %v6363 = vrcp.pop %v6330
  %v6364 = vmul.f32 %v6330, %v6363
  %v6365 = vsub.f32 1.0, %v6364
  %v6366 = vmul.f32 %v6363, %v6365
  %v6367 = vadd.f32 %v6363, %v6366
  %vm6368 = vweird.f32 %v6330
  %vm6369 = vweird.f32 %v6363
  %vm6370 = vmor %vm6368, %vm6369
  %v6371 = vsel %vm6370, %v6363, %v6367
  %v6372 = vand.u32 2147483647, %v6330
  %vm6373 = vcmp.eq.f32.partialorder %v6372, 8.507059e+37
  %v6374 = vand.u32 %v6330, 2147483648
  %v6375 = vor.u32 1.1754944e-38, %v6374
  %v6376 = vsel %vm6373, %v6375, %v6371
  %v6377 = vmul.f32 %v6290, %v6376
  %v6378 = vrcp.pop %v6331
  %v6379 = vmul.f32 %v6331, %v6378
  %v6380 = vsub.f32 1.0, %v6379
  %v6381 = vmul.f32 %v6378, %v6380
  %v6382 = vadd.f32 %v6378, %v6381
  %vm6383 = vweird.f32 %v6331
  %vm6384 = vweird.f32 %v6378
  %vm6385 = vmor %vm6383, %vm6384
  %v6386 = vsel %vm6385, %v6378, %v6382
  %v6387 = vand.u32 2147483647, %v6331
  %vm6388 = vcmp.eq.f32.partialorder %v6387, 8.507059e+37
  %v6389 = vand.u32 %v6331, 2147483648
  %v6390 = vor.u32 1.1754944e-38, %v6389
  %v6391 = vsel %vm6388, %v6390, %v6386
  %v6392 = vmul.f32 %v6291, %v6391
  %v6393 = vrcp.pop %v6332
  %v6394 = vmul.f32 %v6332, %v6393
  %v6395 = vsub.f32 1.0, %v6394
  %v6396 = vmul.f32 %v6393, %v6395
  %v6397 = vadd.f32 %v6393, %v6396
  %vm6398 = vweird.f32 %v6332
  %vm6399 = vweird.f32 %v6393
  %vm6400 = vmor %vm6398, %vm6399
  %v6401 = vsel %vm6400, %v6393, %v6397
  %v6402 = vand.u32 2147483647, %v6332
  %vm6403 = vcmp.eq.f32.partialorder %v6402, 8.507059e+37
  %v6404 = vand.u32 %v6332, 2147483648
  %v6405 = vor.u32 1.1754944e-38, %v6404
  %v6406 = vsel %vm6403, %v6405, %v6401
  %v6407 = vmul.f32 %v6292, %v6406
  %v6408 = vadd.f32 %v6347, 1.0
  %v6409 = vadd.f32 %v6362, 1.0
  %v6410 = vadd.f32 %v6377, 1.0
  %v6411 = vadd.f32 %v6392, 1.0
  %v6412 = vadd.f32 %v6407, 1.0
  %v6413 = vmul.f32 %v6203, %v6408
  %v6414 = vmul.f32 %v6204, %v6409
  %v6415 = vmul.f32 %v6205, %v6410
  %v6416 = vmul.f32 %v6206, %v6411
  %v6417 = vmul.f32 %v6207, %v6412
  %v6419 = vsel %vm1665, %v6413, 0
  %v6422 = vsel %vm1665, %v6414, 0
  %v6425 = vsel %vm1665, %v6415, 0
  %v6428 = vsel %vm1665, %v6416, 0
  %v6431 = vsel %vm1665, %v6417, 0
  %6433 = vmatpush.msra.mxu0 0.0
  %6434 = vmatpush.msra.mxu0 0.0
  %6435 = vmatpush.msra.mxu0 0.0
  %6436 = vmatpush.msra.mxu0 0.0
  %6437 = vmatpush.msra.mxu0 0.0
  %6438 = vmatpush.msra.mxu0 0.0
  %6439 = vmatpush.msra.mxu0 0.0
  %6440 = vmatpush.msra.mxu0 0.0
  %6441 = vmatpush.msra.mxu0 %v46
  %6442 = vmatpush.msra.mxu0 %v45
  %6443 = vmatpush.msra.mxu0 %v44
  %6444 = vmatpush.msra.mxu0 %v43
  %6445 = vmatpush.msra.mxu0 %v42
  %6446 = vmatpush.msra.mxu0 %v41
  %6447 = vmatpush.msra.mxu0 %v40
  %6448 = vmatpush.msra.mxu0 %v39
  %6449 = vmatmul.f32.gmra.mxu0 %v6419
  %v6450 = vpop.f32.mrf.mxu0
  %v6451 = vadd.f32 0.0, %v6450
  %6452 = vmatmul.f32.gmra.mxu0 %v6422
  %v6453 = vpop.f32.mrf.mxu0
  %v6454 = vadd.f32 0.0, %v6453
  %6455 = vmatmul.f32.gmra.mxu0 %v6425
  %v6456 = vpop.f32.mrf.mxu0
  %v6457 = vadd.f32 0.0, %v6456
  %6458 = vmatmul.f32.gmra.mxu0 %v6428
  %v6459 = vpop.f32.mrf.mxu0
  %v6460 = vadd.f32 0.0, %v6459
  %6461 = vmatmul.f32.gmra.mxu0 %v6431
  %v6462 = vpop.f32.mrf.mxu0
  %v6463 = vadd.f32 0.0, %v6462
  %6464 = vdwg.mxu0
  %v6465 = vadd.f32 %v6031, %v6451
  %v6466 = vadd.f32 %v6032, %v6454
  %v6467 = vadd.f32 %v6033, %v6457
  %v6468 = vadd.f32 %v6034, %v6460
  %v6469 = vadd.f32 %v6035, %v6463
  %v6470 = vadd.f32 %v6465, %v66
  %v6471 = vadd.f32 %v6466, %v66
  %v6472 = vadd.f32 %v6467, %v66
  %v6473 = vadd.f32 %v6468, %v66
  %v6474 = vadd.f32 %v6469, %v66
  %6480 = vrot.lane.b32.xlu0 %v3302, 32
  %v6481 = vpop.permute.xlu0 %6480
  %6482 = vrot.lane.b32.xlu0 %v3303, 32
  %v6483 = vpop.permute.xlu0 %6482
  %6484 = vrot.lane.b32.xlu0 %v3304, 32
  %v6485 = vpop.permute.xlu0 %6484
  %6486 = vrot.lane.b32.xlu0 %v3305, 32
  %v6487 = vpop.permute.xlu0 %6486
  %6488 = vrot.lane.b32.xlu0 %v3306, 32
  %v6489 = vpop.permute.xlu0 %6488
  %6500 = vrot.lane.b32.xlu0 %v4886, 64
  %v6501 = vpop.permute.xlu0 %6500
  %6502 = vrot.lane.b32.xlu0 %v4887, 64
  %v6503 = vpop.permute.xlu0 %6502
  %6504 = vrot.lane.b32.xlu0 %v4888, 64
  %v6505 = vpop.permute.xlu0 %6504
  %6506 = vrot.lane.b32.xlu0 %v4889, 64
  %v6507 = vpop.permute.xlu0 %6506
  %6508 = vrot.lane.b32.xlu0 %v4890, 64
  %v6509 = vpop.permute.xlu0 %6508
  %6520 = vrot.lane.b32.xlu0 %v6470, 96
  %v6521 = vpop.permute.xlu0 %6520
  %6522 = vrot.lane.b32.xlu0 %v6471, 96
  %v6523 = vpop.permute.xlu0 %6522
  %6524 = vrot.lane.b32.xlu0 %v6472, 96
  %v6525 = vpop.permute.xlu0 %6524
  %6526 = vrot.lane.b32.xlu0 %v6473, 96
  %v6527 = vpop.permute.xlu0 %6526
  %6528 = vrot.lane.b32.xlu0 %v6474, 96
  %v6529 = vpop.permute.xlu0 %6528
  %v6535 = vsel %vm126, %v1718, %v6481
  %v6536 = vsel %vm126, %v1719, %v6483
  %v6537 = vsel %vm126, %v1720, %v6485
  %v6538 = vsel %vm126, %v1721, %v6487
  %v6539 = vsel %vm126, %v1722, %v6489
  %v6540 = vsel %vm1665, %v6535, %v6501
  %v6541 = vsel %vm1665, %v6536, %v6503
  %v6542 = vsel %vm1665, %v6537, %v6505
  %v6543 = vsel %vm1665, %v6538, %v6507
  %v6544 = vsel %vm1665, %v6539, %v6509
  %vm6545 = vcmask 785408
  %v6546 = vsel %vm6545, %v6540, %v6521
  %v6547 = vsel %vm6545, %v6541, %v6523
  %v6548 = vsel %vm6545, %v6542, %v6525
  %v6549 = vsel %vm6545, %v6543, %v6527
  %v6550 = vsel %vm6545, %v6544, %v6529
  %6551 = vst [vmem:[%s8] sm:$0xff] %v6546
  %6552 = vst [vmem:[%s8 + $0x8] sm:$0xff] %v6547
  %6553 = vst [vmem:[%s8 + $0x10] sm:$0xff] %v6548
  %6554 = vst [vmem:[%s8 + $0x18] sm:$0xff] %v6549
  %6555 = vst [vmem:[%s8 + $0x20] sm:$0x3] %v6550
  // Predicated region
  $region34: #{_lambda_.1} parent=0 // pred_check
    _
  $region35: #{_lambda_.1} parent=0 // pred_check_branch
    %6557 = sbr.rel (0) target = $region37
  $region36: #{_lambda_.1} parent=0 // pred_region
    _
  $region37: #{_lambda_.1} parent=0 // pred_fallthru
    _
  // Predicated region
  $region38: #{_lambda_.1} parent=0 // pred_check
    _
  $region39: #{_lambda_.1} parent=0 // pred_check_branch
    %6559 = sbr.rel (0) target = $region41
  $region40: #{_lambda_.1} parent=0 // pred_region
    _
  $region41: #{_lambda_.1} parent=0 // pred_fallthru
    _

</llo_original>
